<compile_context>
chip_gen: v7x
topology: tpu7x:2x2x1
jax: 0.10.0
libtpu: 0.0.40
codegen_flags: <defaults>
</compile_context>

<pallas_src>
import functools

import jax
import jax.numpy as jnp
from jax.experimental import pallas as pl
from jax.experimental.pallas import tpu as pltpu

LANE = 128


def _round_up(n, m):
    return (n + m - 1) // m * m


# ----------------------------------------------------------------------------
# Mish (matches torch.nn.Mish: x * tanh(softplus(x)), softplus threshold 20).
# Single-exp rewrite:  with e = exp(x),
#   tanh(softplus(x)) = (e^2 + 2e) / (e^2 + 2e + 2)
# 1 EUP exp + 1 approx reciprocal instead of exp + log1p + tanh.
# ----------------------------------------------------------------------------
def _mish(x):
    e = jnp.exp(jnp.minimum(x, 20.0))
    n = e * (e + 2.0)
    t = n * pl.reciprocal(n + 2.0, approx=True)
    # For x > 20: softplus(x) = x and tanh(x) == 1.0 at f32 precision.
    return x * jnp.where(x > 20.0, 1.0, t)


# ----------------------------------------------------------------------------
# Pallas kernel bodies
# ----------------------------------------------------------------------------
def _mm_kernel(*refs, dual):
    """out = mish((a@wa [+ b@wb]) * s + sh)."""
    refs = list(refs)
    a_ref = refs.pop(0)
    b_ref = refs.pop(0) if dual else None
    wa_ref = refs.pop(0)
    wb_ref = refs.pop(0) if dual else None
    s_ref, sh_ref, o_ref = refs

    acc = jnp.dot(a_ref[...], wa_ref[...], preferred_element_type=jnp.float32)
    if dual:
        acc = acc + jnp.dot(b_ref[...], wb_ref[...],
                            preferred_element_type=jnp.float32)
    o_ref[...] = _mish(acc * s_ref[...] + sh_ref[...]).astype(o_ref.dtype)


def _fused_stage_kernel(*refs, th, wo, second):
    """One ReversedCSP main stage: 1x1 CBA -> (in-VMEM zero-padded) 3x3 CBA.

    The 1x1+BN+Mish result is written into the interior of a padded VMEM
    scratch (8-column aligned left pad), the taps are regrouped so the 3x3
    becomes 3 MXU matmuls with K = 3*Cp.  Optional second affine+Mish fuses
    the cat-BN main half on the last stage.
    """
    if second:
        (xt_ref, xm_ref, xb_ref, w1_ref, s1_ref, b1_ref,
         w3_ref, s3_ref, b3_ref, s2_ref, b2_ref, o_ref, upad, ucat) = refs
    else:
        (xt_ref, xm_ref, xb_ref, w1_ref, s1_ref, b1_ref,
         w3_ref, s3_ref, b3_ref, o_ref, upad, ucat) = refs
        s2_ref = b2_ref = None

    cp = o_ref.shape[-1]
    i = pl.program_id(1)
    last = pl.num_programs(1) - 1
    L = 8  # interior column offset (8-column zero pad keeps all stores aligned)

    w1 = w1_ref[...]
    s1 = s1_ref[...]
    b1 = b1_ref[...]

    def conv1x1(x2d):
        u = jnp.dot(x2d, w1, preferred_element_type=jnp.float32)
        return _mish(u * s1 + b1).astype(jnp.bfloat16)

    # Zero the left/right padding columns (aligned full-sublane stores).
    zpad = jnp.zeros((th + 2, L, cp), jnp.bfloat16)
    upad[:, 0:L, :] = zpad
    upad[:, L + wo:2 * L + wo, :] = zpad

    # 1x1 CBA on the main rows, written into the padded-scratch interior
    # (zero halo is applied AFTER the 1x1+Mish, since mish(shift) != 0).
    um = conv1x1(xm_ref[...].reshape(th * wo, cp)).reshape(th, wo, cp)
    upad[1:1 + th, L:L + wo, :] = um

    # Top halo row: zero at the image top, else 1x1 of the neighbouring row.
    @pl.when(i > 0)
    def _():
        upad[0:1, L:L + wo, :] = conv1x1(
            xt_ref[...].reshape(wo, cp)).reshape(1, wo, cp)

    @pl.when(i == 0)
    def _():
        upad[0:1, L:L + wo, :] = jnp.zeros((1, wo, cp), jnp.bfloat16)

    # Bottom halo row.
    @pl.when(i < last)
    def _():
        upad[th + 1:th + 2, L:L + wo, :] = conv1x1(
            xb_ref[...].reshape(wo, cp)).reshape(1, wo, cp)

    @pl.when(i >= last)
    def _():
        upad[th + 1:th + 2, L:L + wo, :] = jnp.zeros((1, wo, cp), jnp.bfloat16)

    # Regroup the 3x3 taps: fold kw into the K axis so the conv is 3 MXU
    # matmuls with K = 3*Cp (shifted reads, aligned lane-blocked writes).
    for kw in range(3):
        ucat[:, :, kw * cp:(kw + 1) * cp] = upad[:, L - 1 + kw:L - 1 + kw + wo, :]

    acc = jnp.zeros((th * wo, cp), jnp.float32)
    for kh in range(3):
        xs = ucat[kh:kh + th, :, :].reshape(th * wo, 3 * cp)
        acc = acc + jnp.dot(xs, w3_ref[kh], preferred_element_type=jnp.float32)

    y = _mish(acc * s3_ref[...] + b3_ref[...])
    if second:
        y = _mish(y * s2_ref[...] + b2_ref[...])
    o_ref[...] = y.reshape(1, th, wo, cp).astype(o_ref.dtype)


def _bypass_out_kernel(h1_ref, x_ref, wby_ref, sby_ref, bby_ref,
                       wa_ref, wb_ref, s_ref, b_ref, o_ref):
    """h2 = mish((x@Wbyp)*s_cat2 + b_cat2) on-tile (never stored to HBM);
    out = mish((h1@Wa + h2@Wb) * s_out + b_out), emitted at the real C."""
    h2 = _mish(jnp.dot(x_ref[...], wby_ref[...],
                       preferred_element_type=jnp.float32)
               * sby_ref[...] + bby_ref[...])
    acc = jnp.dot(h1_ref[...], wa_ref[...], preferred_element_type=jnp.float32)
    acc = acc + jnp.dot(h2.astype(jnp.bfloat16), wb_ref[...],
                        preferred_element_type=jnp.float32)
    o_ref[...] = _mish(acc * s_ref[...] + b_ref[...]).astype(o_ref.dtype)


# ----------------------------------------------------------------------------
# Pallas wrappers
# ----------------------------------------------------------------------------
def matmul_bn_mish(a, wa, scale, shift, *, b=None, wb=None,
                   out_dtype=jnp.bfloat16, max_tm=2048):
    """y = mish((a@wa [+ b@wb]) * scale + shift); bf16 MXU, f32 accumulation.

    No XLA pad of the row axis: a ragged last block is left to Pallas.
    TODO(synk): on v7x halve max_tm so the parallel axis keeps >= 2 steps.
    """
    M, Ka = a.shape
    Cout = wa.shape[1]
    dual = b is not None
    tm = M if M <= max_tm else max_tm
    grid = (pl.cdiv(M, tm),)

    in_specs = [pl.BlockSpec((tm, Ka), lambda i: (i, 0))]
    operands = [a.astype(jnp.bfloat16)]
    if dual:
        Kb = b.shape[1]
        in_specs.append(pl.BlockSpec((tm, Kb), lambda i: (i, 0)))
        operands.append(b.astype(jnp.bfloat16))
    in_specs.append(pl.BlockSpec((Ka, Cout), lambda i: (0, 0)))
    operands.append(wa)
    if dual:
        in_specs.append(pl.BlockSpec((Kb, Cout), lambda i: (0, 0)))
        operands.append(wb)
    vec = pl.BlockSpec((1, Cout), lambda i: (0, 0))
    in_specs += [vec, vec]
    operands += [scale, shift]

    return pl.pallas_call(
        functools.partial(_mm_kernel, dual=dual),
        out_shape=jax.ShapeDtypeStruct((M, Cout), out_dtype),
        grid_spec=pltpu.PrefetchScalarGridSpec(
            num_scalar_prefetch=0, grid=grid,
            in_specs=in_specs,
            out_specs=pl.BlockSpec((tm, Cout), lambda i: (i, 0))),
        compiler_params=pltpu.CompilerParams(dimension_semantics=("parallel",)),
    )(*operands)


def _pick_th(h, max_th=16):
    """Largest row tile <= max_th that divides H (keeps the halo logic exact)."""
    for th in range(min(h, max_th), 0, -1):
        if h % th == 0:
            return th
    return h


def fused_1x1_3x3_stage(x_nhwc, stage, *, out_dtype=jnp.bfloat16, max_th=16):
    """One fused main-branch stage: 1x1 ConvBnAct -> 3x3 ConvBnAct (stride 1).

    Row-tiled with 1-row halos (two extra 1-row BlockSpecs, clamped index
    maps); the intermediate 1x1 activation never leaves VMEM.
    """
    N, H, W, Cp = x_nhwc.shape
    th = _pick_th(H, max_th)
    n_rt = H // th
    second = "s2" in stage

    x_top = pl.BlockSpec(
        (1, 1, W, Cp), lambda n, i: (n, jnp.maximum(i * th - 1, 0), 0, 0))
    x_main = pl.BlockSpec((1, th, W, Cp), lambda n, i: (n, i, 0, 0))
    x_bot = pl.BlockSpec(
        (1, 1, W, Cp), lambda n, i: (n, jnp.minimum(i * th + th, H - 1), 0, 0))
    wsp = pl.BlockSpec((Cp, Cp), lambda n, i: (0, 0))
    w3sp = pl.BlockSpec((3, 3 * Cp, Cp), lambda n, i: (0, 0, 0))
    vec = pl.BlockSpec((1, Cp), lambda n, i: (0, 0))

    in_specs = [x_top, x_main, x_bot, wsp, vec, vec, w3sp, vec, vec]
    operands = [x_nhwc, x_nhwc, x_nhwc,
                stage["w1"], stage["s1"], stage["b1"],
                stage["w3"], stage["s3"], stage["b3"]]
    if second:
        in_specs += [vec, vec]
        operands += [stage["s2"], stage["b2"]]

    return pl.pallas_call(
        functools.partial(_fused_stage_kernel, th=th, wo=W, second=second),
        out_shape=jax.ShapeDtypeStruct((N, H, W, Cp), out_dtype),
        grid_spec=pltpu.PrefetchScalarGridSpec(
            num_scalar_prefetch=0, grid=(N, n_rt),
            in_specs=in_specs,
            out_specs=pl.BlockSpec((1, th, W, Cp), lambda n, i: (n, i, 0, 0)),
            scratch_shapes=[
                pltpu.VMEM((th + 2, W + 16, Cp), jnp.bfloat16),   # padded 1x1 out
                pltpu.VMEM((th + 2, W, 3 * Cp), jnp.bfloat16),    # kw-concat for K=3*Cp
            ]),
        compiler_params=pltpu.CompilerParams(
            dimension_semantics=("parallel", "parallel")),
    )(*operands)


def bypass_out_conv(h1, x, pbyp, pout, *, c_out, max_tm=2048):
    """Bypass 1x1 (+ cat-BN second half + Mish) fused into the out_conv 1x1."""
    M, Cp = h1.shape
    tm = M if M <= max_tm else max_tm
    grid = (pl.cdiv(M, tm),)

    act = pl.BlockSpec((tm, Cp), lambda i: (i, 0))
    wsp = pl.BlockSpec((Cp, Cp), lambda i: (0, 0))
    vec = pl.BlockSpec((1, Cp), lambda i: (0, 0))
    wout = pl.BlockSpec((Cp, c_out), lambda i: (0, 0))
    vout = pl.BlockSpec((1, c_out), lambda i: (0, 0))

    return pl.pallas_call(
        _bypass_out_kernel,
        out_shape=jax.ShapeDtypeStruct((M, c_out), jnp.float32),
        grid_spec=pltpu.PrefetchScalarGridSpec(
            num_scalar_prefetch=0, grid=grid,
            in_specs=[act, act, wsp, vec, vec, wout, wout, vout, vout],
            out_specs=pl.BlockSpec((tm, c_out), lambda i: (i, 0))),
        compiler_params=pltpu.CompilerParams(dimension_semantics=("parallel",)),
    )(h1, x, pbyp["w"], pbyp["s"], pbyp["b"],
      pout["wa"], pout["wb"], pout["s"], pout["b"])


# ----------------------------------------------------------------------------
# im2col (only for the one-off stride-2 in_conv; stays inside the jit)
# ----------------------------------------------------------------------------
def _im2col(x_nhwc, ksize, stride):
    N, H, W, C = x_nhwc.shape
    pad = ksize // 2
    xp = jnp.pad(x_nhwc, ((0, 0), (pad, pad), (pad, pad), (0, 0)))
    Ho = (H + 2 * pad - ksize) // stride + 1
    Wo = (W + 2 * pad - ksize) // stride + 1
    cols = []
    for dh in range(ksize):
        for dw in range(ksize):
            cols.append(xp[:, dh:dh + stride * Ho:stride,
                           dw:dw + stride * Wo:stride, :])
    patches = jnp.stack(cols, axis=3)                    # (N, Ho, Wo, k*k, C)
    return patches.reshape(N * Ho * Wo, ksize * ksize * C), (N, Ho, Wo)


# ----------------------------------------------------------------------------
# Deterministic synthetic parameters (PyTorch-like), then one-time layout prep
# ----------------------------------------------------------------------------
def _make_cba_params(key, cin, cout, ksize, eps=1e-5):
    k = jax.random.split(key, 6)
    fan_in = cin * ksize * ksize
    w = jax.random.normal(k[0], (cout, cin, ksize, ksize), jnp.float32) / jnp.sqrt(fan_in)
    b = 0.1 * jax.random.normal(k[1], (cout,), jnp.float32)
    gamma = 1.0 + 0.1 * jax.random.normal(k[2], (cout,), jnp.float32)
    beta = 0.1 * jax.random.normal(k[3], (cout,), jnp.float32)
    mean = 0.1 * jax.random.normal(k[4], (cout,), jnp.float32)
    var = 0.5 + jax.random.uniform(k[5], (cout,), jnp.float32)
    scale = gamma / jnp.sqrt(var + eps)
    shift = beta + (b - mean) * scale
    return w, scale, shift


def _make_bn_params(key, c, eps):
    k = jax.random.split(key, 4)
    gamma = 1.0 + 0.1 * jax.random.normal(k[0], (c,), jnp.float32)
    beta = 0.1 * jax.random.normal(k[1], (c,), jnp.float32)
    mean = 0.1 * jax.random.normal(k[2], (c,), jnp.float32)
    var = 0.5 + jax.random.uniform(k[3], (c,), jnp.float32)
    scale = gamma / jnp.sqrt(var + eps)
    shift = beta - mean * scale
    return scale, shift


def init_params(key, in_channels, out_channels, depth):
    cin1, cin2 = in_channels
    C = out_channels
    keys = jax.random.split(key, 2 * depth + 6)
    p = {}
    p["in_conv"] = _make_cba_params(keys[0], cin1, C, 3)            # 3x3 s2
    p["rcsp_in"] = _make_cba_params(keys[1], C + cin2, C, 1)        # 1x1
    main = []
    for d in range(depth):
        p1 = _make_cba_params(keys[2 + 2 * d], C, C, 1)
        p3 = _make_cba_params(keys[3 + 2 * d], C, C, 3)
        main.append((p1, p3))
    p["rcsp_main"] = main
    idx = 2 + 2 * depth
    p["bypass_w"] = jax.random.normal(keys[idx], (C, C, 1, 1), jnp.float32) / jnp.sqrt(C)
    cat_scale, cat_shift = _make_bn_params(keys[idx + 1], 2 * C, eps=1e-3)
    p["cat_scale1"], p["cat_shift1"] = cat_scale[:C], cat_shift[:C]   # main half
    p["cat_scale2"], p["cat_shift2"] = cat_scale[C:], cat_shift[C:]   # bypass half
    p["out_conv"] = _make_cba_params(keys[idx + 2], 2 * C, C, 1)
    return p


def prepare_params(params, in_channels, out_channels):
    """One-time layout prep (hoisted out of the forward path): pad channels to
    a lane-dense multiple of 128, transpose weights to (K, Cp), cast to bf16,
    and lay scale/shift out as (1, Cp) f32 rows (zero-padded so padded output
    channels stay exactly zero)."""
    cin1, cin2 = in_channels
    C = out_channels
    Cp = _round_up(C, LANE)

    def vec(v):
        return jnp.pad(v.astype(jnp.float32), (0, Cp - v.shape[0])).reshape(1, Cp)

    def w1x1(w_oihw):
        co, ci = w_oihw.shape[:2]
        w2 = jnp.transpose(w_oihw.reshape(co, ci), (1, 0))          # (ci, co)
        return jnp.pad(w2, ((0, Cp - ci), (0, Cp - co))).astype(jnp.bfloat16)

    def w3x3_grouped(w_oihw):
        # (co,ci,3,3) -> (kh, kw*Cp + ci, co): kw folded into the K axis.
        co, ci = w_oihw.shape[:2]
        wt = jnp.transpose(w_oihw, (2, 3, 1, 0))                    # (kh,kw,ci,co)
        wt = jnp.pad(wt, ((0, 0), (0, 0), (0, Cp - ci), (0, Cp - co)))
        return wt.reshape(3, 3 * Cp, Cp).astype(jnp.bfloat16)

    def w3x3_im2col(w_oihw):
        co, ci = w_oihw.shape[:2]
        w2 = jnp.transpose(w_oihw, (2, 3, 1, 0)).reshape(9 * ci, co)
        return jnp.pad(w2, ((0, 0), (0, Cp - co))).astype(jnp.bfloat16)

    depth = len(params["rcsp_main"])
    # The cat-BN first half is fused into the last main-branch 3x3 conv.
    assert depth >= 1, "depth == 0 not supported by the fused cat-BN epilogue"

    prep = {}
    w, s, b = params["in_conv"]
    prep["in_conv"] = {"w": w3x3_im2col(w), "s": vec(s), "b": vec(b)}

    w, s, b = params["rcsp_in"]                       # (C, C+cin2, 1, 1)
    w2 = w.reshape(C, C + cin2)
    prep["rcsp_in"] = {
        "wa": jnp.pad(jnp.transpose(w2[:, :C], (1, 0)),
                      ((0, Cp - C), (0, Cp - C))).astype(jnp.bfloat16),
        # x2 is fed unpadded (K = cin2): pad only the output-channel axis.
        "wb": jnp.pad(jnp.transpose(w2[:, C:], (1, 0)),
                      ((0, 0), (0, Cp - C))).astype(jnp.bfloat16),
        "s": vec(s), "b": vec(b),
    }

    main = []
    for d, ((w1, s1, b1), (w3, s3, b3)) in enumerate(params["rcsp_main"]):
        stage = {"w1": w1x1(w1), "s1": vec(s1), "b1": vec(b1),
                 "w3": w3x3_grouped(w3), "s3": vec(s3), "b3": vec(b3)}
        if d == depth - 1:
            stage["s2"] = vec(params["cat_scale1"])   # cat-BN (main half)
            stage["b2"] = vec(params["cat_shift1"])
        main.append(stage)
    prep["rcsp_main"] = main

    prep["bypass"] = {"w": w1x1(params["bypass_w"]),
                      "s": vec(params["cat_scale2"]),  # cat-BN (bypass half)
                      "b": vec(params["cat_shift2"])}

    w, s, b = params["out_conv"]                      # (C, 2C, 1, 1)
    # out_conv weights / scale / shift kept at the real C so the last kernel
    # writes only real channels (no padded f32 writeback, no XLA slice).
    w2 = w.reshape(C, 2 * C)
    prep["out_conv"] = {
        "wa": jnp.pad(jnp.transpose(w2[:, :C], (1, 0)),
                      ((0, Cp - C), (0, 0))).astype(jnp.bfloat16),
        "wb": jnp.pad(jnp.transpose(w2[:, C:], (1, 0)),
                      ((0, Cp - C), (0, 0))).astype(jnp.bfloat16),
        "s": s.astype(jnp.float32).reshape(1, C),
        "b": b.astype(jnp.float32).reshape(1, C),
    }
    return prep


# ----------------------------------------------------------------------------
# CSPDownBlock forward
# ----------------------------------------------------------------------------
def csp_down_block_forward(x1_nchw, x2_nchw, prep, out_channels):
    C = out_channels
    Cp = prep["in_conv"]["s"].shape[-1]

    # NCHW -> NHWC at the module boundary only.
    x1 = jnp.transpose(x1_nchw, (0, 2, 3, 1))
    x2 = jnp.transpose(x2_nchw, (0, 2, 3, 1))

    # ---- in_conv: 3x3 stride-2 ConvBnAct (one-off, tiny Cin) ---------------
    cols, (N, Ho, Wo) = _im2col(x1, 3, 2)
    p = prep["in_conv"]
    y1 = matmul_bn_mish(cols, p["w"], p["s"], p["b"])          # (M, Cp) bf16
    M = N * Ho * Wo

    # ---- cat([y1, x2]) -> rcsp.in_conv (1x1): split matmul, no concat, and
    # ---- x2 stays at its native channel count (no lane padding) ------------
    cin2 = x2.shape[-1]
    x2f = x2.reshape(M, cin2)
    p = prep["rcsp_in"]
    x = matmul_bn_mish(y1, p["wa"], p["s"], p["b"], b=x2f, wb=p["wb"])

    # ---- main branch: depth x fused (1x1 CBA -> 3x3 CBA) kernels -----------
    # The last stage's epilogue also applies the cat-BN main half (+ Mish).
    m = x.reshape(N, Ho, Wo, Cp)
    for stage in prep["rcsp_main"]:
        m = fused_1x1_3x3_stage(m, stage)
    h1 = m.reshape(M, Cp)

    # ---- bypass 1x1 (+ cat-BN second half) fused into out_conv -------------
    out = bypass_out_conv(h1, x, prep["bypass"], prep["out_conv"], c_out=C)

    out = out.reshape(N, Ho, Wo, C)
    return jnp.transpose(out, (0, 3, 1, 2))                   # NHWC -> NCHW


# ----------------------------------------------------------------------------
if __name__ == "__main__":
    key = jax.random.PRNGKey(0)
    kp, kx1, kx2 = jax.random.split(key, 3)

    in_channels = (4, 6)
    out_channels = 8
    depth = 2

    params = init_params(kp, in_channels, out_channels, depth)
    prep = prepare_params(params, in_channels, out_channels)   # hoisted, once

    # x1 at full resolution, x2 at half resolution (NCHW), as the PyTorch
    # module expects for the stride-2 downsample + concat.
    x1 = jax.random.normal(kx1, (2, in_channels[0], 16, 16), jnp.float32)
    x2 = jax.random.normal(kx2, (2, in_channels[1], 8, 8), jnp.float32)

    fwd = jax.jit(csp_down_block_forward, static_argnums=(3,))
    out = fwd(x1, x2, prep, out_channels)
    out = jax.block_until_ready(out)

    assert out.shape == (2, out_channels, 8, 8), out.shape
    assert bool(jnp.all(jnp.isfinite(out)))
    print("KERNEL_OK")
</pallas_src>

<mosaic_0001>
module attributes {stable_mosaic.version = 11 : i64} {
  func.func @_mm_kernel(%arg0: i32, %arg1: memref<128x36xbf16, #tpu.memory_space<vmem>>, %arg2: memref<36x128xbf16, #tpu.memory_space<vmem>>, %arg3: memref<1x128xf32, #tpu.memory_space<vmem>>, %arg4: memref<1x128xf32, #tpu.memory_space<vmem>>, %arg5: memref<128x128xbf16, #tpu.memory_space<vmem>>) attributes {dimension_semantics = [#tpu.dimension_semantics<parallel>], iteration_bounds = array<i64: 1>, scalar_prefetch = 0 : i64, scratch_operands = 0 : i64, tpu.core_type = #tpu.core_type<tc>, window_params = [{transform_indices = @transform_0, window_bounds = array<i64: 128, 36>}, {pipeline_mode = #tpu.pipeline_mode<synchronous>, transform_indices = @transform_1, window_bounds = array<i64: 36, 128>}, {pipeline_mode = #tpu.pipeline_mode<synchronous>, transform_indices = @transform_2, window_bounds = array<i64: 1, 128>}, {pipeline_mode = #tpu.pipeline_mode<synchronous>, transform_indices = @transform_3, window_bounds = array<i64: 1, 128>}, {transform_indices = @transform_4, window_bounds = array<i64: 128, 128>}]} {
    %c0 = arith.constant 0 : index
    %c0_0 = arith.constant 0 : index
    %0 = vector.load %arg1[%c0, %c0_0] : memref<128x36xbf16, #tpu.memory_space<vmem>>, vector<128x36xbf16>
    %c0_1 = arith.constant 0 : index
    %c0_2 = arith.constant 0 : index
    %1 = vector.load %arg2[%c0_1, %c0_2] : memref<36x128xbf16, #tpu.memory_space<vmem>>, vector<36x128xbf16>
    %cst = arith.constant dense<0.000000e+00> : vector<128x128xf32>
    %2 = tpu.matmul %0, %1, %cst {dimension_numbers = #tpu.dot_dimension_numbers<[1], [0], [0], [1], [0, 0, 1, 1], [], []>} : vector<128x36xbf16>, vector<36x128xbf16>, vector<128x128xf32> -> vector<128x128xf32>
    %c0_3 = arith.constant 0 : index
    %c0_4 = arith.constant 0 : index
    %3 = vector.load %arg3[%c0_3, %c0_4] : memref<1x128xf32, #tpu.memory_space<vmem>>, vector<1x128xf32>
    %4 = vector.broadcast %3 : vector<1x128xf32> to vector<128x128xf32>
    %5 = arith.mulf %2, %4 : vector<128x128xf32>
    %c0_5 = arith.constant 0 : index
    %c0_6 = arith.constant 0 : index
    %6 = vector.load %arg4[%c0_5, %c0_6] : memref<1x128xf32, #tpu.memory_space<vmem>>, vector<1x128xf32>
    %7 = vector.broadcast %6 : vector<1x128xf32> to vector<128x128xf32>
    %8 = arith.addf %5, %7 : vector<128x128xf32>
    %cst_7 = arith.constant 2.000000e+01 : f32
    %9 = vector.broadcast %cst_7 : f32 to vector<128x128xf32>
    %10 = arith.minimumf %8, %9 : vector<128x128xf32>
    %11 = math.exp %10 : vector<128x128xf32>
    %cst_8 = arith.constant 2.000000e+00 : f32
    %12 = vector.broadcast %cst_8 : f32 to vector<128x128xf32>
    %13 = arith.addf %11, %12 : vector<128x128xf32>
    %14 = arith.mulf %11, %13 : vector<128x128xf32>
    %cst_9 = arith.constant 2.000000e+00 : f32
    %15 = vector.broadcast %cst_9 : f32 to vector<128x128xf32>
    %16 = arith.addf %14, %15 : vector<128x128xf32>
    %17 = tpu.reciprocal %16 {approx = true} : vector<128x128xf32> -> vector<128x128xf32>
    %18 = arith.mulf %14, %17 : vector<128x128xf32>
    %cst_10 = arith.constant 2.000000e+01 : f32
    %19 = vector.broadcast %cst_10 : f32 to vector<128x128xf32>
    %20 = arith.cmpf ogt, %8, %19 : vector<128x128xf32>
    %cst_11 = arith.constant 1.000000e+00 : f32
    %21 = vector.broadcast %cst_11 : f32 to vector<128x128xf32>
    %22 = arith.select %20, %21, %18 : vector<128x128xi1>, vector<128x128xf32>
    %23 = arith.mulf %8, %22 : vector<128x128xf32>
    %24 = arith.truncf %23 : vector<128x128xf32> to vector<128x128xbf16>
    %c0_12 = arith.constant 0 : index
    %c0_13 = arith.constant 0 : index
    %25 = vector.load %arg5[%c0_12, %c0_13] : memref<128x128xbf16, #tpu.memory_space<vmem>>, vector<128x128xbf16>
    tpu.vector_store %arg5[%c0_12, %c0_13], %24 {strides = array<i32>} : memref<128x128xbf16, #tpu.memory_space<vmem>>, vector<128x128xbf16>,
    return
  }
  func.func @transform_0(%arg0: i32) -> (i32, i32) {
    %c0_i32 = arith.constant 0 : i32
    %c0_i32_0 = arith.constant 0 : i32
    return %arg0, %c0_i32 : i32, i32
  }
  func.func @transform_1(%arg0: i32) -> (i32, i32) {
    %c0_i32 = arith.constant 0 : i32
    %c0_i32_0 = arith.constant 0 : i32
    %c0_i32_1 = arith.constant 0 : i32
    return %c0_i32, %c0_i32_0 : i32, i32
  }
  func.func @transform_2(%arg0: i32) -> (i32, i32) {
    %c0_i32 = arith.constant 0 : i32
    %c0_i32_0 = arith.constant 0 : i32
    %c0_i32_1 = arith.constant 0 : i32
    return %c0_i32, %c0_i32_0 : i32, i32
  }
  func.func @transform_3(%arg0: i32) -> (i32, i32) {
    %c0_i32 = arith.constant 0 : i32
    %c0_i32_0 = arith.constant 0 : i32
    %c0_i32_1 = arith.constant 0 : i32
    return %c0_i32, %c0_i32_0 : i32, i32
  }
  func.func @transform_4(%arg0: i32) -> (i32, i32) {
    %c0_i32 = arith.constant 0 : i32
    %c0_i32_0 = arith.constant 0 : i32
    return %arg0, %c0_i32 : i32, i32
  }
}

module attributes {stable_mosaic.version = 11 : i64} {
  func.func @_mm_kernel(%arg0: i32, %arg1: memref<128x128xbf16, #tpu.memory_space<vmem>>, %arg2: memref<128x6xbf16, #tpu.memory_space<vmem>>, %arg3: memref<128x128xbf16, #tpu.memory_space<vmem>>, %arg4: memref<6x128xbf16, #tpu.memory_space<vmem>>, %arg5: memref<1x128xf32, #tpu.memory_space<vmem>>, %arg6: memref<1x128xf32, #tpu.memory_space<vmem>>, %arg7: memref<128x128xbf16, #tpu.memory_space<vmem>>) attributes {dimension_semantics = [#tpu.dimension_semantics<parallel>], iteration_bounds = array<i64: 1>, scalar_prefetch = 0 : i64, scratch_operands = 0 : i64, tpu.core_type = #tpu.core_type<tc>, window_params = [{transform_indices = @transform_0, window_bounds = array<i64: 128, 128>}, {transform_indices = @transform_1, window_bounds = array<i64: 128, 6>}, {pipeline_mode = #tpu.pipeline_mode<synchronous>, transform_indices = @transform_2, window_bounds = array<i64: 128, 128>}, {pipeline_mode = #tpu.pipeline_mode<synchronous>, transform_indices = @transform_3, window_bounds = array<i64: 6, 128>}, {pipeline_mode = #tpu.pipeline_mode<synchronous>, transform_indices = @transform_4, window_bounds = array<i64: 1, 128>}, {pipeline_mode = #tpu.pipeline_mode<synchronous>, transform_indices = @transform_5, window_bounds = array<i64: 1, 128>}, {transform_indices = @transform_6, window_bounds = array<i64: 128, 128>}]} {
    %c0 = arith.constant 0 : index
    %c0_0 = arith.constant 0 : index
    %0 = vector.load %arg1[%c0, %c0_0] : memref<128x128xbf16, #tpu.memory_space<vmem>>, vector<128x128xbf16>
    %c0_1 = arith.constant 0 : index
    %c0_2 = arith.constant 0 : index
    %1 = vector.load %arg3[%c0_1, %c0_2] : memref<128x128xbf16, #tpu.memory_space<vmem>>, vector<128x128xbf16>
    %cst = arith.constant dense<0.000000e+00> : vector<128x128xf32>
    %2 = tpu.matmul %0, %1, %cst {dimension_numbers = #tpu.dot_dimension_numbers<[1], [0], [0], [1], [0, 0, 1, 1], [], []>} : vector<128x128xbf16>, vector<128x128xbf16>, vector<128x128xf32> -> vector<128x128xf32>
    %c0_3 = arith.constant 0 : index
    %c0_4 = arith.constant 0 : index
    %3 = vector.load %arg2[%c0_3, %c0_4] : memref<128x6xbf16, #tpu.memory_space<vmem>>, vector<128x6xbf16>
    %c0_5 = arith.constant 0 : index
    %c0_6 = arith.constant 0 : index
    %4 = vector.load %arg4[%c0_5, %c0_6] : memref<6x128xbf16, #tpu.memory_space<vmem>>, vector<6x128xbf16>
    %cst_7 = arith.constant dense<0.000000e+00> : vector<128x128xf32>
    %5 = tpu.matmul %3, %4, %cst_7 {dimension_numbers = #tpu.dot_dimension_numbers<[1], [0], [0], [1], [0, 0, 1, 1], [], []>} : vector<128x6xbf16>, vector<6x128xbf16>, vector<128x128xf32> -> vector<128x128xf32>
    %6 = arith.addf %2, %5 : vector<128x128xf32>
    %c0_8 = arith.constant 0 : index
    %c0_9 = arith.constant 0 : index
    %7 = vector.load %arg5[%c0_8, %c0_9] : memref<1x128xf32, #tpu.memory_space<vmem>>, vector<1x128xf32>
    %8 = vector.broadcast %7 : vector<1x128xf32> to vector<128x128xf32>
    %9 = arith.mulf %6, %8 : vector<128x128xf32>
    %c0_10 = arith.constant 0 : index
    %c0_11 = arith.constant 0 : index
    %10 = vector.load %arg6[%c0_10, %c0_11] : memref<1x128xf32, #tpu.memory_space<vmem>>, vector<1x128xf32>
    %11 = vector.broadcast %10 : vector<1x128xf32> to vector<128x128xf32>
    %12 = arith.addf %9, %11 : vector<128x128xf32>
    %cst_12 = arith.constant 2.000000e+01 : f32
    %13 = vector.broadcast %cst_12 : f32 to vector<128x128xf32>
    %14 = arith.minimumf %12, %13 : vector<128x128xf32>
    %15 = math.exp %14 : vector<128x128xf32>
    %cst_13 = arith.constant 2.000000e+00 : f32
    %16 = vector.broadcast %cst_13 : f32 to vector<128x128xf32>
    %17 = arith.addf %15, %16 : vector<128x128xf32>
    %18 = arith.mulf %15, %17 : vector<128x128xf32>
    %cst_14 = arith.constant 2.000000e+00 : f32
    %19 = vector.broadcast %cst_14 : f32 to vector<128x128xf32>
    %20 = arith.addf %18, %19 : vector<128x128xf32>
    %21 = tpu.reciprocal %20 {approx = true} : vector<128x128xf32> -> vector<128x128xf32>
    %22 = arith.mulf %18, %21 : vector<128x128xf32>
    %cst_15 = arith.constant 2.000000e+01 : f32
    %23 = vector.broadcast %cst_15 : f32 to vector<128x128xf32>
    %24 = arith.cmpf ogt, %12, %23 : vector<128x128xf32>
    %cst_16 = arith.constant 1.000000e+00 : f32
    %25 = vector.broadcast %cst_16 : f32 to vector<128x128xf32>
    %26 = arith.select %24, %25, %22 : vector<128x128xi1>, vector<128x128xf32>
    %27 = arith.mulf %12, %26 : vector<128x128xf32>
    %28 = arith.truncf %27 : vector<128x128xf32> to vector<128x128xbf16>
    %c0_17 = arith.constant 0 : index
    %c0_18 = arith.constant 0 : index
    %29 = vector.load %arg7[%c0_17, %c0_18] : memref<128x128xbf16, #tpu.memory_space<vmem>>, vector<128x128xbf16>
    tpu.vector_store %arg7[%c0_17, %c0_18], %28 {strides = array<i32>} : memref<128x128xbf16, #tpu.memory_space<vmem>>, vector<128x128xbf16>,
    return
  }
  func.func @transform_0(%arg0: i32) -> (i32, i32) {
    %c0_i32 = arith.constant 0 : i32
    %c0_i32_0 = arith.constant 0 : i32
    return %arg0, %c0_i32 : i32, i32
  }
  func.func @transform_1(%arg0: i32) -> (i32, i32) {
    %c0_i32 = arith.constant 0 : i32
    %c0_i32_0 = arith.constant 0 : i32
    return %arg0, %c0_i32 : i32, i32
  }
  func.func @transform_2(%arg0: i32) -> (i32, i32) {
    %c0_i32 = arith.constant 0 : i32
    %c0_i32_0 = arith.constant 0 : i32
    %c0_i32_1 = arith.constant 0 : i32
    return %c0_i32, %c0_i32_0 : i32, i32
  }
  func.func @transform_3(%arg0: i32) -> (i32, i32) {
    %c0_i32 = arith.constant 0 : i32
    %c0_i32_0 = arith.constant 0 : i32
    %c0_i32_1 = arith.constant 0 : i32
    return %c0_i32, %c0_i32_0 : i32, i32
  }
  func.func @transform_4(%arg0: i32) -> (i32, i32) {
    %c0_i32 = arith.constant 0 : i32
    %c0_i32_0 = arith.constant 0 : i32
    %c0_i32_1 = arith.constant 0 : i32
    return %c0_i32, %c0_i32_0 : i32, i32
  }
  func.func @transform_5(%arg0: i32) -> (i32, i32) {
    %c0_i32 = arith.constant 0 : i32
    %c0_i32_0 = arith.constant 0 : i32
    %c0_i32_1 = arith.constant 0 : i32
    return %c0_i32, %c0_i32_0 : i32, i32
  }
  func.func @transform_6(%arg0: i32) -> (i32, i32) {
    %c0_i32 = arith.constant 0 : i32
    %c0_i32_0 = arith.constant 0 : i32
    return %arg0, %c0_i32 : i32, i32
  }
}

module attributes {stable_mosaic.version = 11 : i64} {
  func.func @_fused_stage_kernel(%arg0: i32, %arg1: i32, %arg2: memref<1x1x8x128xbf16, #tpu.memory_space<vmem>>, %arg3: memref<1x8x8x128xbf16, #tpu.memory_space<vmem>>, %arg4: memref<1x1x8x128xbf16, #tpu.memory_space<vmem>>, %arg5: memref<128x128xbf16, #tpu.memory_space<vmem>>, %arg6: memref<1x128xf32, #tpu.memory_space<vmem>>, %arg7: memref<1x128xf32, #tpu.memory_space<vmem>>, %arg8: memref<3x384x128xbf16, #tpu.memory_space<vmem>>, %arg9: memref<1x128xf32, #tpu.memory_space<vmem>>, %arg10: memref<1x128xf32, #tpu.memory_space<vmem>>, %arg11: memref<1x8x8x128xbf16, #tpu.memory_space<vmem>>, %arg12: memref<10x24x128xbf16, #tpu.memory_space<vmem>>, %arg13: memref<10x8x384xbf16, #tpu.memory_space<vmem>>) attributes {dimension_semantics = [#tpu.dimension_semantics<parallel>, #tpu.dimension_semantics<parallel>], iteration_bounds = array<i64: 2, 1>, scalar_prefetch = 0 : i64, scratch_operands = 2 : i64, tpu.core_type = #tpu.core_type<tc>, window_params = [{transform_indices = @transform_0, window_bounds = array<i64: 1, 1, 8, 128>}, {transform_indices = @transform_1, window_bounds = array<i64: 1, 8, 8, 128>}, {transform_indices = @transform_2, window_bounds = array<i64: 1, 1, 8, 128>}, {pipeline_mode = #tpu.pipeline_mode<synchronous>, transform_indices = @transform_3, window_bounds = array<i64: 128, 128>}, {pipeline_mode = #tpu.pipeline_mode<synchronous>, transform_indices = @transform_4, window_bounds = array<i64: 1, 128>}, {pipeline_mode = #tpu.pipeline_mode<synchronous>, transform_indices = @transform_5, window_bounds = array<i64: 1, 128>}, {pipeline_mode = #tpu.pipeline_mode<synchronous>, transform_indices = @transform_6, window_bounds = array<i64: 3, 384, 128>}, {pipeline_mode = #tpu.pipeline_mode<synchronous>, transform_indices = @transform_7, window_bounds = array<i64: 1, 128>}, {pipeline_mode = #tpu.pipeline_mode<synchronous>, transform_indices = @transform_8, window_bounds = array<i64: 1, 128>}, {transform_indices = @transform_9, window_bounds = array<i64: 1, 8, 8, 128>}]} {
    %c0 = arith.constant 0 : index
    %c0_0 = arith.constant 0 : index
    %0 = vector.load %arg5[%c0, %c0_0] : memref<128x128xbf16, #tpu.memory_space<vmem>>, vector<128x128xbf16>
    %c0_1 = arith.constant 0 : index
    %c0_2 = arith.constant 0 : index
    %1 = vector.load %arg6[%c0_1, %c0_2] : memref<1x128xf32, #tpu.memory_space<vmem>>, vector<1x128xf32>
    %c0_3 = arith.constant 0 : index
    %c0_4 = arith.constant 0 : index
    %2 = vector.load %arg7[%c0_3, %c0_4] : memref<1x128xf32, #tpu.memory_space<vmem>>, vector<1x128xf32>
    %cst = arith.constant 0.000000e+00 : bf16
    %3 = vector.broadcast %cst : bf16 to vector<10x8x128xbf16>
    %c0_5 = arith.constant 0 : index
    %c0_6 = arith.constant 0 : index
    %c0_7 = arith.constant 0 : index
    %4 = vector.load %arg12[%c0_5, %c0_6, %c0_7] : memref<10x24x128xbf16, #tpu.memory_space<vmem>>, vector<10x8x128xbf16>
    tpu.vector_store %arg12[%c0_5, %c0_6, %c0_7], %3 {strides = array<i32>} : memref<10x24x128xbf16, #tpu.memory_space<vmem>>, vector<10x8x128xbf16>,
    %c0_8 = arith.constant 0 : index
    %c16 = arith.constant 16 : index
    %c0_9 = arith.constant 0 : index
    %5 = vector.load %arg12[%c0_8, %c16, %c0_9] : memref<10x24x128xbf16, #tpu.memory_space<vmem>>, vector<10x8x128xbf16>
    tpu.vector_store %arg12[%c0_8, %c16, %c0_9], %3 {strides = array<i32>} : memref<10x24x128xbf16, #tpu.memory_space<vmem>>, vector<10x8x128xbf16>,
    %c0_10 = arith.constant 0 : index
    %c0_11 = arith.constant 0 : index
    %c0_12 = arith.constant 0 : index
    %c0_13 = arith.constant 0 : index
    %6 = vector.load %arg3[%c0_10, %c0_11, %c0_12, %c0_13] : memref<1x8x8x128xbf16, #tpu.memory_space<vmem>>, vector<1x8x8x128xbf16>
    %7 = vector.shape_cast %6 : vector<1x8x8x128xbf16> to vector<64x128xbf16>
    %cst_14 = arith.constant dense<0.000000e+00> : vector<64x128xf32>
    %8 = tpu.matmul %7, %0, %cst_14 {dimension_numbers = #tpu.dot_dimension_numbers<[1], [0], [0], [1], [0, 0, 1, 1], [], []>} : vector<64x128xbf16>, vector<128x128xbf16>, vector<64x128xf32> -> vector<64x128xf32>
    %9 = vector.broadcast %1 : vector<1x128xf32> to vector<64x128xf32>
    %10 = arith.mulf %8, %9 : vector<64x128xf32>
    %11 = vector.broadcast %2 : vector<1x128xf32> to vector<64x128xf32>
    %12 = arith.addf %10, %11 : vector<64x128xf32>
    %cst_15 = arith.constant 2.000000e+01 : f32
    %13 = vector.broadcast %cst_15 : f32 to vector<64x128xf32>
    %14 = arith.minimumf %12, %13 : vector<64x128xf32>
    %15 = math.exp %14 : vector<64x128xf32>
    %cst_16 = arith.constant 2.000000e+00 : f32
    %16 = vector.broadcast %cst_16 : f32 to vector<64x128xf32>
    %17 = arith.addf %15, %16 : vector<64x128xf32>
    %18 = arith.mulf %15, %17 : vector<64x128xf32>
    %cst_17 = arith.constant 2.000000e+00 : f32
    %19 = vector.broadcast %cst_17 : f32 to vector<64x128xf32>
    %20 = arith.addf %18, %19 : vector<64x128xf32>
    %21 = tpu.reciprocal %20 {approx = true} : vector<64x128xf32> -> vector<64x128xf32>
    %22 = arith.mulf %18, %21 : vector<64x128xf32>
    %cst_18 = arith.constant 2.000000e+01 : f32
    %23 = vector.broadcast %cst_18 : f32 to vector<64x128xf32>
    %24 = arith.cmpf ogt, %12, %23 : vector<64x128xf32>
    %cst_19 = arith.constant 1.000000e+00 : f32
    %25 = vector.broadcast %cst_19 : f32 to vector<64x128xf32>
    %26 = arith.select %24, %25, %22 : vector<64x128xi1>, vector<64x128xf32>
    %27 = arith.mulf %12, %26 : vector<64x128xf32>
    %28 = arith.truncf %27 : vector<64x128xf32> to vector<64x128xbf16>
    %29 = vector.shape_cast %28 : vector<64x128xbf16> to vector<8x8x128xbf16>
    %c1 = arith.constant 1 : index
    %c8 = arith.constant 8 : index
    %c0_20 = arith.constant 0 : index
    %30 = vector.load %arg12[%c1, %c8, %c0_20] : memref<10x24x128xbf16, #tpu.memory_space<vmem>>, vector<8x8x128xbf16>
    tpu.vector_store %arg12[%c1, %c8, %c0_20], %29 {strides = array<i32>} : memref<10x24x128xbf16, #tpu.memory_space<vmem>>, vector<8x8x128xbf16>,
    %c0_i32 = arith.constant 0 : i32
    %31 = arith.cmpi sgt, %arg1, %c0_i32 : i32
    %32 = arith.extui %31 : i1 to i32
    %c0_i32_21 = arith.constant 0 : i32
    %33 = arith.cmpi ne, %32, %c0_i32_21 : i32
    scf.if %33 {
      %c0_76 = arith.constant 0 : index
      %c0_77 = arith.constant 0 : index
      %c0_78 = arith.constant 0 : index
      %c0_79 = arith.constant 0 : index
      %92 = vector.load %arg2[%c0_76, %c0_77, %c0_78, %c0_79] : memref<1x1x8x128xbf16, #tpu.memory_space<vmem>>, vector<1x1x8x128xbf16>
      %93 = vector.shape_cast %92 : vector<1x1x8x128xbf16> to vector<8x128xbf16>
      %cst_80 = arith.constant dense<0.000000e+00> : vector<8x128xf32>
      %94 = tpu.matmul %93, %0, %cst_80 {dimension_numbers = #tpu.dot_dimension_numbers<[1], [0], [0], [1], [0, 0, 1, 1], [], []>} : vector<8x128xbf16>, vector<128x128xbf16>, vector<8x128xf32> -> vector<8x128xf32>
      %95 = vector.broadcast %1 : vector<1x128xf32> to vector<8x128xf32>
      %96 = arith.mulf %94, %95 : vector<8x128xf32>
      %97 = vector.broadcast %2 : vector<1x128xf32> to vector<8x128xf32>
      %98 = arith.addf %96, %97 : vector<8x128xf32>
      %cst_81 = arith.constant 2.000000e+01 : f32
      %99 = vector.broadcast %cst_81 : f32 to vector<8x128xf32>
      %100 = arith.minimumf %98, %99 : vector<8x128xf32>
      %101 = math.exp %100 : vector<8x128xf32>
      %cst_82 = arith.constant 2.000000e+00 : f32
      %102 = vector.broadcast %cst_82 : f32 to vector<8x128xf32>
      %103 = arith.addf %101, %102 : vector<8x128xf32>
      %104 = arith.mulf %101, %103 : vector<8x128xf32>
      %cst_83 = arith.constant 2.000000e+00 : f32
      %105 = vector.broadcast %cst_83 : f32 to vector<8x128xf32>
      %106 = arith.addf %104, %105 : vector<8x128xf32>
      %107 = tpu.reciprocal %106 {approx = true} : vector<8x128xf32> -> vector<8x128xf32>
      %108 = arith.mulf %104, %107 : vector<8x128xf32>
      %cst_84 = arith.constant 2.000000e+01 : f32
      %109 = vector.broadcast %cst_84 : f32 to vector<8x128xf32>
      %110 = arith.cmpf ogt, %98, %109 : vector<8x128xf32>
      %cst_85 = arith.constant 1.000000e+00 : f32
      %111 = vector.broadcast %cst_85 : f32 to vector<8x128xf32>
      %112 = arith.select %110, %111, %108 : vector<8x128xi1>, vector<8x128xf32>
      %113 = arith.mulf %98, %112 : vector<8x128xf32>
      %114 = arith.truncf %113 : vector<8x128xf32> to vector<8x128xbf16>
      %115 = vector.shape_cast %114 : vector<8x128xbf16> to vector<1x8x128xbf16>
      %c0_86 = arith.constant 0 : index
      %c8_87 = arith.constant 8 : index
      %c0_88 = arith.constant 0 : index
      %116 = vector.load %arg12[%c0_86, %c8_87, %c0_88] : memref<10x24x128xbf16, #tpu.memory_space<vmem>>, vector<1x8x128xbf16>
      tpu.vector_store %arg12[%c0_86, %c8_87, %c0_88], %115 {strides = array<i32>} : memref<10x24x128xbf16, #tpu.memory_space<vmem>>, vector<1x8x128xbf16>,
    } else {
    }
    %c0_i32_22 = arith.constant 0 : i32
    %34 = arith.cmpi eq, %arg1, %c0_i32_22 : i32
    %35 = arith.extui %34 : i1 to i32
    %c0_i32_23 = arith.constant 0 : i32
    %36 = arith.cmpi ne, %35, %c0_i32_23 : i32
    scf.if %36 {
      %cst_76 = arith.constant 0.000000e+00 : bf16
      %92 = vector.broadcast %cst_76 : bf16 to vector<1x8x128xbf16>
      %c0_77 = arith.constant 0 : index
      %c8_78 = arith.constant 8 : index
      %c0_79 = arith.constant 0 : index
      %93 = vector.load %arg12[%c0_77, %c8_78, %c0_79] : memref<10x24x128xbf16, #tpu.memory_space<vmem>>, vector<1x8x128xbf16>
      tpu.vector_store %arg12[%c0_77, %c8_78, %c0_79], %92 {strides = array<i32>} : memref<10x24x128xbf16, #tpu.memory_space<vmem>>, vector<1x8x128xbf16>,
    } else {
    }
    %c0_i32_24 = arith.constant 0 : i32
    %37 = arith.cmpi slt, %arg1, %c0_i32_24 : i32
    %38 = arith.extui %37 : i1 to i32
    %c0_i32_25 = arith.constant 0 : i32
    %39 = arith.cmpi ne, %38, %c0_i32_25 : i32
    scf.if %39 {
      %c0_76 = arith.constant 0 : index
      %c0_77 = arith.constant 0 : index
      %c0_78 = arith.constant 0 : index
      %c0_79 = arith.constant 0 : index
      %92 = vector.load %arg4[%c0_76, %c0_77, %c0_78, %c0_79] : memref<1x1x8x128xbf16, #tpu.memory_space<vmem>>, vector<1x1x8x128xbf16>
      %93 = vector.shape_cast %92 : vector<1x1x8x128xbf16> to vector<8x128xbf16>
      %cst_80 = arith.constant dense<0.000000e+00> : vector<8x128xf32>
      %94 = tpu.matmul %93, %0, %cst_80 {dimension_numbers = #tpu.dot_dimension_numbers<[1], [0], [0], [1], [0, 0, 1, 1], [], []>} : vector<8x128xbf16>, vector<128x128xbf16>, vector<8x128xf32> -> vector<8x128xf32>
      %95 = vector.broadcast %1 : vector<1x128xf32> to vector<8x128xf32>
      %96 = arith.mulf %94, %95 : vector<8x128xf32>
      %97 = vector.broadcast %2 : vector<1x128xf32> to vector<8x128xf32>
      %98 = arith.addf %96, %97 : vector<8x128xf32>
      %cst_81 = arith.constant 2.000000e+01 : f32
      %99 = vector.broadcast %cst_81 : f32 to vector<8x128xf32>
      %100 = arith.minimumf %98, %99 : vector<8x128xf32>
      %101 = math.exp %100 : vector<8x128xf32>
      %cst_82 = arith.constant 2.000000e+00 : f32
      %102 = vector.broadcast %cst_82 : f32 to vector<8x128xf32>
      %103 = arith.addf %101, %102 : vector<8x128xf32>
      %104 = arith.mulf %101, %103 : vector<8x128xf32>
      %cst_83 = arith.constant 2.000000e+00 : f32
      %105 = vector.broadcast %cst_83 : f32 to vector<8x128xf32>
      %106 = arith.addf %104, %105 : vector<8x128xf32>
      %107 = tpu.reciprocal %106 {approx = true} : vector<8x128xf32> -> vector<8x128xf32>
      %108 = arith.mulf %104, %107 : vector<8x128xf32>
      %cst_84 = arith.constant 2.000000e+01 : f32
      %109 = vector.broadcast %cst_84 : f32 to vector<8x128xf32>
      %110 = arith.cmpf ogt, %98, %109 : vector<8x128xf32>
      %cst_85 = arith.constant 1.000000e+00 : f32
      %111 = vector.broadcast %cst_85 : f32 to vector<8x128xf32>
      %112 = arith.select %110, %111, %108 : vector<8x128xi1>, vector<8x128xf32>
      %113 = arith.mulf %98, %112 : vector<8x128xf32>
      %114 = arith.truncf %113 : vector<8x128xf32> to vector<8x128xbf16>
      %115 = vector.shape_cast %114 : vector<8x128xbf16> to vector<1x8x128xbf16>
      %c9_86 = arith.constant 9 : index
      %c8_87 = arith.constant 8 : index
      %c0_88 = arith.constant 0 : index
      %116 = vector.load %arg12[%c9_86, %c8_87, %c0_88] : memref<10x24x128xbf16, #tpu.memory_space<vmem>>, vector<1x8x128xbf16>
      tpu.vector_store %arg12[%c9_86, %c8_87, %c0_88], %115 {strides = array<i32>} : memref<10x24x128xbf16, #tpu.memory_space<vmem>>, vector<1x8x128xbf16>,
    } else {
    }
    %c0_i32_26 = arith.constant 0 : i32
    %40 = arith.cmpi sge, %arg1, %c0_i32_26 : i32
    %41 = arith.extui %40 : i1 to i32
    %c0_i32_27 = arith.constant 0 : i32
    %42 = arith.cmpi ne, %41, %c0_i32_27 : i32
    scf.if %42 {
      %cst_76 = arith.constant 0.000000e+00 : bf16
      %92 = vector.broadcast %cst_76 : bf16 to vector<1x8x128xbf16>
      %c9_77 = arith.constant 9 : index
      %c8_78 = arith.constant 8 : index
      %c0_79 = arith.constant 0 : index
      %93 = vector.load %arg12[%c9_77, %c8_78, %c0_79] : memref<10x24x128xbf16, #tpu.memory_space<vmem>>, vector<1x8x128xbf16>
      tpu.vector_store %arg12[%c9_77, %c8_78, %c0_79], %92 {strides = array<i32>} : memref<10x24x128xbf16, #tpu.memory_space<vmem>>, vector<1x8x128xbf16>,
    } else {
    }
    %c0_28 = arith.constant 0 : index
    %c7 = arith.constant 7 : index
    %c0_29 = arith.constant 0 : index
    %43 = vector.load %arg12[%c0_28, %c7, %c0_29] : memref<10x24x128xbf16, #tpu.memory_space<vmem>>, vector<10x8x128xbf16>
    %c0_30 = arith.constant 0 : index
    %c0_31 = arith.constant 0 : index
    %c0_32 = arith.constant 0 : index
    %44 = vector.load %arg13[%c0_30, %c0_31, %c0_32] : memref<10x8x384xbf16, #tpu.memory_space<vmem>>, vector<10x8x128xbf16>
    tpu.vector_store %arg13[%c0_30, %c0_31, %c0_32], %43 {strides = array<i32>} : memref<10x8x384xbf16, #tpu.memory_space<vmem>>, vector<10x8x128xbf16>,
    %c0_33 = arith.constant 0 : index
    %c8_34 = arith.constant 8 : index
    %c0_35 = arith.constant 0 : index
    %45 = vector.load %arg12[%c0_33, %c8_34, %c0_35] : memref<10x24x128xbf16, #tpu.memory_space<vmem>>, vector<10x8x128xbf16>
    %c0_36 = arith.constant 0 : index
    %c0_37 = arith.constant 0 : index
    %c128 = arith.constant 128 : index
    %46 = vector.load %arg13[%c0_36, %c0_37, %c128] : memref<10x8x384xbf16, #tpu.memory_space<vmem>>, vector<10x8x128xbf16>
    tpu.vector_store %arg13[%c0_36, %c0_37, %c128], %45 {strides = array<i32>} : memref<10x8x384xbf16, #tpu.memory_space<vmem>>, vector<10x8x128xbf16>,
    %c0_38 = arith.constant 0 : index
    %c9 = arith.constant 9 : index
    %c0_39 = arith.constant 0 : index
    %47 = vector.load %arg12[%c0_38, %c9, %c0_39] : memref<10x24x128xbf16, #tpu.memory_space<vmem>>, vector<10x8x128xbf16>
    %c0_40 = arith.constant 0 : index
    %c0_41 = arith.constant 0 : index
    %c256 = arith.constant 256 : index
    %48 = vector.load %arg13[%c0_40, %c0_41, %c256] : memref<10x8x384xbf16, #tpu.memory_space<vmem>>, vector<10x8x128xbf16>
    tpu.vector_store %arg13[%c0_40, %c0_41, %c256], %47 {strides = array<i32>} : memref<10x8x384xbf16, #tpu.memory_space<vmem>>, vector<10x8x128xbf16>,
    %cst_42 = arith.constant 0.000000e+00 : f32
    %49 = vector.broadcast %cst_42 : f32 to vector<64x128xf32>
    %c0_43 = arith.constant 0 : index
    %c0_44 = arith.constant 0 : index
    %c0_45 = arith.constant 0 : index
    %50 = vector.load %arg13[%c0_43, %c0_44, %c0_45] : memref<10x8x384xbf16, #tpu.memory_space<vmem>>, vector<8x8x384xbf16>
    %51 = vector.shape_cast %50 : vector<8x8x384xbf16> to vector<64x384xbf16>
    %c0_46 = arith.constant 0 : index
    %c0_47 = arith.constant 0 : index
    %c0_48 = arith.constant 0 : index
    %52 = vector.load %arg8[%c0_46, %c0_47, %c0_48] : memref<3x384x128xbf16, #tpu.memory_space<vmem>>, vector<1x384x128xbf16>
    %53 = vector.shape_cast %52 : vector<1x384x128xbf16> to vector<384x128xbf16>
    %cst_49 = arith.constant dense<0.000000e+00> : vector<64x128xf32>
    %54 = tpu.matmul %51, %53, %cst_49 {dimension_numbers = #tpu.dot_dimension_numbers<[1], [0], [0], [1], [0, 0, 1, 1], [], []>} : vector<64x384xbf16>, vector<384x128xbf16>, vector<64x128xf32> -> vector<64x128xf32>
    %55 = arith.addf %49, %54 : vector<64x128xf32>
    %c1_50 = arith.constant 1 : index
    %c0_51 = arith.constant 0 : index
    %c0_52 = arith.constant 0 : index
    %56 = vector.load %arg13[%c1_50, %c0_51, %c0_52] : memref<10x8x384xbf16, #tpu.memory_space<vmem>>, vector<8x8x384xbf16>
    %57 = vector.shape_cast %56 : vector<8x8x384xbf16> to vector<64x384xbf16>
    %c1_53 = arith.constant 1 : index
    %c0_54 = arith.constant 0 : index
    %c0_55 = arith.constant 0 : index
    %58 = vector.load %arg8[%c1_53, %c0_54, %c0_55] : memref<3x384x128xbf16, #tpu.memory_space<vmem>>, vector<1x384x128xbf16>
    %59 = vector.shape_cast %58 : vector<1x384x128xbf16> to vector<384x128xbf16>
    %cst_56 = arith.constant dense<0.000000e+00> : vector<64x128xf32>
    %60 = tpu.matmul %57, %59, %cst_56 {dimension_numbers = #tpu.dot_dimension_numbers<[1], [0], [0], [1], [0, 0, 1, 1], [], []>} : vector<64x384xbf16>, vector<384x128xbf16>, vector<64x128xf32> -> vector<64x128xf32>
    %61 = arith.addf %55, %60 : vector<64x128xf32>
    %c2 = arith.constant 2 : index
    %c0_57 = arith.constant 0 : index
    %c0_58 = arith.constant 0 : index
    %62 = vector.load %arg13[%c2, %c0_57, %c0_58] : memref<10x8x384xbf16, #tpu.memory_space<vmem>>, vector<8x8x384xbf16>
    %63 = vector.shape_cast %62 : vector<8x8x384xbf16> to vector<64x384xbf16>
    %c2_59 = arith.constant 2 : index
    %c0_60 = arith.constant 0 : index
    %c0_61 = arith.constant 0 : index
    %64 = vector.load %arg8[%c2_59, %c0_60, %c0_61] : memref<3x384x128xbf16, #tpu.memory_space<vmem>>, vector<1x384x128xbf16>
    %65 = vector.shape_cast %64 : vector<1x384x128xbf16> to vector<384x128xbf16>
    %cst_62 = arith.constant dense<0.000000e+00> : vector<64x128xf32>
    %66 = tpu.matmul %63, %65, %cst_62 {dimension_numbers = #tpu.dot_dimension_numbers<[1], [0], [0], [1], [0, 0, 1, 1], [], []>} : vector<64x384xbf16>, vector<384x128xbf16>, vector<64x128xf32> -> vector<64x128xf32>
    %67 = arith.addf %61, %66 : vector<64x128xf32>
    %c0_63 = arith.constant 0 : index
    %c0_64 = arith.constant 0 : index
    %68 = vector.load %arg9[%c0_63, %c0_64] : memref<1x128xf32, #tpu.memory_space<vmem>>, vector<1x128xf32>
    %69 = vector.broadcast %68 : vector<1x128xf32> to vector<64x128xf32>
    %70 = arith.mulf %67, %69 : vector<64x128xf32>
    %c0_65 = arith.constant 0 : index
    %c0_66 = arith.constant 0 : index
    %71 = vector.load %arg10[%c0_65, %c0_66] : memref<1x128xf32, #tpu.memory_space<vmem>>, vector<1x128xf32>
    %72 = vector.broadcast %71 : vector<1x128xf32> to vector<64x128xf32>
    %73 = arith.addf %70, %72 : vector<64x128xf32>
    %cst_67 = arith.constant 2.000000e+01 : f32
    %74 = vector.broadcast %cst_67 : f32 to vector<64x128xf32>
    %75 = arith.minimumf %73, %74 : vector<64x128xf32>
    %76 = math.exp %75 : vector<64x128xf32>
    %cst_68 = arith.constant 2.000000e+00 : f32
    %77 = vector.broadcast %cst_68 : f32 to vector<64x128xf32>
    %78 = arith.addf %76, %77 : vector<64x128xf32>
    %79 = arith.mulf %76, %78 : vector<64x128xf32>
    %cst_69 = arith.constant 2.000000e+00 : f32
    %80 = vector.broadcast %cst_69 : f32 to vector<64x128xf32>
    %81 = arith.addf %79, %80 : vector<64x128xf32>
    %82 = tpu.reciprocal %81 {approx = true} : vector<64x128xf32> -> vector<64x128xf32>
    %83 = arith.mulf %79, %82 : vector<64x128xf32>
    %cst_70 = arith.constant 2.000000e+01 : f32
    %84 = vector.broadcast %cst_70 : f32 to vector<64x128xf32>
    %85 = arith.cmpf ogt, %73, %84 : vector<64x128xf32>
    %cst_71 = arith.constant 1.000000e+00 : f32
    %86 = vector.broadcast %cst_71 : f32 to vector<64x128xf32>
    %87 = arith.select %85, %86, %83 : vector<64x128xi1>, vector<64x128xf32>
    %88 = arith.mulf %73, %87 : vector<64x128xf32>
    %89 = vector.shape_cast %88 : vector<64x128xf32> to vector<1x8x8x128xf32>
    %90 = arith.truncf %89 : vector<1x8x8x128xf32> to vector<1x8x8x128xbf16>
    %c0_72 = arith.constant 0 : index
    %c0_73 = arith.constant 0 : index
    %c0_74 = arith.constant 0 : index
    %c0_75 = arith.constant 0 : index
    %91 = vector.load %arg11[%c0_72, %c0_73, %c0_74, %c0_75] : memref<1x8x8x128xbf16, #tpu.memory_space<vmem>>, vector<1x8x8x128xbf16>
    tpu.vector_store %arg11[%c0_72, %c0_73, %c0_74, %c0_75], %90 {strides = array<i32>} : memref<1x8x8x128xbf16, #tpu.memory_space<vmem>>, vector<1x8x8x128xbf16>,
    return
  }
  func.func @transform_0(%arg0: i32, %arg1: i32) -> (i32, i32, i32, i32) {
    %c8_i32 = arith.constant 8 : i32
    %0 = arith.muli %arg1, %c8_i32 : i32
    %c1_i32 = arith.constant 1 : i32
    %1 = arith.subi %0, %c1_i32 : i32
    %c0_i32 = arith.constant 0 : i32
    %2 = arith.maxsi %1, %c0_i32 : i32
    %c0_i32_0 = arith.constant 0 : i32
    %c0_i32_1 = arith.constant 0 : i32
    %c0_i32_2 = arith.constant 0 : i32
    return %arg0, %2, %c0_i32_0, %c0_i32_1 : i32, i32, i32, i32
  }
  func.func @transform_1(%arg0: i32, %arg1: i32) -> (i32, i32, i32, i32) {
    %c0_i32 = arith.constant 0 : i32
    %c0_i32_0 = arith.constant 0 : i32
    %c0_i32_1 = arith.constant 0 : i32
    return %arg0, %arg1, %c0_i32, %c0_i32_0 : i32, i32, i32, i32
  }
  func.func @transform_2(%arg0: i32, %arg1: i32) -> (i32, i32, i32, i32) {
    %c8_i32 = arith.constant 8 : i32
    %0 = arith.muli %arg1, %c8_i32 : i32
    %c8_i32_0 = arith.constant 8 : i32
    %1 = arith.addi %0, %c8_i32_0 : i32
    %c7_i32 = arith.constant 7 : i32
    %2 = arith.minsi %1, %c7_i32 : i32
    %c0_i32 = arith.constant 0 : i32
    %c0_i32_1 = arith.constant 0 : i32
    %c0_i32_2 = arith.constant 0 : i32
    return %arg0, %2, %c0_i32, %c0_i32_1 : i32, i32, i32, i32
  }
  func.func @transform_3(%arg0: i32, %arg1: i32) -> (i32, i32) {
    %c0_i32 = arith.constant 0 : i32
    %c0_i32_0 = arith.constant 0 : i32
    %c0_i32_1 = arith.constant 0 : i32
    return %c0_i32, %c0_i32_0 : i32, i32
  }
  func.func @transform_4(%arg0: i32, %arg1: i32) -> (i32, i32) {
    %c0_i32 = arith.constant 0 : i32
    %c0_i32_0 = arith.constant 0 : i32
    %c0_i32_1 = arith.constant 0 : i32
    return %c0_i32, %c0_i32_0 : i32, i32
  }
  func.func @transform_5(%arg0: i32, %arg1: i32) -> (i32, i32) {
    %c0_i32 = arith.constant 0 : i32
    %c0_i32_0 = arith.constant 0 : i32
    %c0_i32_1 = arith.constant 0 : i32
    return %c0_i32, %c0_i32_0 : i32, i32
  }
  func.func @transform_6(%arg0: i32, %arg1: i32) -> (i32, i32, i32) {
    %c0_i32 = arith.constant 0 : i32
    %c0_i32_0 = arith.constant 0 : i32
    %c0_i32_1 = arith.constant 0 : i32
    %c0_i32_2 = arith.constant 0 : i32
    return %c0_i32, %c0_i32_0, %c0_i32_1 : i32, i32, i32
  }
  func.func @transform_7(%arg0: i32, %arg1: i32) -> (i32, i32) {
    %c0_i32 = arith.constant 0 : i32
    %c0_i32_0 = arith.constant 0 : i32
    %c0_i32_1 = arith.constant 0 : i32
    return %c0_i32, %c0_i32_0 : i32, i32
  }
  func.func @transform_8(%arg0: i32, %arg1: i32) -> (i32, i32) {
    %c0_i32 = arith.constant 0 : i32
    %c0_i32_0 = arith.constant 0 : i32
    %c0_i32_1 = arith.constant 0 : i32
    return %c0_i32, %c0_i32_0 : i32, i32
  }
  func.func @transform_9(%arg0: i32, %arg1: i32) -> (i32, i32, i32, i32) {
    %c0_i32 = arith.constant 0 : i32
    %c0_i32_0 = arith.constant 0 : i32
    %c0_i32_1 = arith.constant 0 : i32
    return %arg0, %arg1, %c0_i32, %c0_i32_0 : i32, i32, i32, i32
  }
}

module attributes {stable_mosaic.version = 11 : i64} {
  func.func @_fused_stage_kernel(%arg0: i32, %arg1: i32, %arg2: memref<1x1x8x128xbf16, #tpu.memory_space<vmem>>, %arg3: memref<1x8x8x128xbf16, #tpu.memory_space<vmem>>, %arg4: memref<1x1x8x128xbf16, #tpu.memory_space<vmem>>, %arg5: memref<128x128xbf16, #tpu.memory_space<vmem>>, %arg6: memref<1x128xf32, #tpu.memory_space<vmem>>, %arg7: memref<1x128xf32, #tpu.memory_space<vmem>>, %arg8: memref<3x384x128xbf16, #tpu.memory_space<vmem>>, %arg9: memref<1x128xf32, #tpu.memory_space<vmem>>, %arg10: memref<1x128xf32, #tpu.memory_space<vmem>>, %arg11: memref<1x128xf32, #tpu.memory_space<vmem>>, %arg12: memref<1x128xf32, #tpu.memory_space<vmem>>, %arg13: memref<1x8x8x128xbf16, #tpu.memory_space<vmem>>, %arg14: memref<10x24x128xbf16, #tpu.memory_space<vmem>>, %arg15: memref<10x8x384xbf16, #tpu.memory_space<vmem>>) attributes {dimension_semantics = [#tpu.dimension_semantics<parallel>, #tpu.dimension_semantics<parallel>], iteration_bounds = array<i64: 2, 1>, scalar_prefetch = 0 : i64, scratch_operands = 2 : i64, tpu.core_type = #tpu.core_type<tc>, window_params = [{transform_indices = @transform_0, window_bounds = array<i64: 1, 1, 8, 128>}, {transform_indices = @transform_1, window_bounds = array<i64: 1, 8, 8, 128>}, {transform_indices = @transform_2, window_bounds = array<i64: 1, 1, 8, 128>}, {pipeline_mode = #tpu.pipeline_mode<synchronous>, transform_indices = @transform_3, window_bounds = array<i64: 128, 128>}, {pipeline_mode = #tpu.pipeline_mode<synchronous>, transform_indices = @transform_4, window_bounds = array<i64: 1, 128>}, {pipeline_mode = #tpu.pipeline_mode<synchronous>, transform_indices = @transform_5, window_bounds = array<i64: 1, 128>}, {pipeline_mode = #tpu.pipeline_mode<synchronous>, transform_indices = @transform_6, window_bounds = array<i64: 3, 384, 128>}, {pipeline_mode = #tpu.pipeline_mode<synchronous>, transform_indices = @transform_7, window_bounds = array<i64: 1, 128>}, {pipeline_mode = #tpu.pipeline_mode<synchronous>, transform_indices = @transform_8, window_bounds = array<i64: 1, 128>}, {pipeline_mode = #tpu.pipeline_mode<synchronous>, transform_indices = @transform_9, window_bounds = array<i64: 1, 128>}, {pipeline_mode = #tpu.pipeline_mode<synchronous>, transform_indices = @transform_10, window_bounds = array<i64: 1, 128>}, {transform_indices = @transform_11, window_bounds = array<i64: 1, 8, 8, 128>}]} {
    %c0 = arith.constant 0 : index
    %c0_0 = arith.constant 0 : index
    %0 = vector.load %arg5[%c0, %c0_0] : memref<128x128xbf16, #tpu.memory_space<vmem>>, vector<128x128xbf16>
    %c0_1 = arith.constant 0 : index
    %c0_2 = arith.constant 0 : index
    %1 = vector.load %arg6[%c0_1, %c0_2] : memref<1x128xf32, #tpu.memory_space<vmem>>, vector<1x128xf32>
    %c0_3 = arith.constant 0 : index
    %c0_4 = arith.constant 0 : index
    %2 = vector.load %arg7[%c0_3, %c0_4] : memref<1x128xf32, #tpu.memory_space<vmem>>, vector<1x128xf32>
    %cst = arith.constant 0.000000e+00 : bf16
    %3 = vector.broadcast %cst : bf16 to vector<10x8x128xbf16>
    %c0_5 = arith.constant 0 : index
    %c0_6 = arith.constant 0 : index
    %c0_7 = arith.constant 0 : index
    %4 = vector.load %arg14[%c0_5, %c0_6, %c0_7] : memref<10x24x128xbf16, #tpu.memory_space<vmem>>, vector<10x8x128xbf16>
    tpu.vector_store %arg14[%c0_5, %c0_6, %c0_7], %3 {strides = array<i32>} : memref<10x24x128xbf16, #tpu.memory_space<vmem>>, vector<10x8x128xbf16>,
    %c0_8 = arith.constant 0 : index
    %c16 = arith.constant 16 : index
    %c0_9 = arith.constant 0 : index
    %5 = vector.load %arg14[%c0_8, %c16, %c0_9] : memref<10x24x128xbf16, #tpu.memory_space<vmem>>, vector<10x8x128xbf16>
    tpu.vector_store %arg14[%c0_8, %c16, %c0_9], %3 {strides = array<i32>} : memref<10x24x128xbf16, #tpu.memory_space<vmem>>, vector<10x8x128xbf16>,
    %c0_10 = arith.constant 0 : index
    %c0_11 = arith.constant 0 : index
    %c0_12 = arith.constant 0 : index
    %c0_13 = arith.constant 0 : index
    %6 = vector.load %arg3[%c0_10, %c0_11, %c0_12, %c0_13] : memref<1x8x8x128xbf16, #tpu.memory_space<vmem>>, vector<1x8x8x128xbf16>
    %7 = vector.shape_cast %6 : vector<1x8x8x128xbf16> to vector<64x128xbf16>
    %cst_14 = arith.constant dense<0.000000e+00> : vector<64x128xf32>
    %8 = tpu.matmul %7, %0, %cst_14 {dimension_numbers = #tpu.dot_dimension_numbers<[1], [0], [0], [1], [0, 0, 1, 1], [], []>} : vector<64x128xbf16>, vector<128x128xbf16>, vector<64x128xf32> -> vector<64x128xf32>
    %9 = vector.broadcast %1 : vector<1x128xf32> to vector<64x128xf32>
    %10 = arith.mulf %8, %9 : vector<64x128xf32>
    %11 = vector.broadcast %2 : vector<1x128xf32> to vector<64x128xf32>
    %12 = arith.addf %10, %11 : vector<64x128xf32>
    %cst_15 = arith.constant 2.000000e+01 : f32
    %13 = vector.broadcast %cst_15 : f32 to vector<64x128xf32>
    %14 = arith.minimumf %12, %13 : vector<64x128xf32>
    %15 = math.exp %14 : vector<64x128xf32>
    %cst_16 = arith.constant 2.000000e+00 : f32
    %16 = vector.broadcast %cst_16 : f32 to vector<64x128xf32>
    %17 = arith.addf %15, %16 : vector<64x128xf32>
    %18 = arith.mulf %15, %17 : vector<64x128xf32>
    %cst_17 = arith.constant 2.000000e+00 : f32
    %19 = vector.broadcast %cst_17 : f32 to vector<64x128xf32>
    %20 = arith.addf %18, %19 : vector<64x128xf32>
    %21 = tpu.reciprocal %20 {approx = true} : vector<64x128xf32> -> vector<64x128xf32>
    %22 = arith.mulf %18, %21 : vector<64x128xf32>
    %cst_18 = arith.constant 2.000000e+01 : f32
    %23 = vector.broadcast %cst_18 : f32 to vector<64x128xf32>
    %24 = arith.cmpf ogt, %12, %23 : vector<64x128xf32>
    %cst_19 = arith.constant 1.000000e+00 : f32
    %25 = vector.broadcast %cst_19 : f32 to vector<64x128xf32>
    %26 = arith.select %24, %25, %22 : vector<64x128xi1>, vector<64x128xf32>
    %27 = arith.mulf %12, %26 : vector<64x128xf32>
    %28 = arith.truncf %27 : vector<64x128xf32> to vector<64x128xbf16>
    %29 = vector.shape_cast %28 : vector<64x128xbf16> to vector<8x8x128xbf16>
    %c1 = arith.constant 1 : index
    %c8 = arith.constant 8 : index
    %c0_20 = arith.constant 0 : index
    %30 = vector.load %arg14[%c1, %c8, %c0_20] : memref<10x24x128xbf16, #tpu.memory_space<vmem>>, vector<8x8x128xbf16>
    tpu.vector_store %arg14[%c1, %c8, %c0_20], %29 {strides = array<i32>} : memref<10x24x128xbf16, #tpu.memory_space<vmem>>, vector<8x8x128xbf16>,
    %c0_i32 = arith.constant 0 : i32
    %31 = arith.cmpi sgt, %arg1, %c0_i32 : i32
    %32 = arith.extui %31 : i1 to i32
    %c0_i32_21 = arith.constant 0 : i32
    %33 = arith.cmpi ne, %32, %c0_i32_21 : i32
    scf.if %33 {
      %c0_85 = arith.constant 0 : index
      %c0_86 = arith.constant 0 : index
      %c0_87 = arith.constant 0 : index
      %c0_88 = arith.constant 0 : index
      %113 = vector.load %arg2[%c0_85, %c0_86, %c0_87, %c0_88] : memref<1x1x8x128xbf16, #tpu.memory_space<vmem>>, vector<1x1x8x128xbf16>
      %114 = vector.shape_cast %113 : vector<1x1x8x128xbf16> to vector<8x128xbf16>
      %cst_89 = arith.constant dense<0.000000e+00> : vector<8x128xf32>
      %115 = tpu.matmul %114, %0, %cst_89 {dimension_numbers = #tpu.dot_dimension_numbers<[1], [0], [0], [1], [0, 0, 1, 1], [], []>} : vector<8x128xbf16>, vector<128x128xbf16>, vector<8x128xf32> -> vector<8x128xf32>
      %116 = vector.broadcast %1 : vector<1x128xf32> to vector<8x128xf32>
      %117 = arith.mulf %115, %116 : vector<8x128xf32>
      %118 = vector.broadcast %2 : vector<1x128xf32> to vector<8x128xf32>
      %119 = arith.addf %117, %118 : vector<8x128xf32>
      %cst_90 = arith.constant 2.000000e+01 : f32
      %120 = vector.broadcast %cst_90 : f32 to vector<8x128xf32>
      %121 = arith.minimumf %119, %120 : vector<8x128xf32>
      %122 = math.exp %121 : vector<8x128xf32>
      %cst_91 = arith.constant 2.000000e+00 : f32
      %123 = vector.broadcast %cst_91 : f32 to vector<8x128xf32>
      %124 = arith.addf %122, %123 : vector<8x128xf32>
      %125 = arith.mulf %122, %124 : vector<8x128xf32>
      %cst_92 = arith.constant 2.000000e+00 : f32
      %126 = vector.broadcast %cst_92 : f32 to vector<8x128xf32>
      %127 = arith.addf %125, %126 : vector<8x128xf32>
      %128 = tpu.reciprocal %127 {approx = true} : vector<8x128xf32> -> vector<8x128xf32>
      %129 = arith.mulf %125, %128 : vector<8x128xf32>
      %cst_93 = arith.constant 2.000000e+01 : f32
      %130 = vector.broadcast %cst_93 : f32 to vector<8x128xf32>
      %131 = arith.cmpf ogt, %119, %130 : vector<8x128xf32>
      %cst_94 = arith.constant 1.000000e+00 : f32
      %132 = vector.broadcast %cst_94 : f32 to vector<8x128xf32>
      %133 = arith.select %131, %132, %129 : vector<8x128xi1>, vector<8x128xf32>
      %134 = arith.mulf %119, %133 : vector<8x128xf32>
      %135 = arith.truncf %134 : vector<8x128xf32> to vector<8x128xbf16>
      %136 = vector.shape_cast %135 : vector<8x128xbf16> to vector<1x8x128xbf16>
      %c0_95 = arith.constant 0 : index
      %c8_96 = arith.constant 8 : index
      %c0_97 = arith.constant 0 : index
      %137 = vector.load %arg14[%c0_95, %c8_96, %c0_97] : memref<10x24x128xbf16, #tpu.memory_space<vmem>>, vector<1x8x128xbf16>
      tpu.vector_store %arg14[%c0_95, %c8_96, %c0_97], %136 {strides = array<i32>} : memref<10x24x128xbf16, #tpu.memory_space<vmem>>, vector<1x8x128xbf16>,
    } else {
    }
    %c0_i32_22 = arith.constant 0 : i32
    %34 = arith.cmpi eq, %arg1, %c0_i32_22 : i32
    %35 = arith.extui %34 : i1 to i32
    %c0_i32_23 = arith.constant 0 : i32
    %36 = arith.cmpi ne, %35, %c0_i32_23 : i32
    scf.if %36 {
      %cst_85 = arith.constant 0.000000e+00 : bf16
      %113 = vector.broadcast %cst_85 : bf16 to vector<1x8x128xbf16>
      %c0_86 = arith.constant 0 : index
      %c8_87 = arith.constant 8 : index
      %c0_88 = arith.constant 0 : index
      %114 = vector.load %arg14[%c0_86, %c8_87, %c0_88] : memref<10x24x128xbf16, #tpu.memory_space<vmem>>, vector<1x8x128xbf16>
      tpu.vector_store %arg14[%c0_86, %c8_87, %c0_88], %113 {strides = array<i32>} : memref<10x24x128xbf16, #tpu.memory_space<vmem>>, vector<1x8x128xbf16>,
    } else {
    }
    %c0_i32_24 = arith.constant 0 : i32
    %37 = arith.cmpi slt, %arg1, %c0_i32_24 : i32
    %38 = arith.extui %37 : i1 to i32
    %c0_i32_25 = arith.constant 0 : i32
    %39 = arith.cmpi ne, %38, %c0_i32_25 : i32
    scf.if %39 {
      %c0_85 = arith.constant 0 : index
      %c0_86 = arith.constant 0 : index
      %c0_87 = arith.constant 0 : index
      %c0_88 = arith.constant 0 : index
      %113 = vector.load %arg4[%c0_85, %c0_86, %c0_87, %c0_88] : memref<1x1x8x128xbf16, #tpu.memory_space<vmem>>, vector<1x1x8x128xbf16>
      %114 = vector.shape_cast %113 : vector<1x1x8x128xbf16> to vector<8x128xbf16>
      %cst_89 = arith.constant dense<0.000000e+00> : vector<8x128xf32>
      %115 = tpu.matmul %114, %0, %cst_89 {dimension_numbers = #tpu.dot_dimension_numbers<[1], [0], [0], [1], [0, 0, 1, 1], [], []>} : vector<8x128xbf16>, vector<128x128xbf16>, vector<8x128xf32> -> vector<8x128xf32>
      %116 = vector.broadcast %1 : vector<1x128xf32> to vector<8x128xf32>
      %117 = arith.mulf %115, %116 : vector<8x128xf32>
      %118 = vector.broadcast %2 : vector<1x128xf32> to vector<8x128xf32>
      %119 = arith.addf %117, %118 : vector<8x128xf32>
      %cst_90 = arith.constant 2.000000e+01 : f32
      %120 = vector.broadcast %cst_90 : f32 to vector<8x128xf32>
      %121 = arith.minimumf %119, %120 : vector<8x128xf32>
      %122 = math.exp %121 : vector<8x128xf32>
      %cst_91 = arith.constant 2.000000e+00 : f32
      %123 = vector.broadcast %cst_91 : f32 to vector<8x128xf32>
      %124 = arith.addf %122, %123 : vector<8x128xf32>
      %125 = arith.mulf %122, %124 : vector<8x128xf32>
      %cst_92 = arith.constant 2.000000e+00 : f32
      %126 = vector.broadcast %cst_92 : f32 to vector<8x128xf32>
      %127 = arith.addf %125, %126 : vector<8x128xf32>
      %128 = tpu.reciprocal %127 {approx = true} : vector<8x128xf32> -> vector<8x128xf32>
      %129 = arith.mulf %125, %128 : vector<8x128xf32>
      %cst_93 = arith.constant 2.000000e+01 : f32
      %130 = vector.broadcast %cst_93 : f32 to vector<8x128xf32>
      %131 = arith.cmpf ogt, %119, %130 : vector<8x128xf32>
      %cst_94 = arith.constant 1.000000e+00 : f32
      %132 = vector.broadcast %cst_94 : f32 to vector<8x128xf32>
      %133 = arith.select %131, %132, %129 : vector<8x128xi1>, vector<8x128xf32>
      %134 = arith.mulf %119, %133 : vector<8x128xf32>
      %135 = arith.truncf %134 : vector<8x128xf32> to vector<8x128xbf16>
      %136 = vector.shape_cast %135 : vector<8x128xbf16> to vector<1x8x128xbf16>
      %c9_95 = arith.constant 9 : index
      %c8_96 = arith.constant 8 : index
      %c0_97 = arith.constant 0 : index
      %137 = vector.load %arg14[%c9_95, %c8_96, %c0_97] : memref<10x24x128xbf16, #tpu.memory_space<vmem>>, vector<1x8x128xbf16>
      tpu.vector_store %arg14[%c9_95, %c8_96, %c0_97], %136 {strides = array<i32>} : memref<10x24x128xbf16, #tpu.memory_space<vmem>>, vector<1x8x128xbf16>,
    } else {
    }
    %c0_i32_26 = arith.constant 0 : i32
    %40 = arith.cmpi sge, %arg1, %c0_i32_26 : i32
    %41 = arith.extui %40 : i1 to i32
    %c0_i32_27 = arith.constant 0 : i32
    %42 = arith.cmpi ne, %41, %c0_i32_27 : i32
    scf.if %42 {
      %cst_85 = arith.constant 0.000000e+00 : bf16
      %113 = vector.broadcast %cst_85 : bf16 to vector<1x8x128xbf16>
      %c9_86 = arith.constant 9 : index
      %c8_87 = arith.constant 8 : index
      %c0_88 = arith.constant 0 : index
      %114 = vector.load %arg14[%c9_86, %c8_87, %c0_88] : memref<10x24x128xbf16, #tpu.memory_space<vmem>>, vector<1x8x128xbf16>
      tpu.vector_store %arg14[%c9_86, %c8_87, %c0_88], %113 {strides = array<i32>} : memref<10x24x128xbf16, #tpu.memory_space<vmem>>, vector<1x8x128xbf16>,
    } else {
    }
    %c0_28 = arith.constant 0 : index
    %c7 = arith.constant 7 : index
    %c0_29 = arith.constant 0 : index
    %43 = vector.load %arg14[%c0_28, %c7, %c0_29] : memref<10x24x128xbf16, #tpu.memory_space<vmem>>, vector<10x8x128xbf16>
    %c0_30 = arith.constant 0 : index
    %c0_31 = arith.constant 0 : index
    %c0_32 = arith.constant 0 : index
    %44 = vector.load %arg15[%c0_30, %c0_31, %c0_32] : memref<10x8x384xbf16, #tpu.memory_space<vmem>>, vector<10x8x128xbf16>
    tpu.vector_store %arg15[%c0_30, %c0_31, %c0_32], %43 {strides = array<i32>} : memref<10x8x384xbf16, #tpu.memory_space<vmem>>, vector<10x8x128xbf16>,
    %c0_33 = arith.constant 0 : index
    %c8_34 = arith.constant 8 : index
    %c0_35 = arith.constant 0 : index
    %45 = vector.load %arg14[%c0_33, %c8_34, %c0_35] : memref<10x24x128xbf16, #tpu.memory_space<vmem>>, vector<10x8x128xbf16>
    %c0_36 = arith.constant 0 : index
    %c0_37 = arith.constant 0 : index
    %c128 = arith.constant 128 : index
    %46 = vector.load %arg15[%c0_36, %c0_37, %c128] : memref<10x8x384xbf16, #tpu.memory_space<vmem>>, vector<10x8x128xbf16>
    tpu.vector_store %arg15[%c0_36, %c0_37, %c128], %45 {strides = array<i32>} : memref<10x8x384xbf16, #tpu.memory_space<vmem>>, vector<10x8x128xbf16>,
    %c0_38 = arith.constant 0 : index
    %c9 = arith.constant 9 : index
    %c0_39 = arith.constant 0 : index
    %47 = vector.load %arg14[%c0_38, %c9, %c0_39] : memref<10x24x128xbf16, #tpu.memory_space<vmem>>, vector<10x8x128xbf16>
    %c0_40 = arith.constant 0 : index
    %c0_41 = arith.constant 0 : index
    %c256 = arith.constant 256 : index
    %48 = vector.load %arg15[%c0_40, %c0_41, %c256] : memref<10x8x384xbf16, #tpu.memory_space<vmem>>, vector<10x8x128xbf16>
    tpu.vector_store %arg15[%c0_40, %c0_41, %c256], %47 {strides = array<i32>} : memref<10x8x384xbf16, #tpu.memory_space<vmem>>, vector<10x8x128xbf16>,
    %cst_42 = arith.constant 0.000000e+00 : f32
    %49 = vector.broadcast %cst_42 : f32 to vector<64x128xf32>
    %c0_43 = arith.constant 0 : index
    %c0_44 = arith.constant 0 : index
    %c0_45 = arith.constant 0 : index
    %50 = vector.load %arg15[%c0_43, %c0_44, %c0_45] : memref<10x8x384xbf16, #tpu.memory_space<vmem>>, vector<8x8x384xbf16>
    %51 = vector.shape_cast %50 : vector<8x8x384xbf16> to vector<64x384xbf16>
    %c0_46 = arith.constant 0 : index
    %c0_47 = arith.constant 0 : index
    %c0_48 = arith.constant 0 : index
    %52 = vector.load %arg8[%c0_46, %c0_47, %c0_48] : memref<3x384x128xbf16, #tpu.memory_space<vmem>>, vector<1x384x128xbf16>
    %53 = vector.shape_cast %52 : vector<1x384x128xbf16> to vector<384x128xbf16>
    %cst_49 = arith.constant dense<0.000000e+00> : vector<64x128xf32>
    %54 = tpu.matmul %51, %53, %cst_49 {dimension_numbers = #tpu.dot_dimension_numbers<[1], [0], [0], [1], [0, 0, 1, 1], [], []>} : vector<64x384xbf16>, vector<384x128xbf16>, vector<64x128xf32> -> vector<64x128xf32>
    %55 = arith.addf %49, %54 : vector<64x128xf32>
    %c1_50 = arith.constant 1 : index
    %c0_51 = arith.constant 0 : index
    %c0_52 = arith.constant 0 : index
    %56 = vector.load %arg15[%c1_50, %c0_51, %c0_52] : memref<10x8x384xbf16, #tpu.memory_space<vmem>>, vector<8x8x384xbf16>
    %57 = vector.shape_cast %56 : vector<8x8x384xbf16> to vector<64x384xbf16>
    %c1_53 = arith.constant 1 : index
    %c0_54 = arith.constant 0 : index
    %c0_55 = arith.constant 0 : index
    %58 = vector.load %arg8[%c1_53, %c0_54, %c0_55] : memref<3x384x128xbf16, #tpu.memory_space<vmem>>, vector<1x384x128xbf16>
    %59 = vector.shape_cast %58 : vector<1x384x128xbf16> to vector<384x128xbf16>
    %cst_56 = arith.constant dense<0.000000e+00> : vector<64x128xf32>
    %60 = tpu.matmul %57, %59, %cst_56 {dimension_numbers = #tpu.dot_dimension_numbers<[1], [0], [0], [1], [0, 0, 1, 1], [], []>} : vector<64x384xbf16>, vector<384x128xbf16>, vector<64x128xf32> -> vector<64x128xf32>
    %61 = arith.addf %55, %60 : vector<64x128xf32>
    %c2 = arith.constant 2 : index
    %c0_57 = arith.constant 0 : index
    %c0_58 = arith.constant 0 : index
    %62 = vector.load %arg15[%c2, %c0_57, %c0_58] : memref<10x8x384xbf16, #tpu.memory_space<vmem>>, vector<8x8x384xbf16>
    %63 = vector.shape_cast %62 : vector<8x8x384xbf16> to vector<64x384xbf16>
    %c2_59 = arith.constant 2 : index
    %c0_60 = arith.constant 0 : index
    %c0_61 = arith.constant 0 : index
    %64 = vector.load %arg8[%c2_59, %c0_60, %c0_61] : memref<3x384x128xbf16, #tpu.memory_space<vmem>>, vector<1x384x128xbf16>
    %65 = vector.shape_cast %64 : vector<1x384x128xbf16> to vector<384x128xbf16>
    %cst_62 = arith.constant dense<0.000000e+00> : vector<64x128xf32>
    %66 = tpu.matmul %63, %65, %cst_62 {dimension_numbers = #tpu.dot_dimension_numbers<[1], [0], [0], [1], [0, 0, 1, 1], [], []>} : vector<64x384xbf16>, vector<384x128xbf16>, vector<64x128xf32> -> vector<64x128xf32>
    %67 = arith.addf %61, %66 : vector<64x128xf32>
    %c0_63 = arith.constant 0 : index
    %c0_64 = arith.constant 0 : index
    %68 = vector.load %arg9[%c0_63, %c0_64] : memref<1x128xf32, #tpu.memory_space<vmem>>, vector<1x128xf32>
    %69 = vector.broadcast %68 : vector<1x128xf32> to vector<64x128xf32>
    %70 = arith.mulf %67, %69 : vector<64x128xf32>
    %c0_65 = arith.constant 0 : index
    %c0_66 = arith.constant 0 : index
    %71 = vector.load %arg10[%c0_65, %c0_66] : memref<1x128xf32, #tpu.memory_space<vmem>>, vector<1x128xf32>
    %72 = vector.broadcast %71 : vector<1x128xf32> to vector<64x128xf32>
    %73 = arith.addf %70, %72 : vector<64x128xf32>
    %cst_67 = arith.constant 2.000000e+01 : f32
    %74 = vector.broadcast %cst_67 : f32 to vector<64x128xf32>
    %75 = arith.minimumf %73, %74 : vector<64x128xf32>
    %76 = math.exp %75 : vector<64x128xf32>
    %cst_68 = arith.constant 2.000000e+00 : f32
    %77 = vector.broadcast %cst_68 : f32 to vector<64x128xf32>
    %78 = arith.addf %76, %77 : vector<64x128xf32>
    %79 = arith.mulf %76, %78 : vector<64x128xf32>
    %cst_69 = arith.constant 2.000000e+00 : f32
    %80 = vector.broadcast %cst_69 : f32 to vector<64x128xf32>
    %81 = arith.addf %79, %80 : vector<64x128xf32>
    %82 = tpu.reciprocal %81 {approx = true} : vector<64x128xf32> -> vector<64x128xf32>
    %83 = arith.mulf %79, %82 : vector<64x128xf32>
    %cst_70 = arith.constant 2.000000e+01 : f32
    %84 = vector.broadcast %cst_70 : f32 to vector<64x128xf32>
    %85 = arith.cmpf ogt, %73, %84 : vector<64x128xf32>
    %cst_71 = arith.constant 1.000000e+00 : f32
    %86 = vector.broadcast %cst_71 : f32 to vector<64x128xf32>
    %87 = arith.select %85, %86, %83 : vector<64x128xi1>, vector<64x128xf32>
    %88 = arith.mulf %73, %87 : vector<64x128xf32>
    %c0_72 = arith.constant 0 : index
    %c0_73 = arith.constant 0 : index
    %89 = vector.load %arg11[%c0_72, %c0_73] : memref<1x128xf32, #tpu.memory_space<vmem>>, vector<1x128xf32>
    %90 = vector.broadcast %89 : vector<1x128xf32> to vector<64x128xf32>
    %91 = arith.mulf %88, %90 : vector<64x128xf32>
    %c0_74 = arith.constant 0 : index
    %c0_75 = arith.constant 0 : index
    %92 = vector.load %arg12[%c0_74, %c0_75] : memref<1x128xf32, #tpu.memory_space<vmem>>, vector<1x128xf32>
    %93 = vector.broadcast %92 : vector<1x128xf32> to vector<64x128xf32>
    %94 = arith.addf %91, %93 : vector<64x128xf32>
    %cst_76 = arith.constant 2.000000e+01 : f32
    %95 = vector.broadcast %cst_76 : f32 to vector<64x128xf32>
    %96 = arith.minimumf %94, %95 : vector<64x128xf32>
    %97 = math.exp %96 : vector<64x128xf32>
    %cst_77 = arith.constant 2.000000e+00 : f32
    %98 = vector.broadcast %cst_77 : f32 to vector<64x128xf32>
    %99 = arith.addf %97, %98 : vector<64x128xf32>
    %100 = arith.mulf %97, %99 : vector<64x128xf32>
    %cst_78 = arith.constant 2.000000e+00 : f32
    %101 = vector.broadcast %cst_78 : f32 to vector<64x128xf32>
    %102 = arith.addf %100, %101 : vector<64x128xf32>
    %103 = tpu.reciprocal %102 {approx = true} : vector<64x128xf32> -> vector<64x128xf32>
    %104 = arith.mulf %100, %103 : vector<64x128xf32>
    %cst_79 = arith.constant 2.000000e+01 : f32
    %105 = vector.broadcast %cst_79 : f32 to vector<64x128xf32>
    %106 = arith.cmpf ogt, %94, %105 : vector<64x128xf32>
    %cst_80 = arith.constant 1.000000e+00 : f32
    %107 = vector.broadcast %cst_80 : f32 to vector<64x128xf32>
    %108 = arith.select %106, %107, %104 : vector<64x128xi1>, vector<64x128xf32>
    %109 = arith.mulf %94, %108 : vector<64x128xf32>
    %110 = vector.shape_cast %109 : vector<64x128xf32> to vector<1x8x8x128xf32>
    %111 = arith.truncf %110 : vector<1x8x8x128xf32> to vector<1x8x8x128xbf16>
    %c0_81 = arith.constant 0 : index
    %c0_82 = arith.constant 0 : index
    %c0_83 = arith.constant 0 : index
    %c0_84 = arith.constant 0 : index
    %112 = vector.load %arg13[%c0_81, %c0_82, %c0_83, %c0_84] : memref<1x8x8x128xbf16, #tpu.memory_space<vmem>>, vector<1x8x8x128xbf16>
    tpu.vector_store %arg13[%c0_81, %c0_82, %c0_83, %c0_84], %111 {strides = array<i32>} : memref<1x8x8x128xbf16, #tpu.memory_space<vmem>>, vector<1x8x8x128xbf16>,
    return
  }
  func.func @transform_0(%arg0: i32, %arg1: i32) -> (i32, i32, i32, i32) {
    %c8_i32 = arith.constant 8 : i32
    %0 = arith.muli %arg1, %c8_i32 : i32
    %c1_i32 = arith.constant 1 : i32
    %1 = arith.subi %0, %c1_i32 : i32
    %c0_i32 = arith.constant 0 : i32
    %2 = arith.maxsi %1, %c0_i32 : i32
    %c0_i32_0 = arith.constant 0 : i32
    %c0_i32_1 = arith.constant 0 : i32
    %c0_i32_2 = arith.constant 0 : i32
    return %arg0, %2, %c0_i32_0, %c0_i32_1 : i32, i32, i32, i32
  }
  func.func @transform_1(%arg0: i32, %arg1: i32) -> (i32, i32, i32, i32) {
    %c0_i32 = arith.constant 0 : i32
    %c0_i32_0 = arith.constant 0 : i32
    %c0_i32_1 = arith.constant 0 : i32
    return %arg0, %arg1, %c0_i32, %c0_i32_0 : i32, i32, i32, i32
  }
  func.func @transform_2(%arg0: i32, %arg1: i32) -> (i32, i32, i32, i32) {
    %c8_i32 = arith.constant 8 : i32
    %0 = arith.muli %arg1, %c8_i32 : i32
    %c8_i32_0 = arith.constant 8 : i32
    %1 = arith.addi %0, %c8_i32_0 : i32
    %c7_i32 = arith.constant 7 : i32
    %2 = arith.minsi %1, %c7_i32 : i32
    %c0_i32 = arith.constant 0 : i32
    %c0_i32_1 = arith.constant 0 : i32
    %c0_i32_2 = arith.constant 0 : i32
    return %arg0, %2, %c0_i32, %c0_i32_1 : i32, i32, i32, i32
  }
  func.func @transform_3(%arg0: i32, %arg1: i32) -> (i32, i32) {
    %c0_i32 = arith.constant 0 : i32
    %c0_i32_0 = arith.constant 0 : i32
    %c0_i32_1 = arith.constant 0 : i32
    return %c0_i32, %c0_i32_0 : i32, i32
  }
  func.func @transform_4(%arg0: i32, %arg1: i32) -> (i32, i32) {
    %c0_i32 = arith.constant 0 : i32
    %c0_i32_0 = arith.constant 0 : i32
    %c0_i32_1 = arith.constant 0 : i32
    return %c0_i32, %c0_i32_0 : i32, i32
  }
  func.func @transform_5(%arg0: i32, %arg1: i32) -> (i32, i32) {
    %c0_i32 = arith.constant 0 : i32
    %c0_i32_0 = arith.constant 0 : i32
    %c0_i32_1 = arith.constant 0 : i32
    return %c0_i32, %c0_i32_0 : i32, i32
  }
  func.func @transform_6(%arg0: i32, %arg1: i32) -> (i32, i32, i32) {
    %c0_i32 = arith.constant 0 : i32
    %c0_i32_0 = arith.constant 0 : i32
    %c0_i32_1 = arith.constant 0 : i32
    %c0_i32_2 = arith.constant 0 : i32
    return %c0_i32, %c0_i32_0, %c0_i32_1 : i32, i32, i32
  }
  func.func @transform_7(%arg0: i32, %arg1: i32) -> (i32, i32) {
    %c0_i32 = arith.constant 0 : i32
    %c0_i32_0 = arith.constant 0 : i32
    %c0_i32_1 = arith.constant 0 : i32
    return %c0_i32, %c0_i32_0 : i32, i32
  }
  func.func @transform_8(%arg0: i32, %arg1: i32) -> (i32, i32) {
    %c0_i32 = arith.constant 0 : i32
    %c0_i32_0 = arith.constant 0 : i32
    %c0_i32_1 = arith.constant 0 : i32
    return %c0_i32, %c0_i32_0 : i32, i32
  }
  func.func @transform_9(%arg0: i32, %arg1: i32) -> (i32, i32) {
    %c0_i32 = arith.constant 0 : i32
    %c0_i32_0 = arith.constant 0 : i32
    %c0_i32_1 = arith.constant 0 : i32
    return %c0_i32, %c0_i32_0 : i32, i32
  }
  func.func @transform_10(%arg0: i32, %arg1: i32) -> (i32, i32) {
    %c0_i32 = arith.constant 0 : i32
    %c0_i32_0 = arith.constant 0 : i32
    %c0_i32_1 = arith.constant 0 : i32
    return %c0_i32, %c0_i32_0 : i32, i32
  }
  func.func @transform_11(%arg0: i32, %arg1: i32) -> (i32, i32, i32, i32) {
    %c0_i32 = arith.constant 0 : i32
    %c0_i32_0 = arith.constant 0 : i32
    %c0_i32_1 = arith.constant 0 : i32
    return %arg0, %arg1, %c0_i32, %c0_i32_0 : i32, i32, i32, i32
  }
}

module attributes {stable_mosaic.version = 11 : i64} {
  func.func @_bypass_out_kernel(%arg0: i32, %arg1: memref<128x128xbf16, #tpu.memory_space<vmem>>, %arg2: memref<128x128xbf16, #tpu.memory_space<vmem>>, %arg3: memref<128x128xbf16, #tpu.memory_space<vmem>>, %arg4: memref<1x128xf32, #tpu.memory_space<vmem>>, %arg5: memref<1x128xf32, #tpu.memory_space<vmem>>, %arg6: memref<128x8xbf16, #tpu.memory_space<vmem>>, %arg7: memref<128x8xbf16, #tpu.memory_space<vmem>>, %arg8: memref<1x8xf32, #tpu.memory_space<vmem>>, %arg9: memref<1x8xf32, #tpu.memory_space<vmem>>, %arg10: memref<128x8xf32, #tpu.memory_space<vmem>>) attributes {dimension_semantics = [#tpu.dimension_semantics<parallel>], iteration_bounds = array<i64: 1>, scalar_prefetch = 0 : i64, scratch_operands = 0 : i64, tpu.core_type = #tpu.core_type<tc>, window_params = [{transform_indices = @transform_0, window_bounds = array<i64: 128, 128>}, {transform_indices = @transform_1, window_bounds = array<i64: 128, 128>}, {pipeline_mode = #tpu.pipeline_mode<synchronous>, transform_indices = @transform_2, window_bounds = array<i64: 128, 128>}, {pipeline_mode = #tpu.pipeline_mode<synchronous>, transform_indices = @transform_3, window_bounds = array<i64: 1, 128>}, {pipeline_mode = #tpu.pipeline_mode<synchronous>, transform_indices = @transform_4, window_bounds = array<i64: 1, 128>}, {pipeline_mode = #tpu.pipeline_mode<synchronous>, transform_indices = @transform_5, window_bounds = array<i64: 128, 8>}, {pipeline_mode = #tpu.pipeline_mode<synchronous>, transform_indices = @transform_6, window_bounds = array<i64: 128, 8>}, {pipeline_mode = #tpu.pipeline_mode<synchronous>, transform_indices = @transform_7, window_bounds = array<i64: 1, 8>}, {pipeline_mode = #tpu.pipeline_mode<synchronous>, transform_indices = @transform_8, window_bounds = array<i64: 1, 8>}, {transform_indices = @transform_9, window_bounds = array<i64: 128, 8>}]} {
    %c0 = arith.constant 0 : index
    %c0_0 = arith.constant 0 : index
    %0 = vector.load %arg2[%c0, %c0_0] : memref<128x128xbf16, #tpu.memory_space<vmem>>, vector<128x128xbf16>
    %c0_1 = arith.constant 0 : index
    %c0_2 = arith.constant 0 : index
    %1 = vector.load %arg3[%c0_1, %c0_2] : memref<128x128xbf16, #tpu.memory_space<vmem>>, vector<128x128xbf16>
    %cst = arith.constant dense<0.000000e+00> : vector<128x128xf32>
    %2 = tpu.matmul %0, %1, %cst {dimension_numbers = #tpu.dot_dimension_numbers<[1], [0], [0], [1], [0, 0, 1, 1], [], []>} : vector<128x128xbf16>, vector<128x128xbf16>, vector<128x128xf32> -> vector<128x128xf32>
    %c0_3 = arith.constant 0 : index
    %c0_4 = arith.constant 0 : index
    %3 = vector.load %arg4[%c0_3, %c0_4] : memref<1x128xf32, #tpu.memory_space<vmem>>, vector<1x128xf32>
    %4 = vector.broadcast %3 : vector<1x128xf32> to vector<128x128xf32>
    %5 = arith.mulf %2, %4 : vector<128x128xf32>
    %c0_5 = arith.constant 0 : index
    %c0_6 = arith.constant 0 : index
    %6 = vector.load %arg5[%c0_5, %c0_6] : memref<1x128xf32, #tpu.memory_space<vmem>>, vector<1x128xf32>
    %7 = vector.broadcast %6 : vector<1x128xf32> to vector<128x128xf32>
    %8 = arith.addf %5, %7 : vector<128x128xf32>
    %cst_7 = arith.constant 2.000000e+01 : f32
    %9 = vector.broadcast %cst_7 : f32 to vector<128x128xf32>
    %10 = arith.minimumf %8, %9 : vector<128x128xf32>
    %11 = math.exp %10 : vector<128x128xf32>
    %cst_8 = arith.constant 2.000000e+00 : f32
    %12 = vector.broadcast %cst_8 : f32 to vector<128x128xf32>
    %13 = arith.addf %11, %12 : vector<128x128xf32>
    %14 = arith.mulf %11, %13 : vector<128x128xf32>
    %cst_9 = arith.constant 2.000000e+00 : f32
    %15 = vector.broadcast %cst_9 : f32 to vector<128x128xf32>
    %16 = arith.addf %14, %15 : vector<128x128xf32>
    %17 = tpu.reciprocal %16 {approx = true} : vector<128x128xf32> -> vector<128x128xf32>
    %18 = arith.mulf %14, %17 : vector<128x128xf32>
    %cst_10 = arith.constant 2.000000e+01 : f32
    %19 = vector.broadcast %cst_10 : f32 to vector<128x128xf32>
    %20 = arith.cmpf ogt, %8, %19 : vector<128x128xf32>
    %cst_11 = arith.constant 1.000000e+00 : f32
    %21 = vector.broadcast %cst_11 : f32 to vector<128x128xf32>
    %22 = arith.select %20, %21, %18 : vector<128x128xi1>, vector<128x128xf32>
    %23 = arith.mulf %8, %22 : vector<128x128xf32>
    %c0_12 = arith.constant 0 : index
    %c0_13 = arith.constant 0 : index
    %24 = vector.load %arg1[%c0_12, %c0_13] : memref<128x128xbf16, #tpu.memory_space<vmem>>, vector<128x128xbf16>
    %c0_14 = arith.constant 0 : index
    %c0_15 = arith.constant 0 : index
    %25 = vector.load %arg6[%c0_14, %c0_15] : memref<128x8xbf16, #tpu.memory_space<vmem>>, vector<128x8xbf16>
    %cst_16 = arith.constant dense<0.000000e+00> : vector<128x8xf32>
    %26 = tpu.matmul %24, %25, %cst_16 {dimension_numbers = #tpu.dot_dimension_numbers<[1], [0], [0], [1], [0, 0, 1, 1], [], []>} : vector<128x128xbf16>, vector<128x8xbf16>, vector<128x8xf32> -> vector<128x8xf32>
    %27 = arith.truncf %23 : vector<128x128xf32> to vector<128x128xbf16>
    %c0_17 = arith.constant 0 : index
    %c0_18 = arith.constant 0 : index
    %28 = vector.load %arg7[%c0_17, %c0_18] : memref<128x8xbf16, #tpu.memory_space<vmem>>, vector<128x8xbf16>
    %cst_19 = arith.constant dense<0.000000e+00> : vector<128x8xf32>
    %29 = tpu.matmul %27, %28, %cst_19 {dimension_numbers = #tpu.dot_dimension_numbers<[1], [0], [0], [1], [0, 0, 1, 1], [], []>} : vector<128x128xbf16>, vector<128x8xbf16>, vector<128x8xf32> -> vector<128x8xf32>
    %30 = arith.addf %26, %29 : vector<128x8xf32>
    %c0_20 = arith.constant 0 : index
    %c0_21 = arith.constant 0 : index
    %31 = vector.load %arg8[%c0_20, %c0_21] : memref<1x8xf32, #tpu.memory_space<vmem>>, vector<1x8xf32>
    %32 = vector.broadcast %31 : vector<1x8xf32> to vector<128x8xf32>
    %33 = arith.mulf %30, %32 : vector<128x8xf32>
    %c0_22 = arith.constant 0 : index
    %c0_23 = arith.constant 0 : index
    %34 = vector.load %arg9[%c0_22, %c0_23] : memref<1x8xf32, #tpu.memory_space<vmem>>, vector<1x8xf32>
    %35 = vector.broadcast %34 : vector<1x8xf32> to vector<128x8xf32>
    %36 = arith.addf %33, %35 : vector<128x8xf32>
    %cst_24 = arith.constant 2.000000e+01 : f32
    %37 = vector.broadcast %cst_24 : f32 to vector<128x8xf32>
    %38 = arith.minimumf %36, %37 : vector<128x8xf32>
    %39 = math.exp %38 : vector<128x8xf32>
    %cst_25 = arith.constant 2.000000e+00 : f32
    %40 = vector.broadcast %cst_25 : f32 to vector<128x8xf32>
    %41 = arith.addf %39, %40 : vector<128x8xf32>
    %42 = arith.mulf %39, %41 : vector<128x8xf32>
    %cst_26 = arith.constant 2.000000e+00 : f32
    %43 = vector.broadcast %cst_26 : f32 to vector<128x8xf32>
    %44 = arith.addf %42, %43 : vector<128x8xf32>
    %45 = tpu.reciprocal %44 {approx = true} : vector<128x8xf32> -> vector<128x8xf32>
    %46 = arith.mulf %42, %45 : vector<128x8xf32>
    %cst_27 = arith.constant 2.000000e+01 : f32
    %47 = vector.broadcast %cst_27 : f32 to vector<128x8xf32>
    %48 = arith.cmpf ogt, %36, %47 : vector<128x8xf32>
    %cst_28 = arith.constant 1.000000e+00 : f32
    %49 = vector.broadcast %cst_28 : f32 to vector<128x8xf32>
    %50 = arith.select %48, %49, %46 : vector<128x8xi1>, vector<128x8xf32>
    %51 = arith.mulf %36, %50 : vector<128x8xf32>
    %c0_29 = arith.constant 0 : index
    %c0_30 = arith.constant 0 : index
    %52 = vector.load %arg10[%c0_29, %c0_30] : memref<128x8xf32, #tpu.memory_space<vmem>>, vector<128x8xf32>
    tpu.vector_store %arg10[%c0_29, %c0_30], %51 {strides = array<i32>} : memref<128x8xf32, #tpu.memory_space<vmem>>, vector<128x8xf32>,
    return
  }
  func.func @transform_0(%arg0: i32) -> (i32, i32) {
    %c0_i32 = arith.constant 0 : i32
    %c0_i32_0 = arith.constant 0 : i32
    return %arg0, %c0_i32 : i32, i32
  }
  func.func @transform_1(%arg0: i32) -> (i32, i32) {
    %c0_i32 = arith.constant 0 : i32
    %c0_i32_0 = arith.constant 0 : i32
    return %arg0, %c0_i32 : i32, i32
  }
  func.func @transform_2(%arg0: i32) -> (i32, i32) {
    %c0_i32 = arith.constant 0 : i32
    %c0_i32_0 = arith.constant 0 : i32
    %c0_i32_1 = arith.constant 0 : i32
    return %c0_i32, %c0_i32_0 : i32, i32
  }
  func.func @transform_3(%arg0: i32) -> (i32, i32) {
    %c0_i32 = arith.constant 0 : i32
    %c0_i32_0 = arith.constant 0 : i32
    %c0_i32_1 = arith.constant 0 : i32
    return %c0_i32, %c0_i32_0 : i32, i32
  }
  func.func @transform_4(%arg0: i32) -> (i32, i32) {
    %c0_i32 = arith.constant 0 : i32
    %c0_i32_0 = arith.constant 0 : i32
    %c0_i32_1 = arith.constant 0 : i32
    return %c0_i32, %c0_i32_0 : i32, i32
  }
  func.func @transform_5(%arg0: i32) -> (i32, i32) {
    %c0_i32 = arith.constant 0 : i32
    %c0_i32_0 = arith.constant 0 : i32
    %c0_i32_1 = arith.constant 0 : i32
    return %c0_i32, %c0_i32_0 : i32, i32
  }
  func.func @transform_6(%arg0: i32) -> (i32, i32) {
    %c0_i32 = arith.constant 0 : i32
    %c0_i32_0 = arith.constant 0 : i32
    %c0_i32_1 = arith.constant 0 : i32
    return %c0_i32, %c0_i32_0 : i32, i32
  }
  func.func @transform_7(%arg0: i32) -> (i32, i32) {
    %c0_i32 = arith.constant 0 : i32
    %c0_i32_0 = arith.constant 0 : i32
    %c0_i32_1 = arith.constant 0 : i32
    return %c0_i32, %c0_i32_0 : i32, i32
  }
  func.func @transform_8(%arg0: i32) -> (i32, i32) {
    %c0_i32 = arith.constant 0 : i32
    %c0_i32_0 = arith.constant 0 : i32
    %c0_i32_1 = arith.constant 0 : i32
    return %c0_i32, %c0_i32_0 : i32, i32
  }
  func.func @transform_9(%arg0: i32) -> (i32, i32) {
    %c0_i32 = arith.constant 0 : i32
    %c0_i32_0 = arith.constant 0 : i32
    return %arg0, %c0_i32 : i32, i32
  }
}

</mosaic_0001>

<llo_original>
// kernel: csp_down_block_forward.5
$region0: #{csp_down_block_forward.5}
  #allocation0 [shape = 'u32[]', space=smem, size = 0x4, offset = 0x4, fixed_abs, tag = 'smem constant byte address 0x4 - core index']
  #allocation1 [shape = 'u32[144,128]{1,0:T(1,128)}', space=vmem, size = 0x12000, scoped, tag = 'internal scratch']
  %s0 = inlined_call_operand.vmem [shape: bf16[128,36], index: 0, kind: input, shape index: {}]
  %s1 = inlined_call_operand.vmem [shape: bf16[36,128], index: 1, kind: input, shape index: {}]
  %s2 = inlined_call_operand.vmem [shape: f32[1,128], index: 2, kind: input, shape index: {}]
  %s3 = inlined_call_operand.vmem [shape: f32[1,128], index: 3, kind: input, shape index: {}]
  %s4 = inlined_call_operand.vmem [shape: bf16[128,128], index: 4, kind: output, shape index: {}]
  %s5 = sld [smem:[#allocation0]]
  $region26: #{csp_down_block_forward.5} parent=0
    _
  %s7 = ssub.s32 1, %s5
  %s8 = scalar_select 0, %s7, %s5
  // Predicated region
  $region2: #{csp_down_block_forward.5} parent=0 // pred_check
    _
  $region3: #{csp_down_block_forward.5} parent=0 // pred_check_branch
    %10 = sbr.rel (0) target = $region5
  $region4: #{csp_down_block_forward.5} parent=0 // pred_region
    _
  $region5: #{csp_down_block_forward.5} parent=0 // pred_fallthru
    _
  // Predicated region
  $region6: #{csp_down_block_forward.5} parent=0 // pred_check
    _
  $region7: #{csp_down_block_forward.5} parent=0 // pred_check_branch
    %12 = sbr.rel (0) target = $region9
  $region8: #{csp_down_block_forward.5} parent=0 // pred_region
    _
  $region9: #{csp_down_block_forward.5} parent=0 // pred_fallthru
    _
  // Predicated region
  $region10: #{csp_down_block_forward.5} parent=0 // pred_check
    _
  $region11: #{csp_down_block_forward.5} parent=0 // pred_check_branch
    %14 = sbr.rel (0) target = $region13
  $region12: #{csp_down_block_forward.5} parent=0 // pred_region
    _
  $region13: #{csp_down_block_forward.5} parent=0 // pred_fallthru
    _
  // Predicated region
  $region14: #{csp_down_block_forward.5} parent=0 // pred_check
    _
  $region15: #{csp_down_block_forward.5} parent=0 // pred_check_branch
    %16 = sbr.rel (0) target = $region17
  $region16: #{csp_down_block_forward.5} parent=0 // pred_region
    _
  $region17: #{csp_down_block_forward.5} parent=0 // pred_fallthru
    _
  %v18 = vld [vmem:[%s0] sm:$0xf]
  %v19 = vld [vmem:[%s0 + $0x4] sm:$0xf]
  %v20 = vld [vmem:[%s0 + $0x8] sm:$0xf]
  %v21 = vld [vmem:[%s0 + $0xc] sm:$0xf]
  %v22 = vld [vmem:[%s0 + $0x10] sm:$0xf]
  %v23 = vld [vmem:[%s0 + $0x14] sm:$0xf]
  %v24 = vld [vmem:[%s0 + $0x18] sm:$0xf]
  %v25 = vld [vmem:[%s0 + $0x1c] sm:$0xf]
  %v26 = vld [vmem:[%s0 + $0x20] sm:$0xf]
  %v27 = vld [vmem:[%s0 + $0x24] sm:$0xf]
  %v28 = vld [vmem:[%s0 + $0x28] sm:$0xf]
  %v29 = vld [vmem:[%s0 + $0x2c] sm:$0xf]
  %v30 = vld [vmem:[%s0 + $0x30] sm:$0xf]
  %v31 = vld [vmem:[%s0 + $0x34] sm:$0xf]
  %v32 = vld [vmem:[%s0 + $0x38] sm:$0xf]
  %v33 = vld [vmem:[%s0 + $0x3c] sm:$0xf]
  %v34 = vld [vmem:[%s1] sm:$0xf]
  %v35 = vld [vmem:[%s1 + $0x4] sm:$0xf]
  %v36 = vld [vmem:[%s1 + $0x8] sm:$0xf]
  %v37 = vld [vmem:[%s1 + $0xc] sm:$0xf]
  %v38 = vld [vmem:[%s1 + $0x10] sm:$0x3]
  %v55 = vunpack.c.l.b16 %v18
  %v56 = vunpack.c.l.b16 %v19
  %v57 = vunpack.c.l.b16 %v20
  %v58 = vunpack.c.l.b16 %v21
  %v59 = vunpack.c.l.b16 %v22
  %v60 = vunpack.c.l.b16 %v23
  %v61 = vunpack.c.l.b16 %v24
  %v62 = vunpack.c.l.b16 %v25
  %v63 = vunpack.c.l.b16 %v26
  %v64 = vunpack.c.l.b16 %v27
  %v65 = vunpack.c.l.b16 %v28
  %v66 = vunpack.c.l.b16 %v29
  %v67 = vunpack.c.l.b16 %v30
  %v68 = vunpack.c.l.b16 %v31
  %v69 = vunpack.c.l.b16 %v32
  %v70 = vunpack.c.l.b16 %v33
  %v71 = vpack.c.b16 %v56, %v55
  %v72 = vpack.c.b16 %v58, %v57
  %v73 = vpack.c.b16 %v60, %v59
  %v74 = vpack.c.b16 %v62, %v61
  %v75 = vpack.c.b16 %v64, %v63
  %v76 = vpack.c.b16 %v66, %v65
  %v77 = vpack.c.b16 %v68, %v67
  %v78 = vpack.c.b16 %v70, %v69
  %v84 = vunpack.c.l.b16 %v34
  %v85 = vunpack.c.l.b16 %v35
  %v86 = vunpack.c.l.b16 %v36
  %v87 = vunpack.c.l.b16 %v37
  %v88 = vunpack.c.l.b16 %v38
  %v89 = vpack.c.b16 %v85, %v84
  %v90 = vpack.c.b16 %v87, %v86
  %v91 = vpack.c.b16 %v88, %v88
  %vm94 = vcmask 293888
  %v96 = vsel %vm94, %v71, 0
  %v99 = vsel %vm94, %v72, 0
  %v102 = vsel %vm94, %v73, 0
  %v105 = vsel %vm94, %v74, 0
  %v108 = vsel %vm94, %v75, 0
  %v111 = vsel %vm94, %v76, 0
  %v114 = vsel %vm94, %v77, 0
  %v117 = vsel %vm94, %v78, 0
  %vm119 = vcmask 1041408
  %v121 = vsel %vm119, %v91, 0
  %123 = vmatprep.subr.bf16.mxu0 0
  %124 = vmatpush1.bf16.msra.mxu0 %v89
  %125 = vmatprep.subr.bf16.mxu0 0
  %126 = vmatpush1.bf16.msra.mxu0 %v90
  %127 = vmatprep.subr.bf16.mxu0 0
  %128 = vmatpush1.bf16.msra.mxu0 %v121
  %129 = vmatprep.subr.bf16.mxu0 0
  %130 = vmatpush1.bf16.msra.mxu0 0
  %131 = vmatprep.subr.bf16.mxu0 0
  %132 = vmatpush1.bf16.msra.mxu0 0
  %133 = vmatprep.subr.bf16.mxu0 0
  %134 = vmatpush1.bf16.msra.mxu0 0
  %135 = vmatprep.subr.bf16.mxu0 0
  %136 = vmatpush1.bf16.msra.mxu0 0
  %137 = vmatprep.subr.bf16.mxu0 0
  %138 = vmatpush1.bf16.msra.mxu0 0
  %139 = vmatprep.subr.bf16.mxu0 0
  %140 = vmatpush1.bf16.msra.mxu0 0
  %141 = vmatprep.subr.bf16.mxu0 0
  %142 = vmatpush1.bf16.msra.mxu0 0
  %143 = vmatprep.subr.bf16.mxu0 0
  %144 = vmatpush1.bf16.msra.mxu0 0
  %145 = vmatprep.subr.bf16.mxu0 0
  %146 = vmatpush1.bf16.msra.mxu0 0
  %147 = vmatprep.subr.bf16.mxu0 0
  %148 = vmatpush1.bf16.msra.mxu0 0
  %149 = vmatprep.subr.bf16.mxu0 0
  %150 = vmatpush1.bf16.msra.mxu0 0
  %151 = vmatprep.subr.bf16.mxu0 0
  %152 = vmatpush1.bf16.msra.mxu0 0
  %153 = vmatprep.subr.bf16.mxu0 0
  %154 = vmatpush1.bf16.msra.mxu0 0
  %155 = vmatprep.mubr.bf16.mxu0 0
  %156 = vmatmul.mubr.bf16.gmra.mrb[0].mxu0 %v96
  %v157 = vpop.f32.mrb[0].mxu0
  %v158 = vadd.f32 0.0, %v157
  %v159 = vpop.f32.mrb[0].mxu0
  %v160 = vpop.f32.mrb[0].mxu0
  %v161 = vadd.f32 0.0, %v160
  %v162 = vpop.f32.mrb[0].mxu0
  %163 = vmatprep.mubr.bf16.mxu0 0
  %164 = vmatmul.mubr.bf16.gmra.mrb[0].mxu0 %v99
  %v165 = vpop.f32.mrb[0].mxu0
  %v166 = vadd.f32 0.0, %v165
  %v167 = vpop.f32.mrb[0].mxu0
  %v168 = vpop.f32.mrb[0].mxu0
  %v169 = vadd.f32 0.0, %v168
  %v170 = vpop.f32.mrb[0].mxu0
  %171 = vmatprep.mubr.bf16.mxu0 0
  %172 = vmatmul.mubr.bf16.gmra.mrb[0].mxu0 %v102
  %v173 = vpop.f32.mrb[0].mxu0
  %v174 = vadd.f32 0.0, %v173
  %v175 = vpop.f32.mrb[0].mxu0
  %v176 = vpop.f32.mrb[0].mxu0
  %v177 = vadd.f32 0.0, %v176
  %v178 = vpop.f32.mrb[0].mxu0
  %179 = vmatprep.mubr.bf16.mxu0 0
  %180 = vmatmul.mubr.bf16.gmra.mrb[0].mxu0 %v105
  %v181 = vpop.f32.mrb[0].mxu0
  %v182 = vadd.f32 0.0, %v181
  %v183 = vpop.f32.mrb[0].mxu0
  %v184 = vpop.f32.mrb[0].mxu0
  %v185 = vadd.f32 0.0, %v184
  %v186 = vpop.f32.mrb[0].mxu0
  %187 = vmatprep.mubr.bf16.mxu0 0
  %188 = vmatmul.mubr.bf16.gmra.mrb[0].mxu0 %v108
  %v189 = vpop.f32.mrb[0].mxu0
  %v190 = vadd.f32 0.0, %v189
  %v191 = vpop.f32.mrb[0].mxu0
  %v192 = vpop.f32.mrb[0].mxu0
  %v193 = vadd.f32 0.0, %v192
  %v194 = vpop.f32.mrb[0].mxu0
  %195 = vmatprep.mubr.bf16.mxu0 0
  %196 = vmatmul.mubr.bf16.gmra.mrb[0].mxu0 %v111
  %v197 = vpop.f32.mrb[0].mxu0
  %v198 = vadd.f32 0.0, %v197
  %v199 = vpop.f32.mrb[0].mxu0
  %v200 = vpop.f32.mrb[0].mxu0
  %v201 = vadd.f32 0.0, %v200
  %v202 = vpop.f32.mrb[0].mxu0
  %203 = vmatprep.mubr.bf16.mxu0 0
  %204 = vmatmul.mubr.bf16.gmra.mrb[0].mxu0 %v114
  %v205 = vpop.f32.mrb[0].mxu0
  %v206 = vadd.f32 0.0, %v205
  %v207 = vpop.f32.mrb[0].mxu0
  %v208 = vpop.f32.mrb[0].mxu0
  %v209 = vadd.f32 0.0, %v208
  %v210 = vpop.f32.mrb[0].mxu0
  %211 = vmatprep.mubr.bf16.mxu0 0
  %212 = vmatmul.mubr.bf16.gmra.mrb[0].mxu0 %v117
  %v213 = vpop.f32.mrb[0].mxu0
  %v214 = vadd.f32 0.0, %v213
  %v215 = vpop.f32.mrb[0].mxu0
  %v216 = vpop.f32.mrb[0].mxu0
  %v217 = vadd.f32 0.0, %v216
  %v218 = vpop.f32.mrb[0].mxu0
  %219 = vdwg.mxu0
  %v220 = vld [vmem:[%s2] sm:$0x1]
  %v222 = vlaneseq
  %v223 = vshrl.u32 %v222, 7
  %v224 = vsub.s32 0, %v223
  %v225 = vrot.slane %v220, %v224
  %v227 = vmul.f32 %v158, %v225
  %v228 = vmul.f32 %v161, %v225
  %v229 = vmul.f32 %v166, %v225
  %v230 = vmul.f32 %v169, %v225
  %v231 = vmul.f32 %v174, %v225
  %v232 = vmul.f32 %v177, %v225
  %v233 = vmul.f32 %v182, %v225
  %v234 = vmul.f32 %v185, %v225
  %v235 = vmul.f32 %v190, %v225
  %v236 = vmul.f32 %v193, %v225
  %v237 = vmul.f32 %v198, %v225
  %v238 = vmul.f32 %v201, %v225
  %v239 = vmul.f32 %v206, %v225
  %v240 = vmul.f32 %v209, %v225
  %v241 = vmul.f32 %v214, %v225
  %v242 = vmul.f32 %v217, %v225
  %v243 = vld [vmem:[%s3] sm:$0x1]
  %v245 = vlaneseq
  %v246 = vshrl.u32 %v245, 7
  %v247 = vsub.s32 0, %v246
  %v248 = vrot.slane %v243, %v247
  %v250 = vadd.f32 %v227, %v248
  %v251 = vadd.f32 %v228, %v248
  %v252 = vadd.f32 %v229, %v248
  %v253 = vadd.f32 %v230, %v248
  %v254 = vadd.f32 %v231, %v248
  %v255 = vadd.f32 %v232, %v248
  %v256 = vadd.f32 %v233, %v248
  %v257 = vadd.f32 %v234, %v248
  %v258 = vadd.f32 %v235, %v248
  %v259 = vadd.f32 %v236, %v248
  %v260 = vadd.f32 %v237, %v248
  %v261 = vadd.f32 %v238, %v248
  %v262 = vadd.f32 %v239, %v248
  %v263 = vadd.f32 %v240, %v248
  %v264 = vadd.f32 %v241, %v248
  %v265 = vadd.f32 %v242, %v248
  %v266 = vmin.f32 %v250, 20.0
  %v267 = vmin.f32 %v251, 20.0
  %v268 = vmin.f32 %v252, 20.0
  %v269 = vmin.f32 %v253, 20.0
  %v270 = vmin.f32 %v254, 20.0
  %v271 = vmin.f32 %v255, 20.0
  %v272 = vmin.f32 %v256, 20.0
  %v273 = vmin.f32 %v257, 20.0
  %v274 = vmin.f32 %v258, 20.0
  %v275 = vmin.f32 %v259, 20.0
  %v276 = vmin.f32 %v260, 20.0
  %v277 = vmin.f32 %v261, 20.0
  %v278 = vmin.f32 %v262, 20.0
  %v279 = vmin.f32 %v263, 20.0
  %v280 = vmin.f32 %v264, 20.0
  %v281 = vmin.f32 %v265, 20.0
  %v282 = vmul.f32 %v266, 1.442695
  %v283 = vpow.pop %v282
  %v284 = vmul.f32 %v267, 1.442695
  %v285 = vpow.pop %v284
  %v286 = vmul.f32 %v268, 1.442695
  %v287 = vpow.pop %v286
  %v288 = vmul.f32 %v269, 1.442695
  %v289 = vpow.pop %v288
  %v290 = vmul.f32 %v270, 1.442695
  %v291 = vpow.pop %v290
  %v292 = vmul.f32 %v271, 1.442695
  %v293 = vpow.pop %v292
  %v294 = vmul.f32 %v272, 1.442695
  %v295 = vpow.pop %v294
  %v296 = vmul.f32 %v273, 1.442695
  %v297 = vpow.pop %v296
  %v298 = vmul.f32 %v274, 1.442695
  %v299 = vpow.pop %v298
  %v300 = vmul.f32 %v275, 1.442695
  %v301 = vpow.pop %v300
  %v302 = vmul.f32 %v276, 1.442695
  %v303 = vpow.pop %v302
  %v304 = vmul.f32 %v277, 1.442695
  %v305 = vpow.pop %v304
  %v306 = vmul.f32 %v278, 1.442695
  %v307 = vpow.pop %v306
  %v308 = vmul.f32 %v279, 1.442695
  %v309 = vpow.pop %v308
  %v310 = vmul.f32 %v280, 1.442695
  %v311 = vpow.pop %v310
  %v312 = vmul.f32 %v281, 1.442695
  %v313 = vpow.pop %v312
  %v314 = vadd.f32 %v283, 2.0
  %v315 = vadd.f32 %v285, 2.0
  %v316 = vadd.f32 %v287, 2.0
  %v317 = vadd.f32 %v289, 2.0
  %v318 = vadd.f32 %v291, 2.0
  %v319 = vadd.f32 %v293, 2.0
  %v320 = vadd.f32 %v295, 2.0
  %v321 = vadd.f32 %v297, 2.0
  %v322 = vadd.f32 %v299, 2.0
  %v323 = vadd.f32 %v301, 2.0
  %v324 = vadd.f32 %v303, 2.0
  %v325 = vadd.f32 %v305, 2.0
  %v326 = vadd.f32 %v307, 2.0
  %v327 = vadd.f32 %v309, 2.0
  %v328 = vadd.f32 %v311, 2.0
  %v329 = vadd.f32 %v313, 2.0
  %v330 = vmul.f32 %v283, %v314
  %v331 = vmul.f32 %v285, %v315
  %v332 = vmul.f32 %v287, %v316
  %v333 = vmul.f32 %v289, %v317
  %v334 = vmul.f32 %v291, %v318
  %v335 = vmul.f32 %v293, %v319
  %v336 = vmul.f32 %v295, %v320
  %v337 = vmul.f32 %v297, %v321
  %v338 = vmul.f32 %v299, %v322
  %v339 = vmul.f32 %v301, %v323
  %v340 = vmul.f32 %v303, %v324
  %v341 = vmul.f32 %v305, %v325
  %v342 = vmul.f32 %v307, %v326
  %v343 = vmul.f32 %v309, %v327
  %v344 = vmul.f32 %v311, %v328
  %v345 = vmul.f32 %v313, %v329
  %v346 = vadd.f32 %v330, 2.0
  %v347 = vadd.f32 %v331, 2.0
  %v348 = vadd.f32 %v332, 2.0
  %v349 = vadd.f32 %v333, 2.0
  %v350 = vadd.f32 %v334, 2.0
  %v351 = vadd.f32 %v335, 2.0
  %v352 = vadd.f32 %v336, 2.0
  %v353 = vadd.f32 %v337, 2.0
  %v354 = vadd.f32 %v338, 2.0
  %v355 = vadd.f32 %v339, 2.0
  %v356 = vadd.f32 %v340, 2.0
  %v357 = vadd.f32 %v341, 2.0
  %v358 = vadd.f32 %v342, 2.0
  %v359 = vadd.f32 %v343, 2.0
  %v360 = vadd.f32 %v344, 2.0
  %v361 = vadd.f32 %v345, 2.0
  %v362 = vrcp.pop %v346
  %v363 = vrcp.pop %v347
  %v364 = vrcp.pop %v348
  %v365 = vrcp.pop %v349
  %v366 = vrcp.pop %v350
  %v367 = vrcp.pop %v351
  %v368 = vrcp.pop %v352
  %v369 = vrcp.pop %v353
  %v370 = vrcp.pop %v354
  %v371 = vrcp.pop %v355
  %v372 = vrcp.pop %v356
  %v373 = vrcp.pop %v357
  %v374 = vrcp.pop %v358
  %v375 = vrcp.pop %v359
  %v376 = vrcp.pop %v360
  %v377 = vrcp.pop %v361
  %v378 = vmul.f32 %v330, %v362
  %v379 = vmul.f32 %v331, %v363
  %v380 = vmul.f32 %v332, %v364
  %v381 = vmul.f32 %v333, %v365
  %v382 = vmul.f32 %v334, %v366
  %v383 = vmul.f32 %v335, %v367
  %v384 = vmul.f32 %v336, %v368
  %v385 = vmul.f32 %v337, %v369
  %v386 = vmul.f32 %v338, %v370
  %v387 = vmul.f32 %v339, %v371
  %v388 = vmul.f32 %v340, %v372
  %v389 = vmul.f32 %v341, %v373
  %v390 = vmul.f32 %v342, %v374
  %v391 = vmul.f32 %v343, %v375
  %v392 = vmul.f32 %v344, %v376
  %v393 = vmul.f32 %v345, %v377
  %vm394 = vcmp.gt.f32.partialorder %v250, 20.0
  %vm395 = vcmp.gt.f32.partialorder %v251, 20.0
  %vm396 = vcmp.gt.f32.partialorder %v252, 20.0
  %vm397 = vcmp.gt.f32.partialorder %v253, 20.0
  %vm398 = vcmp.gt.f32.partialorder %v254, 20.0
  %vm399 = vcmp.gt.f32.partialorder %v255, 20.0
  %vm400 = vcmp.gt.f32.partialorder %v256, 20.0
  %vm401 = vcmp.gt.f32.partialorder %v257, 20.0
  %vm402 = vcmp.gt.f32.partialorder %v258, 20.0
  %vm403 = vcmp.gt.f32.partialorder %v259, 20.0
  %vm404 = vcmp.gt.f32.partialorder %v260, 20.0
  %vm405 = vcmp.gt.f32.partialorder %v261, 20.0
  %vm406 = vcmp.gt.f32.partialorder %v262, 20.0
  %vm407 = vcmp.gt.f32.partialorder %v263, 20.0
  %vm408 = vcmp.gt.f32.partialorder %v264, 20.0
  %vm409 = vcmp.gt.f32.partialorder %v265, 20.0
  %v410 = vsel %vm394, 1.0, %v378
  %v411 = vsel %vm395, 1.0, %v379
  %v412 = vsel %vm396, 1.0, %v380
  %v413 = vsel %vm397, 1.0, %v381
  %v414 = vsel %vm398, 1.0, %v382
  %v415 = vsel %vm399, 1.0, %v383
  %v416 = vsel %vm400, 1.0, %v384
  %v417 = vsel %vm401, 1.0, %v385
  %v418 = vsel %vm402, 1.0, %v386
  %v419 = vsel %vm403, 1.0, %v387
  %v420 = vsel %vm404, 1.0, %v388
  %v421 = vsel %vm405, 1.0, %v389
  %v422 = vsel %vm406, 1.0, %v390
  %v423 = vsel %vm407, 1.0, %v391
  %v424 = vsel %vm408, 1.0, %v392
  %v425 = vsel %vm409, 1.0, %v393
  %v426 = vmul.f32 %v250, %v410
  %v427 = vmul.f32 %v251, %v411
  %v428 = vmul.f32 %v252, %v412
  %v429 = vmul.f32 %v253, %v413
  %v430 = vmul.f32 %v254, %v414
  %v431 = vmul.f32 %v255, %v415
  %v432 = vmul.f32 %v256, %v416
  %v433 = vmul.f32 %v257, %v417
  %v434 = vmul.f32 %v258, %v418
  %v435 = vmul.f32 %v259, %v419
  %v436 = vmul.f32 %v260, %v420
  %v437 = vmul.f32 %v261, %v421
  %v438 = vmul.f32 %v262, %v422
  %v439 = vmul.f32 %v263, %v423
  %v440 = vmul.f32 %v264, %v424
  %v441 = vmul.f32 %v265, %v425
  %v442 = vpack.c.bf16 %v427, %v426
  %v443 = vpack.c.bf16 %v429, %v428
  %v444 = vpack.c.bf16 %v431, %v430
  %v445 = vpack.c.bf16 %v433, %v432
  %v446 = vpack.c.bf16 %v435, %v434
  %v447 = vpack.c.bf16 %v437, %v436
  %v448 = vpack.c.bf16 %v439, %v438
  %v449 = vpack.c.bf16 %v441, %v440
  %v458 = vunpack.c.l.b16 %v442
  %v459 = vunpack.c.h.b16 %v442
  %v460 = vunpack.c.l.b16 %v443
  %v461 = vunpack.c.h.b16 %v443
  %v462 = vunpack.c.l.b16 %v444
  %v463 = vunpack.c.h.b16 %v444
  %v464 = vunpack.c.l.b16 %v445
  %v465 = vunpack.c.h.b16 %v445
  %v466 = vunpack.c.l.b16 %v446
  %v467 = vunpack.c.h.b16 %v446
  %v468 = vunpack.c.l.b16 %v447
  %v469 = vunpack.c.h.b16 %v447
  %v470 = vunpack.c.l.b16 %v448
  %v471 = vunpack.c.h.b16 %v448
  %v472 = vunpack.c.l.b16 %v449
  %v473 = vunpack.c.h.b16 %v449
  %v474 = vpack.c.b16 %v458, %v458
  %v475 = vpack.c.b16 %v459, %v459
  %v476 = vpack.c.b16 %v460, %v460
  %v477 = vpack.c.b16 %v461, %v461
  %v478 = vpack.c.b16 %v462, %v462
  %v479 = vpack.c.b16 %v463, %v463
  %v480 = vpack.c.b16 %v464, %v464
  %v481 = vpack.c.b16 %v465, %v465
  %v482 = vpack.c.b16 %v466, %v466
  %v483 = vpack.c.b16 %v467, %v467
  %v484 = vpack.c.b16 %v468, %v468
  %v485 = vpack.c.b16 %v469, %v469
  %v486 = vpack.c.b16 %v470, %v470
  %v487 = vpack.c.b16 %v471, %v471
  %v488 = vpack.c.b16 %v472, %v472
  %v489 = vpack.c.b16 %v473, %v473
  %506 = vst [vmem:[%s4] sm:$0xf] %v474
  %507 = vst [vmem:[%s4 + $0x4] sm:$0xf] %v475
  %508 = vst [vmem:[%s4 + $0x8] sm:$0xf] %v476
  %509 = vst [vmem:[%s4 + $0xc] sm:$0xf] %v477
  %510 = vst [vmem:[%s4 + $0x10] sm:$0xf] %v478
  %511 = vst [vmem:[%s4 + $0x14] sm:$0xf] %v479
  %512 = vst [vmem:[%s4 + $0x18] sm:$0xf] %v480
  %513 = vst [vmem:[%s4 + $0x1c] sm:$0xf] %v481
  %514 = vst [vmem:[%s4 + $0x20] sm:$0xf] %v482
  %515 = vst [vmem:[%s4 + $0x24] sm:$0xf] %v483
  %516 = vst [vmem:[%s4 + $0x28] sm:$0xf] %v484
  %517 = vst [vmem:[%s4 + $0x2c] sm:$0xf] %v485
  %518 = vst [vmem:[%s4 + $0x30] sm:$0xf] %v486
  %519 = vst [vmem:[%s4 + $0x34] sm:$0xf] %v487
  %520 = vst [vmem:[%s4 + $0x38] sm:$0xf] %v488
  %521 = vst [vmem:[%s4 + $0x3c] sm:$0xf] %v489
  // Predicated region
  $region18: #{csp_down_block_forward.5} parent=0 // pred_check
    _
  $region19: #{csp_down_block_forward.5} parent=0 // pred_check_branch
    %523 = sbr.rel (0) target = $region21
  $region20: #{csp_down_block_forward.5} parent=0 // pred_region
    _
  $region21: #{csp_down_block_forward.5} parent=0 // pred_fallthru
    _
  // Predicated region
  $region22: #{csp_down_block_forward.5} parent=0 // pred_check
    _
  $region23: #{csp_down_block_forward.5} parent=0 // pred_check_branch
    %525 = sbr.rel (0) target = $region25
  $region24: #{csp_down_block_forward.5} parent=0 // pred_region
    _
  $region25: #{csp_down_block_forward.5} parent=0 // pred_fallthru
    _

// kernel: csp_down_block_forward.6
$region0: #{csp_down_block_forward.6}
  #allocation0 [shape = 'u32[]', space=smem, size = 0x4, offset = 0x4, fixed_abs, tag = 'smem constant byte address 0x4 - core index']
  #allocation1 [shape = 'u32[144,128]{1,0:T(1,128)}', space=vmem, size = 0x12000, scoped, tag = 'internal scratch']
  %s0 = inlined_call_operand.vmem [shape: bf16[128,128], index: 0, kind: input, shape index: {}]
  %s1 = inlined_call_operand.vmem [shape: bf16[128,6], index: 1, kind: input, shape index: {}]
  %s2 = inlined_call_operand.vmem [shape: bf16[128,128], index: 2, kind: input, shape index: {}]
  %s3 = inlined_call_operand.vmem [shape: bf16[6,128], index: 3, kind: input, shape index: {}]
  %s4 = inlined_call_operand.vmem [shape: f32[1,128], index: 4, kind: input, shape index: {}]
  %s5 = inlined_call_operand.vmem [shape: f32[1,128], index: 5, kind: input, shape index: {}]
  %s6 = inlined_call_operand.vmem [shape: bf16[128,128], index: 6, kind: output, shape index: {}]
  %s7 = sld [smem:[#allocation0]]
  $region34: #{csp_down_block_forward.6} parent=0
    _
  %s9 = ssub.s32 1, %s7
  %s10 = scalar_select 0, %s9, %s7
  // Predicated region
  $region2: #{csp_down_block_forward.6} parent=0 // pred_check
    _
  $region3: #{csp_down_block_forward.6} parent=0 // pred_check_branch
    %12 = sbr.rel (0) target = $region5
  $region4: #{csp_down_block_forward.6} parent=0 // pred_region
    _
  $region5: #{csp_down_block_forward.6} parent=0 // pred_fallthru
    _
  // Predicated region
  $region6: #{csp_down_block_forward.6} parent=0 // pred_check
    _
  $region7: #{csp_down_block_forward.6} parent=0 // pred_check_branch
    %14 = sbr.rel (0) target = $region9
  $region8: #{csp_down_block_forward.6} parent=0 // pred_region
    _
  $region9: #{csp_down_block_forward.6} parent=0 // pred_fallthru
    _
  // Predicated region
  $region10: #{csp_down_block_forward.6} parent=0 // pred_check
    _
  $region11: #{csp_down_block_forward.6} parent=0 // pred_check_branch
    %16 = sbr.rel (0) target = $region13
  $region12: #{csp_down_block_forward.6} parent=0 // pred_region
    _
  $region13: #{csp_down_block_forward.6} parent=0 // pred_fallthru
    _
  // Predicated region
  $region14: #{csp_down_block_forward.6} parent=0 // pred_check
    _
  $region15: #{csp_down_block_forward.6} parent=0 // pred_check_branch
    %18 = sbr.rel (0) target = $region17
  $region16: #{csp_down_block_forward.6} parent=0 // pred_region
    _
  $region17: #{csp_down_block_forward.6} parent=0 // pred_fallthru
    _
  // Predicated region
  $region18: #{csp_down_block_forward.6} parent=0 // pred_check
    _
  $region19: #{csp_down_block_forward.6} parent=0 // pred_check_branch
    %20 = sbr.rel (0) target = $region21
  $region20: #{csp_down_block_forward.6} parent=0 // pred_region
    _
  $region21: #{csp_down_block_forward.6} parent=0 // pred_fallthru
    _
  // Predicated region
  $region22: #{csp_down_block_forward.6} parent=0 // pred_check
    _
  $region23: #{csp_down_block_forward.6} parent=0 // pred_check_branch
    %22 = sbr.rel (0) target = $region25
  $region24: #{csp_down_block_forward.6} parent=0 // pred_region
    _
  $region25: #{csp_down_block_forward.6} parent=0 // pred_fallthru
    _
  %v24 = vld [vmem:[%s0] sm:$0xf]
  %v25 = vld [vmem:[%s0 + $0x4] sm:$0xf]
  %v26 = vld [vmem:[%s0 + $0x8] sm:$0xf]
  %v27 = vld [vmem:[%s0 + $0xc] sm:$0xf]
  %v28 = vld [vmem:[%s0 + $0x10] sm:$0xf]
  %v29 = vld [vmem:[%s0 + $0x14] sm:$0xf]
  %v30 = vld [vmem:[%s0 + $0x18] sm:$0xf]
  %v31 = vld [vmem:[%s0 + $0x1c] sm:$0xf]
  %v32 = vld [vmem:[%s0 + $0x20] sm:$0xf]
  %v33 = vld [vmem:[%s0 + $0x24] sm:$0xf]
  %v34 = vld [vmem:[%s0 + $0x28] sm:$0xf]
  %v35 = vld [vmem:[%s0 + $0x2c] sm:$0xf]
  %v36 = vld [vmem:[%s0 + $0x30] sm:$0xf]
  %v37 = vld [vmem:[%s0 + $0x34] sm:$0xf]
  %v38 = vld [vmem:[%s0 + $0x38] sm:$0xf]
  %v39 = vld [vmem:[%s0 + $0x3c] sm:$0xf]
  %v40 = vld [vmem:[%s2] sm:$0xf]
  %v41 = vld [vmem:[%s2 + $0x4] sm:$0xf]
  %v42 = vld [vmem:[%s2 + $0x8] sm:$0xf]
  %v43 = vld [vmem:[%s2 + $0xc] sm:$0xf]
  %v44 = vld [vmem:[%s2 + $0x10] sm:$0xf]
  %v45 = vld [vmem:[%s2 + $0x14] sm:$0xf]
  %v46 = vld [vmem:[%s2 + $0x18] sm:$0xf]
  %v47 = vld [vmem:[%s2 + $0x1c] sm:$0xf]
  %v48 = vld [vmem:[%s2 + $0x20] sm:$0xf]
  %v49 = vld [vmem:[%s2 + $0x24] sm:$0xf]
  %v50 = vld [vmem:[%s2 + $0x28] sm:$0xf]
  %v51 = vld [vmem:[%s2 + $0x2c] sm:$0xf]
  %v52 = vld [vmem:[%s2 + $0x30] sm:$0xf]
  %v53 = vld [vmem:[%s2 + $0x34] sm:$0xf]
  %v54 = vld [vmem:[%s2 + $0x38] sm:$0xf]
  %v55 = vld [vmem:[%s2 + $0x3c] sm:$0xf]
  %v56 = vld [vmem:[%s1] sm:$0xf]
  %v57 = vld [vmem:[%s1 + $0x4] sm:$0xf]
  %v58 = vld [vmem:[%s1 + $0x8] sm:$0xf]
  %v59 = vld [vmem:[%s1 + $0xc] sm:$0xf]
  %v60 = vld [vmem:[%s1 + $0x10] sm:$0xf]
  %v61 = vld [vmem:[%s1 + $0x14] sm:$0xf]
  %v62 = vld [vmem:[%s1 + $0x18] sm:$0xf]
  %v63 = vld [vmem:[%s1 + $0x1c] sm:$0xf]
  %v64 = vld [vmem:[%s1 + $0x20] sm:$0xf]
  %v65 = vld [vmem:[%s1 + $0x24] sm:$0xf]
  %v66 = vld [vmem:[%s1 + $0x28] sm:$0xf]
  %v67 = vld [vmem:[%s1 + $0x2c] sm:$0xf]
  %v68 = vld [vmem:[%s1 + $0x30] sm:$0xf]
  %v69 = vld [vmem:[%s1 + $0x34] sm:$0xf]
  %v70 = vld [vmem:[%s1 + $0x38] sm:$0xf]
  %v71 = vld [vmem:[%s1 + $0x3c] sm:$0xf]
  %v72 = vld [vmem:[%s3] sm:$0x7]
  %v89 = vunpack.c.l.b16 %v56
  %v90 = vunpack.c.l.b16 %v57
  %v91 = vunpack.c.l.b16 %v58
  %v92 = vunpack.c.l.b16 %v59
  %v93 = vunpack.c.l.b16 %v60
  %v94 = vunpack.c.l.b16 %v61
  %v95 = vunpack.c.l.b16 %v62
  %v96 = vunpack.c.l.b16 %v63
  %v97 = vunpack.c.l.b16 %v64
  %v98 = vunpack.c.l.b16 %v65
  %v99 = vunpack.c.l.b16 %v66
  %v100 = vunpack.c.l.b16 %v67
  %v101 = vunpack.c.l.b16 %v68
  %v102 = vunpack.c.l.b16 %v69
  %v103 = vunpack.c.l.b16 %v70
  %v104 = vunpack.c.l.b16 %v71
  %v105 = vpack.c.b16 %v90, %v89
  %v106 = vpack.c.b16 %v92, %v91
  %v107 = vpack.c.b16 %v94, %v93
  %v108 = vpack.c.b16 %v96, %v95
  %v109 = vpack.c.b16 %v98, %v97
  %v110 = vpack.c.b16 %v100, %v99
  %v111 = vpack.c.b16 %v102, %v101
  %v112 = vpack.c.b16 %v104, %v103
  %vm113 = vcmask 48128
  %v115 = vsel %vm113, %v105, 0
  %v118 = vsel %vm113, %v106, 0
  %v121 = vsel %vm113, %v107, 0
  %v124 = vsel %vm113, %v108, 0
  %v127 = vsel %vm113, %v109, 0
  %v130 = vsel %vm113, %v110, 0
  %v133 = vsel %vm113, %v111, 0
  %v136 = vsel %vm113, %v112, 0
  %vm138 = vcmask 1042432
  %v140 = vsel %vm138, %v72, 0
  %142 = vmatprep.subr.bf16.mxu0 0
  %143 = vmatpush1.bf16.msra.mxu0 %v140
  %144 = vmatprep.subr.bf16.mxu0 0
  %145 = vmatpush1.bf16.msra.mxu0 0
  %146 = vmatprep.subr.bf16.mxu0 0
  %147 = vmatpush1.bf16.msra.mxu0 0
  %148 = vmatprep.subr.bf16.mxu0 0
  %149 = vmatpush1.bf16.msra.mxu0 0
  %150 = vmatprep.subr.bf16.mxu0 0
  %151 = vmatpush1.bf16.msra.mxu0 0
  %152 = vmatprep.subr.bf16.mxu0 0
  %153 = vmatpush1.bf16.msra.mxu0 0
  %154 = vmatprep.subr.bf16.mxu0 0
  %155 = vmatpush1.bf16.msra.mxu0 0
  %156 = vmatprep.subr.bf16.mxu0 0
  %157 = vmatpush1.bf16.msra.mxu0 0
  %158 = vmatprep.subr.bf16.mxu0 0
  %159 = vmatpush1.bf16.msra.mxu0 0
  %160 = vmatprep.subr.bf16.mxu0 0
  %161 = vmatpush1.bf16.msra.mxu0 0
  %162 = vmatprep.subr.bf16.mxu0 0
  %163 = vmatpush1.bf16.msra.mxu0 0
  %164 = vmatprep.subr.bf16.mxu0 0
  %165 = vmatpush1.bf16.msra.mxu0 0
  %166 = vmatprep.subr.bf16.mxu0 0
  %167 = vmatpush1.bf16.msra.mxu0 0
  %168 = vmatprep.subr.bf16.mxu0 0
  %169 = vmatpush1.bf16.msra.mxu0 0
  %170 = vmatprep.subr.bf16.mxu0 0
  %171 = vmatpush1.bf16.msra.mxu0 0
  %172 = vmatprep.subr.bf16.mxu0 0
  %173 = vmatpush1.bf16.msra.mxu0 0
  %174 = vmatprep.mubr.bf16.mxu0 0
  %175 = vmatmul.mubr.bf16.gmra.mrb[0].mxu0 %v115
  %v176 = vpop.f32.mrb[0].mxu0
  %v177 = vadd.f32 0.0, %v176
  %v178 = vpop.f32.mrb[0].mxu0
  %v179 = vpop.f32.mrb[0].mxu0
  %v180 = vadd.f32 0.0, %v179
  %v181 = vpop.f32.mrb[0].mxu0
  %182 = vmatprep.mubr.bf16.mxu0 0
  %183 = vmatmul.mubr.bf16.gmra.mrb[0].mxu0 %v118
  %v184 = vpop.f32.mrb[0].mxu0
  %v185 = vadd.f32 0.0, %v184
  %v186 = vpop.f32.mrb[0].mxu0
  %v187 = vpop.f32.mrb[0].mxu0
  %v188 = vadd.f32 0.0, %v187
  %v189 = vpop.f32.mrb[0].mxu0
  %190 = vmatprep.mubr.bf16.mxu0 0
  %191 = vmatmul.mubr.bf16.gmra.mrb[0].mxu0 %v121
  %v192 = vpop.f32.mrb[0].mxu0
  %v193 = vadd.f32 0.0, %v192
  %v194 = vpop.f32.mrb[0].mxu0
  %v195 = vpop.f32.mrb[0].mxu0
  %v196 = vadd.f32 0.0, %v195
  %v197 = vpop.f32.mrb[0].mxu0
  %198 = vmatprep.mubr.bf16.mxu0 0
  %199 = vmatmul.mubr.bf16.gmra.mrb[0].mxu0 %v124
  %v200 = vpop.f32.mrb[0].mxu0
  %v201 = vadd.f32 0.0, %v200
  %v202 = vpop.f32.mrb[0].mxu0
  %v203 = vpop.f32.mrb[0].mxu0
  %v204 = vadd.f32 0.0, %v203
  %v205 = vpop.f32.mrb[0].mxu0
  %206 = vmatprep.mubr.bf16.mxu0 0
  %207 = vmatmul.mubr.bf16.gmra.mrb[0].mxu0 %v127
  %v208 = vpop.f32.mrb[0].mxu0
  %v209 = vadd.f32 0.0, %v208
  %v210 = vpop.f32.mrb[0].mxu0
  %v211 = vpop.f32.mrb[0].mxu0
  %v212 = vadd.f32 0.0, %v211
  %v213 = vpop.f32.mrb[0].mxu0
  %214 = vmatprep.mubr.bf16.mxu0 0
  %215 = vmatmul.mubr.bf16.gmra.mrb[0].mxu0 %v130
  %v216 = vpop.f32.mrb[0].mxu0
  %v217 = vadd.f32 0.0, %v216
  %v218 = vpop.f32.mrb[0].mxu0
  %v219 = vpop.f32.mrb[0].mxu0
  %v220 = vadd.f32 0.0, %v219
  %v221 = vpop.f32.mrb[0].mxu0
  %222 = vmatprep.mubr.bf16.mxu0 0
  %223 = vmatmul.mubr.bf16.gmra.mrb[0].mxu0 %v133
  %v224 = vpop.f32.mrb[0].mxu0
  %v225 = vadd.f32 0.0, %v224
  %v226 = vpop.f32.mrb[0].mxu0
  %v227 = vpop.f32.mrb[0].mxu0
  %v228 = vadd.f32 0.0, %v227
  %v229 = vpop.f32.mrb[0].mxu0
  %230 = vmatprep.mubr.bf16.mxu0 0
  %231 = vmatmul.mubr.bf16.gmra.mrb[0].mxu0 %v136
  %v232 = vpop.f32.mrb[0].mxu0
  %v233 = vadd.f32 0.0, %v232
  %v234 = vpop.f32.mrb[0].mxu0
  %v235 = vpop.f32.mrb[0].mxu0
  %v236 = vadd.f32 0.0, %v235
  %v237 = vpop.f32.mrb[0].mxu0
  %238 = vdwg.mxu0
  %v255 = vunpack.c.l.b16 %v24
  %v256 = vunpack.c.l.b16 %v25
  %v257 = vunpack.c.l.b16 %v26
  %v258 = vunpack.c.l.b16 %v27
  %v259 = vunpack.c.l.b16 %v28
  %v260 = vunpack.c.l.b16 %v29
  %v261 = vunpack.c.l.b16 %v30
  %v262 = vunpack.c.l.b16 %v31
  %v263 = vunpack.c.l.b16 %v32
  %v264 = vunpack.c.l.b16 %v33
  %v265 = vunpack.c.l.b16 %v34
  %v266 = vunpack.c.l.b16 %v35
  %v267 = vunpack.c.l.b16 %v36
  %v268 = vunpack.c.l.b16 %v37
  %v269 = vunpack.c.l.b16 %v38
  %v270 = vunpack.c.l.b16 %v39
  %v271 = vpack.c.b16 %v256, %v255
  %v272 = vpack.c.b16 %v258, %v257
  %v273 = vpack.c.b16 %v260, %v259
  %v274 = vpack.c.b16 %v262, %v261
  %v275 = vpack.c.b16 %v264, %v263
  %v276 = vpack.c.b16 %v266, %v265
  %v277 = vpack.c.b16 %v268, %v267
  %v278 = vpack.c.b16 %v270, %v269
  %v303 = vunpack.c.l.b16 %v40
  %v304 = vunpack.c.l.b16 %v41
  %v305 = vunpack.c.l.b16 %v42
  %v306 = vunpack.c.l.b16 %v43
  %v307 = vunpack.c.l.b16 %v44
  %v308 = vunpack.c.l.b16 %v45
  %v309 = vunpack.c.l.b16 %v46
  %v310 = vunpack.c.l.b16 %v47
  %v311 = vunpack.c.l.b16 %v48
  %v312 = vunpack.c.l.b16 %v49
  %v313 = vunpack.c.l.b16 %v50
  %v314 = vunpack.c.l.b16 %v51
  %v315 = vunpack.c.l.b16 %v52
  %v316 = vunpack.c.l.b16 %v53
  %v317 = vunpack.c.l.b16 %v54
  %v318 = vunpack.c.l.b16 %v55
  %v319 = vpack.c.b16 %v304, %v303
  %v320 = vpack.c.b16 %v306, %v305
  %v321 = vpack.c.b16 %v308, %v307
  %v322 = vpack.c.b16 %v310, %v309
  %v323 = vpack.c.b16 %v312, %v311
  %v324 = vpack.c.b16 %v314, %v313
  %v325 = vpack.c.b16 %v316, %v315
  %v326 = vpack.c.b16 %v318, %v317
  %335 = vmatprep.subr.bf16.mxu0 0
  %336 = vmatpush1.bf16.msra.mxu0 %v319
  %337 = vmatprep.subr.bf16.mxu0 0
  %338 = vmatpush1.bf16.msra.mxu0 %v320
  %339 = vmatprep.subr.bf16.mxu0 0
  %340 = vmatpush1.bf16.msra.mxu0 %v321
  %341 = vmatprep.subr.bf16.mxu0 0
  %342 = vmatpush1.bf16.msra.mxu0 %v322
  %343 = vmatprep.subr.bf16.mxu0 0
  %344 = vmatpush1.bf16.msra.mxu0 %v323
  %345 = vmatprep.subr.bf16.mxu0 0
  %346 = vmatpush1.bf16.msra.mxu0 %v324
  %347 = vmatprep.subr.bf16.mxu0 0
  %348 = vmatpush1.bf16.msra.mxu0 %v325
  %349 = vmatprep.subr.bf16.mxu0 0
  %350 = vmatpush1.bf16.msra.mxu0 %v326
  %351 = vmatprep.subr.bf16.mxu0 0
  %352 = vmatpush1.bf16.msra.mxu0 0
  %353 = vmatprep.subr.bf16.mxu0 0
  %354 = vmatpush1.bf16.msra.mxu0 0
  %355 = vmatprep.subr.bf16.mxu0 0
  %356 = vmatpush1.bf16.msra.mxu0 0
  %357 = vmatprep.subr.bf16.mxu0 0
  %358 = vmatpush1.bf16.msra.mxu0 0
  %359 = vmatprep.subr.bf16.mxu0 0
  %360 = vmatpush1.bf16.msra.mxu0 0
  %361 = vmatprep.subr.bf16.mxu0 0
  %362 = vmatpush1.bf16.msra.mxu0 0
  %363 = vmatprep.subr.bf16.mxu0 0
  %364 = vmatpush1.bf16.msra.mxu0 0
  %365 = vmatprep.subr.bf16.mxu0 0
  %366 = vmatpush1.bf16.msra.mxu0 0
  %367 = vmatprep.mubr.bf16.mxu0 0
  %368 = vmatmul.mubr.bf16.gmra.mrb[0].mxu0 %v271
  %v369 = vpop.f32.mrb[0].mxu0
  %v370 = vadd.f32 %v177, %v369
  %v371 = vpop.f32.mrb[0].mxu0
  %v372 = vpop.f32.mrb[0].mxu0
  %v373 = vadd.f32 %v180, %v372
  %v374 = vpop.f32.mrb[0].mxu0
  %375 = vmatprep.mubr.bf16.mxu0 0
  %376 = vmatmul.mubr.bf16.gmra.mrb[0].mxu0 %v272
  %v377 = vpop.f32.mrb[0].mxu0
  %v378 = vadd.f32 %v185, %v377
  %v379 = vpop.f32.mrb[0].mxu0
  %v380 = vpop.f32.mrb[0].mxu0
  %v381 = vadd.f32 %v188, %v380
  %v382 = vpop.f32.mrb[0].mxu0
  %383 = vmatprep.mubr.bf16.mxu0 0
  %384 = vmatmul.mubr.bf16.gmra.mrb[0].mxu0 %v273
  %v385 = vpop.f32.mrb[0].mxu0
  %v386 = vadd.f32 %v193, %v385
  %v387 = vpop.f32.mrb[0].mxu0
  %v388 = vpop.f32.mrb[0].mxu0
  %v389 = vadd.f32 %v196, %v388
  %v390 = vpop.f32.mrb[0].mxu0
  %391 = vmatprep.mubr.bf16.mxu0 0
  %392 = vmatmul.mubr.bf16.gmra.mrb[0].mxu0 %v274
  %v393 = vpop.f32.mrb[0].mxu0
  %v394 = vadd.f32 %v201, %v393
  %v395 = vpop.f32.mrb[0].mxu0
  %v396 = vpop.f32.mrb[0].mxu0
  %v397 = vadd.f32 %v204, %v396
  %v398 = vpop.f32.mrb[0].mxu0
  %399 = vmatprep.mubr.bf16.mxu0 0
  %400 = vmatmul.mubr.bf16.gmra.mrb[0].mxu0 %v275
  %v401 = vpop.f32.mrb[0].mxu0
  %v402 = vadd.f32 %v209, %v401
  %v403 = vpop.f32.mrb[0].mxu0
  %v404 = vpop.f32.mrb[0].mxu0
  %v405 = vadd.f32 %v212, %v404
  %v406 = vpop.f32.mrb[0].mxu0
  %407 = vmatprep.mubr.bf16.mxu0 0
  %408 = vmatmul.mubr.bf16.gmra.mrb[0].mxu0 %v276
  %v409 = vpop.f32.mrb[0].mxu0
  %v410 = vadd.f32 %v217, %v409
  %v411 = vpop.f32.mrb[0].mxu0
  %v412 = vpop.f32.mrb[0].mxu0
  %v413 = vadd.f32 %v220, %v412
  %v414 = vpop.f32.mrb[0].mxu0
  %415 = vmatprep.mubr.bf16.mxu0 0
  %416 = vmatmul.mubr.bf16.gmra.mrb[0].mxu0 %v277
  %v417 = vpop.f32.mrb[0].mxu0
  %v418 = vadd.f32 %v225, %v417
  %v419 = vpop.f32.mrb[0].mxu0
  %v420 = vpop.f32.mrb[0].mxu0
  %v421 = vadd.f32 %v228, %v420
  %v422 = vpop.f32.mrb[0].mxu0
  %423 = vmatprep.mubr.bf16.mxu0 0
  %424 = vmatmul.mubr.bf16.gmra.mrb[0].mxu0 %v278
  %v425 = vpop.f32.mrb[0].mxu0
  %v426 = vadd.f32 %v233, %v425
  %v427 = vpop.f32.mrb[0].mxu0
  %v428 = vpop.f32.mrb[0].mxu0
  %v429 = vadd.f32 %v236, %v428
  %v430 = vpop.f32.mrb[0].mxu0
  %431 = vdwg.mxu0
  %v432 = vld [vmem:[%s4] sm:$0x1]
  %v434 = vlaneseq
  %v435 = vshrl.u32 %v434, 7
  %v436 = vsub.s32 0, %v435
  %v437 = vrot.slane %v432, %v436
  %v439 = vmul.f32 %v370, %v437
  %v440 = vmul.f32 %v373, %v437
  %v441 = vmul.f32 %v378, %v437
  %v442 = vmul.f32 %v381, %v437
  %v443 = vmul.f32 %v386, %v437
  %v444 = vmul.f32 %v389, %v437
  %v445 = vmul.f32 %v394, %v437
  %v446 = vmul.f32 %v397, %v437
  %v447 = vmul.f32 %v402, %v437
  %v448 = vmul.f32 %v405, %v437
  %v449 = vmul.f32 %v410, %v437
  %v450 = vmul.f32 %v413, %v437
  %v451 = vmul.f32 %v418, %v437
  %v452 = vmul.f32 %v421, %v437
  %v453 = vmul.f32 %v426, %v437
  %v454 = vmul.f32 %v429, %v437
  %v455 = vld [vmem:[%s5] sm:$0x1]
  %v457 = vlaneseq
  %v458 = vshrl.u32 %v457, 7
  %v459 = vsub.s32 0, %v458
  %v460 = vrot.slane %v455, %v459
  %v462 = vadd.f32 %v439, %v460
  %v463 = vadd.f32 %v440, %v460
  %v464 = vadd.f32 %v441, %v460
  %v465 = vadd.f32 %v442, %v460
  %v466 = vadd.f32 %v443, %v460
  %v467 = vadd.f32 %v444, %v460
  %v468 = vadd.f32 %v445, %v460
  %v469 = vadd.f32 %v446, %v460
  %v470 = vadd.f32 %v447, %v460
  %v471 = vadd.f32 %v448, %v460
  %v472 = vadd.f32 %v449, %v460
  %v473 = vadd.f32 %v450, %v460
  %v474 = vadd.f32 %v451, %v460
  %v475 = vadd.f32 %v452, %v460
  %v476 = vadd.f32 %v453, %v460
  %v477 = vadd.f32 %v454, %v460
  %v478 = vmin.f32 %v462, 20.0
  %v479 = vmin.f32 %v463, 20.0
  %v480 = vmin.f32 %v464, 20.0
  %v481 = vmin.f32 %v465, 20.0
  %v482 = vmin.f32 %v466, 20.0
  %v483 = vmin.f32 %v467, 20.0
  %v484 = vmin.f32 %v468, 20.0
  %v485 = vmin.f32 %v469, 20.0
  %v486 = vmin.f32 %v470, 20.0
  %v487 = vmin.f32 %v471, 20.0
  %v488 = vmin.f32 %v472, 20.0
  %v489 = vmin.f32 %v473, 20.0
  %v490 = vmin.f32 %v474, 20.0
  %v491 = vmin.f32 %v475, 20.0
  %v492 = vmin.f32 %v476, 20.0
  %v493 = vmin.f32 %v477, 20.0
  %v494 = vmul.f32 %v478, 1.442695
  %v495 = vpow.pop %v494
  %v496 = vmul.f32 %v479, 1.442695
  %v497 = vpow.pop %v496
  %v498 = vmul.f32 %v480, 1.442695
  %v499 = vpow.pop %v498
  %v500 = vmul.f32 %v481, 1.442695
  %v501 = vpow.pop %v500
  %v502 = vmul.f32 %v482, 1.442695
  %v503 = vpow.pop %v502
  %v504 = vmul.f32 %v483, 1.442695
  %v505 = vpow.pop %v504
  %v506 = vmul.f32 %v484, 1.442695
  %v507 = vpow.pop %v506
  %v508 = vmul.f32 %v485, 1.442695
  %v509 = vpow.pop %v508
  %v510 = vmul.f32 %v486, 1.442695
  %v511 = vpow.pop %v510
  %v512 = vmul.f32 %v487, 1.442695
  %v513 = vpow.pop %v512
  %v514 = vmul.f32 %v488, 1.442695
  %v515 = vpow.pop %v514
  %v516 = vmul.f32 %v489, 1.442695
  %v517 = vpow.pop %v516
  %v518 = vmul.f32 %v490, 1.442695
  %v519 = vpow.pop %v518
  %v520 = vmul.f32 %v491, 1.442695
  %v521 = vpow.pop %v520
  %v522 = vmul.f32 %v492, 1.442695
  %v523 = vpow.pop %v522
  %v524 = vmul.f32 %v493, 1.442695
  %v525 = vpow.pop %v524
  %v526 = vadd.f32 %v495, 2.0
  %v527 = vadd.f32 %v497, 2.0
  %v528 = vadd.f32 %v499, 2.0
  %v529 = vadd.f32 %v501, 2.0
  %v530 = vadd.f32 %v503, 2.0
  %v531 = vadd.f32 %v505, 2.0
  %v532 = vadd.f32 %v507, 2.0
  %v533 = vadd.f32 %v509, 2.0
  %v534 = vadd.f32 %v511, 2.0
  %v535 = vadd.f32 %v513, 2.0
  %v536 = vadd.f32 %v515, 2.0
  %v537 = vadd.f32 %v517, 2.0
  %v538 = vadd.f32 %v519, 2.0
  %v539 = vadd.f32 %v521, 2.0
  %v540 = vadd.f32 %v523, 2.0
  %v541 = vadd.f32 %v525, 2.0
  %v542 = vmul.f32 %v495, %v526
  %v543 = vmul.f32 %v497, %v527
  %v544 = vmul.f32 %v499, %v528
  %v545 = vmul.f32 %v501, %v529
  %v546 = vmul.f32 %v503, %v530
  %v547 = vmul.f32 %v505, %v531
  %v548 = vmul.f32 %v507, %v532
  %v549 = vmul.f32 %v509, %v533
  %v550 = vmul.f32 %v511, %v534
  %v551 = vmul.f32 %v513, %v535
  %v552 = vmul.f32 %v515, %v536
  %v553 = vmul.f32 %v517, %v537
  %v554 = vmul.f32 %v519, %v538
  %v555 = vmul.f32 %v521, %v539
  %v556 = vmul.f32 %v523, %v540
  %v557 = vmul.f32 %v525, %v541
  %v558 = vadd.f32 %v542, 2.0
  %v559 = vadd.f32 %v543, 2.0
  %v560 = vadd.f32 %v544, 2.0
  %v561 = vadd.f32 %v545, 2.0
  %v562 = vadd.f32 %v546, 2.0
  %v563 = vadd.f32 %v547, 2.0
  %v564 = vadd.f32 %v548, 2.0
  %v565 = vadd.f32 %v549, 2.0
  %v566 = vadd.f32 %v550, 2.0
  %v567 = vadd.f32 %v551, 2.0
  %v568 = vadd.f32 %v552, 2.0
  %v569 = vadd.f32 %v553, 2.0
  %v570 = vadd.f32 %v554, 2.0
  %v571 = vadd.f32 %v555, 2.0
  %v572 = vadd.f32 %v556, 2.0
  %v573 = vadd.f32 %v557, 2.0
  %v574 = vrcp.pop %v558
  %v575 = vrcp.pop %v559
  %v576 = vrcp.pop %v560
  %v577 = vrcp.pop %v561
  %v578 = vrcp.pop %v562
  %v579 = vrcp.pop %v563
  %v580 = vrcp.pop %v564
  %v581 = vrcp.pop %v565
  %v582 = vrcp.pop %v566
  %v583 = vrcp.pop %v567
  %v584 = vrcp.pop %v568
  %v585 = vrcp.pop %v569
  %v586 = vrcp.pop %v570
  %v587 = vrcp.pop %v571
  %v588 = vrcp.pop %v572
  %v589 = vrcp.pop %v573
  %v590 = vmul.f32 %v542, %v574
  %v591 = vmul.f32 %v543, %v575
  %v592 = vmul.f32 %v544, %v576
  %v593 = vmul.f32 %v545, %v577
  %v594 = vmul.f32 %v546, %v578
  %v595 = vmul.f32 %v547, %v579
  %v596 = vmul.f32 %v548, %v580
  %v597 = vmul.f32 %v549, %v581
  %v598 = vmul.f32 %v550, %v582
  %v599 = vmul.f32 %v551, %v583
  %v600 = vmul.f32 %v552, %v584
  %v601 = vmul.f32 %v553, %v585
  %v602 = vmul.f32 %v554, %v586
  %v603 = vmul.f32 %v555, %v587
  %v604 = vmul.f32 %v556, %v588
  %v605 = vmul.f32 %v557, %v589
  %vm606 = vcmp.gt.f32.partialorder %v462, 20.0
  %vm607 = vcmp.gt.f32.partialorder %v463, 20.0
  %vm608 = vcmp.gt.f32.partialorder %v464, 20.0
  %vm609 = vcmp.gt.f32.partialorder %v465, 20.0
  %vm610 = vcmp.gt.f32.partialorder %v466, 20.0
  %vm611 = vcmp.gt.f32.partialorder %v467, 20.0
  %vm612 = vcmp.gt.f32.partialorder %v468, 20.0
  %vm613 = vcmp.gt.f32.partialorder %v469, 20.0
  %vm614 = vcmp.gt.f32.partialorder %v470, 20.0
  %vm615 = vcmp.gt.f32.partialorder %v471, 20.0
  %vm616 = vcmp.gt.f32.partialorder %v472, 20.0
  %vm617 = vcmp.gt.f32.partialorder %v473, 20.0
  %vm618 = vcmp.gt.f32.partialorder %v474, 20.0
  %vm619 = vcmp.gt.f32.partialorder %v475, 20.0
  %vm620 = vcmp.gt.f32.partialorder %v476, 20.0
  %vm621 = vcmp.gt.f32.partialorder %v477, 20.0
  %v622 = vsel %vm606, 1.0, %v590
  %v623 = vsel %vm607, 1.0, %v591
  %v624 = vsel %vm608, 1.0, %v592
  %v625 = vsel %vm609, 1.0, %v593
  %v626 = vsel %vm610, 1.0, %v594
  %v627 = vsel %vm611, 1.0, %v595
  %v628 = vsel %vm612, 1.0, %v596
  %v629 = vsel %vm613, 1.0, %v597
  %v630 = vsel %vm614, 1.0, %v598
  %v631 = vsel %vm615, 1.0, %v599
  %v632 = vsel %vm616, 1.0, %v600
  %v633 = vsel %vm617, 1.0, %v601
  %v634 = vsel %vm618, 1.0, %v602
  %v635 = vsel %vm619, 1.0, %v603
  %v636 = vsel %vm620, 1.0, %v604
  %v637 = vsel %vm621, 1.0, %v605
  %v638 = vmul.f32 %v462, %v622
  %v639 = vmul.f32 %v463, %v623
  %v640 = vmul.f32 %v464, %v624
  %v641 = vmul.f32 %v465, %v625
  %v642 = vmul.f32 %v466, %v626
  %v643 = vmul.f32 %v467, %v627
  %v644 = vmul.f32 %v468, %v628
  %v645 = vmul.f32 %v469, %v629
  %v646 = vmul.f32 %v470, %v630
  %v647 = vmul.f32 %v471, %v631
  %v648 = vmul.f32 %v472, %v632
  %v649 = vmul.f32 %v473, %v633
  %v650 = vmul.f32 %v474, %v634
  %v651 = vmul.f32 %v475, %v635
  %v652 = vmul.f32 %v476, %v636
  %v653 = vmul.f32 %v477, %v637
  %v654 = vpack.c.bf16 %v639, %v638
  %v655 = vpack.c.bf16 %v641, %v640
  %v656 = vpack.c.bf16 %v643, %v642
  %v657 = vpack.c.bf16 %v645, %v644
  %v658 = vpack.c.bf16 %v647, %v646
  %v659 = vpack.c.bf16 %v649, %v648
  %v660 = vpack.c.bf16 %v651, %v650
  %v661 = vpack.c.bf16 %v653, %v652
  %v670 = vunpack.c.l.b16 %v654
  %v671 = vunpack.c.h.b16 %v654
  %v672 = vunpack.c.l.b16 %v655
  %v673 = vunpack.c.h.b16 %v655
  %v674 = vunpack.c.l.b16 %v656
  %v675 = vunpack.c.h.b16 %v656
  %v676 = vunpack.c.l.b16 %v657
  %v677 = vunpack.c.h.b16 %v657
  %v678 = vunpack.c.l.b16 %v658
  %v679 = vunpack.c.h.b16 %v658
  %v680 = vunpack.c.l.b16 %v659
  %v681 = vunpack.c.h.b16 %v659
  %v682 = vunpack.c.l.b16 %v660
  %v683 = vunpack.c.h.b16 %v660
  %v684 = vunpack.c.l.b16 %v661
  %v685 = vunpack.c.h.b16 %v661
  %v686 = vpack.c.b16 %v670, %v670
  %v687 = vpack.c.b16 %v671, %v671
  %v688 = vpack.c.b16 %v672, %v672
  %v689 = vpack.c.b16 %v673, %v673
  %v690 = vpack.c.b16 %v674, %v674
  %v691 = vpack.c.b16 %v675, %v675
  %v692 = vpack.c.b16 %v676, %v676
  %v693 = vpack.c.b16 %v677, %v677
  %v694 = vpack.c.b16 %v678, %v678
  %v695 = vpack.c.b16 %v679, %v679
  %v696 = vpack.c.b16 %v680, %v680
  %v697 = vpack.c.b16 %v681, %v681
  %v698 = vpack.c.b16 %v682, %v682
  %v699 = vpack.c.b16 %v683, %v683
  %v700 = vpack.c.b16 %v684, %v684
  %v701 = vpack.c.b16 %v685, %v685
  %718 = vst [vmem:[%s6] sm:$0xf] %v686
  %719 = vst [vmem:[%s6 + $0x4] sm:$0xf] %v687
  %720 = vst [vmem:[%s6 + $0x8] sm:$0xf] %v688
  %721 = vst [vmem:[%s6 + $0xc] sm:$0xf] %v689
  %722 = vst [vmem:[%s6 + $0x10] sm:$0xf] %v690
  %723 = vst [vmem:[%s6 + $0x14] sm:$0xf] %v691
  %724 = vst [vmem:[%s6 + $0x18] sm:$0xf] %v692
  %725 = vst [vmem:[%s6 + $0x1c] sm:$0xf] %v693
  %726 = vst [vmem:[%s6 + $0x20] sm:$0xf] %v694
  %727 = vst [vmem:[%s6 + $0x24] sm:$0xf] %v695
  %728 = vst [vmem:[%s6 + $0x28] sm:$0xf] %v696
  %729 = vst [vmem:[%s6 + $0x2c] sm:$0xf] %v697
  %730 = vst [vmem:[%s6 + $0x30] sm:$0xf] %v698
  %731 = vst [vmem:[%s6 + $0x34] sm:$0xf] %v699
  %732 = vst [vmem:[%s6 + $0x38] sm:$0xf] %v700
  %733 = vst [vmem:[%s6 + $0x3c] sm:$0xf] %v701
  // Predicated region
  $region26: #{csp_down_block_forward.6} parent=0 // pred_check
    _
  $region27: #{csp_down_block_forward.6} parent=0 // pred_check_branch
    %735 = sbr.rel (0) target = $region29
  $region28: #{csp_down_block_forward.6} parent=0 // pred_region
    _
  $region29: #{csp_down_block_forward.6} parent=0 // pred_fallthru
    _
  // Predicated region
  $region30: #{csp_down_block_forward.6} parent=0 // pred_check
    _
  $region31: #{csp_down_block_forward.6} parent=0 // pred_check_branch
    %737 = sbr.rel (0) target = $region33
  $region32: #{csp_down_block_forward.6} parent=0 // pred_region
    _
  $region33: #{csp_down_block_forward.6} parent=0 // pred_fallthru
    _

// kernel: csp_down_block_forward.9
$region0: #{csp_down_block_forward.9}
  #allocation0 [shape = 'u32[]', space=smem, size = 0x4, offset = 0x4, fixed_abs, tag = 'smem constant byte address 0x4 - core index']
  #allocation1 [shape = 'u32[144,128]{1,0:T(1,128)}', space=vmem, size = 0x12000, scoped, tag = 'internal scratch']
  %s0 = inlined_call_operand.vmem [shape: bf16[128,128], index: 0, kind: input, shape index: {}]
  %s1 = inlined_call_operand.vmem [shape: bf16[128,128], index: 1, kind: input, shape index: {}]
  %s2 = inlined_call_operand.vmem [shape: bf16[128,128], index: 2, kind: input, shape index: {}]
  %s3 = inlined_call_operand.vmem [shape: f32[1,128], index: 3, kind: input, shape index: {}]
  %s4 = inlined_call_operand.vmem [shape: f32[1,128], index: 4, kind: input, shape index: {}]
  %s5 = inlined_call_operand.vmem [shape: bf16[128,8], index: 5, kind: input, shape index: {}]
  %s6 = inlined_call_operand.vmem [shape: bf16[128,8], index: 6, kind: input, shape index: {}]
  %s7 = inlined_call_operand.vmem [shape: f32[1,8], index: 7, kind: input, shape index: {}]
  %s8 = inlined_call_operand.vmem [shape: f32[1,8], index: 8, kind: input, shape index: {}]
  %s9 = inlined_call_operand.vmem [shape: f32[128,8], index: 9, kind: output, shape index: {}]
  %s10 = sld [smem:[#allocation0]]
  $region46: #{csp_down_block_forward.9} parent=0
    _
  %s12 = ssub.s32 1, %s10
  %s13 = scalar_select 0, %s12, %s10
  // Predicated region
  $region2: #{csp_down_block_forward.9} parent=0 // pred_check
    _
  $region3: #{csp_down_block_forward.9} parent=0 // pred_check_branch
    %15 = sbr.rel (0) target = $region5
  $region4: #{csp_down_block_forward.9} parent=0 // pred_region
    _
  $region5: #{csp_down_block_forward.9} parent=0 // pred_fallthru
    _
  // Predicated region
  $region6: #{csp_down_block_forward.9} parent=0 // pred_check
    _
  $region7: #{csp_down_block_forward.9} parent=0 // pred_check_branch
    %17 = sbr.rel (0) target = $region9
  $region8: #{csp_down_block_forward.9} parent=0 // pred_region
    _
  $region9: #{csp_down_block_forward.9} parent=0 // pred_fallthru
    _
  // Predicated region
  $region10: #{csp_down_block_forward.9} parent=0 // pred_check
    _
  $region11: #{csp_down_block_forward.9} parent=0 // pred_check_branch
    %19 = sbr.rel (0) target = $region13
  $region12: #{csp_down_block_forward.9} parent=0 // pred_region
    _
  $region13: #{csp_down_block_forward.9} parent=0 // pred_fallthru
    _
  // Predicated region
  $region14: #{csp_down_block_forward.9} parent=0 // pred_check
    _
  $region15: #{csp_down_block_forward.9} parent=0 // pred_check_branch
    %21 = sbr.rel (0) target = $region17
  $region16: #{csp_down_block_forward.9} parent=0 // pred_region
    _
  $region17: #{csp_down_block_forward.9} parent=0 // pred_fallthru
    _
  // Predicated region
  $region18: #{csp_down_block_forward.9} parent=0 // pred_check
    _
  $region19: #{csp_down_block_forward.9} parent=0 // pred_check_branch
    %23 = sbr.rel (0) target = $region21
  $region20: #{csp_down_block_forward.9} parent=0 // pred_region
    _
  $region21: #{csp_down_block_forward.9} parent=0 // pred_fallthru
    _
  // Predicated region
  $region22: #{csp_down_block_forward.9} parent=0 // pred_check
    _
  $region23: #{csp_down_block_forward.9} parent=0 // pred_check_branch
    %25 = sbr.rel (0) target = $region25
  $region24: #{csp_down_block_forward.9} parent=0 // pred_region
    _
  $region25: #{csp_down_block_forward.9} parent=0 // pred_fallthru
    _
  // Predicated region
  $region26: #{csp_down_block_forward.9} parent=0 // pred_check
    _
  $region27: #{csp_down_block_forward.9} parent=0 // pred_check_branch
    %27 = sbr.rel (0) target = $region29
  $region28: #{csp_down_block_forward.9} parent=0 // pred_region
    _
  $region29: #{csp_down_block_forward.9} parent=0 // pred_fallthru
    _
  // Predicated region
  $region30: #{csp_down_block_forward.9} parent=0 // pred_check
    _
  $region31: #{csp_down_block_forward.9} parent=0 // pred_check_branch
    %29 = sbr.rel (0) target = $region33
  $region32: #{csp_down_block_forward.9} parent=0 // pred_region
    _
  $region33: #{csp_down_block_forward.9} parent=0 // pred_fallthru
    _
  // Predicated region
  $region34: #{csp_down_block_forward.9} parent=0 // pred_check
    _
  $region35: #{csp_down_block_forward.9} parent=0 // pred_check_branch
    %31 = sbr.rel (0) target = $region37
  $region36: #{csp_down_block_forward.9} parent=0 // pred_region
    _
  $region37: #{csp_down_block_forward.9} parent=0 // pred_fallthru
    _
  %v33 = vld [vmem:[%s1] sm:$0xf]
  %v34 = vld [vmem:[%s1 + $0x4] sm:$0xf]
  %v35 = vld [vmem:[%s1 + $0x8] sm:$0xf]
  %v36 = vld [vmem:[%s1 + $0xc] sm:$0xf]
  %v37 = vld [vmem:[%s1 + $0x10] sm:$0xf]
  %v38 = vld [vmem:[%s1 + $0x14] sm:$0xf]
  %v39 = vld [vmem:[%s1 + $0x18] sm:$0xf]
  %v40 = vld [vmem:[%s1 + $0x1c] sm:$0xf]
  %v41 = vld [vmem:[%s1 + $0x20] sm:$0xf]
  %v42 = vld [vmem:[%s1 + $0x24] sm:$0xf]
  %v43 = vld [vmem:[%s1 + $0x28] sm:$0xf]
  %v44 = vld [vmem:[%s1 + $0x2c] sm:$0xf]
  %v45 = vld [vmem:[%s1 + $0x30] sm:$0xf]
  %v46 = vld [vmem:[%s1 + $0x34] sm:$0xf]
  %v47 = vld [vmem:[%s1 + $0x38] sm:$0xf]
  %v48 = vld [vmem:[%s1 + $0x3c] sm:$0xf]
  %v49 = vld [vmem:[%s2] sm:$0xf]
  %v50 = vld [vmem:[%s2 + $0x4] sm:$0xf]
  %v51 = vld [vmem:[%s2 + $0x8] sm:$0xf]
  %v52 = vld [vmem:[%s2 + $0xc] sm:$0xf]
  %v53 = vld [vmem:[%s2 + $0x10] sm:$0xf]
  %v54 = vld [vmem:[%s2 + $0x14] sm:$0xf]
  %v55 = vld [vmem:[%s2 + $0x18] sm:$0xf]
  %v56 = vld [vmem:[%s2 + $0x1c] sm:$0xf]
  %v57 = vld [vmem:[%s2 + $0x20] sm:$0xf]
  %v58 = vld [vmem:[%s2 + $0x24] sm:$0xf]
  %v59 = vld [vmem:[%s2 + $0x28] sm:$0xf]
  %v60 = vld [vmem:[%s2 + $0x2c] sm:$0xf]
  %v61 = vld [vmem:[%s2 + $0x30] sm:$0xf]
  %v62 = vld [vmem:[%s2 + $0x34] sm:$0xf]
  %v63 = vld [vmem:[%s2 + $0x38] sm:$0xf]
  %v64 = vld [vmem:[%s2 + $0x3c] sm:$0xf]
  %v81 = vunpack.c.l.b16 %v33
  %v82 = vunpack.c.l.b16 %v34
  %v83 = vunpack.c.l.b16 %v35
  %v84 = vunpack.c.l.b16 %v36
  %v85 = vunpack.c.l.b16 %v37
  %v86 = vunpack.c.l.b16 %v38
  %v87 = vunpack.c.l.b16 %v39
  %v88 = vunpack.c.l.b16 %v40
  %v89 = vunpack.c.l.b16 %v41
  %v90 = vunpack.c.l.b16 %v42
  %v91 = vunpack.c.l.b16 %v43
  %v92 = vunpack.c.l.b16 %v44
  %v93 = vunpack.c.l.b16 %v45
  %v94 = vunpack.c.l.b16 %v46
  %v95 = vunpack.c.l.b16 %v47
  %v96 = vunpack.c.l.b16 %v48
  %v97 = vpack.c.b16 %v82, %v81
  %v98 = vpack.c.b16 %v84, %v83
  %v99 = vpack.c.b16 %v86, %v85
  %v100 = vpack.c.b16 %v88, %v87
  %v101 = vpack.c.b16 %v90, %v89
  %v102 = vpack.c.b16 %v92, %v91
  %v103 = vpack.c.b16 %v94, %v93
  %v104 = vpack.c.b16 %v96, %v95
  %v129 = vunpack.c.l.b16 %v49
  %v130 = vunpack.c.l.b16 %v50
  %v131 = vunpack.c.l.b16 %v51
  %v132 = vunpack.c.l.b16 %v52
  %v133 = vunpack.c.l.b16 %v53
  %v134 = vunpack.c.l.b16 %v54
  %v135 = vunpack.c.l.b16 %v55
  %v136 = vunpack.c.l.b16 %v56
  %v137 = vunpack.c.l.b16 %v57
  %v138 = vunpack.c.l.b16 %v58
  %v139 = vunpack.c.l.b16 %v59
  %v140 = vunpack.c.l.b16 %v60
  %v141 = vunpack.c.l.b16 %v61
  %v142 = vunpack.c.l.b16 %v62
  %v143 = vunpack.c.l.b16 %v63
  %v144 = vunpack.c.l.b16 %v64
  %v145 = vpack.c.b16 %v130, %v129
  %v146 = vpack.c.b16 %v132, %v131
  %v147 = vpack.c.b16 %v134, %v133
  %v148 = vpack.c.b16 %v136, %v135
  %v149 = vpack.c.b16 %v138, %v137
  %v150 = vpack.c.b16 %v140, %v139
  %v151 = vpack.c.b16 %v142, %v141
  %v152 = vpack.c.b16 %v144, %v143
  %161 = vmatprep.subr.bf16.mxu0 0
  %162 = vmatpush1.bf16.msra.mxu0 %v145
  %163 = vmatprep.subr.bf16.mxu0 0
  %164 = vmatpush1.bf16.msra.mxu0 %v146
  %165 = vmatprep.subr.bf16.mxu0 0
  %166 = vmatpush1.bf16.msra.mxu0 %v147
  %167 = vmatprep.subr.bf16.mxu0 0
  %168 = vmatpush1.bf16.msra.mxu0 %v148
  %169 = vmatprep.subr.bf16.mxu0 0
  %170 = vmatpush1.bf16.msra.mxu0 %v149
  %171 = vmatprep.subr.bf16.mxu0 0
  %172 = vmatpush1.bf16.msra.mxu0 %v150
  %173 = vmatprep.subr.bf16.mxu0 0
  %174 = vmatpush1.bf16.msra.mxu0 %v151
  %175 = vmatprep.subr.bf16.mxu0 0
  %176 = vmatpush1.bf16.msra.mxu0 %v152
  %177 = vmatprep.subr.bf16.mxu0 0
  %178 = vmatpush1.bf16.msra.mxu0 0
  %179 = vmatprep.subr.bf16.mxu0 0
  %180 = vmatpush1.bf16.msra.mxu0 0
  %181 = vmatprep.subr.bf16.mxu0 0
  %182 = vmatpush1.bf16.msra.mxu0 0
  %183 = vmatprep.subr.bf16.mxu0 0
  %184 = vmatpush1.bf16.msra.mxu0 0
  %185 = vmatprep.subr.bf16.mxu0 0
  %186 = vmatpush1.bf16.msra.mxu0 0
  %187 = vmatprep.subr.bf16.mxu0 0
  %188 = vmatpush1.bf16.msra.mxu0 0
  %189 = vmatprep.subr.bf16.mxu0 0
  %190 = vmatpush1.bf16.msra.mxu0 0
  %191 = vmatprep.subr.bf16.mxu0 0
  %192 = vmatpush1.bf16.msra.mxu0 0
  %193 = vmatprep.mubr.bf16.mxu0 0
  %194 = vmatmul.mubr.bf16.gmra.mrb[0].mxu0 %v97
  %v195 = vpop.f32.mrb[0].mxu0
  %v196 = vadd.f32 0.0, %v195
  %v197 = vpop.f32.mrb[0].mxu0
  %v198 = vpop.f32.mrb[0].mxu0
  %v199 = vadd.f32 0.0, %v198
  %v200 = vpop.f32.mrb[0].mxu0
  %201 = vmatprep.mubr.bf16.mxu0 0
  %202 = vmatmul.mubr.bf16.gmra.mrb[0].mxu0 %v98
  %v203 = vpop.f32.mrb[0].mxu0
  %v204 = vadd.f32 0.0, %v203
  %v205 = vpop.f32.mrb[0].mxu0
  %v206 = vpop.f32.mrb[0].mxu0
  %v207 = vadd.f32 0.0, %v206
  %v208 = vpop.f32.mrb[0].mxu0
  %209 = vmatprep.mubr.bf16.mxu0 0
  %210 = vmatmul.mubr.bf16.gmra.mrb[0].mxu0 %v99
  %v211 = vpop.f32.mrb[0].mxu0
  %v212 = vadd.f32 0.0, %v211
  %v213 = vpop.f32.mrb[0].mxu0
  %v214 = vpop.f32.mrb[0].mxu0
  %v215 = vadd.f32 0.0, %v214
  %v216 = vpop.f32.mrb[0].mxu0
  %217 = vmatprep.mubr.bf16.mxu0 0
  %218 = vmatmul.mubr.bf16.gmra.mrb[0].mxu0 %v100
  %v219 = vpop.f32.mrb[0].mxu0
  %v220 = vadd.f32 0.0, %v219
  %v221 = vpop.f32.mrb[0].mxu0
  %v222 = vpop.f32.mrb[0].mxu0
  %v223 = vadd.f32 0.0, %v222
  %v224 = vpop.f32.mrb[0].mxu0
  %225 = vmatprep.mubr.bf16.mxu0 0
  %226 = vmatmul.mubr.bf16.gmra.mrb[0].mxu0 %v101
  %v227 = vpop.f32.mrb[0].mxu0
  %v228 = vadd.f32 0.0, %v227
  %v229 = vpop.f32.mrb[0].mxu0
  %v230 = vpop.f32.mrb[0].mxu0
  %v231 = vadd.f32 0.0, %v230
  %v232 = vpop.f32.mrb[0].mxu0
  %233 = vmatprep.mubr.bf16.mxu0 0
  %234 = vmatmul.mubr.bf16.gmra.mrb[0].mxu0 %v102
  %v235 = vpop.f32.mrb[0].mxu0
  %v236 = vadd.f32 0.0, %v235
  %v237 = vpop.f32.mrb[0].mxu0
  %v238 = vpop.f32.mrb[0].mxu0
  %v239 = vadd.f32 0.0, %v238
  %v240 = vpop.f32.mrb[0].mxu0
  %241 = vmatprep.mubr.bf16.mxu0 0
  %242 = vmatmul.mubr.bf16.gmra.mrb[0].mxu0 %v103
  %v243 = vpop.f32.mrb[0].mxu0
  %v244 = vadd.f32 0.0, %v243
  %v245 = vpop.f32.mrb[0].mxu0
  %v246 = vpop.f32.mrb[0].mxu0
  %v247 = vadd.f32 0.0, %v246
  %v248 = vpop.f32.mrb[0].mxu0
  %249 = vmatprep.mubr.bf16.mxu0 0
  %250 = vmatmul.mubr.bf16.gmra.mrb[0].mxu0 %v104
  %v251 = vpop.f32.mrb[0].mxu0
  %v252 = vadd.f32 0.0, %v251
  %v253 = vpop.f32.mrb[0].mxu0
  %v254 = vpop.f32.mrb[0].mxu0
  %v255 = vadd.f32 0.0, %v254
  %v256 = vpop.f32.mrb[0].mxu0
  %257 = vdwg.mxu0
  %v258 = vld [vmem:[%s3] sm:$0x1]
  %v260 = vlaneseq
  %v261 = vshrl.u32 %v260, 7
  %v262 = vsub.s32 0, %v261
  %v263 = vrot.slane %v258, %v262
  %v265 = vmul.f32 %v196, %v263
  %v266 = vmul.f32 %v199, %v263
  %v267 = vmul.f32 %v204, %v263
  %v268 = vmul.f32 %v207, %v263
  %v269 = vmul.f32 %v212, %v263
  %v270 = vmul.f32 %v215, %v263
  %v271 = vmul.f32 %v220, %v263
  %v272 = vmul.f32 %v223, %v263
  %v273 = vmul.f32 %v228, %v263
  %v274 = vmul.f32 %v231, %v263
  %v275 = vmul.f32 %v236, %v263
  %v276 = vmul.f32 %v239, %v263
  %v277 = vmul.f32 %v244, %v263
  %v278 = vmul.f32 %v247, %v263
  %v279 = vmul.f32 %v252, %v263
  %v280 = vmul.f32 %v255, %v263
  %v281 = vld [vmem:[%s4] sm:$0x1]
  %v283 = vlaneseq
  %v284 = vshrl.u32 %v283, 7
  %v285 = vsub.s32 0, %v284
  %v286 = vrot.slane %v281, %v285
  %v288 = vadd.f32 %v265, %v286
  %v289 = vadd.f32 %v266, %v286
  %v290 = vadd.f32 %v267, %v286
  %v291 = vadd.f32 %v268, %v286
  %v292 = vadd.f32 %v269, %v286
  %v293 = vadd.f32 %v270, %v286
  %v294 = vadd.f32 %v271, %v286
  %v295 = vadd.f32 %v272, %v286
  %v296 = vadd.f32 %v273, %v286
  %v297 = vadd.f32 %v274, %v286
  %v298 = vadd.f32 %v275, %v286
  %v299 = vadd.f32 %v276, %v286
  %v300 = vadd.f32 %v277, %v286
  %v301 = vadd.f32 %v278, %v286
  %v302 = vadd.f32 %v279, %v286
  %v303 = vadd.f32 %v280, %v286
  %v304 = vmin.f32 %v288, 20.0
  %v305 = vmin.f32 %v289, 20.0
  %v306 = vmin.f32 %v290, 20.0
  %v307 = vmin.f32 %v291, 20.0
  %v308 = vmin.f32 %v292, 20.0
  %v309 = vmin.f32 %v293, 20.0
  %v310 = vmin.f32 %v294, 20.0
  %v311 = vmin.f32 %v295, 20.0
  %v312 = vmin.f32 %v296, 20.0
  %v313 = vmin.f32 %v297, 20.0
  %v314 = vmin.f32 %v298, 20.0
  %v315 = vmin.f32 %v299, 20.0
  %v316 = vmin.f32 %v300, 20.0
  %v317 = vmin.f32 %v301, 20.0
  %v318 = vmin.f32 %v302, 20.0
  %v319 = vmin.f32 %v303, 20.0
  %v320 = vmul.f32 %v304, 1.442695
  %v321 = vpow.pop %v320
  %v322 = vmul.f32 %v305, 1.442695
  %v323 = vpow.pop %v322
  %v324 = vmul.f32 %v306, 1.442695
  %v325 = vpow.pop %v324
  %v326 = vmul.f32 %v307, 1.442695
  %v327 = vpow.pop %v326
  %v328 = vmul.f32 %v308, 1.442695
  %v329 = vpow.pop %v328
  %v330 = vmul.f32 %v309, 1.442695
  %v331 = vpow.pop %v330
  %v332 = vmul.f32 %v310, 1.442695
  %v333 = vpow.pop %v332
  %v334 = vmul.f32 %v311, 1.442695
  %v335 = vpow.pop %v334
  %v336 = vmul.f32 %v312, 1.442695
  %v337 = vpow.pop %v336
  %v338 = vmul.f32 %v313, 1.442695
  %v339 = vpow.pop %v338
  %v340 = vmul.f32 %v314, 1.442695
  %v341 = vpow.pop %v340
  %v342 = vmul.f32 %v315, 1.442695
  %v343 = vpow.pop %v342
  %v344 = vmul.f32 %v316, 1.442695
  %v345 = vpow.pop %v344
  %v346 = vmul.f32 %v317, 1.442695
  %v347 = vpow.pop %v346
  %v348 = vmul.f32 %v318, 1.442695
  %v349 = vpow.pop %v348
  %v350 = vmul.f32 %v319, 1.442695
  %v351 = vpow.pop %v350
  %v352 = vadd.f32 %v321, 2.0
  %v353 = vadd.f32 %v323, 2.0
  %v354 = vadd.f32 %v325, 2.0
  %v355 = vadd.f32 %v327, 2.0
  %v356 = vadd.f32 %v329, 2.0
  %v357 = vadd.f32 %v331, 2.0
  %v358 = vadd.f32 %v333, 2.0
  %v359 = vadd.f32 %v335, 2.0
  %v360 = vadd.f32 %v337, 2.0
  %v361 = vadd.f32 %v339, 2.0
  %v362 = vadd.f32 %v341, 2.0
  %v363 = vadd.f32 %v343, 2.0
  %v364 = vadd.f32 %v345, 2.0
  %v365 = vadd.f32 %v347, 2.0
  %v366 = vadd.f32 %v349, 2.0
  %v367 = vadd.f32 %v351, 2.0
  %v368 = vmul.f32 %v321, %v352
  %v369 = vmul.f32 %v323, %v353
  %v370 = vmul.f32 %v325, %v354
  %v371 = vmul.f32 %v327, %v355
  %v372 = vmul.f32 %v329, %v356
  %v373 = vmul.f32 %v331, %v357
  %v374 = vmul.f32 %v333, %v358
  %v375 = vmul.f32 %v335, %v359
  %v376 = vmul.f32 %v337, %v360
  %v377 = vmul.f32 %v339, %v361
  %v378 = vmul.f32 %v341, %v362
  %v379 = vmul.f32 %v343, %v363
  %v380 = vmul.f32 %v345, %v364
  %v381 = vmul.f32 %v347, %v365
  %v382 = vmul.f32 %v349, %v366
  %v383 = vmul.f32 %v351, %v367
  %v384 = vadd.f32 %v368, 2.0
  %v385 = vadd.f32 %v369, 2.0
  %v386 = vadd.f32 %v370, 2.0
  %v387 = vadd.f32 %v371, 2.0
  %v388 = vadd.f32 %v372, 2.0
  %v389 = vadd.f32 %v373, 2.0
  %v390 = vadd.f32 %v374, 2.0
  %v391 = vadd.f32 %v375, 2.0
  %v392 = vadd.f32 %v376, 2.0
  %v393 = vadd.f32 %v377, 2.0
  %v394 = vadd.f32 %v378, 2.0
  %v395 = vadd.f32 %v379, 2.0
  %v396 = vadd.f32 %v380, 2.0
  %v397 = vadd.f32 %v381, 2.0
  %v398 = vadd.f32 %v382, 2.0
  %v399 = vadd.f32 %v383, 2.0
  %v400 = vrcp.pop %v384
  %v401 = vrcp.pop %v385
  %v402 = vrcp.pop %v386
  %v403 = vrcp.pop %v387
  %v404 = vrcp.pop %v388
  %v405 = vrcp.pop %v389
  %v406 = vrcp.pop %v390
  %v407 = vrcp.pop %v391
  %v408 = vrcp.pop %v392
  %v409 = vrcp.pop %v393
  %v410 = vrcp.pop %v394
  %v411 = vrcp.pop %v395
  %v412 = vrcp.pop %v396
  %v413 = vrcp.pop %v397
  %v414 = vrcp.pop %v398
  %v415 = vrcp.pop %v399
  %v416 = vmul.f32 %v368, %v400
  %v417 = vmul.f32 %v369, %v401
  %v418 = vmul.f32 %v370, %v402
  %v419 = vmul.f32 %v371, %v403
  %v420 = vmul.f32 %v372, %v404
  %v421 = vmul.f32 %v373, %v405
  %v422 = vmul.f32 %v374, %v406
  %v423 = vmul.f32 %v375, %v407
  %v424 = vmul.f32 %v376, %v408
  %v425 = vmul.f32 %v377, %v409
  %v426 = vmul.f32 %v378, %v410
  %v427 = vmul.f32 %v379, %v411
  %v428 = vmul.f32 %v380, %v412
  %v429 = vmul.f32 %v381, %v413
  %v430 = vmul.f32 %v382, %v414
  %v431 = vmul.f32 %v383, %v415
  %vm432 = vcmp.gt.f32.partialorder %v288, 20.0
  %vm433 = vcmp.gt.f32.partialorder %v289, 20.0
  %vm434 = vcmp.gt.f32.partialorder %v290, 20.0
  %vm435 = vcmp.gt.f32.partialorder %v291, 20.0
  %vm436 = vcmp.gt.f32.partialorder %v292, 20.0
  %vm437 = vcmp.gt.f32.partialorder %v293, 20.0
  %vm438 = vcmp.gt.f32.partialorder %v294, 20.0
  %vm439 = vcmp.gt.f32.partialorder %v295, 20.0
  %vm440 = vcmp.gt.f32.partialorder %v296, 20.0
  %vm441 = vcmp.gt.f32.partialorder %v297, 20.0
  %vm442 = vcmp.gt.f32.partialorder %v298, 20.0
  %vm443 = vcmp.gt.f32.partialorder %v299, 20.0
  %vm444 = vcmp.gt.f32.partialorder %v300, 20.0
  %vm445 = vcmp.gt.f32.partialorder %v301, 20.0
  %vm446 = vcmp.gt.f32.partialorder %v302, 20.0
  %vm447 = vcmp.gt.f32.partialorder %v303, 20.0
  %v448 = vsel %vm432, 1.0, %v416
  %v449 = vsel %vm433, 1.0, %v417
  %v450 = vsel %vm434, 1.0, %v418
  %v451 = vsel %vm435, 1.0, %v419
  %v452 = vsel %vm436, 1.0, %v420
  %v453 = vsel %vm437, 1.0, %v421
  %v454 = vsel %vm438, 1.0, %v422
  %v455 = vsel %vm439, 1.0, %v423
  %v456 = vsel %vm440, 1.0, %v424
  %v457 = vsel %vm441, 1.0, %v425
  %v458 = vsel %vm442, 1.0, %v426
  %v459 = vsel %vm443, 1.0, %v427
  %v460 = vsel %vm444, 1.0, %v428
  %v461 = vsel %vm445, 1.0, %v429
  %v462 = vsel %vm446, 1.0, %v430
  %v463 = vsel %vm447, 1.0, %v431
  %v464 = vmul.f32 %v288, %v448
  %v465 = vmul.f32 %v289, %v449
  %v466 = vmul.f32 %v290, %v450
  %v467 = vmul.f32 %v291, %v451
  %v468 = vmul.f32 %v292, %v452
  %v469 = vmul.f32 %v293, %v453
  %v470 = vmul.f32 %v294, %v454
  %v471 = vmul.f32 %v295, %v455
  %v472 = vmul.f32 %v296, %v456
  %v473 = vmul.f32 %v297, %v457
  %v474 = vmul.f32 %v298, %v458
  %v475 = vmul.f32 %v299, %v459
  %v476 = vmul.f32 %v300, %v460
  %v477 = vmul.f32 %v301, %v461
  %v478 = vmul.f32 %v302, %v462
  %v479 = vmul.f32 %v303, %v463
  %v480 = vld [vmem:[%s0] sm:$0xf]
  %v481 = vld [vmem:[%s0 + $0x4] sm:$0xf]
  %v482 = vld [vmem:[%s0 + $0x8] sm:$0xf]
  %v483 = vld [vmem:[%s0 + $0xc] sm:$0xf]
  %v484 = vld [vmem:[%s0 + $0x10] sm:$0xf]
  %v485 = vld [vmem:[%s0 + $0x14] sm:$0xf]
  %v486 = vld [vmem:[%s0 + $0x18] sm:$0xf]
  %v487 = vld [vmem:[%s0 + $0x1c] sm:$0xf]
  %v488 = vld [vmem:[%s0 + $0x20] sm:$0xf]
  %v489 = vld [vmem:[%s0 + $0x24] sm:$0xf]
  %v490 = vld [vmem:[%s0 + $0x28] sm:$0xf]
  %v491 = vld [vmem:[%s0 + $0x2c] sm:$0xf]
  %v492 = vld [vmem:[%s0 + $0x30] sm:$0xf]
  %v493 = vld [vmem:[%s0 + $0x34] sm:$0xf]
  %v494 = vld [vmem:[%s0 + $0x38] sm:$0xf]
  %v495 = vld [vmem:[%s0 + $0x3c] sm:$0xf]
  %v496 = vld [vmem:[%s5] sm:$0xf]
  %v497 = vld [vmem:[%s5 + $0x4] sm:$0xf]
  %v498 = vld [vmem:[%s5 + $0x8] sm:$0xf]
  %v499 = vld [vmem:[%s5 + $0xc] sm:$0xf]
  %v500 = vld [vmem:[%s5 + $0x10] sm:$0xf]
  %v501 = vld [vmem:[%s5 + $0x14] sm:$0xf]
  %v502 = vld [vmem:[%s5 + $0x18] sm:$0xf]
  %v503 = vld [vmem:[%s5 + $0x1c] sm:$0xf]
  %v504 = vld [vmem:[%s5 + $0x20] sm:$0xf]
  %v505 = vld [vmem:[%s5 + $0x24] sm:$0xf]
  %v506 = vld [vmem:[%s5 + $0x28] sm:$0xf]
  %v507 = vld [vmem:[%s5 + $0x2c] sm:$0xf]
  %v508 = vld [vmem:[%s5 + $0x30] sm:$0xf]
  %v509 = vld [vmem:[%s5 + $0x34] sm:$0xf]
  %v510 = vld [vmem:[%s5 + $0x38] sm:$0xf]
  %v511 = vld [vmem:[%s5 + $0x3c] sm:$0xf]
  %v512 = vpack.c.bf16 %v465, %v464
  %v513 = vpack.c.bf16 %v467, %v466
  %v514 = vpack.c.bf16 %v469, %v468
  %v515 = vpack.c.bf16 %v471, %v470
  %v516 = vpack.c.bf16 %v473, %v472
  %v517 = vpack.c.bf16 %v475, %v474
  %v518 = vpack.c.bf16 %v477, %v476
  %v519 = vpack.c.bf16 %v479, %v478
  %v520 = vld [vmem:[%s6] sm:$0xf]
  %v521 = vld [vmem:[%s6 + $0x4] sm:$0xf]
  %v522 = vld [vmem:[%s6 + $0x8] sm:$0xf]
  %v523 = vld [vmem:[%s6 + $0xc] sm:$0xf]
  %v524 = vld [vmem:[%s6 + $0x10] sm:$0xf]
  %v525 = vld [vmem:[%s6 + $0x14] sm:$0xf]
  %v526 = vld [vmem:[%s6 + $0x18] sm:$0xf]
  %v527 = vld [vmem:[%s6 + $0x1c] sm:$0xf]
  %v528 = vld [vmem:[%s6 + $0x20] sm:$0xf]
  %v529 = vld [vmem:[%s6 + $0x24] sm:$0xf]
  %v530 = vld [vmem:[%s6 + $0x28] sm:$0xf]
  %v531 = vld [vmem:[%s6 + $0x2c] sm:$0xf]
  %v532 = vld [vmem:[%s6 + $0x30] sm:$0xf]
  %v533 = vld [vmem:[%s6 + $0x34] sm:$0xf]
  %v534 = vld [vmem:[%s6 + $0x38] sm:$0xf]
  %v535 = vld [vmem:[%s6 + $0x3c] sm:$0xf]
  %v552 = vunpack.c.l.b16 %v520
  %v553 = vunpack.c.l.b16 %v521
  %v554 = vunpack.c.l.b16 %v522
  %v555 = vunpack.c.l.b16 %v523
  %v556 = vunpack.c.l.b16 %v524
  %v557 = vunpack.c.l.b16 %v525
  %v558 = vunpack.c.l.b16 %v526
  %v559 = vunpack.c.l.b16 %v527
  %v560 = vunpack.c.l.b16 %v528
  %v561 = vunpack.c.l.b16 %v529
  %v562 = vunpack.c.l.b16 %v530
  %v563 = vunpack.c.l.b16 %v531
  %v564 = vunpack.c.l.b16 %v532
  %v565 = vunpack.c.l.b16 %v533
  %v566 = vunpack.c.l.b16 %v534
  %v567 = vunpack.c.l.b16 %v535
  %v568 = vpack.c.b16 %v553, %v552
  %v569 = vpack.c.b16 %v555, %v554
  %v570 = vpack.c.b16 %v557, %v556
  %v571 = vpack.c.b16 %v559, %v558
  %v572 = vpack.c.b16 %v561, %v560
  %v573 = vpack.c.b16 %v563, %v562
  %v574 = vpack.c.b16 %v565, %v564
  %v575 = vpack.c.b16 %v567, %v566
  %584 = vmatprep.subr.bf16.mxu0 0
  %585 = vmatpush1.bf16.msra.mxu0 %v568
  %586 = vmatprep.subr.bf16.mxu0 0
  %587 = vmatpush1.bf16.msra.mxu0 %v569
  %588 = vmatprep.subr.bf16.mxu0 0
  %589 = vmatpush1.bf16.msra.mxu0 %v570
  %590 = vmatprep.subr.bf16.mxu0 0
  %591 = vmatpush1.bf16.msra.mxu0 %v571
  %592 = vmatprep.subr.bf16.mxu0 0
  %593 = vmatpush1.bf16.msra.mxu0 %v572
  %594 = vmatprep.subr.bf16.mxu0 0
  %595 = vmatpush1.bf16.msra.mxu0 %v573
  %596 = vmatprep.subr.bf16.mxu0 0
  %597 = vmatpush1.bf16.msra.mxu0 %v574
  %598 = vmatprep.subr.bf16.mxu0 0
  %599 = vmatpush1.bf16.msra.mxu0 %v575
  %600 = vmatprep.subr.bf16.mxu0 0
  %601 = vmatpush1.bf16.msra.mxu0 0
  %602 = vmatprep.subr.bf16.mxu0 0
  %603 = vmatpush1.bf16.msra.mxu0 0
  %604 = vmatprep.subr.bf16.mxu0 0
  %605 = vmatpush1.bf16.msra.mxu0 0
  %606 = vmatprep.subr.bf16.mxu0 0
  %607 = vmatpush1.bf16.msra.mxu0 0
  %608 = vmatprep.subr.bf16.mxu0 0
  %609 = vmatpush1.bf16.msra.mxu0 0
  %610 = vmatprep.subr.bf16.mxu0 0
  %611 = vmatpush1.bf16.msra.mxu0 0
  %612 = vmatprep.subr.bf16.mxu0 0
  %613 = vmatpush1.bf16.msra.mxu0 0
  %614 = vmatprep.subr.bf16.mxu0 0
  %615 = vmatpush1.bf16.msra.mxu0 0
  %616 = vmatprep.mubr.bf16.mxu0 0
  %617 = vmatmul.mubr.bf16.gmra.mrb[0].mxu0 %v512
  %v618 = vpop.f32.mrb[0].mxu0
  %v619 = vadd.f32 0.0, %v618
  %v620 = vpop.f32.mrb[0].mxu0
  %v621 = vpop.f32.mrb[0].mxu0
  %v622 = vadd.f32 0.0, %v621
  %v623 = vpop.f32.mrb[0].mxu0
  %624 = vmatprep.mubr.bf16.mxu0 0
  %625 = vmatmul.mubr.bf16.gmra.mrb[0].mxu0 %v513
  %v626 = vpop.f32.mrb[0].mxu0
  %v627 = vadd.f32 0.0, %v626
  %v628 = vpop.f32.mrb[0].mxu0
  %v629 = vpop.f32.mrb[0].mxu0
  %v630 = vadd.f32 0.0, %v629
  %v631 = vpop.f32.mrb[0].mxu0
  %632 = vmatprep.mubr.bf16.mxu0 0
  %633 = vmatmul.mubr.bf16.gmra.mrb[0].mxu0 %v514
  %v634 = vpop.f32.mrb[0].mxu0
  %v635 = vadd.f32 0.0, %v634
  %v636 = vpop.f32.mrb[0].mxu0
  %v637 = vpop.f32.mrb[0].mxu0
  %v638 = vadd.f32 0.0, %v637
  %v639 = vpop.f32.mrb[0].mxu0
  %640 = vmatprep.mubr.bf16.mxu0 0
  %641 = vmatmul.mubr.bf16.gmra.mrb[0].mxu0 %v515
  %v642 = vpop.f32.mrb[0].mxu0
  %v643 = vadd.f32 0.0, %v642
  %v644 = vpop.f32.mrb[0].mxu0
  %v645 = vpop.f32.mrb[0].mxu0
  %v646 = vadd.f32 0.0, %v645
  %v647 = vpop.f32.mrb[0].mxu0
  %648 = vmatprep.mubr.bf16.mxu0 0
  %649 = vmatmul.mubr.bf16.gmra.mrb[0].mxu0 %v516
  %v650 = vpop.f32.mrb[0].mxu0
  %v651 = vadd.f32 0.0, %v650
  %v652 = vpop.f32.mrb[0].mxu0
  %v653 = vpop.f32.mrb[0].mxu0
  %v654 = vadd.f32 0.0, %v653
  %v655 = vpop.f32.mrb[0].mxu0
  %656 = vmatprep.mubr.bf16.mxu0 0
  %657 = vmatmul.mubr.bf16.gmra.mrb[0].mxu0 %v517
  %v658 = vpop.f32.mrb[0].mxu0
  %v659 = vadd.f32 0.0, %v658
  %v660 = vpop.f32.mrb[0].mxu0
  %v661 = vpop.f32.mrb[0].mxu0
  %v662 = vadd.f32 0.0, %v661
  %v663 = vpop.f32.mrb[0].mxu0
  %664 = vmatprep.mubr.bf16.mxu0 0
  %665 = vmatmul.mubr.bf16.gmra.mrb[0].mxu0 %v518
  %v666 = vpop.f32.mrb[0].mxu0
  %v667 = vadd.f32 0.0, %v666
  %v668 = vpop.f32.mrb[0].mxu0
  %v669 = vpop.f32.mrb[0].mxu0
  %v670 = vadd.f32 0.0, %v669
  %v671 = vpop.f32.mrb[0].mxu0
  %672 = vmatprep.mubr.bf16.mxu0 0
  %673 = vmatmul.mubr.bf16.gmra.mrb[0].mxu0 %v519
  %v674 = vpop.f32.mrb[0].mxu0
  %v675 = vadd.f32 0.0, %v674
  %v676 = vpop.f32.mrb[0].mxu0
  %v677 = vpop.f32.mrb[0].mxu0
  %v678 = vadd.f32 0.0, %v677
  %v679 = vpop.f32.mrb[0].mxu0
  %680 = vdwg.mxu0
  %v697 = vunpack.c.l.b16 %v480
  %v698 = vunpack.c.l.b16 %v481
  %v699 = vunpack.c.l.b16 %v482
  %v700 = vunpack.c.l.b16 %v483
  %v701 = vunpack.c.l.b16 %v484
  %v702 = vunpack.c.l.b16 %v485
  %v703 = vunpack.c.l.b16 %v486
  %v704 = vunpack.c.l.b16 %v487
  %v705 = vunpack.c.l.b16 %v488
  %v706 = vunpack.c.l.b16 %v489
  %v707 = vunpack.c.l.b16 %v490
  %v708 = vunpack.c.l.b16 %v491
  %v709 = vunpack.c.l.b16 %v492
  %v710 = vunpack.c.l.b16 %v493
  %v711 = vunpack.c.l.b16 %v494
  %v712 = vunpack.c.l.b16 %v495
  %v713 = vpack.c.b16 %v698, %v697
  %v714 = vpack.c.b16 %v700, %v699
  %v715 = vpack.c.b16 %v702, %v701
  %v716 = vpack.c.b16 %v704, %v703
  %v717 = vpack.c.b16 %v706, %v705
  %v718 = vpack.c.b16 %v708, %v707
  %v719 = vpack.c.b16 %v710, %v709
  %v720 = vpack.c.b16 %v712, %v711
  %v745 = vunpack.c.l.b16 %v496
  %v746 = vunpack.c.l.b16 %v497
  %v747 = vunpack.c.l.b16 %v498
  %v748 = vunpack.c.l.b16 %v499
  %v749 = vunpack.c.l.b16 %v500
  %v750 = vunpack.c.l.b16 %v501
  %v751 = vunpack.c.l.b16 %v502
  %v752 = vunpack.c.l.b16 %v503
  %v753 = vunpack.c.l.b16 %v504
  %v754 = vunpack.c.l.b16 %v505
  %v755 = vunpack.c.l.b16 %v506
  %v756 = vunpack.c.l.b16 %v507
  %v757 = vunpack.c.l.b16 %v508
  %v758 = vunpack.c.l.b16 %v509
  %v759 = vunpack.c.l.b16 %v510
  %v760 = vunpack.c.l.b16 %v511
  %v761 = vpack.c.b16 %v746, %v745
  %v762 = vpack.c.b16 %v748, %v747
  %v763 = vpack.c.b16 %v750, %v749
  %v764 = vpack.c.b16 %v752, %v751
  %v765 = vpack.c.b16 %v754, %v753
  %v766 = vpack.c.b16 %v756, %v755
  %v767 = vpack.c.b16 %v758, %v757
  %v768 = vpack.c.b16 %v760, %v759
  %777 = vmatprep.subr.bf16.mxu0 0
  %778 = vmatpush1.bf16.msra.mxu0 %v761
  %779 = vmatprep.subr.bf16.mxu0 0
  %780 = vmatpush1.bf16.msra.mxu0 %v762
  %781 = vmatprep.subr.bf16.mxu0 0
  %782 = vmatpush1.bf16.msra.mxu0 %v763
  %783 = vmatprep.subr.bf16.mxu0 0
  %784 = vmatpush1.bf16.msra.mxu0 %v764
  %785 = vmatprep.subr.bf16.mxu0 0
  %786 = vmatpush1.bf16.msra.mxu0 %v765
  %787 = vmatprep.subr.bf16.mxu0 0
  %788 = vmatpush1.bf16.msra.mxu0 %v766
  %789 = vmatprep.subr.bf16.mxu0 0
  %790 = vmatpush1.bf16.msra.mxu0 %v767
  %791 = vmatprep.subr.bf16.mxu0 0
  %792 = vmatpush1.bf16.msra.mxu0 %v768
  %793 = vmatprep.subr.bf16.mxu0 0
  %794 = vmatpush1.bf16.msra.mxu0 0
  %795 = vmatprep.subr.bf16.mxu0 0
  %796 = vmatpush1.bf16.msra.mxu0 0
  %797 = vmatprep.subr.bf16.mxu0 0
  %798 = vmatpush1.bf16.msra.mxu0 0
  %799 = vmatprep.subr.bf16.mxu0 0
  %800 = vmatpush1.bf16.msra.mxu0 0
  %801 = vmatprep.subr.bf16.mxu0 0
  %802 = vmatpush1.bf16.msra.mxu0 0
  %803 = vmatprep.subr.bf16.mxu0 0
  %804 = vmatpush1.bf16.msra.mxu0 0
  %805 = vmatprep.subr.bf16.mxu0 0
  %806 = vmatpush1.bf16.msra.mxu0 0
  %807 = vmatprep.subr.bf16.mxu0 0
  %808 = vmatpush1.bf16.msra.mxu0 0
  %809 = vmatprep.mubr.bf16.mxu0 0
  %810 = vmatmul.mubr.bf16.gmra.mrb[0].mxu0 %v713
  %v811 = vpop.f32.mrb[0].mxu0
  %v812 = vadd.f32 %v619, %v811
  %v813 = vpop.f32.mrb[0].mxu0
  %v814 = vpop.f32.mrb[0].mxu0
  %v815 = vadd.f32 %v622, %v814
  %v816 = vpop.f32.mrb[0].mxu0
  %817 = vmatprep.mubr.bf16.mxu0 0
  %818 = vmatmul.mubr.bf16.gmra.mrb[0].mxu0 %v714
  %v819 = vpop.f32.mrb[0].mxu0
  %v820 = vadd.f32 %v627, %v819
  %v821 = vpop.f32.mrb[0].mxu0
  %v822 = vpop.f32.mrb[0].mxu0
  %v823 = vadd.f32 %v630, %v822
  %v824 = vpop.f32.mrb[0].mxu0
  %825 = vmatprep.mubr.bf16.mxu0 0
  %826 = vmatmul.mubr.bf16.gmra.mrb[0].mxu0 %v715
  %v827 = vpop.f32.mrb[0].mxu0
  %v828 = vadd.f32 %v635, %v827
  %v829 = vpop.f32.mrb[0].mxu0
  %v830 = vpop.f32.mrb[0].mxu0
  %v831 = vadd.f32 %v638, %v830
  %v832 = vpop.f32.mrb[0].mxu0
  %833 = vmatprep.mubr.bf16.mxu0 0
  %834 = vmatmul.mubr.bf16.gmra.mrb[0].mxu0 %v716
  %v835 = vpop.f32.mrb[0].mxu0
  %v836 = vadd.f32 %v643, %v835
  %v837 = vpop.f32.mrb[0].mxu0
  %v838 = vpop.f32.mrb[0].mxu0
  %v839 = vadd.f32 %v646, %v838
  %v840 = vpop.f32.mrb[0].mxu0
  %841 = vmatprep.mubr.bf16.mxu0 0
  %842 = vmatmul.mubr.bf16.gmra.mrb[0].mxu0 %v717
  %v843 = vpop.f32.mrb[0].mxu0
  %v844 = vadd.f32 %v651, %v843
  %v845 = vpop.f32.mrb[0].mxu0
  %v846 = vpop.f32.mrb[0].mxu0
  %v847 = vadd.f32 %v654, %v846
  %v848 = vpop.f32.mrb[0].mxu0
  %849 = vmatprep.mubr.bf16.mxu0 0
  %850 = vmatmul.mubr.bf16.gmra.mrb[0].mxu0 %v718
  %v851 = vpop.f32.mrb[0].mxu0
  %v852 = vadd.f32 %v659, %v851
  %v853 = vpop.f32.mrb[0].mxu0
  %v854 = vpop.f32.mrb[0].mxu0
  %v855 = vadd.f32 %v662, %v854
  %v856 = vpop.f32.mrb[0].mxu0
  %857 = vmatprep.mubr.bf16.mxu0 0
  %858 = vmatmul.mubr.bf16.gmra.mrb[0].mxu0 %v719
  %v859 = vpop.f32.mrb[0].mxu0
  %v860 = vadd.f32 %v667, %v859
  %v861 = vpop.f32.mrb[0].mxu0
  %v862 = vpop.f32.mrb[0].mxu0
  %v863 = vadd.f32 %v670, %v862
  %v864 = vpop.f32.mrb[0].mxu0
  %865 = vmatprep.mubr.bf16.mxu0 0
  %866 = vmatmul.mubr.bf16.gmra.mrb[0].mxu0 %v720
  %v867 = vpop.f32.mrb[0].mxu0
  %v868 = vadd.f32 %v675, %v867
  %v869 = vpop.f32.mrb[0].mxu0
  %v870 = vpop.f32.mrb[0].mxu0
  %v871 = vadd.f32 %v678, %v870
  %v872 = vpop.f32.mrb[0].mxu0
  %873 = vdwg.mxu0
  %v874 = vld [vmem:[%s7] sm:$0x1]
  %v876 = vlaneseq
  %v877 = vshrl.u32 %v876, 7
  %v878 = vsub.s32 0, %v877
  %v879 = vrot.slane %v874, %v878
  %v881 = vmul.f32 %v812, %v879
  %v882 = vmul.f32 %v815, %v879
  %v883 = vmul.f32 %v820, %v879
  %v884 = vmul.f32 %v823, %v879
  %v885 = vmul.f32 %v828, %v879
  %v886 = vmul.f32 %v831, %v879
  %v887 = vmul.f32 %v836, %v879
  %v888 = vmul.f32 %v839, %v879
  %v889 = vmul.f32 %v844, %v879
  %v890 = vmul.f32 %v847, %v879
  %v891 = vmul.f32 %v852, %v879
  %v892 = vmul.f32 %v855, %v879
  %v893 = vmul.f32 %v860, %v879
  %v894 = vmul.f32 %v863, %v879
  %v895 = vmul.f32 %v868, %v879
  %v896 = vmul.f32 %v871, %v879
  %v897 = vld [vmem:[%s8] sm:$0x1]
  %v899 = vlaneseq
  %v900 = vshrl.u32 %v899, 7
  %v901 = vsub.s32 0, %v900
  %v902 = vrot.slane %v897, %v901
  %v904 = vadd.f32 %v881, %v902
  %v905 = vadd.f32 %v882, %v902
  %v906 = vadd.f32 %v883, %v902
  %v907 = vadd.f32 %v884, %v902
  %v908 = vadd.f32 %v885, %v902
  %v909 = vadd.f32 %v886, %v902
  %v910 = vadd.f32 %v887, %v902
  %v911 = vadd.f32 %v888, %v902
  %v912 = vadd.f32 %v889, %v902
  %v913 = vadd.f32 %v890, %v902
  %v914 = vadd.f32 %v891, %v902
  %v915 = vadd.f32 %v892, %v902
  %v916 = vadd.f32 %v893, %v902
  %v917 = vadd.f32 %v894, %v902
  %v918 = vadd.f32 %v895, %v902
  %v919 = vadd.f32 %v896, %v902
  %v920 = vmin.f32 %v904, 20.0
  %v921 = vmin.f32 %v905, 20.0
  %v922 = vmin.f32 %v906, 20.0
  %v923 = vmin.f32 %v907, 20.0
  %v924 = vmin.f32 %v908, 20.0
  %v925 = vmin.f32 %v909, 20.0
  %v926 = vmin.f32 %v910, 20.0
  %v927 = vmin.f32 %v911, 20.0
  %v928 = vmin.f32 %v912, 20.0
  %v929 = vmin.f32 %v913, 20.0
  %v930 = vmin.f32 %v914, 20.0
  %v931 = vmin.f32 %v915, 20.0
  %v932 = vmin.f32 %v916, 20.0
  %v933 = vmin.f32 %v917, 20.0
  %v934 = vmin.f32 %v918, 20.0
  %v935 = vmin.f32 %v919, 20.0
  %v936 = vmul.f32 %v920, 1.442695
  %v937 = vpow.pop %v936
  %v938 = vmul.f32 %v921, 1.442695
  %v939 = vpow.pop %v938
  %v940 = vmul.f32 %v922, 1.442695
  %v941 = vpow.pop %v940
  %v942 = vmul.f32 %v923, 1.442695
  %v943 = vpow.pop %v942
  %v944 = vmul.f32 %v924, 1.442695
  %v945 = vpow.pop %v944
  %v946 = vmul.f32 %v925, 1.442695
  %v947 = vpow.pop %v946
  %v948 = vmul.f32 %v926, 1.442695
  %v949 = vpow.pop %v948
  %v950 = vmul.f32 %v927, 1.442695
  %v951 = vpow.pop %v950
  %v952 = vmul.f32 %v928, 1.442695
  %v953 = vpow.pop %v952
  %v954 = vmul.f32 %v929, 1.442695
  %v955 = vpow.pop %v954
  %v956 = vmul.f32 %v930, 1.442695
  %v957 = vpow.pop %v956
  %v958 = vmul.f32 %v931, 1.442695
  %v959 = vpow.pop %v958
  %v960 = vmul.f32 %v932, 1.442695
  %v961 = vpow.pop %v960
  %v962 = vmul.f32 %v933, 1.442695
  %v963 = vpow.pop %v962
  %v964 = vmul.f32 %v934, 1.442695
  %v965 = vpow.pop %v964
  %v966 = vmul.f32 %v935, 1.442695
  %v967 = vpow.pop %v966
  %v968 = vadd.f32 %v937, 2.0
  %v969 = vadd.f32 %v939, 2.0
  %v970 = vadd.f32 %v941, 2.0
  %v971 = vadd.f32 %v943, 2.0
  %v972 = vadd.f32 %v945, 2.0
  %v973 = vadd.f32 %v947, 2.0
  %v974 = vadd.f32 %v949, 2.0
  %v975 = vadd.f32 %v951, 2.0
  %v976 = vadd.f32 %v953, 2.0
  %v977 = vadd.f32 %v955, 2.0
  %v978 = vadd.f32 %v957, 2.0
  %v979 = vadd.f32 %v959, 2.0
  %v980 = vadd.f32 %v961, 2.0
  %v981 = vadd.f32 %v963, 2.0
  %v982 = vadd.f32 %v965, 2.0
  %v983 = vadd.f32 %v967, 2.0
  %v984 = vmul.f32 %v937, %v968
  %v985 = vmul.f32 %v939, %v969
  %v986 = vmul.f32 %v941, %v970
  %v987 = vmul.f32 %v943, %v971
  %v988 = vmul.f32 %v945, %v972
  %v989 = vmul.f32 %v947, %v973
  %v990 = vmul.f32 %v949, %v974
  %v991 = vmul.f32 %v951, %v975
  %v992 = vmul.f32 %v953, %v976
  %v993 = vmul.f32 %v955, %v977
  %v994 = vmul.f32 %v957, %v978
  %v995 = vmul.f32 %v959, %v979
  %v996 = vmul.f32 %v961, %v980
  %v997 = vmul.f32 %v963, %v981
  %v998 = vmul.f32 %v965, %v982
  %v999 = vmul.f32 %v967, %v983
  %v1000 = vadd.f32 %v984, 2.0
  %v1001 = vadd.f32 %v985, 2.0
  %v1002 = vadd.f32 %v986, 2.0
  %v1003 = vadd.f32 %v987, 2.0
  %v1004 = vadd.f32 %v988, 2.0
  %v1005 = vadd.f32 %v989, 2.0
  %v1006 = vadd.f32 %v990, 2.0
  %v1007 = vadd.f32 %v991, 2.0
  %v1008 = vadd.f32 %v992, 2.0
  %v1009 = vadd.f32 %v993, 2.0
  %v1010 = vadd.f32 %v994, 2.0
  %v1011 = vadd.f32 %v995, 2.0
  %v1012 = vadd.f32 %v996, 2.0
  %v1013 = vadd.f32 %v997, 2.0
  %v1014 = vadd.f32 %v998, 2.0
  %v1015 = vadd.f32 %v999, 2.0
  %v1016 = vrcp.pop %v1000
  %v1017 = vrcp.pop %v1001
  %v1018 = vrcp.pop %v1002
  %v1019 = vrcp.pop %v1003
  %v1020 = vrcp.pop %v1004
  %v1021 = vrcp.pop %v1005
  %v1022 = vrcp.pop %v1006
  %v1023 = vrcp.pop %v1007
  %v1024 = vrcp.pop %v1008
  %v1025 = vrcp.pop %v1009
  %v1026 = vrcp.pop %v1010
  %v1027 = vrcp.pop %v1011
  %v1028 = vrcp.pop %v1012
  %v1029 = vrcp.pop %v1013
  %v1030 = vrcp.pop %v1014
  %v1031 = vrcp.pop %v1015
  %v1032 = vmul.f32 %v984, %v1016
  %v1033 = vmul.f32 %v985, %v1017
  %v1034 = vmul.f32 %v986, %v1018
  %v1035 = vmul.f32 %v987, %v1019
  %v1036 = vmul.f32 %v988, %v1020
  %v1037 = vmul.f32 %v989, %v1021
  %v1038 = vmul.f32 %v990, %v1022
  %v1039 = vmul.f32 %v991, %v1023
  %v1040 = vmul.f32 %v992, %v1024
  %v1041 = vmul.f32 %v993, %v1025
  %v1042 = vmul.f32 %v994, %v1026
  %v1043 = vmul.f32 %v995, %v1027
  %v1044 = vmul.f32 %v996, %v1028
  %v1045 = vmul.f32 %v997, %v1029
  %v1046 = vmul.f32 %v998, %v1030
  %v1047 = vmul.f32 %v999, %v1031
  %vm1048 = vcmp.gt.f32.partialorder %v904, 20.0
  %vm1049 = vcmp.gt.f32.partialorder %v905, 20.0
  %vm1050 = vcmp.gt.f32.partialorder %v906, 20.0
  %vm1051 = vcmp.gt.f32.partialorder %v907, 20.0
  %vm1052 = vcmp.gt.f32.partialorder %v908, 20.0
  %vm1053 = vcmp.gt.f32.partialorder %v909, 20.0
  %vm1054 = vcmp.gt.f32.partialorder %v910, 20.0
  %vm1055 = vcmp.gt.f32.partialorder %v911, 20.0
  %vm1056 = vcmp.gt.f32.partialorder %v912, 20.0
  %vm1057 = vcmp.gt.f32.partialorder %v913, 20.0
  %vm1058 = vcmp.gt.f32.partialorder %v914, 20.0
  %vm1059 = vcmp.gt.f32.partialorder %v915, 20.0
  %vm1060 = vcmp.gt.f32.partialorder %v916, 20.0
  %vm1061 = vcmp.gt.f32.partialorder %v917, 20.0
  %vm1062 = vcmp.gt.f32.partialorder %v918, 20.0
  %vm1063 = vcmp.gt.f32.partialorder %v919, 20.0
  %v1064 = vsel %vm1048, 1.0, %v1032
  %v1065 = vsel %vm1049, 1.0, %v1033
  %v1066 = vsel %vm1050, 1.0, %v1034
  %v1067 = vsel %vm1051, 1.0, %v1035
  %v1068 = vsel %vm1052, 1.0, %v1036
  %v1069 = vsel %vm1053, 1.0, %v1037
  %v1070 = vsel %vm1054, 1.0, %v1038
  %v1071 = vsel %vm1055, 1.0, %v1039
  %v1072 = vsel %vm1056, 1.0, %v1040
  %v1073 = vsel %vm1057, 1.0, %v1041
  %v1074 = vsel %vm1058, 1.0, %v1042
  %v1075 = vsel %vm1059, 1.0, %v1043
  %v1076 = vsel %vm1060, 1.0, %v1044
  %v1077 = vsel %vm1061, 1.0, %v1045
  %v1078 = vsel %vm1062, 1.0, %v1046
  %v1079 = vsel %vm1063, 1.0, %v1047
  %v1080 = vmul.f32 %v904, %v1064
  %v1081 = vmul.f32 %v905, %v1065
  %v1082 = vmul.f32 %v906, %v1066
  %v1083 = vmul.f32 %v907, %v1067
  %v1084 = vmul.f32 %v908, %v1068
  %v1085 = vmul.f32 %v909, %v1069
  %v1086 = vmul.f32 %v910, %v1070
  %v1087 = vmul.f32 %v911, %v1071
  %v1088 = vmul.f32 %v912, %v1072
  %v1089 = vmul.f32 %v913, %v1073
  %v1090 = vmul.f32 %v914, %v1074
  %v1091 = vmul.f32 %v915, %v1075
  %v1092 = vmul.f32 %v916, %v1076
  %v1093 = vmul.f32 %v917, %v1077
  %v1094 = vmul.f32 %v918, %v1078
  %v1095 = vmul.f32 %v919, %v1079
  %vm1096 = vcmask 64512
  %1097 = vst.msk [vmem:[%s9] sm:$0xff] %vm1096, %v1080
  %1098 = vst.msk [vmem:[%s9 + $0x8] sm:$0xff] %vm1096, %v1081
  %1099 = vst.msk [vmem:[%s9 + $0x10] sm:$0xff] %vm1096, %v1082
  %1100 = vst.msk [vmem:[%s9 + $0x18] sm:$0xff] %vm1096, %v1083
  %1101 = vst.msk [vmem:[%s9 + $0x20] sm:$0xff] %vm1096, %v1084
  %1102 = vst.msk [vmem:[%s9 + $0x28] sm:$0xff] %vm1096, %v1085
  %1103 = vst.msk [vmem:[%s9 + $0x30] sm:$0xff] %vm1096, %v1086
  %1104 = vst.msk [vmem:[%s9 + $0x38] sm:$0xff] %vm1096, %v1087
  %1105 = vst.msk [vmem:[%s9 + $0x40] sm:$0xff] %vm1096, %v1088
  %1106 = vst.msk [vmem:[%s9 + $0x48] sm:$0xff] %vm1096, %v1089
  %1107 = vst.msk [vmem:[%s9 + $0x50] sm:$0xff] %vm1096, %v1090
  %1108 = vst.msk [vmem:[%s9 + $0x58] sm:$0xff] %vm1096, %v1091
  %1109 = vst.msk [vmem:[%s9 + $0x60] sm:$0xff] %vm1096, %v1092
  %1110 = vst.msk [vmem:[%s9 + $0x68] sm:$0xff] %vm1096, %v1093
  %1111 = vst.msk [vmem:[%s9 + $0x70] sm:$0xff] %vm1096, %v1094
  %1112 = vst.msk [vmem:[%s9 + $0x78] sm:$0xff] %vm1096, %v1095
  // Predicated region
  $region38: #{csp_down_block_forward.9} parent=0 // pred_check
    _
  $region39: #{csp_down_block_forward.9} parent=0 // pred_check_branch
    %1114 = sbr.rel (0) target = $region41
  $region40: #{csp_down_block_forward.9} parent=0 // pred_region
    _
  $region41: #{csp_down_block_forward.9} parent=0 // pred_fallthru
    _
  // Predicated region
  $region42: #{csp_down_block_forward.9} parent=0 // pred_check
    _
  $region43: #{csp_down_block_forward.9} parent=0 // pred_check_branch
    %1116 = sbr.rel (0) target = $region45
  $region44: #{csp_down_block_forward.9} parent=0 // pred_region
    _
  $region45: #{csp_down_block_forward.9} parent=0 // pred_fallthru
    _

// kernel: csp_down_block_forward.7
$region0: #{csp_down_block_forward.7}
  #allocation0 [shape = 'u32[]', space=smem, size = 0x4, offset = 0x4, fixed_abs, tag = 'smem constant byte address 0x4 - core index']
  #allocation1 [shape = 'u32[144,128]{1,0:T(1,128)}', space=vmem, size = 0x12000, scoped, tag = 'internal scratch']
  #allocation2 [shape = 'bf16[10,24,128]{2,1,0:T(8,128)(2,1)}', space=vmem, size = 0xf000, scoped, tag = 'scratch operand']
  #allocation3 [shape = 'bf16[10,8,384]{2,1,0:T(8,128)(2,1)}', space=vmem, size = 0xf000, scoped, tag = 'scratch operand']
  %s0 = inlined_call_operand.vmem [shape: bf16[2,8,8,128], index: 0, kind: input, shape index: {}, may-alias: {0,1,2}]
  %s1 = inlined_call_operand.vmem [shape: bf16[2,8,8,128], index: 1, kind: input, shape index: {}, may-alias: {0,1,2}]
  %s2 = inlined_call_operand.vmem [shape: bf16[2,8,8,128], index: 2, kind: input, shape index: {}, may-alias: {0,1,2}]
  %s3 = inlined_call_operand.vmem [shape: bf16[128,128], index: 3, kind: input, shape index: {}]
  %s4 = inlined_call_operand.vmem [shape: f32[1,128], index: 4, kind: input, shape index: {}]
  %s5 = inlined_call_operand.vmem [shape: f32[1,128], index: 5, kind: input, shape index: {}]
  %s6 = inlined_call_operand.vmem [shape: bf16[3,384,128], index: 6, kind: input, shape index: {}]
  %s7 = inlined_call_operand.vmem [shape: f32[1,128], index: 7, kind: input, shape index: {}]
  %s8 = inlined_call_operand.vmem [shape: f32[1,128], index: 8, kind: input, shape index: {}]
  %s9 = inlined_call_operand.vmem [shape: bf16[2,8,8,128], index: 9, kind: output, shape index: {}]
  %s10 = sld [smem:[#allocation0]]
  $region85: #{csp_down_block_forward.7} parent=0
    _
  %s12 = ssub.s32 1, %s10
  %s13 = scalar_select 0, %s12, %s10
  loop: start=0, step=1, limit=4
  $region2: #{csp_down_block_forward.7} parent=0 // loop_pre_header
    _
  $region3: #{csp_down_block_forward.7} parent=0 // loop_header
    %s15 = sphi 0, %s19
    %p16 = scmp.ge.s32.totalorder %s15, 4
    %s22 = sphi 0, %s34
    %s23 = sphi 0, %s30
    %s24 = sphi 0, %s22
    %s25 = sphi 0, %s23
    %s26 = sphi 0, %s24
    %s27 = sphi 0, %s25
    %s47 = sphi 0, %s49
    %s50 = sphi 0, %s47
    %s51 = sphi 0, %s50
    %s67 = sphi 0, %s51
    %s75 = sphi 0, %s77
    %s78 = sphi 0, %s75
    %s79 = sphi 0, %s78
    %s95 = sphi 0, %s79
    %s111 = sphi 0, %s113
    %s114 = sphi 0, %s111
    %s115 = sphi 0, %s114
    %s131 = sphi 0, %s115
    %s135 = sphi 0, %s135
    %s137 = sphi 0, %s135
    %s138 = sphi 0, %s137
    %s152 = sphi 0, %s138
    %s156 = sphi 0, %s156
    %s158 = sphi 0, %s156
    %s159 = sphi 0, %s158
    %s173 = sphi 0, %s159
    %s177 = sphi 0, %s177
    %s179 = sphi 0, %s177
    %s180 = sphi 0, %s179
    %s194 = sphi 0, %s180
    %s198 = sphi 0, %s198
    %s200 = sphi 0, %s198
    %s201 = sphi 0, %s200
    %s215 = sphi 0, %s201
    %s219 = sphi 0, %s219
    %s221 = sphi 0, %s219
    %s222 = sphi 0, %s221
    %s236 = sphi 0, %s222
    %s240 = sphi 0, %s240
    %s242 = sphi 0, %s240
    %s243 = sphi 0, %s242
    %s257 = sphi 0, %s243
    %s265 = sphi 0, %s267
    %s268 = sphi 0, %s265
    %s269 = sphi 0, %s268
    %s285 = sphi 0, %s269
  $region4: #{csp_down_block_forward.7} parent=0 // loop_header_branch
    %18 = sbr.rel (%p16) target = $region8
  $region5: #{csp_down_block_forward.7} parent=0 // loop_body
    %s20 = ssub.s32 %s15, 1
    %s21 = ssub.s32 %s15, 2
    %s28 = sadd.s32 1, %s23
    %p29 = scmp.ge.s32.totalorder %s28, 1
    %s30 = scalar_select %p29, 0, %s28
    %s31 = sadd.s32 1, %s22
    %s32 = scalar_select %p29, %s31, %s22
    %p33 = scmp.ge.s32.totalorder %s32, 2
    %s34 = scalar_select %p33, 0, %s32
    %s35 = smul.u32 %s23, 8
    %s36 = ssub.s32 %s35, 1
    %p37 = scmp.gt.s32.totalorder %s36, 0
    %s38 = scalar_select %p37, %s36, 0
    %s39 = smul.u32 %s30, 8
    %s40 = ssub.s32 %s39, 1
    %p41 = scmp.gt.s32.totalorder %s40, 0
    %s42 = scalar_select %p41, %s40, 0
    %s43 = ssub.s32 %s22, %s34
    %s44 = ssub.s32 %s38, %s42
    %s45 = sor.u32 %s43, %s44
    %p46 = scmp.eq.s32.totalorder %s45, 0
    %s48 = sadd.s32 %s47, 1
    %s49 = scalar_select %p46, %s47, %s48
    %p52 = pneg %p46
    %p53 = scmp.eq.s32.totalorder %s15, 1
    %p54 = por %p52, %p53
    %p55 = scmp.ne.s32.totalorder %s47, %s50
    %p56 = scmp.eq.s32.totalorder %s15, 0
    %p57 = por %p55, %p56
    %p58 = scmp.ne.s32.totalorder %s47, %s50
    %p59 = scmp.eq.s32.totalorder %s20, 1
    %p60 = por %p58, %p59
    %p61 = scmp.ne.s32.totalorder %s50, %s51
    %p62 = scmp.eq.s32.totalorder %s20, 0
    %p63 = por %p61, %p62
    %p64 = scmp.ne.s32.totalorder %s50, %s51
    %p65 = scmp.eq.s32.totalorder %s21, 1
    %p66 = por %p64, %p65
    %p68 = scmp.ne.s32.totalorder %s51, %s67
    %p69 = scmp.eq.s32.totalorder %s21, 0
    %p70 = por %p68, %p69
    %s71 = ssub.s32 %s22, %s34
    %s72 = ssub.s32 %s23, %s30
    %s73 = sor.u32 %s71, %s72
    %p74 = scmp.eq.s32.totalorder %s73, 0
    %s76 = sadd.s32 %s75, 1
    %s77 = scalar_select %p74, %s75, %s76
    %p80 = pneg %p74
    %p81 = scmp.eq.s32.totalorder %s15, 1
    %p82 = por %p80, %p81
    %p83 = scmp.ne.s32.totalorder %s75, %s78
    %p84 = scmp.eq.s32.totalorder %s15, 0
    %p85 = por %p83, %p84
    %p86 = scmp.ne.s32.totalorder %s75, %s78
    %p87 = scmp.eq.s32.totalorder %s20, 1
    %p88 = por %p86, %p87
    %p89 = scmp.ne.s32.totalorder %s78, %s79
    %p90 = scmp.eq.s32.totalorder %s20, 0
    %p91 = por %p89, %p90
    %p92 = scmp.ne.s32.totalorder %s78, %s79
    %p93 = scmp.eq.s32.totalorder %s21, 1
    %p94 = por %p92, %p93
    %p96 = scmp.ne.s32.totalorder %s79, %s95
    %p97 = scmp.eq.s32.totalorder %s21, 0
    %p98 = por %p96, %p97
    %s99 = smul.u32 %s23, 8
    %s100 = sadd.s32 %s99, 8
    %p101 = scmp.lt.s32.totalorder %s100, 7
    %s102 = scalar_select %p101, %s100, 7
    %s103 = smul.u32 %s30, 8
    %s104 = sadd.s32 %s103, 8
    %p105 = scmp.lt.s32.totalorder %s104, 7
    %s106 = scalar_select %p105, %s104, 7
    %s107 = ssub.s32 %s22, %s34
    %s108 = ssub.s32 %s102, %s106
    %s109 = sor.u32 %s107, %s108
    %p110 = scmp.eq.s32.totalorder %s109, 0
    %s112 = sadd.s32 %s111, 1
    %s113 = scalar_select %p110, %s111, %s112
    %p116 = pneg %p110
    %p117 = scmp.eq.s32.totalorder %s15, 1
    %p118 = por %p116, %p117
    %p119 = scmp.ne.s32.totalorder %s111, %s114
    %p120 = scmp.eq.s32.totalorder %s15, 0
    %p121 = por %p119, %p120
    %p122 = scmp.ne.s32.totalorder %s111, %s114
    %p123 = scmp.eq.s32.totalorder %s20, 1
    %p124 = por %p122, %p123
    %p125 = scmp.ne.s32.totalorder %s114, %s115
    %p126 = scmp.eq.s32.totalorder %s20, 0
    %p127 = por %p125, %p126
    %p128 = scmp.ne.s32.totalorder %s114, %s115
    %p129 = scmp.eq.s32.totalorder %s21, 1
    %p130 = por %p128, %p129
    %p132 = scmp.ne.s32.totalorder %s115, %s131
    %p133 = scmp.eq.s32.totalorder %s21, 0
    %p134 = por %p132, %p133
    %s136 = sadd.s32 %s135, 1
    %p139 = scmp.eq.s32.totalorder %s15, 1
    %p140 = scmp.ne.s32.totalorder %s135, %s137
    %p141 = scmp.eq.s32.totalorder %s15, 0
    %p142 = por %p140, %p141
    %p143 = scmp.ne.s32.totalorder %s135, %s137
    %p144 = scmp.eq.s32.totalorder %s20, 1
    %p145 = por %p143, %p144
    %p146 = scmp.ne.s32.totalorder %s137, %s138
    %p147 = scmp.eq.s32.totalorder %s20, 0
    %p148 = por %p146, %p147
    %p149 = scmp.ne.s32.totalorder %s137, %s138
    %p150 = scmp.eq.s32.totalorder %s21, 1
    %p151 = por %p149, %p150
    %p153 = scmp.ne.s32.totalorder %s138, %s152
    %p154 = scmp.eq.s32.totalorder %s21, 0
    %p155 = por %p153, %p154
    %s157 = sadd.s32 %s156, 1
    %p160 = scmp.eq.s32.totalorder %s15, 1
    %p161 = scmp.ne.s32.totalorder %s156, %s158
    %p162 = scmp.eq.s32.totalorder %s15, 0
    %p163 = por %p161, %p162
    %p164 = scmp.ne.s32.totalorder %s156, %s158
    %p165 = scmp.eq.s32.totalorder %s20, 1
    %p166 = por %p164, %p165
    %p167 = scmp.ne.s32.totalorder %s158, %s159
    %p168 = scmp.eq.s32.totalorder %s20, 0
    %p169 = por %p167, %p168
    %p170 = scmp.ne.s32.totalorder %s158, %s159
    %p171 = scmp.eq.s32.totalorder %s21, 1
    %p172 = por %p170, %p171
    %p174 = scmp.ne.s32.totalorder %s159, %s173
    %p175 = scmp.eq.s32.totalorder %s21, 0
    %p176 = por %p174, %p175
    %s178 = sadd.s32 %s177, 1
    %p181 = scmp.eq.s32.totalorder %s15, 1
    %p182 = scmp.ne.s32.totalorder %s177, %s179
    %p183 = scmp.eq.s32.totalorder %s15, 0
    %p184 = por %p182, %p183
    %p185 = scmp.ne.s32.totalorder %s177, %s179
    %p186 = scmp.eq.s32.totalorder %s20, 1
    %p187 = por %p185, %p186
    %p188 = scmp.ne.s32.totalorder %s179, %s180
    %p189 = scmp.eq.s32.totalorder %s20, 0
    %p190 = por %p188, %p189
    %p191 = scmp.ne.s32.totalorder %s179, %s180
    %p192 = scmp.eq.s32.totalorder %s21, 1
    %p193 = por %p191, %p192
    %p195 = scmp.ne.s32.totalorder %s180, %s194
    %p196 = scmp.eq.s32.totalorder %s21, 0
    %p197 = por %p195, %p196
    %s199 = sadd.s32 %s198, 1
    %p202 = scmp.eq.s32.totalorder %s15, 1
    %p203 = scmp.ne.s32.totalorder %s198, %s200
    %p204 = scmp.eq.s32.totalorder %s15, 0
    %p205 = por %p203, %p204
    %p206 = scmp.ne.s32.totalorder %s198, %s200
    %p207 = scmp.eq.s32.totalorder %s20, 1
    %p208 = por %p206, %p207
    %p209 = scmp.ne.s32.totalorder %s200, %s201
    %p210 = scmp.eq.s32.totalorder %s20, 0
    %p211 = por %p209, %p210
    %p212 = scmp.ne.s32.totalorder %s200, %s201
    %p213 = scmp.eq.s32.totalorder %s21, 1
    %p214 = por %p212, %p213
    %p216 = scmp.ne.s32.totalorder %s201, %s215
    %p217 = scmp.eq.s32.totalorder %s21, 0
    %p218 = por %p216, %p217
    %s220 = sadd.s32 %s219, 1
    %p223 = scmp.eq.s32.totalorder %s15, 1
    %p224 = scmp.ne.s32.totalorder %s219, %s221
    %p225 = scmp.eq.s32.totalorder %s15, 0
    %p226 = por %p224, %p225
    %p227 = scmp.ne.s32.totalorder %s219, %s221
    %p228 = scmp.eq.s32.totalorder %s20, 1
    %p229 = por %p227, %p228
    %p230 = scmp.ne.s32.totalorder %s221, %s222
    %p231 = scmp.eq.s32.totalorder %s20, 0
    %p232 = por %p230, %p231
    %p233 = scmp.ne.s32.totalorder %s221, %s222
    %p234 = scmp.eq.s32.totalorder %s21, 1
    %p235 = por %p233, %p234
    %p237 = scmp.ne.s32.totalorder %s222, %s236
    %p238 = scmp.eq.s32.totalorder %s21, 0
    %p239 = por %p237, %p238
    %s241 = sadd.s32 %s240, 1
    %p244 = scmp.eq.s32.totalorder %s15, 1
    %p245 = scmp.ne.s32.totalorder %s240, %s242
    %p246 = scmp.eq.s32.totalorder %s15, 0
    %p247 = por %p245, %p246
    %p248 = scmp.ne.s32.totalorder %s240, %s242
    %p249 = scmp.eq.s32.totalorder %s20, 1
    %p250 = por %p248, %p249
    %p251 = scmp.ne.s32.totalorder %s242, %s243
    %p252 = scmp.eq.s32.totalorder %s20, 0
    %p253 = por %p251, %p252
    %p254 = scmp.ne.s32.totalorder %s242, %s243
    %p255 = scmp.eq.s32.totalorder %s21, 1
    %p256 = por %p254, %p255
    %p258 = scmp.ne.s32.totalorder %s243, %s257
    %p259 = scmp.eq.s32.totalorder %s21, 0
    %p260 = por %p258, %p259
    %s261 = ssub.s32 %s22, %s34
    %s262 = ssub.s32 %s23, %s30
    %s263 = sor.u32 %s261, %s262
    %p264 = scmp.eq.s32.totalorder %s263, 0
    %s266 = sadd.s32 %s265, 1
    %s267 = scalar_select %p264, %s265, %s266
    %p270 = pneg %p264
    %p271 = scmp.eq.s32.totalorder %s15, 1
    %p272 = por %p270, %p271
    %p273 = scmp.ne.s32.totalorder %s265, %s268
    %p274 = scmp.eq.s32.totalorder %s15, 0
    %p275 = por %p273, %p274
    %p276 = scmp.ne.s32.totalorder %s265, %s268
    %p277 = scmp.eq.s32.totalorder %s20, 1
    %p278 = por %p276, %p277
    %p279 = scmp.ne.s32.totalorder %s268, %s269
    %p280 = scmp.eq.s32.totalorder %s20, 0
    %p281 = por %p279, %p280
    %p282 = scmp.ne.s32.totalorder %s268, %s269
    %p283 = scmp.eq.s32.totalorder %s21, 1
    %p284 = por %p282, %p283
    %p286 = scmp.ne.s32.totalorder %s269, %s285
    %p287 = scmp.eq.s32.totalorder %s21, 0
    %p288 = por %p286, %p287
    %p289 = scmp.le.s32.totalorder 1, %s15
    %p290 = scmp.lt.s32.totalorder %s15, 3
    %p291 = pnand %p289, %p290
    %p292 = pneg %p291
    // Predicated region
    $region9: #{csp_down_block_forward.7} parent=5 // pred_check
      _
    $region10: #{csp_down_block_forward.7} parent=5 // pred_check_branch
      %294 = sbr.rel (%p291) target = $region12
    $region11: #{csp_down_block_forward.7} parent=5 // pred_region
      %s295 = ssub.s32 %s15, 1
      // Predicated region
      $region13: #{csp_down_block_forward.7} parent=11 // pred_check
        %p296 = pneg %p148
      $region14: #{csp_down_block_forward.7} parent=11 // pred_check_branch
        %298 = sbr.rel (%p296) target = $region16
      $region15: #{csp_down_block_forward.7} parent=11 // pred_region
        _
      $region16: #{csp_down_block_forward.7} parent=11 // pred_fallthru
        _
      // Predicated region
      $region17: #{csp_down_block_forward.7} parent=11 // pred_check
        %p299 = pneg %p169
      $region18: #{csp_down_block_forward.7} parent=11 // pred_check_branch
        %301 = sbr.rel (%p299) target = $region20
      $region19: #{csp_down_block_forward.7} parent=11 // pred_region
        _
      $region20: #{csp_down_block_forward.7} parent=11 // pred_fallthru
        _
      // Predicated region
      $region21: #{csp_down_block_forward.7} parent=11 // pred_check
        %p302 = pneg %p190
      $region22: #{csp_down_block_forward.7} parent=11 // pred_check_branch
        %304 = sbr.rel (%p302) target = $region24
      $region23: #{csp_down_block_forward.7} parent=11 // pred_region
        _
      $region24: #{csp_down_block_forward.7} parent=11 // pred_fallthru
        _
      // Predicated region
      $region25: #{csp_down_block_forward.7} parent=11 // pred_check
        %p305 = pneg %p211
      $region26: #{csp_down_block_forward.7} parent=11 // pred_check_branch
        %307 = sbr.rel (%p305) target = $region28
      $region27: #{csp_down_block_forward.7} parent=11 // pred_region
        _
      $region28: #{csp_down_block_forward.7} parent=11 // pred_fallthru
        _
      // Predicated region
      $region29: #{csp_down_block_forward.7} parent=11 // pred_check
        %p308 = pneg %p232
      $region30: #{csp_down_block_forward.7} parent=11 // pred_check_branch
        %310 = sbr.rel (%p308) target = $region32
      $region31: #{csp_down_block_forward.7} parent=11 // pred_region
        _
      $region32: #{csp_down_block_forward.7} parent=11 // pred_fallthru
        _
      // Predicated region
      $region33: #{csp_down_block_forward.7} parent=11 // pred_check
        %p311 = pneg %p253
      $region34: #{csp_down_block_forward.7} parent=11 // pred_check_branch
        %313 = sbr.rel (%p311) target = $region36
      $region35: #{csp_down_block_forward.7} parent=11 // pred_region
        _
      $region36: #{csp_down_block_forward.7} parent=11 // pred_fallthru
        _
    $region12: #{csp_down_block_forward.7} parent=5 // pred_fallthru
      _
    %p314 = scmp.lt.s32.totalorder %s15, 2
    // Predicated region
    $region37: #{csp_down_block_forward.7} parent=5 // pred_check
      %p315 = pneg %p314
    $region38: #{csp_down_block_forward.7} parent=5 // pred_check_branch
      %317 = sbr.rel (%p315) target = $region40
    $region39: #{csp_down_block_forward.7} parent=5 // pred_region
      // Predicated region
      $region41: #{csp_down_block_forward.7} parent=39 // pred_check
        %p318 = pneg %p57
      $region42: #{csp_down_block_forward.7} parent=39 // pred_check_branch
        %320 = sbr.rel (%p318) target = $region44
      $region43: #{csp_down_block_forward.7} parent=39 // pred_region
        %s321 = smul.u32 %s23, 8
        %s322 = ssub.s32 %s321, 1
        %p323 = scmp.gt.s32.totalorder %s322, 0
        %s324 = scalar_select %p323, %s322, 0
        %p325 = scmp.lt.s32.totalorder %s22, 1
        %s326 = scalar_select %p325, %s22, 1
        %p327 = scmp.lt.s32.totalorder %s324, 7
        %s328 = scalar_select %p327, %s324, 7
        %s329 = smul.addr %s326, 8
        %s330 = sadd.s32 %s328, %s329
        %s331 = smul.addr %s330, 4
        %s332 = scalar_lea.vmem %s0, %s331
        %s333 = smul.u32 %s23, 8
        %s334 = ssub.s32 %s333, 1
        %p335 = scmp.gt.s32.totalorder %s334, 0
        %s336 = scalar_select %p335, %s334, 0
      $region44: #{csp_down_block_forward.7} parent=39 // pred_fallthru
        _
      // Predicated region
      $region45: #{csp_down_block_forward.7} parent=39 // pred_check
        %p337 = pneg %p85
      $region46: #{csp_down_block_forward.7} parent=39 // pred_check_branch
        %339 = sbr.rel (%p337) target = $region48
      $region47: #{csp_down_block_forward.7} parent=39 // pred_region
        %s340 = smul.u32 8, %s23
        %p341 = scmp.lt.s32.totalorder %s22, 1
        %s342 = scalar_select %p341, %s22, 1
        %p343 = scmp.lt.s32.totalorder %s340, 7
        %s344 = scalar_select %p343, %s340, 7
        %s345 = smul.addr %s342, 8
        %s346 = sadd.s32 %s344, %s345
        %s347 = smul.addr %s346, 4
        %s348 = scalar_lea.vmem %s1, %s347
        %s349 = smul.u32 8, %s23
      $region48: #{csp_down_block_forward.7} parent=39 // pred_fallthru
        _
      // Predicated region
      $region49: #{csp_down_block_forward.7} parent=39 // pred_check
        %p350 = pneg %p121
      $region50: #{csp_down_block_forward.7} parent=39 // pred_check_branch
        %352 = sbr.rel (%p350) target = $region52
      $region51: #{csp_down_block_forward.7} parent=39 // pred_region
        %s353 = smul.u32 %s23, 8
        %s354 = sadd.s32 %s353, 8
        %p355 = scmp.lt.s32.totalorder %s354, 7
        %s356 = scalar_select %p355, %s354, 7
        %p357 = scmp.lt.s32.totalorder %s22, 1
        %s358 = scalar_select %p357, %s22, 1
        %p359 = scmp.lt.s32.totalorder %s356, 7
        %s360 = scalar_select %p359, %s356, 7
        %s361 = smul.addr %s358, 8
        %s362 = sadd.s32 %s360, %s361
        %s363 = smul.addr %s362, 4
        %s364 = scalar_lea.vmem %s2, %s363
        %s365 = smul.u32 %s23, 8
        %s366 = sadd.s32 %s365, 8
        %p367 = scmp.lt.s32.totalorder %s366, 7
        %s368 = scalar_select %p367, %s366, 7
      $region52: #{csp_down_block_forward.7} parent=39 // pred_fallthru
        _
    $region40: #{csp_down_block_forward.7} parent=5 // pred_fallthru
      _
    %p369 = scmp.le.s32.totalorder 1, %s15
    %p370 = scmp.lt.s32.totalorder %s15, 3
    %p371 = pnand %p369, %p370
    %p372 = pneg %p371
    // Predicated region
    $region53: #{csp_down_block_forward.7} parent=5 // pred_check
      _
    $region54: #{csp_down_block_forward.7} parent=5 // pred_check_branch
      %374 = sbr.rel (%p371) target = $region56
    $region55: #{csp_down_block_forward.7} parent=5 // pred_region
      %s375 = ssub.s32 %s15, 1
      %s376 = smul.u32 %s25, 8
      %s377 = ssub.s32 %s376, 1
      %p378 = scmp.gt.s32.totalorder %s377, 0
      %s379 = scalar_select %p378, %s377, 0
      %p380 = scmp.lt.s32.totalorder %s24, 1
      %s381 = scalar_select %p380, %s24, 1
      %p382 = scmp.lt.s32.totalorder %s379, 7
      %s383 = scalar_select %p382, %s379, 7
      %s384 = smul.addr %s381, 8
      %s385 = sadd.s32 %s383, %s384
      %s386 = smul.addr %s385, 4
      %s387 = scalar_lea.vmem %s0, %s386
      %p388 = pneg %p63
      %p389 = pneg %p60
      %s390 = smul.u32 8, %s25
      %p391 = scmp.lt.s32.totalorder %s24, 1
      %s392 = scalar_select %p391, %s24, 1
      %p393 = scmp.lt.s32.totalorder %s390, 7
      %s394 = scalar_select %p393, %s390, 7
      %s395 = smul.addr %s392, 8
      %s396 = sadd.s32 %s394, %s395
      %s397 = smul.addr %s396, 4
      %s398 = scalar_lea.vmem %s1, %s397
      %p399 = pneg %p91
      %p400 = pneg %p88
      %s401 = smul.u32 %s25, 8
      %s402 = sadd.s32 %s401, 8
      %p403 = scmp.lt.s32.totalorder %s402, 7
      %s404 = scalar_select %p403, %s402, 7
      %p405 = scmp.lt.s32.totalorder %s24, 1
      %s406 = scalar_select %p405, %s24, 1
      %p407 = scmp.lt.s32.totalorder %s404, 7
      %s408 = scalar_select %p407, %s404, 7
      %s409 = smul.addr %s406, 8
      %s410 = sadd.s32 %s408, %s409
      %s411 = smul.addr %s410, 4
      %s412 = scalar_lea.vmem %s2, %s411
      %p413 = pneg %p127
      %p414 = pneg %p124
      %p415 = pneg %p148
      %p416 = pneg %p145
      %p417 = pneg %p169
      %p418 = pneg %p166
      %p419 = pneg %p190
      %p420 = pneg %p187
      %p421 = pneg %p211
      %p422 = pneg %p208
      %p423 = pneg %p232
      %p424 = pneg %p229
      %p425 = pneg %p253
      %p426 = pneg %p250
      %p427 = pneg %p281
      %p428 = pneg %p278
      %s429 = smul.u32 8, %s25
      %p430 = scmp.lt.s32.totalorder %s24, 1
      %s431 = scalar_select %p430, %s24, 1
      %p432 = scmp.lt.s32.totalorder %s429, 7
      %s433 = scalar_select %p432, %s429, 7
      %s434 = smul.addr %s431, 8
      %s435 = sadd.s32 %s433, %s434
      %s436 = smul.addr %s435, 4
      %s437 = scalar_lea.vmem %s9, %s436
      %s438 = smul.u32 %s25, 8
      %s439 = ssub.s32 %s438, 1
      %p440 = scmp.gt.s32.totalorder %s439, 0
      %s441 = scalar_select %p440, %s439, 0
      %p442 = scmp.lt.s32.totalorder %s24, 1
      %s443 = scalar_select %p442, %s24, 1
      %p444 = scmp.lt.s32.totalorder %s441, 7
      %s445 = scalar_select %p444, %s441, 7
      %s446 = smul.addr %s443, 8
      %s447 = sadd.s32 %s445, %s446
      %s448 = smul.addr %s447, 4
      %s449 = scalar_lea.vmem %s0, %s448
      %s450 = smul.u32 %s25, 8
      %s451 = ssub.s32 %s450, 1
      %p452 = scmp.gt.s32.totalorder %s451, 0
      %s453 = scalar_select %p452, %s451, 0
      %s454 = smul.u32 8, %s25
      %p455 = scmp.lt.s32.totalorder %s24, 1
      %s456 = scalar_select %p455, %s24, 1
      %p457 = scmp.lt.s32.totalorder %s454, 7
      %s458 = scalar_select %p457, %s454, 7
      %s459 = smul.addr %s456, 8
      %s460 = sadd.s32 %s458, %s459
      %s461 = smul.addr %s460, 4
      %s462 = scalar_lea.vmem %s1, %s461
      %s463 = smul.u32 8, %s25
      %s464 = smul.u32 %s25, 8
      %s465 = sadd.s32 %s464, 8
      %p466 = scmp.lt.s32.totalorder %s465, 7
      %s467 = scalar_select %p466, %s465, 7
      %p468 = scmp.lt.s32.totalorder %s24, 1
      %s469 = scalar_select %p468, %s24, 1
      %p470 = scmp.lt.s32.totalorder %s467, 7
      %s471 = scalar_select %p470, %s467, 7
      %s472 = smul.addr %s469, 8
      %s473 = sadd.s32 %s471, %s472
      %s474 = smul.addr %s473, 4
      %s475 = scalar_lea.vmem %s2, %s474
      %s476 = smul.u32 %s25, 8
      %s477 = sadd.s32 %s476, 8
      %p478 = scmp.lt.s32.totalorder %s477, 7
      %s479 = scalar_select %p478, %s477, 7
      %s480 = smul.u32 8, %s25
      %p481 = scmp.lt.s32.totalorder %s24, 1
      %s482 = scalar_select %p481, %s24, 1
      %p483 = scmp.lt.s32.totalorder %s480, 7
      %s484 = scalar_select %p483, %s480, 7
      %s485 = smul.addr %s482, 8
      %s486 = sadd.s32 %s484, %s485
      %s487 = smul.addr %s486, 4
      %s488 = scalar_lea.vmem %s9, %s487
      %s489 = smul.u32 8, %s25
      %v491 = vld [vmem:[%s3] sm:$0xf]
      %v492 = vld [vmem:[%s3 + $0x4] sm:$0xf]
      %v493 = vld [vmem:[%s3 + $0x8] sm:$0xf]
      %v494 = vld [vmem:[%s3 + $0xc] sm:$0xf]
      %v495 = vld [vmem:[%s3 + $0x10] sm:$0xf]
      %v496 = vld [vmem:[%s3 + $0x14] sm:$0xf]
      %v497 = vld [vmem:[%s3 + $0x18] sm:$0xf]
      %v498 = vld [vmem:[%s3 + $0x1c] sm:$0xf]
      %v499 = vld [vmem:[%s3 + $0x20] sm:$0xf]
      %v500 = vld [vmem:[%s3 + $0x24] sm:$0xf]
      %v501 = vld [vmem:[%s3 + $0x28] sm:$0xf]
      %v502 = vld [vmem:[%s3 + $0x2c] sm:$0xf]
      %v503 = vld [vmem:[%s3 + $0x30] sm:$0xf]
      %v504 = vld [vmem:[%s3 + $0x34] sm:$0xf]
      %v505 = vld [vmem:[%s3 + $0x38] sm:$0xf]
      %v506 = vld [vmem:[%s3 + $0x3c] sm:$0xf]
      %v507 = vld [vmem:[%s4] sm:$0x1]
      %v508 = vld [vmem:[%s5] sm:$0x1]
      %509 = vst [vmem:[#allocation2] sm:$0xf] 0
      %510 = vst [vmem:[#allocation2 + $0xc] sm:$0xf] 0
      %511 = vst [vmem:[#allocation2 + $0x18] sm:$0xf] 0
      %512 = vst [vmem:[#allocation2 + $0x24] sm:$0xf] 0
      %513 = vst [vmem:[#allocation2 + $0x30] sm:$0xf] 0
      %514 = vst [vmem:[#allocation2 + $0x3c] sm:$0xf] 0
      %515 = vst [vmem:[#allocation2 + $0x48] sm:$0xf] 0
      %516 = vst [vmem:[#allocation2 + $0x54] sm:$0xf] 0
      %517 = vst [vmem:[#allocation2 + $0x60] sm:$0xf] 0
      %518 = vst [vmem:[#allocation2 + $0x6c] sm:$0xf] 0
      %519 = vst [vmem:[#allocation2 + $0x8] sm:$0xf] 0
      %520 = vst [vmem:[#allocation2 + $0x14] sm:$0xf] 0
      %521 = vst [vmem:[#allocation2 + $0x20] sm:$0xf] 0
      %522 = vst [vmem:[#allocation2 + $0x2c] sm:$0xf] 0
      %523 = vst [vmem:[#allocation2 + $0x38] sm:$0xf] 0
      %524 = vst [vmem:[#allocation2 + $0x44] sm:$0xf] 0
      %525 = vst [vmem:[#allocation2 + $0x50] sm:$0xf] 0
      %526 = vst [vmem:[#allocation2 + $0x5c] sm:$0xf] 0
      %527 = vst [vmem:[#allocation2 + $0x68] sm:$0xf] 0
      %528 = vst [vmem:[#allocation2 + $0x74] sm:$0xf] 0
      %v529 = vld [vmem:[%s462] sm:$0xf]
      %v530 = vld [vmem:[%s462 + $0x4] sm:$0xf]
      %v531 = vld [vmem:[%s462 + $0x8] sm:$0xf]
      %v532 = vld [vmem:[%s462 + $0xc] sm:$0xf]
      %v533 = vld [vmem:[%s462 + $0x10] sm:$0xf]
      %v534 = vld [vmem:[%s462 + $0x14] sm:$0xf]
      %v535 = vld [vmem:[%s462 + $0x18] sm:$0xf]
      %v536 = vld [vmem:[%s462 + $0x1c] sm:$0xf]
      %v545 = vunpack.c.l.b16 %v529
      %v546 = vunpack.c.l.b16 %v530
      %v547 = vunpack.c.l.b16 %v531
      %v548 = vunpack.c.l.b16 %v532
      %v549 = vunpack.c.l.b16 %v533
      %v550 = vunpack.c.l.b16 %v534
      %v551 = vunpack.c.l.b16 %v535
      %v552 = vunpack.c.l.b16 %v536
      %v553 = vpack.c.b16 %v546, %v545
      %v554 = vpack.c.b16 %v548, %v547
      %v555 = vpack.c.b16 %v550, %v549
      %v556 = vpack.c.b16 %v552, %v551
      %v577 = vunpack.c.l.b16 %v491
      %v578 = vunpack.c.l.b16 %v492
      %v579 = vunpack.c.l.b16 %v493
      %v580 = vunpack.c.l.b16 %v494
      %v581 = vunpack.c.l.b16 %v495
      %v582 = vunpack.c.l.b16 %v496
      %v583 = vunpack.c.l.b16 %v497
      %v584 = vunpack.c.l.b16 %v498
      %v585 = vunpack.c.l.b16 %v499
      %v586 = vunpack.c.l.b16 %v500
      %v587 = vunpack.c.l.b16 %v501
      %v588 = vunpack.c.l.b16 %v502
      %v589 = vunpack.c.l.b16 %v503
      %v590 = vunpack.c.l.b16 %v504
      %v591 = vunpack.c.l.b16 %v505
      %v592 = vunpack.c.l.b16 %v506
      %v593 = vpack.c.b16 %v578, %v577
      %v594 = vpack.c.b16 %v580, %v579
      %v595 = vpack.c.b16 %v582, %v581
      %v596 = vpack.c.b16 %v584, %v583
      %v597 = vpack.c.b16 %v586, %v585
      %v598 = vpack.c.b16 %v588, %v587
      %v599 = vpack.c.b16 %v590, %v589
      %v600 = vpack.c.b16 %v592, %v591
      %609 = vmatprep.subr.bf16.mxu0 0
      %610 = vmatpush1.bf16.msra.mxu0 %v593
      %611 = vmatprep.subr.bf16.mxu0 0
      %612 = vmatpush1.bf16.msra.mxu0 %v594
      %613 = vmatprep.subr.bf16.mxu0 0
      %614 = vmatpush1.bf16.msra.mxu0 %v595
      %615 = vmatprep.subr.bf16.mxu0 0
      %616 = vmatpush1.bf16.msra.mxu0 %v596
      %617 = vmatprep.subr.bf16.mxu0 0
      %618 = vmatpush1.bf16.msra.mxu0 %v597
      %619 = vmatprep.subr.bf16.mxu0 0
      %620 = vmatpush1.bf16.msra.mxu0 %v598
      %621 = vmatprep.subr.bf16.mxu0 0
      %622 = vmatpush1.bf16.msra.mxu0 %v599
      %623 = vmatprep.subr.bf16.mxu0 0
      %624 = vmatpush1.bf16.msra.mxu0 %v600
      %625 = vmatprep.subr.bf16.mxu0 0
      %626 = vmatpush1.bf16.msra.mxu0 0
      %627 = vmatprep.subr.bf16.mxu0 0
      %628 = vmatpush1.bf16.msra.mxu0 0
      %629 = vmatprep.subr.bf16.mxu0 0
      %630 = vmatpush1.bf16.msra.mxu0 0
      %631 = vmatprep.subr.bf16.mxu0 0
      %632 = vmatpush1.bf16.msra.mxu0 0
      %633 = vmatprep.subr.bf16.mxu0 0
      %634 = vmatpush1.bf16.msra.mxu0 0
      %635 = vmatprep.subr.bf16.mxu0 0
      %636 = vmatpush1.bf16.msra.mxu0 0
      %637 = vmatprep.subr.bf16.mxu0 0
      %638 = vmatpush1.bf16.msra.mxu0 0
      %639 = vmatprep.subr.bf16.mxu0 0
      %640 = vmatpush1.bf16.msra.mxu0 0
      %641 = vmatprep.mubr.bf16.mxu0 0
      %642 = vmatmul.mubr.bf16.gmra.mrb[0].mxu0 %v553
      %v643 = vpop.f32.mrb[0].mxu0
      %v644 = vadd.f32 0.0, %v643
      %v645 = vpop.f32.mrb[0].mxu0
      %v646 = vpop.f32.mrb[0].mxu0
      %v647 = vadd.f32 0.0, %v646
      %v648 = vpop.f32.mrb[0].mxu0
      %649 = vmatprep.mubr.bf16.mxu0 0
      %650 = vmatmul.mubr.bf16.gmra.mrb[0].mxu0 %v554
      %v651 = vpop.f32.mrb[0].mxu0
      %v652 = vadd.f32 0.0, %v651
      %v653 = vpop.f32.mrb[0].mxu0
      %v654 = vpop.f32.mrb[0].mxu0
      %v655 = vadd.f32 0.0, %v654
      %v656 = vpop.f32.mrb[0].mxu0
      %657 = vmatprep.mubr.bf16.mxu0 0
      %658 = vmatmul.mubr.bf16.gmra.mrb[0].mxu0 %v555
      %v659 = vpop.f32.mrb[0].mxu0
      %v660 = vadd.f32 0.0, %v659
      %v661 = vpop.f32.mrb[0].mxu0
      %v662 = vpop.f32.mrb[0].mxu0
      %v663 = vadd.f32 0.0, %v662
      %v664 = vpop.f32.mrb[0].mxu0
      %665 = vmatprep.mubr.bf16.mxu0 0
      %666 = vmatmul.mubr.bf16.gmra.mrb[0].mxu0 %v556
      %v667 = vpop.f32.mrb[0].mxu0
      %v668 = vadd.f32 0.0, %v667
      %v669 = vpop.f32.mrb[0].mxu0
      %v670 = vpop.f32.mrb[0].mxu0
      %v671 = vadd.f32 0.0, %v670
      %v672 = vpop.f32.mrb[0].mxu0
      %673 = vdwg.mxu0
      %v675 = vlaneseq
      %v676 = vshrl.u32 %v675, 7
      %v677 = vsub.s32 0, %v676
      %v678 = vrot.slane %v507, %v677
      %v680 = vmul.f32 %v644, %v678
      %v681 = vmul.f32 %v647, %v678
      %v682 = vmul.f32 %v652, %v678
      %v683 = vmul.f32 %v655, %v678
      %v684 = vmul.f32 %v660, %v678
      %v685 = vmul.f32 %v663, %v678
      %v686 = vmul.f32 %v668, %v678
      %v687 = vmul.f32 %v671, %v678
      %v689 = vlaneseq
      %v690 = vshrl.u32 %v689, 7
      %v691 = vsub.s32 0, %v690
      %v692 = vrot.slane %v508, %v691
      %v694 = vadd.f32 %v680, %v692
      %v695 = vadd.f32 %v681, %v692
      %v696 = vadd.f32 %v682, %v692
      %v697 = vadd.f32 %v683, %v692
      %v698 = vadd.f32 %v684, %v692
      %v699 = vadd.f32 %v685, %v692
      %v700 = vadd.f32 %v686, %v692
      %v701 = vadd.f32 %v687, %v692
      %v702 = vmin.f32 %v694, 20.0
      %v703 = vmin.f32 %v695, 20.0
      %v704 = vmin.f32 %v696, 20.0
      %v705 = vmin.f32 %v697, 20.0
      %v706 = vmin.f32 %v698, 20.0
      %v707 = vmin.f32 %v699, 20.0
      %v708 = vmin.f32 %v700, 20.0
      %v709 = vmin.f32 %v701, 20.0
      %v710 = vmul.f32 %v702, 1.442695
      %v711 = vpow.pop %v710
      %v712 = vmul.f32 %v703, 1.442695
      %v713 = vpow.pop %v712
      %v714 = vmul.f32 %v704, 1.442695
      %v715 = vpow.pop %v714
      %v716 = vmul.f32 %v705, 1.442695
      %v717 = vpow.pop %v716
      %v718 = vmul.f32 %v706, 1.442695
      %v719 = vpow.pop %v718
      %v720 = vmul.f32 %v707, 1.442695
      %v721 = vpow.pop %v720
      %v722 = vmul.f32 %v708, 1.442695
      %v723 = vpow.pop %v722
      %v724 = vmul.f32 %v709, 1.442695
      %v725 = vpow.pop %v724
      %v726 = vadd.f32 %v711, 2.0
      %v727 = vadd.f32 %v713, 2.0
      %v728 = vadd.f32 %v715, 2.0
      %v729 = vadd.f32 %v717, 2.0
      %v730 = vadd.f32 %v719, 2.0
      %v731 = vadd.f32 %v721, 2.0
      %v732 = vadd.f32 %v723, 2.0
      %v733 = vadd.f32 %v725, 2.0
      %v734 = vmul.f32 %v711, %v726
      %v735 = vmul.f32 %v713, %v727
      %v736 = vmul.f32 %v715, %v728
      %v737 = vmul.f32 %v717, %v729
      %v738 = vmul.f32 %v719, %v730
      %v739 = vmul.f32 %v721, %v731
      %v740 = vmul.f32 %v723, %v732
      %v741 = vmul.f32 %v725, %v733
      %v742 = vadd.f32 %v734, 2.0
      %v743 = vadd.f32 %v735, 2.0
      %v744 = vadd.f32 %v736, 2.0
      %v745 = vadd.f32 %v737, 2.0
      %v746 = vadd.f32 %v738, 2.0
      %v747 = vadd.f32 %v739, 2.0
      %v748 = vadd.f32 %v740, 2.0
      %v749 = vadd.f32 %v741, 2.0
      %v750 = vrcp.pop %v742
      %v751 = vrcp.pop %v743
      %v752 = vrcp.pop %v744
      %v753 = vrcp.pop %v745
      %v754 = vrcp.pop %v746
      %v755 = vrcp.pop %v747
      %v756 = vrcp.pop %v748
      %v757 = vrcp.pop %v749
      %v758 = vmul.f32 %v734, %v750
      %v759 = vmul.f32 %v735, %v751
      %v760 = vmul.f32 %v736, %v752
      %v761 = vmul.f32 %v737, %v753
      %v762 = vmul.f32 %v738, %v754
      %v763 = vmul.f32 %v739, %v755
      %v764 = vmul.f32 %v740, %v756
      %v765 = vmul.f32 %v741, %v757
      %vm766 = vcmp.gt.f32.partialorder %v694, 20.0
      %vm767 = vcmp.gt.f32.partialorder %v695, 20.0
      %vm768 = vcmp.gt.f32.partialorder %v696, 20.0
      %vm769 = vcmp.gt.f32.partialorder %v697, 20.0
      %vm770 = vcmp.gt.f32.partialorder %v698, 20.0
      %vm771 = vcmp.gt.f32.partialorder %v699, 20.0
      %vm772 = vcmp.gt.f32.partialorder %v700, 20.0
      %vm773 = vcmp.gt.f32.partialorder %v701, 20.0
      %v774 = vsel %vm766, 1.0, %v758
      %v775 = vsel %vm767, 1.0, %v759
      %v776 = vsel %vm768, 1.0, %v760
      %v777 = vsel %vm769, 1.0, %v761
      %v778 = vsel %vm770, 1.0, %v762
      %v779 = vsel %vm771, 1.0, %v763
      %v780 = vsel %vm772, 1.0, %v764
      %v781 = vsel %vm773, 1.0, %v765
      %v782 = vmul.f32 %v694, %v774
      %v783 = vmul.f32 %v695, %v775
      %v784 = vmul.f32 %v696, %v776
      %v785 = vmul.f32 %v697, %v777
      %v786 = vmul.f32 %v698, %v778
      %v787 = vmul.f32 %v699, %v779
      %v788 = vmul.f32 %v700, %v780
      %v789 = vmul.f32 %v701, %v781
      %v790 = vpack.c.bf16 %v783, %v782
      %v791 = vpack.c.bf16 %v785, %v784
      %v792 = vpack.c.bf16 %v787, %v786
      %v793 = vpack.c.bf16 %v789, %v788
      %v798 = vunpack.c.l.b16 %v790
      %v799 = vunpack.c.h.b16 %v790
      %v800 = vunpack.c.l.b16 %v791
      %v801 = vunpack.c.h.b16 %v791
      %v802 = vunpack.c.l.b16 %v792
      %v803 = vunpack.c.h.b16 %v792
      %v804 = vunpack.c.l.b16 %v793
      %v805 = vunpack.c.h.b16 %v793
      %v806 = vpack.c.b16 %v798, %v798
      %v807 = vpack.c.b16 %v799, %v799
      %v808 = vpack.c.b16 %v800, %v800
      %v809 = vpack.c.b16 %v801, %v801
      %v810 = vpack.c.b16 %v802, %v802
      %v811 = vpack.c.b16 %v803, %v803
      %v812 = vpack.c.b16 %v804, %v804
      %v813 = vpack.c.b16 %v805, %v805
      %s822 = scalar_lea.vmem [#allocation2], 12
      %823 = vst [vmem:[%s822 + $0x4] sm:$0xf] %v806
      %824 = vst [vmem:[%s822 + $0x10] sm:$0xf] %v807
      %825 = vst [vmem:[%s822 + $0x1c] sm:$0xf] %v808
      %826 = vst [vmem:[%s822 + $0x28] sm:$0xf] %v809
      %827 = vst [vmem:[%s822 + $0x34] sm:$0xf] %v810
      %828 = vst [vmem:[%s822 + $0x40] sm:$0xf] %v811
      %829 = vst [vmem:[%s822 + $0x4c] sm:$0xf] %v812
      %830 = vst [vmem:[%s822 + $0x58] sm:$0xf] %v813
      %p831 = scmp.gt.s32.totalorder %s25, 0
      // Predicated region
      $region57: #{csp_down_block_forward.7} parent=55 // pred_check
        %p832 = pneg %p831
      $region58: #{csp_down_block_forward.7} parent=55 // pred_check_branch
        %834 = sbr.rel (%p832) target = $region60
      $region59: #{csp_down_block_forward.7} parent=55 // pred_region
        %v835 = vld [vmem:[%s449] sm:$0xf]
        %836 = vmatprep.subr.bf16.mxu0 0
        %837 = vmatpush1.bf16.msra.mxu0 %v593
        %838 = vmatprep.subr.bf16.mxu0 0
        %839 = vmatpush1.bf16.msra.mxu0 %v594
        %840 = vmatprep.subr.bf16.mxu0 0
        %841 = vmatpush1.bf16.msra.mxu0 %v595
        %842 = vmatprep.subr.bf16.mxu0 0
        %843 = vmatpush1.bf16.msra.mxu0 %v596
        %844 = vmatprep.subr.bf16.mxu0 0
        %845 = vmatpush1.bf16.msra.mxu0 %v597
        %846 = vmatprep.subr.bf16.mxu0 0
        %847 = vmatpush1.bf16.msra.mxu0 %v598
        %848 = vmatprep.subr.bf16.mxu0 0
        %849 = vmatpush1.bf16.msra.mxu0 %v599
        %850 = vmatprep.subr.bf16.mxu0 0
        %851 = vmatpush1.bf16.msra.mxu0 %v600
        %852 = vmatprep.subr.bf16.mxu0 0
        %853 = vmatpush1.bf16.msra.mxu0 0
        %854 = vmatprep.subr.bf16.mxu0 0
        %855 = vmatpush1.bf16.msra.mxu0 0
        %856 = vmatprep.subr.bf16.mxu0 0
        %857 = vmatpush1.bf16.msra.mxu0 0
        %858 = vmatprep.subr.bf16.mxu0 0
        %859 = vmatpush1.bf16.msra.mxu0 0
        %860 = vmatprep.subr.bf16.mxu0 0
        %861 = vmatpush1.bf16.msra.mxu0 0
        %862 = vmatprep.subr.bf16.mxu0 0
        %863 = vmatpush1.bf16.msra.mxu0 0
        %864 = vmatprep.subr.bf16.mxu0 0
        %865 = vmatpush1.bf16.msra.mxu0 0
        %866 = vmatprep.subr.bf16.mxu0 0
        %867 = vmatpush1.bf16.msra.mxu0 0
        %868 = vmatprep.mubr.bf16.mxu0 0
        %869 = vmatmul.mubr.bf16.gmra.mrb[0].mxu0 %v835
        %v870 = vpop.f32.mrb[0].mxu0
        %v871 = vadd.f32 0.0, %v870
        %v872 = vpop.f32.mrb[0].mxu0
        %v873 = vpop.f32.mrb[0].mxu0
        %v874 = vpop.f32.mrb[0].mxu0
        %875 = vdwg.mxu0
        %v876 = vmul.f32 %v871, %v678
        %v877 = vadd.f32 %v876, %v692
        %v878 = vmin.f32 %v877, 20.0
        %v879 = vmul.f32 %v878, 1.442695
        %v880 = vpow.pop %v879
        %v881 = vadd.f32 %v880, 2.0
        %v882 = vmul.f32 %v880, %v881
        %v883 = vadd.f32 %v882, 2.0
        %v884 = vrcp.pop %v883
        %v885 = vmul.f32 %v882, %v884
        %vm886 = vcmp.gt.f32.partialorder %v877, 20.0
        %v887 = vsel %vm886, 1.0, %v885
        %v888 = vmul.f32 %v877, %v887
        %v889 = vpack.c.bf16 %v888, %v888
        %890 = vst [vmem:[#allocation2 + $0x4] sm:$0xf] %v889
      $region60: #{csp_down_block_forward.7} parent=55 // pred_fallthru
        _
      %p891 = scmp.eq.s32.totalorder %s25, 0
      // Predicated region
      $region61: #{csp_down_block_forward.7} parent=55 // pred_check
        %p892 = pneg %p891
      $region62: #{csp_down_block_forward.7} parent=55 // pred_check_branch
        %894 = sbr.rel (%p892) target = $region64
      $region63: #{csp_down_block_forward.7} parent=55 // pred_region
        %895 = vst [vmem:[#allocation2 + $0x4] sm:$0xf] 0
      $region64: #{csp_down_block_forward.7} parent=55 // pred_fallthru
        _
      %p896 = scmp.lt.s32.totalorder %s25, 0
      // Predicated region
      $region65: #{csp_down_block_forward.7} parent=55 // pred_check
        %p897 = pneg %p896
      $region66: #{csp_down_block_forward.7} parent=55 // pred_check_branch
        %899 = sbr.rel (%p897) target = $region68
      $region67: #{csp_down_block_forward.7} parent=55 // pred_region
        %v900 = vld [vmem:[%s475] sm:$0xf]
        %901 = vmatprep.subr.bf16.mxu0 0
        %902 = vmatpush1.bf16.msra.mxu0 %v593
        %903 = vmatprep.subr.bf16.mxu0 0
        %904 = vmatpush1.bf16.msra.mxu0 %v594
        %905 = vmatprep.subr.bf16.mxu0 0
        %906 = vmatpush1.bf16.msra.mxu0 %v595
        %907 = vmatprep.subr.bf16.mxu0 0
        %908 = vmatpush1.bf16.msra.mxu0 %v596
        %909 = vmatprep.subr.bf16.mxu0 0
        %910 = vmatpush1.bf16.msra.mxu0 %v597
        %911 = vmatprep.subr.bf16.mxu0 0
        %912 = vmatpush1.bf16.msra.mxu0 %v598
        %913 = vmatprep.subr.bf16.mxu0 0
        %914 = vmatpush1.bf16.msra.mxu0 %v599
        %915 = vmatprep.subr.bf16.mxu0 0
        %916 = vmatpush1.bf16.msra.mxu0 %v600
        %917 = vmatprep.subr.bf16.mxu0 0
        %918 = vmatpush1.bf16.msra.mxu0 0
        %919 = vmatprep.subr.bf16.mxu0 0
        %920 = vmatpush1.bf16.msra.mxu0 0
        %921 = vmatprep.subr.bf16.mxu0 0
        %922 = vmatpush1.bf16.msra.mxu0 0
        %923 = vmatprep.subr.bf16.mxu0 0
        %924 = vmatpush1.bf16.msra.mxu0 0
        %925 = vmatprep.subr.bf16.mxu0 0
        %926 = vmatpush1.bf16.msra.mxu0 0
        %927 = vmatprep.subr.bf16.mxu0 0
        %928 = vmatpush1.bf16.msra.mxu0 0
        %929 = vmatprep.subr.bf16.mxu0 0
        %930 = vmatpush1.bf16.msra.mxu0 0
        %931 = vmatprep.subr.bf16.mxu0 0
        %932 = vmatpush1.bf16.msra.mxu0 0
        %933 = vmatprep.mubr.bf16.mxu0 0
        %934 = vmatmul.mubr.bf16.gmra.mrb[0].mxu0 %v900
        %v935 = vpop.f32.mrb[0].mxu0
        %v936 = vadd.f32 0.0, %v935
        %v937 = vpop.f32.mrb[0].mxu0
        %v938 = vpop.f32.mrb[0].mxu0
        %v939 = vpop.f32.mrb[0].mxu0
        %940 = vdwg.mxu0
        %v941 = vmul.f32 %v936, %v678
        %v942 = vadd.f32 %v941, %v692
        %v943 = vmin.f32 %v942, 20.0
        %v944 = vmul.f32 %v943, 1.442695
        %v945 = vpow.pop %v944
        %v946 = vadd.f32 %v945, 2.0
        %v947 = vmul.f32 %v945, %v946
        %v948 = vadd.f32 %v947, 2.0
        %v949 = vrcp.pop %v948
        %v950 = vmul.f32 %v947, %v949
        %vm951 = vcmp.gt.f32.partialorder %v942, 20.0
        %v952 = vsel %vm951, 1.0, %v950
        %v953 = vmul.f32 %v942, %v952
        %v954 = vpack.c.bf16 %v953, %v953
        %s955 = scalar_lea.vmem [#allocation2], 108
        %956 = vst [vmem:[%s955 + $0x4] sm:$0xf] %v954
      $region68: #{csp_down_block_forward.7} parent=55 // pred_fallthru
        _
      %p957 = scmp.ge.s32.totalorder %s25, 0
      // Predicated region
      $region69: #{csp_down_block_forward.7} parent=55 // pred_check
        %p958 = pneg %p957
      $region70: #{csp_down_block_forward.7} parent=55 // pred_check_branch
        %960 = sbr.rel (%p958) target = $region72
      $region71: #{csp_down_block_forward.7} parent=55 // pred_region
        %s961 = scalar_lea.vmem [#allocation2], 108
        %962 = vst [vmem:[%s961 + $0x4] sm:$0xf] 0
      $region72: #{csp_down_block_forward.7} parent=55 // pred_fallthru
        _
      %v963 = vld [vmem:[#allocation2] sm:$0x8]
      %v964 = vld [vmem:[#allocation2 + $0x4] sm:$0xf]
      %v965 = vld [vmem:[#allocation2 + $0xc] sm:$0x8]
      %v966 = vld [vmem:[#allocation2 + $0x10] sm:$0xf]
      %v967 = vld [vmem:[#allocation2 + $0x18] sm:$0x8]
      %v968 = vld [vmem:[#allocation2 + $0x1c] sm:$0xf]
      %v969 = vld [vmem:[#allocation2 + $0x24] sm:$0x8]
      %v970 = vld [vmem:[#allocation2 + $0x28] sm:$0xf]
      %v971 = vld [vmem:[#allocation2 + $0x30] sm:$0x8]
      %v972 = vld [vmem:[#allocation2 + $0x34] sm:$0xf]
      %v973 = vld [vmem:[#allocation2 + $0x3c] sm:$0x8]
      %v974 = vld [vmem:[#allocation2 + $0x40] sm:$0xf]
      %v975 = vld [vmem:[#allocation2 + $0x48] sm:$0x8]
      %v976 = vld [vmem:[#allocation2 + $0x4c] sm:$0xf]
      %v977 = vld [vmem:[#allocation2 + $0x54] sm:$0x8]
      %v978 = vld [vmem:[#allocation2 + $0x58] sm:$0xf]
      %v979 = vld [vmem:[#allocation2 + $0x60] sm:$0x8]
      %v980 = vld [vmem:[#allocation2 + $0x64] sm:$0xf]
      %v981 = vld [vmem:[#allocation2 + $0x6c] sm:$0x8]
      %v982 = vld [vmem:[#allocation2 + $0x70] sm:$0xf]
      %vm983 = vsmask.f32 256
      %vm984 = vsmask.f32 4368
      %vm985 = vmor %vm983, %vm984
      %v987 = vshrl.u32 %v963, 16
      %v989 = vrot.slane %v987, 7
      %v990 = vrot.slane %v989, 4
      %v992 = vshrl.u32 %v964, 16
      %v994 = vrot.slane %v992, 7
      %v995 = vshll.u32 %v964, 16
      %v997 = vor.u32 %v994, %v995
      %v998 = vsel %vm985, %v990, %v997
      %v1000 = vshrl.u32 %v965, 16
      %v1002 = vrot.slane %v1000, 7
      %v1003 = vrot.slane %v1002, 4
      %v1005 = vshrl.u32 %v966, 16
      %v1007 = vrot.slane %v1005, 7
      %v1008 = vshll.u32 %v966, 16
      %v1010 = vor.u32 %v1007, %v1008
      %v1011 = vsel %vm985, %v1003, %v1010
      %v1013 = vshrl.u32 %v967, 16
      %v1015 = vrot.slane %v1013, 7
      %v1016 = vrot.slane %v1015, 4
      %v1018 = vshrl.u32 %v968, 16
      %v1020 = vrot.slane %v1018, 7
      %v1021 = vshll.u32 %v968, 16
      %v1023 = vor.u32 %v1020, %v1021
      %v1024 = vsel %vm985, %v1016, %v1023
      %v1026 = vshrl.u32 %v969, 16
      %v1028 = vrot.slane %v1026, 7
      %v1029 = vrot.slane %v1028, 4
      %v1031 = vshrl.u32 %v970, 16
      %v1033 = vrot.slane %v1031, 7
      %v1034 = vshll.u32 %v970, 16
      %v1036 = vor.u32 %v1033, %v1034
      %v1037 = vsel %vm985, %v1029, %v1036
      %v1039 = vshrl.u32 %v971, 16
      %v1041 = vrot.slane %v1039, 7
      %v1042 = vrot.slane %v1041, 4
      %v1044 = vshrl.u32 %v972, 16
      %v1046 = vrot.slane %v1044, 7
      %v1047 = vshll.u32 %v972, 16
      %v1049 = vor.u32 %v1046, %v1047
      %v1050 = vsel %vm985, %v1042, %v1049
      %v1052 = vshrl.u32 %v973, 16
      %v1054 = vrot.slane %v1052, 7
      %v1055 = vrot.slane %v1054, 4
      %v1057 = vshrl.u32 %v974, 16
      %v1059 = vrot.slane %v1057, 7
      %v1060 = vshll.u32 %v974, 16
      %v1062 = vor.u32 %v1059, %v1060
      %v1063 = vsel %vm985, %v1055, %v1062
      %v1065 = vshrl.u32 %v975, 16
      %v1067 = vrot.slane %v1065, 7
      %v1068 = vrot.slane %v1067, 4
      %v1070 = vshrl.u32 %v976, 16
      %v1072 = vrot.slane %v1070, 7
      %v1073 = vshll.u32 %v976, 16
      %v1075 = vor.u32 %v1072, %v1073
      %v1076 = vsel %vm985, %v1068, %v1075
      %v1078 = vshrl.u32 %v977, 16
      %v1080 = vrot.slane %v1078, 7
      %v1081 = vrot.slane %v1080, 4
      %v1083 = vshrl.u32 %v978, 16
      %v1085 = vrot.slane %v1083, 7
      %v1086 = vshll.u32 %v978, 16
      %v1088 = vor.u32 %v1085, %v1086
      %v1089 = vsel %vm985, %v1081, %v1088
      %v1091 = vshrl.u32 %v979, 16
      %v1093 = vrot.slane %v1091, 7
      %v1094 = vrot.slane %v1093, 4
      %v1096 = vshrl.u32 %v980, 16
      %v1098 = vrot.slane %v1096, 7
      %v1099 = vshll.u32 %v980, 16
      %v1101 = vor.u32 %v1098, %v1099
      %v1102 = vsel %vm985, %v1094, %v1101
      %v1104 = vshrl.u32 %v981, 16
      %v1106 = vrot.slane %v1104, 7
      %v1107 = vrot.slane %v1106, 4
      %v1109 = vshrl.u32 %v982, 16
      %v1111 = vrot.slane %v1109, 7
      %v1112 = vshll.u32 %v982, 16
      %v1114 = vor.u32 %v1111, %v1112
      %v1115 = vsel %vm985, %v1107, %v1114
      %1126 = vst [vmem:[#allocation3] sm:$0xf] %v998
      %1127 = vst [vmem:[#allocation3 + $0xc] sm:$0xf] %v1011
      %1128 = vst [vmem:[#allocation3 + $0x18] sm:$0xf] %v1024
      %1129 = vst [vmem:[#allocation3 + $0x24] sm:$0xf] %v1037
      %1130 = vst [vmem:[#allocation3 + $0x30] sm:$0xf] %v1050
      %1131 = vst [vmem:[#allocation3 + $0x3c] sm:$0xf] %v1063
      %1132 = vst [vmem:[#allocation3 + $0x48] sm:$0xf] %v1076
      %1133 = vst [vmem:[#allocation3 + $0x54] sm:$0xf] %v1089
      %1134 = vst [vmem:[#allocation3 + $0x60] sm:$0xf] %v1102
      %1135 = vst [vmem:[#allocation3 + $0x6c] sm:$0xf] %v1115
      %v1136 = vld [vmem:[#allocation2 + $0x4] sm:$0xf]
      %v1137 = vld [vmem:[#allocation2 + $0x10] sm:$0xf]
      %v1138 = vld [vmem:[#allocation2 + $0x1c] sm:$0xf]
      %v1139 = vld [vmem:[#allocation2 + $0x28] sm:$0xf]
      %v1140 = vld [vmem:[#allocation2 + $0x34] sm:$0xf]
      %v1141 = vld [vmem:[#allocation2 + $0x40] sm:$0xf]
      %v1142 = vld [vmem:[#allocation2 + $0x4c] sm:$0xf]
      %v1143 = vld [vmem:[#allocation2 + $0x58] sm:$0xf]
      %v1144 = vld [vmem:[#allocation2 + $0x64] sm:$0xf]
      %v1145 = vld [vmem:[#allocation2 + $0x70] sm:$0xf]
      %1146 = vst [vmem:[#allocation3 + $0x4] sm:$0xf] %v1136
      %1147 = vst [vmem:[#allocation3 + $0x10] sm:$0xf] %v1137
      %1148 = vst [vmem:[#allocation3 + $0x1c] sm:$0xf] %v1138
      %1149 = vst [vmem:[#allocation3 + $0x28] sm:$0xf] %v1139
      %1150 = vst [vmem:[#allocation3 + $0x34] sm:$0xf] %v1140
      %1151 = vst [vmem:[#allocation3 + $0x40] sm:$0xf] %v1141
      %1152 = vst [vmem:[#allocation3 + $0x4c] sm:$0xf] %v1142
      %1153 = vst [vmem:[#allocation3 + $0x58] sm:$0xf] %v1143
      %1154 = vst [vmem:[#allocation3 + $0x64] sm:$0xf] %v1144
      %1155 = vst [vmem:[#allocation3 + $0x70] sm:$0xf] %v1145
      %v1156 = vld [vmem:[#allocation2 + $0x4] sm:$0xf]
      %v1157 = vld [vmem:[#allocation2 + $0x8] sm:$0x1]
      %v1158 = vld [vmem:[#allocation2 + $0x10] sm:$0xf]
      %v1159 = vld [vmem:[#allocation2 + $0x14] sm:$0x1]
      %v1160 = vld [vmem:[#allocation2 + $0x1c] sm:$0xf]
      %v1161 = vld [vmem:[#allocation2 + $0x20] sm:$0x1]
      %v1162 = vld [vmem:[#allocation2 + $0x28] sm:$0xf]
      %v1163 = vld [vmem:[#allocation2 + $0x2c] sm:$0x1]
      %v1164 = vld [vmem:[#allocation2 + $0x34] sm:$0xf]
      %v1165 = vld [vmem:[#allocation2 + $0x38] sm:$0x1]
      %v1166 = vld [vmem:[#allocation2 + $0x40] sm:$0xf]
      %v1167 = vld [vmem:[#allocation2 + $0x44] sm:$0x1]
      %v1168 = vld [vmem:[#allocation2 + $0x4c] sm:$0xf]
      %v1169 = vld [vmem:[#allocation2 + $0x50] sm:$0x1]
      %v1170 = vld [vmem:[#allocation2 + $0x58] sm:$0xf]
      %v1171 = vld [vmem:[#allocation2 + $0x5c] sm:$0x1]
      %v1172 = vld [vmem:[#allocation2 + $0x64] sm:$0xf]
      %v1173 = vld [vmem:[#allocation2 + $0x68] sm:$0x1]
      %v1174 = vld [vmem:[#allocation2 + $0x70] sm:$0xf]
      %v1175 = vld [vmem:[#allocation2 + $0x74] sm:$0x1]
      %vm1176 = vsmask.f32 3328
      %vm1177 = vsmask.f32 7440
      %vm1178 = vmor %vm1176, %vm1177
      %v1180 = vshrl.u32 %v1156, 16
      %v1182 = vrot.slane %v1180, 4
      %v1183 = vshll.u32 %v1156, 16
      %v1185 = vrot.slane %v1183, 5
      %v1186 = vor.u32 %v1182, %v1185
      %v1187 = vrot.slane %v1186, 4
      %v1189 = vshll.u32 %v1157, 16
      %v1191 = vrot.slane %v1189, 5
      %v1192 = vsel %vm1178, %v1187, %v1191
      %v1194 = vshrl.u32 %v1158, 16
      %v1196 = vrot.slane %v1194, 4
      %v1197 = vshll.u32 %v1158, 16
      %v1199 = vrot.slane %v1197, 5
      %v1200 = vor.u32 %v1196, %v1199
      %v1201 = vrot.slane %v1200, 4
      %v1203 = vshll.u32 %v1159, 16
      %v1205 = vrot.slane %v1203, 5
      %v1206 = vsel %vm1178, %v1201, %v1205
      %v1208 = vshrl.u32 %v1160, 16
      %v1210 = vrot.slane %v1208, 4
      %v1211 = vshll.u32 %v1160, 16
      %v1213 = vrot.slane %v1211, 5
      %v1214 = vor.u32 %v1210, %v1213
      %v1215 = vrot.slane %v1214, 4
      %v1217 = vshll.u32 %v1161, 16
      %v1219 = vrot.slane %v1217, 5
      %v1220 = vsel %vm1178, %v1215, %v1219
      %v1222 = vshrl.u32 %v1162, 16
      %v1224 = vrot.slane %v1222, 4
      %v1225 = vshll.u32 %v1162, 16
      %v1227 = vrot.slane %v1225, 5
      %v1228 = vor.u32 %v1224, %v1227
      %v1229 = vrot.slane %v1228, 4
      %v1231 = vshll.u32 %v1163, 16
      %v1233 = vrot.slane %v1231, 5
      %v1234 = vsel %vm1178, %v1229, %v1233
      %v1236 = vshrl.u32 %v1164, 16
      %v1238 = vrot.slane %v1236, 4
      %v1239 = vshll.u32 %v1164, 16
      %v1241 = vrot.slane %v1239, 5
      %v1242 = vor.u32 %v1238, %v1241
      %v1243 = vrot.slane %v1242, 4
      %v1245 = vshll.u32 %v1165, 16
      %v1247 = vrot.slane %v1245, 5
      %v1248 = vsel %vm1178, %v1243, %v1247
      %v1250 = vshrl.u32 %v1166, 16
      %v1252 = vrot.slane %v1250, 4
      %v1253 = vshll.u32 %v1166, 16
      %v1255 = vrot.slane %v1253, 5
      %v1256 = vor.u32 %v1252, %v1255
      %v1257 = vrot.slane %v1256, 4
      %v1259 = vshll.u32 %v1167, 16
      %v1261 = vrot.slane %v1259, 5
      %v1262 = vsel %vm1178, %v1257, %v1261
      %v1264 = vshrl.u32 %v1168, 16
      %v1266 = vrot.slane %v1264, 4
      %v1267 = vshll.u32 %v1168, 16
      %v1269 = vrot.slane %v1267, 5
      %v1270 = vor.u32 %v1266, %v1269
      %v1271 = vrot.slane %v1270, 4
      %v1273 = vshll.u32 %v1169, 16
      %v1275 = vrot.slane %v1273, 5
      %v1276 = vsel %vm1178, %v1271, %v1275
      %v1278 = vshrl.u32 %v1170, 16
      %v1280 = vrot.slane %v1278, 4
      %v1281 = vshll.u32 %v1170, 16
      %v1283 = vrot.slane %v1281, 5
      %v1284 = vor.u32 %v1280, %v1283
      %v1285 = vrot.slane %v1284, 4
      %v1287 = vshll.u32 %v1171, 16
      %v1289 = vrot.slane %v1287, 5
      %v1290 = vsel %vm1178, %v1285, %v1289
      %v1292 = vshrl.u32 %v1172, 16
      %v1294 = vrot.slane %v1292, 4
      %v1295 = vshll.u32 %v1172, 16
      %v1297 = vrot.slane %v1295, 5
      %v1298 = vor.u32 %v1294, %v1297
      %v1299 = vrot.slane %v1298, 4
      %v1301 = vshll.u32 %v1173, 16
      %v1303 = vrot.slane %v1301, 5
      %v1304 = vsel %vm1178, %v1299, %v1303
      %v1306 = vshrl.u32 %v1174, 16
      %v1308 = vrot.slane %v1306, 4
      %v1309 = vshll.u32 %v1174, 16
      %v1311 = vrot.slane %v1309, 5
      %v1312 = vor.u32 %v1308, %v1311
      %v1313 = vrot.slane %v1312, 4
      %v1315 = vshll.u32 %v1175, 16
      %v1317 = vrot.slane %v1315, 5
      %v1318 = vsel %vm1178, %v1313, %v1317
      %1329 = vst [vmem:[#allocation3 + $0x8] sm:$0xf] %v1192
      %1330 = vst [vmem:[#allocation3 + $0x14] sm:$0xf] %v1206
      %1331 = vst [vmem:[#allocation3 + $0x20] sm:$0xf] %v1220
      %1332 = vst [vmem:[#allocation3 + $0x2c] sm:$0xf] %v1234
      %1333 = vst [vmem:[#allocation3 + $0x38] sm:$0xf] %v1248
      %1334 = vst [vmem:[#allocation3 + $0x44] sm:$0xf] %v1262
      %1335 = vst [vmem:[#allocation3 + $0x50] sm:$0xf] %v1276
      %1336 = vst [vmem:[#allocation3 + $0x5c] sm:$0xf] %v1290
      %1337 = vst [vmem:[#allocation3 + $0x68] sm:$0xf] %v1304
      %1338 = vst [vmem:[#allocation3 + $0x74] sm:$0xf] %v1318
      %v1339 = vld [vmem:[#allocation3] sm:$0xff]
      %v1340 = vld [vmem:[#allocation3 + $0x8] sm:$0xf]
      %v1341 = vld [vmem:[#allocation3 + $0xc] sm:$0xff]
      %v1342 = vld [vmem:[#allocation3 + $0x14] sm:$0xf]
      %v1343 = vld [vmem:[#allocation3 + $0x18] sm:$0xff]
      %v1344 = vld [vmem:[#allocation3 + $0x20] sm:$0xf]
      %v1345 = vld [vmem:[#allocation3 + $0x24] sm:$0xff]
      %v1346 = vld [vmem:[#allocation3 + $0x2c] sm:$0xf]
      %v1347 = vld [vmem:[#allocation3 + $0x30] sm:$0xff]
      %v1348 = vld [vmem:[#allocation3 + $0x38] sm:$0xf]
      %v1349 = vld [vmem:[#allocation3 + $0x3c] sm:$0xff]
      %v1350 = vld [vmem:[#allocation3 + $0x44] sm:$0xf]
      %v1351 = vld [vmem:[#allocation3 + $0x48] sm:$0xff]
      %v1352 = vld [vmem:[#allocation3 + $0x50] sm:$0xf]
      %v1353 = vld [vmem:[#allocation3 + $0x54] sm:$0xff]
      %v1354 = vld [vmem:[#allocation3 + $0x5c] sm:$0xf]
      %v1355 = vld [vmem:[%s6] sm:$0xf]
      %v1356 = vld [vmem:[%s6 + $0x4] sm:$0xf]
      %v1357 = vld [vmem:[%s6 + $0x8] sm:$0xf]
      %v1358 = vld [vmem:[%s6 + $0xc] sm:$0xf]
      %v1359 = vld [vmem:[%s6 + $0x10] sm:$0xf]
      %v1360 = vld [vmem:[%s6 + $0x14] sm:$0xf]
      %v1361 = vld [vmem:[%s6 + $0x18] sm:$0xf]
      %v1362 = vld [vmem:[%s6 + $0x1c] sm:$0xf]
      %v1363 = vld [vmem:[%s6 + $0x20] sm:$0xf]
      %v1364 = vld [vmem:[%s6 + $0x24] sm:$0xf]
      %v1365 = vld [vmem:[%s6 + $0x28] sm:$0xf]
      %v1366 = vld [vmem:[%s6 + $0x2c] sm:$0xf]
      %v1367 = vld [vmem:[%s6 + $0x30] sm:$0xf]
      %v1368 = vld [vmem:[%s6 + $0x34] sm:$0xf]
      %v1369 = vld [vmem:[%s6 + $0x38] sm:$0xf]
      %v1370 = vld [vmem:[%s6 + $0x3c] sm:$0xf]
      %v1371 = vld [vmem:[%s6 + $0x40] sm:$0xf]
      %v1372 = vld [vmem:[%s6 + $0x44] sm:$0xf]
      %v1373 = vld [vmem:[%s6 + $0x48] sm:$0xf]
      %v1374 = vld [vmem:[%s6 + $0x4c] sm:$0xf]
      %v1375 = vld [vmem:[%s6 + $0x50] sm:$0xf]
      %v1376 = vld [vmem:[%s6 + $0x54] sm:$0xf]
      %v1377 = vld [vmem:[%s6 + $0x58] sm:$0xf]
      %v1378 = vld [vmem:[%s6 + $0x5c] sm:$0xf]
      %v1379 = vld [vmem:[%s6 + $0x60] sm:$0xf]
      %v1380 = vld [vmem:[%s6 + $0x64] sm:$0xf]
      %v1381 = vld [vmem:[%s6 + $0x68] sm:$0xf]
      %v1382 = vld [vmem:[%s6 + $0x6c] sm:$0xf]
      %v1383 = vld [vmem:[%s6 + $0x70] sm:$0xf]
      %v1384 = vld [vmem:[%s6 + $0x74] sm:$0xf]
      %v1385 = vld [vmem:[%s6 + $0x78] sm:$0xf]
      %v1386 = vld [vmem:[%s6 + $0x7c] sm:$0xf]
      %v1387 = vld [vmem:[%s6 + $0x80] sm:$0xf]
      %v1388 = vld [vmem:[%s6 + $0x84] sm:$0xf]
      %v1389 = vld [vmem:[%s6 + $0x88] sm:$0xf]
      %v1390 = vld [vmem:[%s6 + $0x8c] sm:$0xf]
      %v1391 = vld [vmem:[%s6 + $0x90] sm:$0xf]
      %v1392 = vld [vmem:[%s6 + $0x94] sm:$0xf]
      %v1393 = vld [vmem:[%s6 + $0x98] sm:$0xf]
      %v1394 = vld [vmem:[%s6 + $0x9c] sm:$0xf]
      %v1395 = vld [vmem:[%s6 + $0xa0] sm:$0xf]
      %v1396 = vld [vmem:[%s6 + $0xa4] sm:$0xf]
      %v1397 = vld [vmem:[%s6 + $0xa8] sm:$0xf]
      %v1398 = vld [vmem:[%s6 + $0xac] sm:$0xf]
      %v1399 = vld [vmem:[%s6 + $0xb0] sm:$0xf]
      %v1400 = vld [vmem:[%s6 + $0xb4] sm:$0xf]
      %v1401 = vld [vmem:[%s6 + $0xb8] sm:$0xf]
      %v1402 = vld [vmem:[%s6 + $0xbc] sm:$0xf]
      %s1403 = scalar_lea.vmem [#allocation3], 12
      %v1404 = vld [vmem:[%s1403] sm:$0xff]
      %v1405 = vld [vmem:[%s1403 + $0x8] sm:$0xf]
      %v1406 = vld [vmem:[%s1403 + $0xc] sm:$0xff]
      %v1407 = vld [vmem:[%s1403 + $0x14] sm:$0xf]
      %v1408 = vld [vmem:[%s1403 + $0x18] sm:$0xff]
      %v1409 = vld [vmem:[%s1403 + $0x20] sm:$0xf]
      %v1410 = vld [vmem:[%s1403 + $0x24] sm:$0xff]
      %v1411 = vld [vmem:[%s1403 + $0x2c] sm:$0xf]
      %v1412 = vld [vmem:[%s1403 + $0x30] sm:$0xff]
      %v1413 = vld [vmem:[%s1403 + $0x38] sm:$0xf]
      %v1414 = vld [vmem:[%s1403 + $0x3c] sm:$0xff]
      %v1415 = vld [vmem:[%s1403 + $0x44] sm:$0xf]
      %v1416 = vld [vmem:[%s1403 + $0x48] sm:$0xff]
      %v1417 = vld [vmem:[%s1403 + $0x50] sm:$0xf]
      %v1418 = vld [vmem:[%s1403 + $0x54] sm:$0xff]
      %v1419 = vld [vmem:[%s1403 + $0x5c] sm:$0xf]
      %s1420 = scalar_lea.vmem %s6, 192
      %v1421 = vld [vmem:[%s1420] sm:$0xf]
      %v1422 = vld [vmem:[%s1420 + $0x4] sm:$0xf]
      %v1423 = vld [vmem:[%s1420 + $0x8] sm:$0xf]
      %v1424 = vld [vmem:[%s1420 + $0xc] sm:$0xf]
      %v1425 = vld [vmem:[%s1420 + $0x10] sm:$0xf]
      %v1426 = vld [vmem:[%s1420 + $0x14] sm:$0xf]
      %v1427 = vld [vmem:[%s1420 + $0x18] sm:$0xf]
      %v1428 = vld [vmem:[%s1420 + $0x1c] sm:$0xf]
      %v1429 = vld [vmem:[%s1420 + $0x20] sm:$0xf]
      %v1430 = vld [vmem:[%s1420 + $0x24] sm:$0xf]
      %v1431 = vld [vmem:[%s1420 + $0x28] sm:$0xf]
      %v1432 = vld [vmem:[%s1420 + $0x2c] sm:$0xf]
      %v1433 = vld [vmem:[%s1420 + $0x30] sm:$0xf]
      %v1434 = vld [vmem:[%s1420 + $0x34] sm:$0xf]
      %v1435 = vld [vmem:[%s1420 + $0x38] sm:$0xf]
      %v1436 = vld [vmem:[%s1420 + $0x3c] sm:$0xf]
      %v1437 = vld [vmem:[%s1420 + $0x40] sm:$0xf]
      %v1438 = vld [vmem:[%s1420 + $0x44] sm:$0xf]
      %v1439 = vld [vmem:[%s1420 + $0x48] sm:$0xf]
      %v1440 = vld [vmem:[%s1420 + $0x4c] sm:$0xf]
      %v1441 = vld [vmem:[%s1420 + $0x50] sm:$0xf]
      %v1442 = vld [vmem:[%s1420 + $0x54] sm:$0xf]
      %v1443 = vld [vmem:[%s1420 + $0x58] sm:$0xf]
      %v1444 = vld [vmem:[%s1420 + $0x5c] sm:$0xf]
      %v1445 = vld [vmem:[%s1420 + $0x60] sm:$0xf]
      %v1446 = vld [vmem:[%s1420 + $0x64] sm:$0xf]
      %v1447 = vld [vmem:[%s1420 + $0x68] sm:$0xf]
      %v1448 = vld [vmem:[%s1420 + $0x6c] sm:$0xf]
      %v1449 = vld [vmem:[%s1420 + $0x70] sm:$0xf]
      %v1450 = vld [vmem:[%s1420 + $0x74] sm:$0xf]
      %v1451 = vld [vmem:[%s1420 + $0x78] sm:$0xf]
      %v1452 = vld [vmem:[%s1420 + $0x7c] sm:$0xf]
      %v1453 = vld [vmem:[%s1420 + $0x80] sm:$0xf]
      %v1454 = vld [vmem:[%s1420 + $0x84] sm:$0xf]
      %v1455 = vld [vmem:[%s1420 + $0x88] sm:$0xf]
      %v1456 = vld [vmem:[%s1420 + $0x8c] sm:$0xf]
      %v1457 = vld [vmem:[%s1420 + $0x90] sm:$0xf]
      %v1458 = vld [vmem:[%s1420 + $0x94] sm:$0xf]
      %v1459 = vld [vmem:[%s1420 + $0x98] sm:$0xf]
      %v1460 = vld [vmem:[%s1420 + $0x9c] sm:$0xf]
      %v1461 = vld [vmem:[%s1420 + $0xa0] sm:$0xf]
      %v1462 = vld [vmem:[%s1420 + $0xa4] sm:$0xf]
      %v1463 = vld [vmem:[%s1420 + $0xa8] sm:$0xf]
      %v1464 = vld [vmem:[%s1420 + $0xac] sm:$0xf]
      %v1465 = vld [vmem:[%s1420 + $0xb0] sm:$0xf]
      %v1466 = vld [vmem:[%s1420 + $0xb4] sm:$0xf]
      %v1467 = vld [vmem:[%s1420 + $0xb8] sm:$0xf]
      %v1468 = vld [vmem:[%s1420 + $0xbc] sm:$0xf]
      %v1485 = vunpack.c.l.b16 %v1404
      %v1486 = vunpack.c.h.b16 %v1404
      %v1487 = vunpack.c.l.b16 %v1405
      %v1488 = vunpack.c.l.b16 %v1406
      %v1489 = vunpack.c.h.b16 %v1406
      %v1490 = vunpack.c.l.b16 %v1407
      %v1491 = vunpack.c.l.b16 %v1408
      %v1492 = vunpack.c.h.b16 %v1408
      %v1493 = vunpack.c.l.b16 %v1409
      %v1494 = vunpack.c.l.b16 %v1410
      %v1495 = vunpack.c.h.b16 %v1410
      %v1496 = vunpack.c.l.b16 %v1411
      %v1497 = vunpack.c.l.b16 %v1412
      %v1498 = vunpack.c.h.b16 %v1412
      %v1499 = vunpack.c.l.b16 %v1413
      %v1500 = vunpack.c.l.b16 %v1414
      %v1501 = vunpack.c.h.b16 %v1414
      %v1502 = vunpack.c.l.b16 %v1415
      %v1503 = vunpack.c.l.b16 %v1416
      %v1504 = vunpack.c.h.b16 %v1416
      %v1505 = vunpack.c.l.b16 %v1417
      %v1506 = vunpack.c.l.b16 %v1418
      %v1507 = vunpack.c.h.b16 %v1418
      %v1508 = vunpack.c.l.b16 %v1419
      %v1509 = vpack.c.b16 %v1488, %v1485
      %v1510 = vpack.c.b16 %v1489, %v1486
      %v1511 = vpack.c.b16 %v1490, %v1487
      %v1512 = vpack.c.b16 %v1494, %v1491
      %v1513 = vpack.c.b16 %v1495, %v1492
      %v1514 = vpack.c.b16 %v1496, %v1493
      %v1515 = vpack.c.b16 %v1500, %v1497
      %v1516 = vpack.c.b16 %v1501, %v1498
      %v1517 = vpack.c.b16 %v1502, %v1499
      %v1518 = vpack.c.b16 %v1506, %v1503
      %v1519 = vpack.c.b16 %v1507, %v1504
      %v1520 = vpack.c.b16 %v1508, %v1505
      %v1581 = vunpack.c.l.b16 %v1421
      %v1582 = vunpack.c.l.b16 %v1422
      %v1583 = vunpack.c.l.b16 %v1423
      %v1584 = vunpack.c.l.b16 %v1424
      %v1585 = vunpack.c.l.b16 %v1425
      %v1586 = vunpack.c.l.b16 %v1426
      %v1587 = vunpack.c.l.b16 %v1427
      %v1588 = vunpack.c.l.b16 %v1428
      %v1589 = vunpack.c.l.b16 %v1429
      %v1590 = vunpack.c.l.b16 %v1430
      %v1591 = vunpack.c.l.b16 %v1431
      %v1592 = vunpack.c.l.b16 %v1432
      %v1593 = vunpack.c.l.b16 %v1433
      %v1594 = vunpack.c.l.b16 %v1434
      %v1595 = vunpack.c.l.b16 %v1435
      %v1596 = vunpack.c.l.b16 %v1436
      %v1597 = vunpack.c.l.b16 %v1437
      %v1598 = vunpack.c.l.b16 %v1438
      %v1599 = vunpack.c.l.b16 %v1439
      %v1600 = vunpack.c.l.b16 %v1440
      %v1601 = vunpack.c.l.b16 %v1441
      %v1602 = vunpack.c.l.b16 %v1442
      %v1603 = vunpack.c.l.b16 %v1443
      %v1604 = vunpack.c.l.b16 %v1444
      %v1605 = vunpack.c.l.b16 %v1445
      %v1606 = vunpack.c.l.b16 %v1446
      %v1607 = vunpack.c.l.b16 %v1447
      %v1608 = vunpack.c.l.b16 %v1448
      %v1609 = vunpack.c.l.b16 %v1449
      %v1610 = vunpack.c.l.b16 %v1450
      %v1611 = vunpack.c.l.b16 %v1451
      %v1612 = vunpack.c.l.b16 %v1452
      %v1613 = vunpack.c.l.b16 %v1453
      %v1614 = vunpack.c.l.b16 %v1454
      %v1615 = vunpack.c.l.b16 %v1455
      %v1616 = vunpack.c.l.b16 %v1456
      %v1617 = vunpack.c.l.b16 %v1457
      %v1618 = vunpack.c.l.b16 %v1458
      %v1619 = vunpack.c.l.b16 %v1459
      %v1620 = vunpack.c.l.b16 %v1460
      %v1621 = vunpack.c.l.b16 %v1461
      %v1622 = vunpack.c.l.b16 %v1462
      %v1623 = vunpack.c.l.b16 %v1463
      %v1624 = vunpack.c.l.b16 %v1464
      %v1625 = vunpack.c.l.b16 %v1465
      %v1626 = vunpack.c.l.b16 %v1466
      %v1627 = vunpack.c.l.b16 %v1467
      %v1628 = vunpack.c.l.b16 %v1468
      %v1629 = vpack.c.b16 %v1582, %v1581
      %v1630 = vpack.c.b16 %v1584, %v1583
      %v1631 = vpack.c.b16 %v1586, %v1585
      %v1632 = vpack.c.b16 %v1588, %v1587
      %v1633 = vpack.c.b16 %v1590, %v1589
      %v1634 = vpack.c.b16 %v1592, %v1591
      %v1635 = vpack.c.b16 %v1594, %v1593
      %v1636 = vpack.c.b16 %v1596, %v1595
      %v1637 = vpack.c.b16 %v1598, %v1597
      %v1638 = vpack.c.b16 %v1600, %v1599
      %v1639 = vpack.c.b16 %v1602, %v1601
      %v1640 = vpack.c.b16 %v1604, %v1603
      %v1641 = vpack.c.b16 %v1606, %v1605
      %v1642 = vpack.c.b16 %v1608, %v1607
      %v1643 = vpack.c.b16 %v1610, %v1609
      %v1644 = vpack.c.b16 %v1612, %v1611
      %v1645 = vpack.c.b16 %v1614, %v1613
      %v1646 = vpack.c.b16 %v1616, %v1615
      %v1647 = vpack.c.b16 %v1618, %v1617
      %v1648 = vpack.c.b16 %v1620, %v1619
      %v1649 = vpack.c.b16 %v1622, %v1621
      %v1650 = vpack.c.b16 %v1624, %v1623
      %v1651 = vpack.c.b16 %v1626, %v1625
      %v1652 = vpack.c.b16 %v1628, %v1627
      %1677 = vmatprep.subr.bf16.mxu0 0
      %1678 = vmatpush1.bf16.msra.mxu0 %v1629
      %1679 = vmatprep.subr.bf16.mxu0 0
      %1680 = vmatpush1.bf16.msra.mxu0 %v1630
      %1681 = vmatprep.subr.bf16.mxu0 0
      %1682 = vmatpush1.bf16.msra.mxu0 %v1631
      %1683 = vmatprep.subr.bf16.mxu0 0
      %1684 = vmatpush1.bf16.msra.mxu0 %v1632
      %1685 = vmatprep.subr.bf16.mxu0 0
      %1686 = vmatpush1.bf16.msra.mxu0 %v1633
      %1687 = vmatprep.subr.bf16.mxu0 0
      %1688 = vmatpush1.bf16.msra.mxu0 %v1634
      %1689 = vmatprep.subr.bf16.mxu0 0
      %1690 = vmatpush1.bf16.msra.mxu0 %v1635
      %1691 = vmatprep.subr.bf16.mxu0 0
      %1692 = vmatpush1.bf16.msra.mxu0 %v1636
      %1693 = vmatprep.subr.bf16.mxu0 0
      %1694 = vmatpush1.bf16.msra.mxu0 %v1637
      %1695 = vmatprep.subr.bf16.mxu0 0
      %1696 = vmatpush1.bf16.msra.mxu0 %v1638
      %1697 = vmatprep.subr.bf16.mxu0 0
      %1698 = vmatpush1.bf16.msra.mxu0 %v1639
      %1699 = vmatprep.subr.bf16.mxu0 0
      %1700 = vmatpush1.bf16.msra.mxu0 %v1640
      %1701 = vmatprep.subr.bf16.mxu0 0
      %1702 = vmatpush1.bf16.msra.mxu0 %v1641
      %1703 = vmatprep.subr.bf16.mxu0 0
      %1704 = vmatpush1.bf16.msra.mxu0 %v1642
      %1705 = vmatprep.subr.bf16.mxu0 0
      %1706 = vmatpush1.bf16.msra.mxu0 %v1643
      %1707 = vmatprep.subr.bf16.mxu0 0
      %1708 = vmatpush1.bf16.msra.mxu0 %v1644
      %1709 = vmatprep.mubr.bf16.mxu0 %v1510
      %1710 = vmatmul.mubr.bf16.gmra.mrb[0].mxu0 %v1509
      %v1711 = vpop.f32.mrb[0].mxu0
      %v1712 = vadd.f32 0.0, %v1711
      %v1713 = vpop.f32.mrb[0].mxu0
      %v1714 = vpop.f32.mrb[0].mxu0
      %v1715 = vadd.f32 0.0, %v1714
      %v1716 = vpop.f32.mrb[0].mxu0
      %1717 = vmatprep.mubr.bf16.mxu0 %v1513
      %1718 = vmatmul.mubr.bf16.gmra.mrb[0].mxu0 %v1512
      %v1719 = vpop.f32.mrb[0].mxu0
      %v1720 = vadd.f32 0.0, %v1719
      %v1721 = vpop.f32.mrb[0].mxu0
      %v1722 = vpop.f32.mrb[0].mxu0
      %v1723 = vadd.f32 0.0, %v1722
      %v1724 = vpop.f32.mrb[0].mxu0
      %1725 = vmatprep.mubr.bf16.mxu0 %v1516
      %1726 = vmatmul.mubr.bf16.gmra.mrb[0].mxu0 %v1515
      %v1727 = vpop.f32.mrb[0].mxu0
      %v1728 = vadd.f32 0.0, %v1727
      %v1729 = vpop.f32.mrb[0].mxu0
      %v1730 = vpop.f32.mrb[0].mxu0
      %v1731 = vadd.f32 0.0, %v1730
      %v1732 = vpop.f32.mrb[0].mxu0
      %1733 = vmatprep.mubr.bf16.mxu0 %v1519
      %1734 = vmatmul.mubr.bf16.gmra.mrb[0].mxu0 %v1518
      %v1735 = vpop.f32.mrb[0].mxu0
      %v1736 = vadd.f32 0.0, %v1735
      %v1737 = vpop.f32.mrb[0].mxu0
      %v1738 = vpop.f32.mrb[0].mxu0
      %v1739 = vadd.f32 0.0, %v1738
      %v1740 = vpop.f32.mrb[0].mxu0
      %1741 = vdwg.mxu0
      %1742 = vmatprep.subr.bf16.mxu0 0
      %1743 = vmatpush1.bf16.msra.mxu0 %v1645
      %1744 = vmatprep.subr.bf16.mxu0 0
      %1745 = vmatpush1.bf16.msra.mxu0 %v1646
      %1746 = vmatprep.subr.bf16.mxu0 0
      %1747 = vmatpush1.bf16.msra.mxu0 %v1647
      %1748 = vmatprep.subr.bf16.mxu0 0
      %1749 = vmatpush1.bf16.msra.mxu0 %v1648
      %1750 = vmatprep.subr.bf16.mxu0 0
      %1751 = vmatpush1.bf16.msra.mxu0 %v1649
      %1752 = vmatprep.subr.bf16.mxu0 0
      %1753 = vmatpush1.bf16.msra.mxu0 %v1650
      %1754 = vmatprep.subr.bf16.mxu0 0
      %1755 = vmatpush1.bf16.msra.mxu0 %v1651
      %1756 = vmatprep.subr.bf16.mxu0 0
      %1757 = vmatpush1.bf16.msra.mxu0 %v1652
      %1758 = vmatprep.subr.bf16.mxu0 0
      %1759 = vmatpush1.bf16.msra.mxu0 0
      %1760 = vmatprep.subr.bf16.mxu0 0
      %1761 = vmatpush1.bf16.msra.mxu0 0
      %1762 = vmatprep.subr.bf16.mxu0 0
      %1763 = vmatpush1.bf16.msra.mxu0 0
      %1764 = vmatprep.subr.bf16.mxu0 0
      %1765 = vmatpush1.bf16.msra.mxu0 0
      %1766 = vmatprep.subr.bf16.mxu0 0
      %1767 = vmatpush1.bf16.msra.mxu0 0
      %1768 = vmatprep.subr.bf16.mxu0 0
      %1769 = vmatpush1.bf16.msra.mxu0 0
      %1770 = vmatprep.subr.bf16.mxu0 0
      %1771 = vmatpush1.bf16.msra.mxu0 0
      %1772 = vmatprep.subr.bf16.mxu0 0
      %1773 = vmatpush1.bf16.msra.mxu0 0
      %1774 = vmatprep.mubr.bf16.mxu0 0
      %1775 = vmatmul.mubr.bf16.gmra.mrb[0].mxu0 %v1511
      %v1776 = vpop.f32.mrb[0].mxu0
      %v1777 = vadd.f32 %v1712, %v1776
      %v1778 = vpop.f32.mrb[0].mxu0
      %v1779 = vpop.f32.mrb[0].mxu0
      %v1780 = vadd.f32 %v1715, %v1779
      %v1781 = vpop.f32.mrb[0].mxu0
      %1782 = vmatprep.mubr.bf16.mxu0 0
      %1783 = vmatmul.mubr.bf16.gmra.mrb[0].mxu0 %v1514
      %v1784 = vpop.f32.mrb[0].mxu0
      %v1785 = vadd.f32 %v1720, %v1784
      %v1786 = vpop.f32.mrb[0].mxu0
      %v1787 = vpop.f32.mrb[0].mxu0
      %v1788 = vadd.f32 %v1723, %v1787
      %v1789 = vpop.f32.mrb[0].mxu0
      %1790 = vmatprep.mubr.bf16.mxu0 0
      %1791 = vmatmul.mubr.bf16.gmra.mrb[0].mxu0 %v1517
      %v1792 = vpop.f32.mrb[0].mxu0
      %v1793 = vadd.f32 %v1728, %v1792
      %v1794 = vpop.f32.mrb[0].mxu0
      %v1795 = vpop.f32.mrb[0].mxu0
      %v1796 = vadd.f32 %v1731, %v1795
      %v1797 = vpop.f32.mrb[0].mxu0
      %1798 = vmatprep.mubr.bf16.mxu0 0
      %1799 = vmatmul.mubr.bf16.gmra.mrb[0].mxu0 %v1520
      %v1800 = vpop.f32.mrb[0].mxu0
      %v1801 = vadd.f32 %v1736, %v1800
      %v1802 = vpop.f32.mrb[0].mxu0
      %v1803 = vpop.f32.mrb[0].mxu0
      %v1804 = vadd.f32 %v1739, %v1803
      %v1805 = vpop.f32.mrb[0].mxu0
      %1806 = vdwg.mxu0
      %v1823 = vunpack.c.l.b16 %v1339
      %v1824 = vunpack.c.h.b16 %v1339
      %v1825 = vunpack.c.l.b16 %v1340
      %v1826 = vunpack.c.l.b16 %v1341
      %v1827 = vunpack.c.h.b16 %v1341
      %v1828 = vunpack.c.l.b16 %v1342
      %v1829 = vunpack.c.l.b16 %v1343
      %v1830 = vunpack.c.h.b16 %v1343
      %v1831 = vunpack.c.l.b16 %v1344
      %v1832 = vunpack.c.l.b16 %v1345
      %v1833 = vunpack.c.h.b16 %v1345
      %v1834 = vunpack.c.l.b16 %v1346
      %v1835 = vunpack.c.l.b16 %v1347
      %v1836 = vunpack.c.h.b16 %v1347
      %v1837 = vunpack.c.l.b16 %v1348
      %v1838 = vunpack.c.l.b16 %v1349
      %v1839 = vunpack.c.h.b16 %v1349
      %v1840 = vunpack.c.l.b16 %v1350
      %v1841 = vunpack.c.l.b16 %v1351
      %v1842 = vunpack.c.h.b16 %v1351
      %v1843 = vunpack.c.l.b16 %v1352
      %v1844 = vunpack.c.l.b16 %v1353
      %v1845 = vunpack.c.h.b16 %v1353
      %v1846 = vunpack.c.l.b16 %v1354
      %v1847 = vpack.c.b16 %v1826, %v1823
      %v1848 = vpack.c.b16 %v1827, %v1824
      %v1849 = vpack.c.b16 %v1828, %v1825
      %v1850 = vpack.c.b16 %v1832, %v1829
      %v1851 = vpack.c.b16 %v1833, %v1830
      %v1852 = vpack.c.b16 %v1834, %v1831
      %v1853 = vpack.c.b16 %v1838, %v1835
      %v1854 = vpack.c.b16 %v1839, %v1836
      %v1855 = vpack.c.b16 %v1840, %v1837
      %v1856 = vpack.c.b16 %v1844, %v1841
      %v1857 = vpack.c.b16 %v1845, %v1842
      %v1858 = vpack.c.b16 %v1846, %v1843
      %v1919 = vunpack.c.l.b16 %v1355
      %v1920 = vunpack.c.l.b16 %v1356
      %v1921 = vunpack.c.l.b16 %v1357
      %v1922 = vunpack.c.l.b16 %v1358
      %v1923 = vunpack.c.l.b16 %v1359
      %v1924 = vunpack.c.l.b16 %v1360
      %v1925 = vunpack.c.l.b16 %v1361
      %v1926 = vunpack.c.l.b16 %v1362
      %v1927 = vunpack.c.l.b16 %v1363
      %v1928 = vunpack.c.l.b16 %v1364
      %v1929 = vunpack.c.l.b16 %v1365
      %v1930 = vunpack.c.l.b16 %v1366
      %v1931 = vunpack.c.l.b16 %v1367
      %v1932 = vunpack.c.l.b16 %v1368
      %v1933 = vunpack.c.l.b16 %v1369
      %v1934 = vunpack.c.l.b16 %v1370
      %v1935 = vunpack.c.l.b16 %v1371
      %v1936 = vunpack.c.l.b16 %v1372
      %v1937 = vunpack.c.l.b16 %v1373
      %v1938 = vunpack.c.l.b16 %v1374
      %v1939 = vunpack.c.l.b16 %v1375
      %v1940 = vunpack.c.l.b16 %v1376
      %v1941 = vunpack.c.l.b16 %v1377
      %v1942 = vunpack.c.l.b16 %v1378
      %v1943 = vunpack.c.l.b16 %v1379
      %v1944 = vunpack.c.l.b16 %v1380
      %v1945 = vunpack.c.l.b16 %v1381
      %v1946 = vunpack.c.l.b16 %v1382
      %v1947 = vunpack.c.l.b16 %v1383
      %v1948 = vunpack.c.l.b16 %v1384
      %v1949 = vunpack.c.l.b16 %v1385
      %v1950 = vunpack.c.l.b16 %v1386
      %v1951 = vunpack.c.l.b16 %v1387
      %v1952 = vunpack.c.l.b16 %v1388
      %v1953 = vunpack.c.l.b16 %v1389
      %v1954 = vunpack.c.l.b16 %v1390
      %v1955 = vunpack.c.l.b16 %v1391
      %v1956 = vunpack.c.l.b16 %v1392
      %v1957 = vunpack.c.l.b16 %v1393
      %v1958 = vunpack.c.l.b16 %v1394
      %v1959 = vunpack.c.l.b16 %v1395
      %v1960 = vunpack.c.l.b16 %v1396
      %v1961 = vunpack.c.l.b16 %v1397
      %v1962 = vunpack.c.l.b16 %v1398
      %v1963 = vunpack.c.l.b16 %v1399
      %v1964 = vunpack.c.l.b16 %v1400
      %v1965 = vunpack.c.l.b16 %v1401
      %v1966 = vunpack.c.l.b16 %v1402
      %v1967 = vpack.c.b16 %v1920, %v1919
      %v1968 = vpack.c.b16 %v1922, %v1921
      %v1969 = vpack.c.b16 %v1924, %v1923
      %v1970 = vpack.c.b16 %v1926, %v1925
      %v1971 = vpack.c.b16 %v1928, %v1927
      %v1972 = vpack.c.b16 %v1930, %v1929
      %v1973 = vpack.c.b16 %v1932, %v1931
      %v1974 = vpack.c.b16 %v1934, %v1933
      %v1975 = vpack.c.b16 %v1936, %v1935
      %v1976 = vpack.c.b16 %v1938, %v1937
      %v1977 = vpack.c.b16 %v1940, %v1939
      %v1978 = vpack.c.b16 %v1942, %v1941
      %v1979 = vpack.c.b16 %v1944, %v1943
      %v1980 = vpack.c.b16 %v1946, %v1945
      %v1981 = vpack.c.b16 %v1948, %v1947
      %v1982 = vpack.c.b16 %v1950, %v1949
      %v1983 = vpack.c.b16 %v1952, %v1951
      %v1984 = vpack.c.b16 %v1954, %v1953
      %v1985 = vpack.c.b16 %v1956, %v1955
      %v1986 = vpack.c.b16 %v1958, %v1957
      %v1987 = vpack.c.b16 %v1960, %v1959
      %v1988 = vpack.c.b16 %v1962, %v1961
      %v1989 = vpack.c.b16 %v1964, %v1963
      %v1990 = vpack.c.b16 %v1966, %v1965
      %2015 = vmatprep.subr.bf16.mxu0 0
      %2016 = vmatpush1.bf16.msra.mxu0 %v1967
      %2017 = vmatprep.subr.bf16.mxu0 0
      %2018 = vmatpush1.bf16.msra.mxu0 %v1968
      %2019 = vmatprep.subr.bf16.mxu0 0
      %2020 = vmatpush1.bf16.msra.mxu0 %v1969
      %2021 = vmatprep.subr.bf16.mxu0 0
      %2022 = vmatpush1.bf16.msra.mxu0 %v1970
      %2023 = vmatprep.subr.bf16.mxu0 0
      %2024 = vmatpush1.bf16.msra.mxu0 %v1971
      %2025 = vmatprep.subr.bf16.mxu0 0
      %2026 = vmatpush1.bf16.msra.mxu0 %v1972
      %2027 = vmatprep.subr.bf16.mxu0 0
      %2028 = vmatpush1.bf16.msra.mxu0 %v1973
      %2029 = vmatprep.subr.bf16.mxu0 0
      %2030 = vmatpush1.bf16.msra.mxu0 %v1974
      %2031 = vmatprep.subr.bf16.mxu0 0
      %2032 = vmatpush1.bf16.msra.mxu0 %v1975
      %2033 = vmatprep.subr.bf16.mxu0 0
      %2034 = vmatpush1.bf16.msra.mxu0 %v1976
      %2035 = vmatprep.subr.bf16.mxu0 0
      %2036 = vmatpush1.bf16.msra.mxu0 %v1977
      %2037 = vmatprep.subr.bf16.mxu0 0
      %2038 = vmatpush1.bf16.msra.mxu0 %v1978
      %2039 = vmatprep.subr.bf16.mxu0 0
      %2040 = vmatpush1.bf16.msra.mxu0 %v1979
      %2041 = vmatprep.subr.bf16.mxu0 0
      %2042 = vmatpush1.bf16.msra.mxu0 %v1980
      %2043 = vmatprep.subr.bf16.mxu0 0
      %2044 = vmatpush1.bf16.msra.mxu0 %v1981
      %2045 = vmatprep.subr.bf16.mxu0 0
      %2046 = vmatpush1.bf16.msra.mxu0 %v1982
      %2047 = vmatprep.mubr.bf16.mxu0 %v1848
      %2048 = vmatmul.mubr.bf16.gmra.mrb[0].mxu0 %v1847
      %v2049 = vpop.f32.mrb[0].mxu0
      %v2050 = vadd.f32 %v1777, %v2049
      %v2051 = vpop.f32.mrb[0].mxu0
      %v2052 = vpop.f32.mrb[0].mxu0
      %v2053 = vadd.f32 %v1780, %v2052
      %v2054 = vpop.f32.mrb[0].mxu0
      %2055 = vmatprep.mubr.bf16.mxu0 %v1851
      %2056 = vmatmul.mubr.bf16.gmra.mrb[0].mxu0 %v1850
      %v2057 = vpop.f32.mrb[0].mxu0
      %v2058 = vadd.f32 %v1785, %v2057
      %v2059 = vpop.f32.mrb[0].mxu0
      %v2060 = vpop.f32.mrb[0].mxu0
      %v2061 = vadd.f32 %v1788, %v2060
      %v2062 = vpop.f32.mrb[0].mxu0
      %2063 = vmatprep.mubr.bf16.mxu0 %v1854
      %2064 = vmatmul.mubr.bf16.gmra.mrb[0].mxu0 %v1853
      %v2065 = vpop.f32.mrb[0].mxu0
      %v2066 = vadd.f32 %v1793, %v2065
      %v2067 = vpop.f32.mrb[0].mxu0
      %v2068 = vpop.f32.mrb[0].mxu0
      %v2069 = vadd.f32 %v1796, %v2068
      %v2070 = vpop.f32.mrb[0].mxu0
      %2071 = vmatprep.mubr.bf16.mxu0 %v1857
      %2072 = vmatmul.mubr.bf16.gmra.mrb[0].mxu0 %v1856
      %v2073 = vpop.f32.mrb[0].mxu0
      %v2074 = vadd.f32 %v1801, %v2073
      %v2075 = vpop.f32.mrb[0].mxu0
      %v2076 = vpop.f32.mrb[0].mxu0
      %v2077 = vadd.f32 %v1804, %v2076
      %v2078 = vpop.f32.mrb[0].mxu0
      %2079 = vdwg.mxu0
      %2080 = vmatprep.subr.bf16.mxu0 0
      %2081 = vmatpush1.bf16.msra.mxu0 %v1983
      %2082 = vmatprep.subr.bf16.mxu0 0
      %2083 = vmatpush1.bf16.msra.mxu0 %v1984
      %2084 = vmatprep.subr.bf16.mxu0 0
      %2085 = vmatpush1.bf16.msra.mxu0 %v1985
      %2086 = vmatprep.subr.bf16.mxu0 0
      %2087 = vmatpush1.bf16.msra.mxu0 %v1986
      %2088 = vmatprep.subr.bf16.mxu0 0
      %2089 = vmatpush1.bf16.msra.mxu0 %v1987
      %2090 = vmatprep.subr.bf16.mxu0 0
      %2091 = vmatpush1.bf16.msra.mxu0 %v1988
      %2092 = vmatprep.subr.bf16.mxu0 0
      %2093 = vmatpush1.bf16.msra.mxu0 %v1989
      %2094 = vmatprep.subr.bf16.mxu0 0
      %2095 = vmatpush1.bf16.msra.mxu0 %v1990
      %2096 = vmatprep.subr.bf16.mxu0 0
      %2097 = vmatpush1.bf16.msra.mxu0 0
      %2098 = vmatprep.subr.bf16.mxu0 0
      %2099 = vmatpush1.bf16.msra.mxu0 0
      %2100 = vmatprep.subr.bf16.mxu0 0
      %2101 = vmatpush1.bf16.msra.mxu0 0
      %2102 = vmatprep.subr.bf16.mxu0 0
      %2103 = vmatpush1.bf16.msra.mxu0 0
      %2104 = vmatprep.subr.bf16.mxu0 0
      %2105 = vmatpush1.bf16.msra.mxu0 0
      %2106 = vmatprep.subr.bf16.mxu0 0
      %2107 = vmatpush1.bf16.msra.mxu0 0
      %2108 = vmatprep.subr.bf16.mxu0 0
      %2109 = vmatpush1.bf16.msra.mxu0 0
      %2110 = vmatprep.subr.bf16.mxu0 0
      %2111 = vmatpush1.bf16.msra.mxu0 0
      %2112 = vmatprep.mubr.bf16.mxu0 0
      %2113 = vmatmul.mubr.bf16.gmra.mrb[0].mxu0 %v1849
      %v2114 = vpop.f32.mrb[0].mxu0
      %v2115 = vadd.f32 %v2050, %v2114
      %v2116 = vpop.f32.mrb[0].mxu0
      %v2117 = vpop.f32.mrb[0].mxu0
      %v2118 = vadd.f32 %v2053, %v2117
      %v2119 = vpop.f32.mrb[0].mxu0
      %2120 = vmatprep.mubr.bf16.mxu0 0
      %2121 = vmatmul.mubr.bf16.gmra.mrb[0].mxu0 %v1852
      %v2122 = vpop.f32.mrb[0].mxu0
      %v2123 = vadd.f32 %v2058, %v2122
      %v2124 = vpop.f32.mrb[0].mxu0
      %v2125 = vpop.f32.mrb[0].mxu0
      %v2126 = vadd.f32 %v2061, %v2125
      %v2127 = vpop.f32.mrb[0].mxu0
      %2128 = vmatprep.mubr.bf16.mxu0 0
      %2129 = vmatmul.mubr.bf16.gmra.mrb[0].mxu0 %v1855
      %v2130 = vpop.f32.mrb[0].mxu0
      %v2131 = vadd.f32 %v2066, %v2130
      %v2132 = vpop.f32.mrb[0].mxu0
      %v2133 = vpop.f32.mrb[0].mxu0
      %v2134 = vadd.f32 %v2069, %v2133
      %v2135 = vpop.f32.mrb[0].mxu0
      %2136 = vmatprep.mubr.bf16.mxu0 0
      %2137 = vmatmul.mubr.bf16.gmra.mrb[0].mxu0 %v1858
      %v2138 = vpop.f32.mrb[0].mxu0
      %v2139 = vadd.f32 %v2074, %v2138
      %v2140 = vpop.f32.mrb[0].mxu0
      %v2141 = vpop.f32.mrb[0].mxu0
      %v2142 = vadd.f32 %v2077, %v2141
      %v2143 = vpop.f32.mrb[0].mxu0
      %2144 = vdwg.mxu0
      %s2145 = scalar_lea.vmem [#allocation3], 24
      %v2146 = vld [vmem:[%s2145] sm:$0xff]
      %v2147 = vld [vmem:[%s2145 + $0x8] sm:$0xf]
      %v2148 = vld [vmem:[%s2145 + $0xc] sm:$0xff]
      %v2149 = vld [vmem:[%s2145 + $0x14] sm:$0xf]
      %v2150 = vld [vmem:[%s2145 + $0x18] sm:$0xff]
      %v2151 = vld [vmem:[%s2145 + $0x20] sm:$0xf]
      %v2152 = vld [vmem:[%s2145 + $0x24] sm:$0xff]
      %v2153 = vld [vmem:[%s2145 + $0x2c] sm:$0xf]
      %v2154 = vld [vmem:[%s2145 + $0x30] sm:$0xff]
      %v2155 = vld [vmem:[%s2145 + $0x38] sm:$0xf]
      %v2156 = vld [vmem:[%s2145 + $0x3c] sm:$0xff]
      %v2157 = vld [vmem:[%s2145 + $0x44] sm:$0xf]
      %v2158 = vld [vmem:[%s2145 + $0x48] sm:$0xff]
      %v2159 = vld [vmem:[%s2145 + $0x50] sm:$0xf]
      %v2160 = vld [vmem:[%s2145 + $0x54] sm:$0xff]
      %v2161 = vld [vmem:[%s2145 + $0x5c] sm:$0xf]
      %s2162 = scalar_lea.vmem %s6, 384
      %v2163 = vld [vmem:[%s2162] sm:$0xf]
      %v2164 = vld [vmem:[%s2162 + $0x4] sm:$0xf]
      %v2165 = vld [vmem:[%s2162 + $0x8] sm:$0xf]
      %v2166 = vld [vmem:[%s2162 + $0xc] sm:$0xf]
      %v2167 = vld [vmem:[%s2162 + $0x10] sm:$0xf]
      %v2168 = vld [vmem:[%s2162 + $0x14] sm:$0xf]
      %v2169 = vld [vmem:[%s2162 + $0x18] sm:$0xf]
      %v2170 = vld [vmem:[%s2162 + $0x1c] sm:$0xf]
      %v2171 = vld [vmem:[%s2162 + $0x20] sm:$0xf]
      %v2172 = vld [vmem:[%s2162 + $0x24] sm:$0xf]
      %v2173 = vld [vmem:[%s2162 + $0x28] sm:$0xf]
      %v2174 = vld [vmem:[%s2162 + $0x2c] sm:$0xf]
      %v2175 = vld [vmem:[%s2162 + $0x30] sm:$0xf]
      %v2176 = vld [vmem:[%s2162 + $0x34] sm:$0xf]
      %v2177 = vld [vmem:[%s2162 + $0x38] sm:$0xf]
      %v2178 = vld [vmem:[%s2162 + $0x3c] sm:$0xf]
      %v2179 = vld [vmem:[%s2162 + $0x40] sm:$0xf]
      %v2180 = vld [vmem:[%s2162 + $0x44] sm:$0xf]
      %v2181 = vld [vmem:[%s2162 + $0x48] sm:$0xf]
      %v2182 = vld [vmem:[%s2162 + $0x4c] sm:$0xf]
      %v2183 = vld [vmem:[%s2162 + $0x50] sm:$0xf]
      %v2184 = vld [vmem:[%s2162 + $0x54] sm:$0xf]
      %v2185 = vld [vmem:[%s2162 + $0x58] sm:$0xf]
      %v2186 = vld [vmem:[%s2162 + $0x5c] sm:$0xf]
      %v2187 = vld [vmem:[%s2162 + $0x60] sm:$0xf]
      %v2188 = vld [vmem:[%s2162 + $0x64] sm:$0xf]
      %v2189 = vld [vmem:[%s2162 + $0x68] sm:$0xf]
      %v2190 = vld [vmem:[%s2162 + $0x6c] sm:$0xf]
      %v2191 = vld [vmem:[%s2162 + $0x70] sm:$0xf]
      %v2192 = vld [vmem:[%s2162 + $0x74] sm:$0xf]
      %v2193 = vld [vmem:[%s2162 + $0x78] sm:$0xf]
      %v2194 = vld [vmem:[%s2162 + $0x7c] sm:$0xf]
      %v2195 = vld [vmem:[%s2162 + $0x80] sm:$0xf]
      %v2196 = vld [vmem:[%s2162 + $0x84] sm:$0xf]
      %v2197 = vld [vmem:[%s2162 + $0x88] sm:$0xf]
      %v2198 = vld [vmem:[%s2162 + $0x8c] sm:$0xf]
      %v2199 = vld [vmem:[%s2162 + $0x90] sm:$0xf]
      %v2200 = vld [vmem:[%s2162 + $0x94] sm:$0xf]
      %v2201 = vld [vmem:[%s2162 + $0x98] sm:$0xf]
      %v2202 = vld [vmem:[%s2162 + $0x9c] sm:$0xf]
      %v2203 = vld [vmem:[%s2162 + $0xa0] sm:$0xf]
      %v2204 = vld [vmem:[%s2162 + $0xa4] sm:$0xf]
      %v2205 = vld [vmem:[%s2162 + $0xa8] sm:$0xf]
      %v2206 = vld [vmem:[%s2162 + $0xac] sm:$0xf]
      %v2207 = vld [vmem:[%s2162 + $0xb0] sm:$0xf]
      %v2208 = vld [vmem:[%s2162 + $0xb4] sm:$0xf]
      %v2209 = vld [vmem:[%s2162 + $0xb8] sm:$0xf]
      %v2210 = vld [vmem:[%s2162 + $0xbc] sm:$0xf]
      %v2227 = vunpack.c.l.b16 %v2146
      %v2228 = vunpack.c.h.b16 %v2146
      %v2229 = vunpack.c.l.b16 %v2147
      %v2230 = vunpack.c.l.b16 %v2148
      %v2231 = vunpack.c.h.b16 %v2148
      %v2232 = vunpack.c.l.b16 %v2149
      %v2233 = vunpack.c.l.b16 %v2150
      %v2234 = vunpack.c.h.b16 %v2150
      %v2235 = vunpack.c.l.b16 %v2151
      %v2236 = vunpack.c.l.b16 %v2152
      %v2237 = vunpack.c.h.b16 %v2152
      %v2238 = vunpack.c.l.b16 %v2153
      %v2239 = vunpack.c.l.b16 %v2154
      %v2240 = vunpack.c.h.b16 %v2154
      %v2241 = vunpack.c.l.b16 %v2155
      %v2242 = vunpack.c.l.b16 %v2156
      %v2243 = vunpack.c.h.b16 %v2156
      %v2244 = vunpack.c.l.b16 %v2157
      %v2245 = vunpack.c.l.b16 %v2158
      %v2246 = vunpack.c.h.b16 %v2158
      %v2247 = vunpack.c.l.b16 %v2159
      %v2248 = vunpack.c.l.b16 %v2160
      %v2249 = vunpack.c.h.b16 %v2160
      %v2250 = vunpack.c.l.b16 %v2161
      %v2251 = vpack.c.b16 %v2230, %v2227
      %v2252 = vpack.c.b16 %v2231, %v2228
      %v2253 = vpack.c.b16 %v2232, %v2229
      %v2254 = vpack.c.b16 %v2236, %v2233
      %v2255 = vpack.c.b16 %v2237, %v2234
      %v2256 = vpack.c.b16 %v2238, %v2235
      %v2257 = vpack.c.b16 %v2242, %v2239
      %v2258 = vpack.c.b16 %v2243, %v2240
      %v2259 = vpack.c.b16 %v2244, %v2241
      %v2260 = vpack.c.b16 %v2248, %v2245
      %v2261 = vpack.c.b16 %v2249, %v2246
      %v2262 = vpack.c.b16 %v2250, %v2247
      %v2323 = vunpack.c.l.b16 %v2163
      %v2324 = vunpack.c.l.b16 %v2164
      %v2325 = vunpack.c.l.b16 %v2165
      %v2326 = vunpack.c.l.b16 %v2166
      %v2327 = vunpack.c.l.b16 %v2167
      %v2328 = vunpack.c.l.b16 %v2168
      %v2329 = vunpack.c.l.b16 %v2169
      %v2330 = vunpack.c.l.b16 %v2170
      %v2331 = vunpack.c.l.b16 %v2171
      %v2332 = vunpack.c.l.b16 %v2172
      %v2333 = vunpack.c.l.b16 %v2173
      %v2334 = vunpack.c.l.b16 %v2174
      %v2335 = vunpack.c.l.b16 %v2175
      %v2336 = vunpack.c.l.b16 %v2176
      %v2337 = vunpack.c.l.b16 %v2177
      %v2338 = vunpack.c.l.b16 %v2178
      %v2339 = vunpack.c.l.b16 %v2179
      %v2340 = vunpack.c.l.b16 %v2180
      %v2341 = vunpack.c.l.b16 %v2181
      %v2342 = vunpack.c.l.b16 %v2182
      %v2343 = vunpack.c.l.b16 %v2183
      %v2344 = vunpack.c.l.b16 %v2184
      %v2345 = vunpack.c.l.b16 %v2185
      %v2346 = vunpack.c.l.b16 %v2186
      %v2347 = vunpack.c.l.b16 %v2187
      %v2348 = vunpack.c.l.b16 %v2188
      %v2349 = vunpack.c.l.b16 %v2189
      %v2350 = vunpack.c.l.b16 %v2190
      %v2351 = vunpack.c.l.b16 %v2191
      %v2352 = vunpack.c.l.b16 %v2192
      %v2353 = vunpack.c.l.b16 %v2193
      %v2354 = vunpack.c.l.b16 %v2194
      %v2355 = vunpack.c.l.b16 %v2195
      %v2356 = vunpack.c.l.b16 %v2196
      %v2357 = vunpack.c.l.b16 %v2197
      %v2358 = vunpack.c.l.b16 %v2198
      %v2359 = vunpack.c.l.b16 %v2199
      %v2360 = vunpack.c.l.b16 %v2200
      %v2361 = vunpack.c.l.b16 %v2201
      %v2362 = vunpack.c.l.b16 %v2202
      %v2363 = vunpack.c.l.b16 %v2203
      %v2364 = vunpack.c.l.b16 %v2204
      %v2365 = vunpack.c.l.b16 %v2205
      %v2366 = vunpack.c.l.b16 %v2206
      %v2367 = vunpack.c.l.b16 %v2207
      %v2368 = vunpack.c.l.b16 %v2208
      %v2369 = vunpack.c.l.b16 %v2209
      %v2370 = vunpack.c.l.b16 %v2210
      %v2371 = vpack.c.b16 %v2324, %v2323
      %v2372 = vpack.c.b16 %v2326, %v2325
      %v2373 = vpack.c.b16 %v2328, %v2327
      %v2374 = vpack.c.b16 %v2330, %v2329
      %v2375 = vpack.c.b16 %v2332, %v2331
      %v2376 = vpack.c.b16 %v2334, %v2333
      %v2377 = vpack.c.b16 %v2336, %v2335
      %v2378 = vpack.c.b16 %v2338, %v2337
      %v2379 = vpack.c.b16 %v2340, %v2339
      %v2380 = vpack.c.b16 %v2342, %v2341
      %v2381 = vpack.c.b16 %v2344, %v2343
      %v2382 = vpack.c.b16 %v2346, %v2345
      %v2383 = vpack.c.b16 %v2348, %v2347
      %v2384 = vpack.c.b16 %v2350, %v2349
      %v2385 = vpack.c.b16 %v2352, %v2351
      %v2386 = vpack.c.b16 %v2354, %v2353
      %v2387 = vpack.c.b16 %v2356, %v2355
      %v2388 = vpack.c.b16 %v2358, %v2357
      %v2389 = vpack.c.b16 %v2360, %v2359
      %v2390 = vpack.c.b16 %v2362, %v2361
      %v2391 = vpack.c.b16 %v2364, %v2363
      %v2392 = vpack.c.b16 %v2366, %v2365
      %v2393 = vpack.c.b16 %v2368, %v2367
      %v2394 = vpack.c.b16 %v2370, %v2369
      %2419 = vmatprep.subr.bf16.mxu0 0
      %2420 = vmatpush1.bf16.msra.mxu0 %v2371
      %2421 = vmatprep.subr.bf16.mxu0 0
      %2422 = vmatpush1.bf16.msra.mxu0 %v2372
      %2423 = vmatprep.subr.bf16.mxu0 0
      %2424 = vmatpush1.bf16.msra.mxu0 %v2373
      %2425 = vmatprep.subr.bf16.mxu0 0
      %2426 = vmatpush1.bf16.msra.mxu0 %v2374
      %2427 = vmatprep.subr.bf16.mxu0 0
      %2428 = vmatpush1.bf16.msra.mxu0 %v2375
      %2429 = vmatprep.subr.bf16.mxu0 0
      %2430 = vmatpush1.bf16.msra.mxu0 %v2376
      %2431 = vmatprep.subr.bf16.mxu0 0
      %2432 = vmatpush1.bf16.msra.mxu0 %v2377
      %2433 = vmatprep.subr.bf16.mxu0 0
      %2434 = vmatpush1.bf16.msra.mxu0 %v2378
      %2435 = vmatprep.subr.bf16.mxu0 0
      %2436 = vmatpush1.bf16.msra.mxu0 %v2379
      %2437 = vmatprep.subr.bf16.mxu0 0
      %2438 = vmatpush1.bf16.msra.mxu0 %v2380
      %2439 = vmatprep.subr.bf16.mxu0 0
      %2440 = vmatpush1.bf16.msra.mxu0 %v2381
      %2441 = vmatprep.subr.bf16.mxu0 0
      %2442 = vmatpush1.bf16.msra.mxu0 %v2382
      %2443 = vmatprep.subr.bf16.mxu0 0
      %2444 = vmatpush1.bf16.msra.mxu0 %v2383
      %2445 = vmatprep.subr.bf16.mxu0 0
      %2446 = vmatpush1.bf16.msra.mxu0 %v2384
      %2447 = vmatprep.subr.bf16.mxu0 0
      %2448 = vmatpush1.bf16.msra.mxu0 %v2385
      %2449 = vmatprep.subr.bf16.mxu0 0
      %2450 = vmatpush1.bf16.msra.mxu0 %v2386
      %2451 = vmatprep.mubr.bf16.mxu0 %v2252
      %2452 = vmatmul.mubr.bf16.gmra.mrb[0].mxu0 %v2251
      %v2453 = vpop.f32.mrb[0].mxu0
      %v2454 = vadd.f32 0.0, %v2453
      %v2455 = vpop.f32.mrb[0].mxu0
      %v2456 = vpop.f32.mrb[0].mxu0
      %v2457 = vadd.f32 0.0, %v2456
      %v2458 = vpop.f32.mrb[0].mxu0
      %2459 = vmatprep.mubr.bf16.mxu0 %v2255
      %2460 = vmatmul.mubr.bf16.gmra.mrb[0].mxu0 %v2254
      %v2461 = vpop.f32.mrb[0].mxu0
      %v2462 = vadd.f32 0.0, %v2461
      %v2463 = vpop.f32.mrb[0].mxu0
      %v2464 = vpop.f32.mrb[0].mxu0
      %v2465 = vadd.f32 0.0, %v2464
      %v2466 = vpop.f32.mrb[0].mxu0
      %2467 = vmatprep.mubr.bf16.mxu0 %v2258
      %2468 = vmatmul.mubr.bf16.gmra.mrb[0].mxu0 %v2257
      %v2469 = vpop.f32.mrb[0].mxu0
      %v2470 = vadd.f32 0.0, %v2469
      %v2471 = vpop.f32.mrb[0].mxu0
      %v2472 = vpop.f32.mrb[0].mxu0
      %v2473 = vadd.f32 0.0, %v2472
      %v2474 = vpop.f32.mrb[0].mxu0
      %2475 = vmatprep.mubr.bf16.mxu0 %v2261
      %2476 = vmatmul.mubr.bf16.gmra.mrb[0].mxu0 %v2260
      %v2477 = vpop.f32.mrb[0].mxu0
      %v2478 = vadd.f32 0.0, %v2477
      %v2479 = vpop.f32.mrb[0].mxu0
      %v2480 = vpop.f32.mrb[0].mxu0
      %v2481 = vadd.f32 0.0, %v2480
      %v2482 = vpop.f32.mrb[0].mxu0
      %2483 = vdwg.mxu0
      %2484 = vmatprep.subr.bf16.mxu0 0
      %2485 = vmatpush1.bf16.msra.mxu0 %v2387
      %2486 = vmatprep.subr.bf16.mxu0 0
      %2487 = vmatpush1.bf16.msra.mxu0 %v2388
      %2488 = vmatprep.subr.bf16.mxu0 0
      %2489 = vmatpush1.bf16.msra.mxu0 %v2389
      %2490 = vmatprep.subr.bf16.mxu0 0
      %2491 = vmatpush1.bf16.msra.mxu0 %v2390
      %2492 = vmatprep.subr.bf16.mxu0 0
      %2493 = vmatpush1.bf16.msra.mxu0 %v2391
      %2494 = vmatprep.subr.bf16.mxu0 0
      %2495 = vmatpush1.bf16.msra.mxu0 %v2392
      %2496 = vmatprep.subr.bf16.mxu0 0
      %2497 = vmatpush1.bf16.msra.mxu0 %v2393
      %2498 = vmatprep.subr.bf16.mxu0 0
      %2499 = vmatpush1.bf16.msra.mxu0 %v2394
      %2500 = vmatprep.subr.bf16.mxu0 0
      %2501 = vmatpush1.bf16.msra.mxu0 0
      %2502 = vmatprep.subr.bf16.mxu0 0
      %2503 = vmatpush1.bf16.msra.mxu0 0
      %2504 = vmatprep.subr.bf16.mxu0 0
      %2505 = vmatpush1.bf16.msra.mxu0 0
      %2506 = vmatprep.subr.bf16.mxu0 0
      %2507 = vmatpush1.bf16.msra.mxu0 0
      %2508 = vmatprep.subr.bf16.mxu0 0
      %2509 = vmatpush1.bf16.msra.mxu0 0
      %2510 = vmatprep.subr.bf16.mxu0 0
      %2511 = vmatpush1.bf16.msra.mxu0 0
      %2512 = vmatprep.subr.bf16.mxu0 0
      %2513 = vmatpush1.bf16.msra.mxu0 0
      %2514 = vmatprep.subr.bf16.mxu0 0
      %2515 = vmatpush1.bf16.msra.mxu0 0
      %2516 = vmatprep.mubr.bf16.mxu0 0
      %2517 = vmatmul.mubr.bf16.gmra.mrb[0].mxu0 %v2253
      %v2518 = vpop.f32.mrb[0].mxu0
      %v2519 = vadd.f32 %v2454, %v2518
      %v2520 = vpop.f32.mrb[0].mxu0
      %v2521 = vpop.f32.mrb[0].mxu0
      %v2522 = vadd.f32 %v2457, %v2521
      %v2523 = vpop.f32.mrb[0].mxu0
      %2524 = vmatprep.mubr.bf16.mxu0 0
      %2525 = vmatmul.mubr.bf16.gmra.mrb[0].mxu0 %v2256
      %v2526 = vpop.f32.mrb[0].mxu0
      %v2527 = vadd.f32 %v2462, %v2526
      %v2528 = vpop.f32.mrb[0].mxu0
      %v2529 = vpop.f32.mrb[0].mxu0
      %v2530 = vadd.f32 %v2465, %v2529
      %v2531 = vpop.f32.mrb[0].mxu0
      %2532 = vmatprep.mubr.bf16.mxu0 0
      %2533 = vmatmul.mubr.bf16.gmra.mrb[0].mxu0 %v2259
      %v2534 = vpop.f32.mrb[0].mxu0
      %v2535 = vadd.f32 %v2470, %v2534
      %v2536 = vpop.f32.mrb[0].mxu0
      %v2537 = vpop.f32.mrb[0].mxu0
      %v2538 = vadd.f32 %v2473, %v2537
      %v2539 = vpop.f32.mrb[0].mxu0
      %2540 = vmatprep.mubr.bf16.mxu0 0
      %2541 = vmatmul.mubr.bf16.gmra.mrb[0].mxu0 %v2262
      %v2542 = vpop.f32.mrb[0].mxu0
      %v2543 = vadd.f32 %v2478, %v2542
      %v2544 = vpop.f32.mrb[0].mxu0
      %v2545 = vpop.f32.mrb[0].mxu0
      %v2546 = vadd.f32 %v2481, %v2545
      %v2547 = vpop.f32.mrb[0].mxu0
      %2548 = vdwg.mxu0
      %v2549 = vadd.f32 %v2115, %v2519
      %v2550 = vadd.f32 %v2118, %v2522
      %v2551 = vadd.f32 %v2123, %v2527
      %v2552 = vadd.f32 %v2126, %v2530
      %v2553 = vadd.f32 %v2131, %v2535
      %v2554 = vadd.f32 %v2134, %v2538
      %v2555 = vadd.f32 %v2139, %v2543
      %v2556 = vadd.f32 %v2142, %v2546
      %v2557 = vld [vmem:[%s7] sm:$0x1]
      %v2559 = vlaneseq
      %v2560 = vshrl.u32 %v2559, 7
      %v2561 = vsub.s32 0, %v2560
      %v2562 = vrot.slane %v2557, %v2561
      %v2564 = vmul.f32 %v2549, %v2562
      %v2565 = vmul.f32 %v2550, %v2562
      %v2566 = vmul.f32 %v2551, %v2562
      %v2567 = vmul.f32 %v2552, %v2562
      %v2568 = vmul.f32 %v2553, %v2562
      %v2569 = vmul.f32 %v2554, %v2562
      %v2570 = vmul.f32 %v2555, %v2562
      %v2571 = vmul.f32 %v2556, %v2562
      %v2572 = vld [vmem:[%s8] sm:$0x1]
      %v2574 = vlaneseq
      %v2575 = vshrl.u32 %v2574, 7
      %v2576 = vsub.s32 0, %v2575
      %v2577 = vrot.slane %v2572, %v2576
      %v2579 = vadd.f32 %v2564, %v2577
      %v2580 = vadd.f32 %v2565, %v2577
      %v2581 = vadd.f32 %v2566, %v2577
      %v2582 = vadd.f32 %v2567, %v2577
      %v2583 = vadd.f32 %v2568, %v2577
      %v2584 = vadd.f32 %v2569, %v2577
      %v2585 = vadd.f32 %v2570, %v2577
      %v2586 = vadd.f32 %v2571, %v2577
      %v2587 = vmin.f32 %v2579, 20.0
      %v2588 = vmin.f32 %v2580, 20.0
      %v2589 = vmin.f32 %v2581, 20.0
      %v2590 = vmin.f32 %v2582, 20.0
      %v2591 = vmin.f32 %v2583, 20.0
      %v2592 = vmin.f32 %v2584, 20.0
      %v2593 = vmin.f32 %v2585, 20.0
      %v2594 = vmin.f32 %v2586, 20.0
      %v2595 = vmul.f32 %v2587, 1.442695
      %v2596 = vpow.pop %v2595
      %v2597 = vmul.f32 %v2588, 1.442695
      %v2598 = vpow.pop %v2597
      %v2599 = vmul.f32 %v2589, 1.442695
      %v2600 = vpow.pop %v2599
      %v2601 = vmul.f32 %v2590, 1.442695
      %v2602 = vpow.pop %v2601
      %v2603 = vmul.f32 %v2591, 1.442695
      %v2604 = vpow.pop %v2603
      %v2605 = vmul.f32 %v2592, 1.442695
      %v2606 = vpow.pop %v2605
      %v2607 = vmul.f32 %v2593, 1.442695
      %v2608 = vpow.pop %v2607
      %v2609 = vmul.f32 %v2594, 1.442695
      %v2610 = vpow.pop %v2609
      %v2611 = vadd.f32 %v2596, 2.0
      %v2612 = vadd.f32 %v2598, 2.0
      %v2613 = vadd.f32 %v2600, 2.0
      %v2614 = vadd.f32 %v2602, 2.0
      %v2615 = vadd.f32 %v2604, 2.0
      %v2616 = vadd.f32 %v2606, 2.0
      %v2617 = vadd.f32 %v2608, 2.0
      %v2618 = vadd.f32 %v2610, 2.0
      %v2619 = vmul.f32 %v2596, %v2611
      %v2620 = vmul.f32 %v2598, %v2612
      %v2621 = vmul.f32 %v2600, %v2613
      %v2622 = vmul.f32 %v2602, %v2614
      %v2623 = vmul.f32 %v2604, %v2615
      %v2624 = vmul.f32 %v2606, %v2616
      %v2625 = vmul.f32 %v2608, %v2617
      %v2626 = vmul.f32 %v2610, %v2618
      %v2627 = vadd.f32 %v2619, 2.0
      %v2628 = vadd.f32 %v2620, 2.0
      %v2629 = vadd.f32 %v2621, 2.0
      %v2630 = vadd.f32 %v2622, 2.0
      %v2631 = vadd.f32 %v2623, 2.0
      %v2632 = vadd.f32 %v2624, 2.0
      %v2633 = vadd.f32 %v2625, 2.0
      %v2634 = vadd.f32 %v2626, 2.0
      %v2635 = vrcp.pop %v2627
      %v2636 = vrcp.pop %v2628
      %v2637 = vrcp.pop %v2629
      %v2638 = vrcp.pop %v2630
      %v2639 = vrcp.pop %v2631
      %v2640 = vrcp.pop %v2632
      %v2641 = vrcp.pop %v2633
      %v2642 = vrcp.pop %v2634
      %v2643 = vmul.f32 %v2619, %v2635
      %v2644 = vmul.f32 %v2620, %v2636
      %v2645 = vmul.f32 %v2621, %v2637
      %v2646 = vmul.f32 %v2622, %v2638
      %v2647 = vmul.f32 %v2623, %v2639
      %v2648 = vmul.f32 %v2624, %v2640
      %v2649 = vmul.f32 %v2625, %v2641
      %v2650 = vmul.f32 %v2626, %v2642
      %vm2651 = vcmp.gt.f32.partialorder %v2579, 20.0
      %vm2652 = vcmp.gt.f32.partialorder %v2580, 20.0
      %vm2653 = vcmp.gt.f32.partialorder %v2581, 20.0
      %vm2654 = vcmp.gt.f32.partialorder %v2582, 20.0
      %vm2655 = vcmp.gt.f32.partialorder %v2583, 20.0
      %vm2656 = vcmp.gt.f32.partialorder %v2584, 20.0
      %vm2657 = vcmp.gt.f32.partialorder %v2585, 20.0
      %vm2658 = vcmp.gt.f32.partialorder %v2586, 20.0
      %v2659 = vsel %vm2651, 1.0, %v2643
      %v2660 = vsel %vm2652, 1.0, %v2644
      %v2661 = vsel %vm2653, 1.0, %v2645
      %v2662 = vsel %vm2654, 1.0, %v2646
      %v2663 = vsel %vm2655, 1.0, %v2647
      %v2664 = vsel %vm2656, 1.0, %v2648
      %v2665 = vsel %vm2657, 1.0, %v2649
      %v2666 = vsel %vm2658, 1.0, %v2650
      %v2667 = vmul.f32 %v2579, %v2659
      %v2668 = vmul.f32 %v2580, %v2660
      %v2669 = vmul.f32 %v2581, %v2661
      %v2670 = vmul.f32 %v2582, %v2662
      %v2671 = vmul.f32 %v2583, %v2663
      %v2672 = vmul.f32 %v2584, %v2664
      %v2673 = vmul.f32 %v2585, %v2665
      %v2674 = vmul.f32 %v2586, %v2666
      %v2675 = vpack.c.bf16 %v2667, %v2667
      %v2676 = vpack.c.bf16 %v2668, %v2668
      %v2677 = vpack.c.bf16 %v2669, %v2669
      %v2678 = vpack.c.bf16 %v2670, %v2670
      %v2679 = vpack.c.bf16 %v2671, %v2671
      %v2680 = vpack.c.bf16 %v2672, %v2672
      %v2681 = vpack.c.bf16 %v2673, %v2673
      %v2682 = vpack.c.bf16 %v2674, %v2674
      %2683 = vst [vmem:[%s488] sm:$0xf] %v2675
      %2684 = vst [vmem:[%s488 + $0x4] sm:$0xf] %v2676
      %2685 = vst [vmem:[%s488 + $0x8] sm:$0xf] %v2677
      %2686 = vst [vmem:[%s488 + $0xc] sm:$0xf] %v2678
      %2687 = vst [vmem:[%s488 + $0x10] sm:$0xf] %v2679
      %2688 = vst [vmem:[%s488 + $0x14] sm:$0xf] %v2680
      %2689 = vst [vmem:[%s488 + $0x18] sm:$0xf] %v2681
      %2690 = vst [vmem:[%s488 + $0x1c] sm:$0xf] %v2682
      %s2691 = smul.u32 8, %s25
      %p2692 = scmp.lt.s32.totalorder %s24, 1
      %s2693 = scalar_select %p2692, %s24, 1
      %p2694 = scmp.lt.s32.totalorder %s2691, 7
      %s2695 = scalar_select %p2694, %s2691, 7
      %s2696 = smul.addr %s2693, 8
      %s2697 = sadd.s32 %s2695, %s2696
      %s2698 = smul.addr %s2697, 4
      %s2699 = scalar_lea.vmem %s9, %s2698
      // Predicated region
      $region73: #{csp_down_block_forward.7} parent=55 // pred_check
        %p2700 = pneg %p278
      $region74: #{csp_down_block_forward.7} parent=55 // pred_check_branch
        %2702 = sbr.rel (%p2700) target = $region76
      $region75: #{csp_down_block_forward.7} parent=55 // pred_region
        %s2703 = smul.u32 8, %s25
      $region76: #{csp_down_block_forward.7} parent=55 // pred_fallthru
        _
    $region56: #{csp_down_block_forward.7} parent=5 // pred_fallthru
      _
    %p2704 = scmp.le.s32.totalorder 2, %s15
    // Predicated region
    $region77: #{csp_down_block_forward.7} parent=5 // pred_check
      %p2705 = pneg %p2704
    $region78: #{csp_down_block_forward.7} parent=5 // pred_check_branch
      %2707 = sbr.rel (%p2705) target = $region80
    $region79: #{csp_down_block_forward.7} parent=5 // pred_region
      %s2708 = ssub.s32 %s15, 2
      // Predicated region
      $region81: #{csp_down_block_forward.7} parent=79 // pred_check
        %p2709 = pneg %p284
      $region82: #{csp_down_block_forward.7} parent=79 // pred_check_branch
        %2711 = sbr.rel (%p2709) target = $region84
      $region83: #{csp_down_block_forward.7} parent=79 // pred_region
        %s2712 = smul.u32 8, %s27
        %p2713 = scmp.lt.s32.totalorder %s26, 1
        %s2714 = scalar_select %p2713, %s26, 1
        %p2715 = scmp.lt.s32.totalorder %s2712, 7
        %s2716 = scalar_select %p2715, %s2712, 7
        %s2717 = smul.addr %s2714, 8
        %s2718 = sadd.s32 %s2716, %s2717
        %s2719 = smul.addr %s2718, 4
        %s2720 = scalar_lea.vmem %s9, %s2719
      $region84: #{csp_down_block_forward.7} parent=79 // pred_fallthru
        _
    $region80: #{csp_down_block_forward.7} parent=5 // pred_fallthru
      _
  $region6: #{csp_down_block_forward.7} parent=0 // loop_footer
    %s19 = sadd.s32 1, %s15
  $region7: #{csp_down_block_forward.7} parent=0 // loop_footer_branch
    %14 = sbr.rel target = $region3
  $region8: #{csp_down_block_forward.7} parent=0 // loop_exit
    _

// kernel: csp_down_block_forward.8
$region0: #{csp_down_block_forward.8}
  #allocation0 [shape = 'u32[]', space=smem, size = 0x4, offset = 0x4, fixed_abs, tag = 'smem constant byte address 0x4 - core index']
  #allocation1 [shape = 'u32[144,128]{1,0:T(1,128)}', space=vmem, size = 0x12000, scoped, tag = 'internal scratch']
  #allocation2 [shape = 'bf16[10,24,128]{2,1,0:T(8,128)(2,1)}', space=vmem, size = 0xf000, scoped, tag = 'scratch operand']
  #allocation3 [shape = 'bf16[10,8,384]{2,1,0:T(8,128)(2,1)}', space=vmem, size = 0xf000, scoped, tag = 'scratch operand']
  %s0 = inlined_call_operand.vmem [shape: bf16[2,8,8,128], index: 0, kind: input, shape index: {}, may-alias: {0,1,2}]
  %s1 = inlined_call_operand.vmem [shape: bf16[2,8,8,128], index: 1, kind: input, shape index: {}, may-alias: {0,1,2}]
  %s2 = inlined_call_operand.vmem [shape: bf16[2,8,8,128], index: 2, kind: input, shape index: {}, may-alias: {0,1,2}]
  %s3 = inlined_call_operand.vmem [shape: bf16[128,128], index: 3, kind: input, shape index: {}]
  %s4 = inlined_call_operand.vmem [shape: f32[1,128], index: 4, kind: input, shape index: {}]
  %s5 = inlined_call_operand.vmem [shape: f32[1,128], index: 5, kind: input, shape index: {}]
  %s6 = inlined_call_operand.vmem [shape: bf16[3,384,128], index: 6, kind: input, shape index: {}]
  %s7 = inlined_call_operand.vmem [shape: f32[1,128], index: 7, kind: input, shape index: {}]
  %s8 = inlined_call_operand.vmem [shape: f32[1,128], index: 8, kind: input, shape index: {}]
  %s9 = inlined_call_operand.vmem [shape: f32[1,128], index: 9, kind: input, shape index: {}]
  %s10 = inlined_call_operand.vmem [shape: f32[1,128], index: 10, kind: input, shape index: {}]
  %s11 = inlined_call_operand.vmem [shape: bf16[2,8,8,128], index: 11, kind: output, shape index: {}]
  %s12 = sld [smem:[#allocation0]]
  $region93: #{csp_down_block_forward.8} parent=0
    _
  %s14 = ssub.s32 1, %s12
  %s15 = scalar_select 0, %s14, %s12
  loop: start=0, step=1, limit=4
  $region2: #{csp_down_block_forward.8} parent=0 // loop_pre_header
    _
  $region3: #{csp_down_block_forward.8} parent=0 // loop_header
    %s17 = sphi 0, %s21
    %p18 = scmp.ge.s32.totalorder %s17, 4
    %s24 = sphi 0, %s36
    %s25 = sphi 0, %s32
    %s26 = sphi 0, %s24
    %s27 = sphi 0, %s25
    %s28 = sphi 0, %s26
    %s29 = sphi 0, %s27
    %s49 = sphi 0, %s51
    %s52 = sphi 0, %s49
    %s53 = sphi 0, %s52
    %s69 = sphi 0, %s53
    %s77 = sphi 0, %s79
    %s80 = sphi 0, %s77
    %s81 = sphi 0, %s80
    %s97 = sphi 0, %s81
    %s113 = sphi 0, %s115
    %s116 = sphi 0, %s113
    %s117 = sphi 0, %s116
    %s133 = sphi 0, %s117
    %s137 = sphi 0, %s137
    %s139 = sphi 0, %s137
    %s140 = sphi 0, %s139
    %s154 = sphi 0, %s140
    %s158 = sphi 0, %s158
    %s160 = sphi 0, %s158
    %s161 = sphi 0, %s160
    %s175 = sphi 0, %s161
    %s179 = sphi 0, %s179
    %s181 = sphi 0, %s179
    %s182 = sphi 0, %s181
    %s196 = sphi 0, %s182
    %s200 = sphi 0, %s200
    %s202 = sphi 0, %s200
    %s203 = sphi 0, %s202
    %s217 = sphi 0, %s203
    %s221 = sphi 0, %s221
    %s223 = sphi 0, %s221
    %s224 = sphi 0, %s223
    %s238 = sphi 0, %s224
    %s242 = sphi 0, %s242
    %s244 = sphi 0, %s242
    %s245 = sphi 0, %s244
    %s259 = sphi 0, %s245
    %s263 = sphi 0, %s263
    %s265 = sphi 0, %s263
    %s266 = sphi 0, %s265
    %s280 = sphi 0, %s266
    %s284 = sphi 0, %s284
    %s286 = sphi 0, %s284
    %s287 = sphi 0, %s286
    %s301 = sphi 0, %s287
    %s309 = sphi 0, %s311
    %s312 = sphi 0, %s309
    %s313 = sphi 0, %s312
    %s329 = sphi 0, %s313
  $region4: #{csp_down_block_forward.8} parent=0 // loop_header_branch
    %20 = sbr.rel (%p18) target = $region8
  $region5: #{csp_down_block_forward.8} parent=0 // loop_body
    %s22 = ssub.s32 %s17, 1
    %s23 = ssub.s32 %s17, 2
    %s30 = sadd.s32 1, %s25
    %p31 = scmp.ge.s32.totalorder %s30, 1
    %s32 = scalar_select %p31, 0, %s30
    %s33 = sadd.s32 1, %s24
    %s34 = scalar_select %p31, %s33, %s24
    %p35 = scmp.ge.s32.totalorder %s34, 2
    %s36 = scalar_select %p35, 0, %s34
    %s37 = smul.u32 %s25, 8
    %s38 = ssub.s32 %s37, 1
    %p39 = scmp.gt.s32.totalorder %s38, 0
    %s40 = scalar_select %p39, %s38, 0
    %s41 = smul.u32 %s32, 8
    %s42 = ssub.s32 %s41, 1
    %p43 = scmp.gt.s32.totalorder %s42, 0
    %s44 = scalar_select %p43, %s42, 0
    %s45 = ssub.s32 %s24, %s36
    %s46 = ssub.s32 %s40, %s44
    %s47 = sor.u32 %s45, %s46
    %p48 = scmp.eq.s32.totalorder %s47, 0
    %s50 = sadd.s32 %s49, 1
    %s51 = scalar_select %p48, %s49, %s50
    %p54 = pneg %p48
    %p55 = scmp.eq.s32.totalorder %s17, 1
    %p56 = por %p54, %p55
    %p57 = scmp.ne.s32.totalorder %s49, %s52
    %p58 = scmp.eq.s32.totalorder %s17, 0
    %p59 = por %p57, %p58
    %p60 = scmp.ne.s32.totalorder %s49, %s52
    %p61 = scmp.eq.s32.totalorder %s22, 1
    %p62 = por %p60, %p61
    %p63 = scmp.ne.s32.totalorder %s52, %s53
    %p64 = scmp.eq.s32.totalorder %s22, 0
    %p65 = por %p63, %p64
    %p66 = scmp.ne.s32.totalorder %s52, %s53
    %p67 = scmp.eq.s32.totalorder %s23, 1
    %p68 = por %p66, %p67
    %p70 = scmp.ne.s32.totalorder %s53, %s69
    %p71 = scmp.eq.s32.totalorder %s23, 0
    %p72 = por %p70, %p71
    %s73 = ssub.s32 %s24, %s36
    %s74 = ssub.s32 %s25, %s32
    %s75 = sor.u32 %s73, %s74
    %p76 = scmp.eq.s32.totalorder %s75, 0
    %s78 = sadd.s32 %s77, 1
    %s79 = scalar_select %p76, %s77, %s78
    %p82 = pneg %p76
    %p83 = scmp.eq.s32.totalorder %s17, 1
    %p84 = por %p82, %p83
    %p85 = scmp.ne.s32.totalorder %s77, %s80
    %p86 = scmp.eq.s32.totalorder %s17, 0
    %p87 = por %p85, %p86
    %p88 = scmp.ne.s32.totalorder %s77, %s80
    %p89 = scmp.eq.s32.totalorder %s22, 1
    %p90 = por %p88, %p89
    %p91 = scmp.ne.s32.totalorder %s80, %s81
    %p92 = scmp.eq.s32.totalorder %s22, 0
    %p93 = por %p91, %p92
    %p94 = scmp.ne.s32.totalorder %s80, %s81
    %p95 = scmp.eq.s32.totalorder %s23, 1
    %p96 = por %p94, %p95
    %p98 = scmp.ne.s32.totalorder %s81, %s97
    %p99 = scmp.eq.s32.totalorder %s23, 0
    %p100 = por %p98, %p99
    %s101 = smul.u32 %s25, 8
    %s102 = sadd.s32 %s101, 8
    %p103 = scmp.lt.s32.totalorder %s102, 7
    %s104 = scalar_select %p103, %s102, 7
    %s105 = smul.u32 %s32, 8
    %s106 = sadd.s32 %s105, 8
    %p107 = scmp.lt.s32.totalorder %s106, 7
    %s108 = scalar_select %p107, %s106, 7
    %s109 = ssub.s32 %s24, %s36
    %s110 = ssub.s32 %s104, %s108
    %s111 = sor.u32 %s109, %s110
    %p112 = scmp.eq.s32.totalorder %s111, 0
    %s114 = sadd.s32 %s113, 1
    %s115 = scalar_select %p112, %s113, %s114
    %p118 = pneg %p112
    %p119 = scmp.eq.s32.totalorder %s17, 1
    %p120 = por %p118, %p119
    %p121 = scmp.ne.s32.totalorder %s113, %s116
    %p122 = scmp.eq.s32.totalorder %s17, 0
    %p123 = por %p121, %p122
    %p124 = scmp.ne.s32.totalorder %s113, %s116
    %p125 = scmp.eq.s32.totalorder %s22, 1
    %p126 = por %p124, %p125
    %p127 = scmp.ne.s32.totalorder %s116, %s117
    %p128 = scmp.eq.s32.totalorder %s22, 0
    %p129 = por %p127, %p128
    %p130 = scmp.ne.s32.totalorder %s116, %s117
    %p131 = scmp.eq.s32.totalorder %s23, 1
    %p132 = por %p130, %p131
    %p134 = scmp.ne.s32.totalorder %s117, %s133
    %p135 = scmp.eq.s32.totalorder %s23, 0
    %p136 = por %p134, %p135
    %s138 = sadd.s32 %s137, 1
    %p141 = scmp.eq.s32.totalorder %s17, 1
    %p142 = scmp.ne.s32.totalorder %s137, %s139
    %p143 = scmp.eq.s32.totalorder %s17, 0
    %p144 = por %p142, %p143
    %p145 = scmp.ne.s32.totalorder %s137, %s139
    %p146 = scmp.eq.s32.totalorder %s22, 1
    %p147 = por %p145, %p146
    %p148 = scmp.ne.s32.totalorder %s139, %s140
    %p149 = scmp.eq.s32.totalorder %s22, 0
    %p150 = por %p148, %p149
    %p151 = scmp.ne.s32.totalorder %s139, %s140
    %p152 = scmp.eq.s32.totalorder %s23, 1
    %p153 = por %p151, %p152
    %p155 = scmp.ne.s32.totalorder %s140, %s154
    %p156 = scmp.eq.s32.totalorder %s23, 0
    %p157 = por %p155, %p156
    %s159 = sadd.s32 %s158, 1
    %p162 = scmp.eq.s32.totalorder %s17, 1
    %p163 = scmp.ne.s32.totalorder %s158, %s160
    %p164 = scmp.eq.s32.totalorder %s17, 0
    %p165 = por %p163, %p164
    %p166 = scmp.ne.s32.totalorder %s158, %s160
    %p167 = scmp.eq.s32.totalorder %s22, 1
    %p168 = por %p166, %p167
    %p169 = scmp.ne.s32.totalorder %s160, %s161
    %p170 = scmp.eq.s32.totalorder %s22, 0
    %p171 = por %p169, %p170
    %p172 = scmp.ne.s32.totalorder %s160, %s161
    %p173 = scmp.eq.s32.totalorder %s23, 1
    %p174 = por %p172, %p173
    %p176 = scmp.ne.s32.totalorder %s161, %s175
    %p177 = scmp.eq.s32.totalorder %s23, 0
    %p178 = por %p176, %p177
    %s180 = sadd.s32 %s179, 1
    %p183 = scmp.eq.s32.totalorder %s17, 1
    %p184 = scmp.ne.s32.totalorder %s179, %s181
    %p185 = scmp.eq.s32.totalorder %s17, 0
    %p186 = por %p184, %p185
    %p187 = scmp.ne.s32.totalorder %s179, %s181
    %p188 = scmp.eq.s32.totalorder %s22, 1
    %p189 = por %p187, %p188
    %p190 = scmp.ne.s32.totalorder %s181, %s182
    %p191 = scmp.eq.s32.totalorder %s22, 0
    %p192 = por %p190, %p191
    %p193 = scmp.ne.s32.totalorder %s181, %s182
    %p194 = scmp.eq.s32.totalorder %s23, 1
    %p195 = por %p193, %p194
    %p197 = scmp.ne.s32.totalorder %s182, %s196
    %p198 = scmp.eq.s32.totalorder %s23, 0
    %p199 = por %p197, %p198
    %s201 = sadd.s32 %s200, 1
    %p204 = scmp.eq.s32.totalorder %s17, 1
    %p205 = scmp.ne.s32.totalorder %s200, %s202
    %p206 = scmp.eq.s32.totalorder %s17, 0
    %p207 = por %p205, %p206
    %p208 = scmp.ne.s32.totalorder %s200, %s202
    %p209 = scmp.eq.s32.totalorder %s22, 1
    %p210 = por %p208, %p209
    %p211 = scmp.ne.s32.totalorder %s202, %s203
    %p212 = scmp.eq.s32.totalorder %s22, 0
    %p213 = por %p211, %p212
    %p214 = scmp.ne.s32.totalorder %s202, %s203
    %p215 = scmp.eq.s32.totalorder %s23, 1
    %p216 = por %p214, %p215
    %p218 = scmp.ne.s32.totalorder %s203, %s217
    %p219 = scmp.eq.s32.totalorder %s23, 0
    %p220 = por %p218, %p219
    %s222 = sadd.s32 %s221, 1
    %p225 = scmp.eq.s32.totalorder %s17, 1
    %p226 = scmp.ne.s32.totalorder %s221, %s223
    %p227 = scmp.eq.s32.totalorder %s17, 0
    %p228 = por %p226, %p227
    %p229 = scmp.ne.s32.totalorder %s221, %s223
    %p230 = scmp.eq.s32.totalorder %s22, 1
    %p231 = por %p229, %p230
    %p232 = scmp.ne.s32.totalorder %s223, %s224
    %p233 = scmp.eq.s32.totalorder %s22, 0
    %p234 = por %p232, %p233
    %p235 = scmp.ne.s32.totalorder %s223, %s224
    %p236 = scmp.eq.s32.totalorder %s23, 1
    %p237 = por %p235, %p236
    %p239 = scmp.ne.s32.totalorder %s224, %s238
    %p240 = scmp.eq.s32.totalorder %s23, 0
    %p241 = por %p239, %p240
    %s243 = sadd.s32 %s242, 1
    %p246 = scmp.eq.s32.totalorder %s17, 1
    %p247 = scmp.ne.s32.totalorder %s242, %s244
    %p248 = scmp.eq.s32.totalorder %s17, 0
    %p249 = por %p247, %p248
    %p250 = scmp.ne.s32.totalorder %s242, %s244
    %p251 = scmp.eq.s32.totalorder %s22, 1
    %p252 = por %p250, %p251
    %p253 = scmp.ne.s32.totalorder %s244, %s245
    %p254 = scmp.eq.s32.totalorder %s22, 0
    %p255 = por %p253, %p254
    %p256 = scmp.ne.s32.totalorder %s244, %s245
    %p257 = scmp.eq.s32.totalorder %s23, 1
    %p258 = por %p256, %p257
    %p260 = scmp.ne.s32.totalorder %s245, %s259
    %p261 = scmp.eq.s32.totalorder %s23, 0
    %p262 = por %p260, %p261
    %s264 = sadd.s32 %s263, 1
    %p267 = scmp.eq.s32.totalorder %s17, 1
    %p268 = scmp.ne.s32.totalorder %s263, %s265
    %p269 = scmp.eq.s32.totalorder %s17, 0
    %p270 = por %p268, %p269
    %p271 = scmp.ne.s32.totalorder %s263, %s265
    %p272 = scmp.eq.s32.totalorder %s22, 1
    %p273 = por %p271, %p272
    %p274 = scmp.ne.s32.totalorder %s265, %s266
    %p275 = scmp.eq.s32.totalorder %s22, 0
    %p276 = por %p274, %p275
    %p277 = scmp.ne.s32.totalorder %s265, %s266
    %p278 = scmp.eq.s32.totalorder %s23, 1
    %p279 = por %p277, %p278
    %p281 = scmp.ne.s32.totalorder %s266, %s280
    %p282 = scmp.eq.s32.totalorder %s23, 0
    %p283 = por %p281, %p282
    %s285 = sadd.s32 %s284, 1
    %p288 = scmp.eq.s32.totalorder %s17, 1
    %p289 = scmp.ne.s32.totalorder %s284, %s286
    %p290 = scmp.eq.s32.totalorder %s17, 0
    %p291 = por %p289, %p290
    %p292 = scmp.ne.s32.totalorder %s284, %s286
    %p293 = scmp.eq.s32.totalorder %s22, 1
    %p294 = por %p292, %p293
    %p295 = scmp.ne.s32.totalorder %s286, %s287
    %p296 = scmp.eq.s32.totalorder %s22, 0
    %p297 = por %p295, %p296
    %p298 = scmp.ne.s32.totalorder %s286, %s287
    %p299 = scmp.eq.s32.totalorder %s23, 1
    %p300 = por %p298, %p299
    %p302 = scmp.ne.s32.totalorder %s287, %s301
    %p303 = scmp.eq.s32.totalorder %s23, 0
    %p304 = por %p302, %p303
    %s305 = ssub.s32 %s24, %s36
    %s306 = ssub.s32 %s25, %s32
    %s307 = sor.u32 %s305, %s306
    %p308 = scmp.eq.s32.totalorder %s307, 0
    %s310 = sadd.s32 %s309, 1
    %s311 = scalar_select %p308, %s309, %s310
    %p314 = pneg %p308
    %p315 = scmp.eq.s32.totalorder %s17, 1
    %p316 = por %p314, %p315
    %p317 = scmp.ne.s32.totalorder %s309, %s312
    %p318 = scmp.eq.s32.totalorder %s17, 0
    %p319 = por %p317, %p318
    %p320 = scmp.ne.s32.totalorder %s309, %s312
    %p321 = scmp.eq.s32.totalorder %s22, 1
    %p322 = por %p320, %p321
    %p323 = scmp.ne.s32.totalorder %s312, %s313
    %p324 = scmp.eq.s32.totalorder %s22, 0
    %p325 = por %p323, %p324
    %p326 = scmp.ne.s32.totalorder %s312, %s313
    %p327 = scmp.eq.s32.totalorder %s23, 1
    %p328 = por %p326, %p327
    %p330 = scmp.ne.s32.totalorder %s313, %s329
    %p331 = scmp.eq.s32.totalorder %s23, 0
    %p332 = por %p330, %p331
    %p333 = scmp.le.s32.totalorder 1, %s17
    %p334 = scmp.lt.s32.totalorder %s17, 3
    %p335 = pnand %p333, %p334
    %p336 = pneg %p335
    // Predicated region
    $region9: #{csp_down_block_forward.8} parent=5 // pred_check
      _
    $region10: #{csp_down_block_forward.8} parent=5 // pred_check_branch
      %338 = sbr.rel (%p335) target = $region12
    $region11: #{csp_down_block_forward.8} parent=5 // pred_region
      %s339 = ssub.s32 %s17, 1
      // Predicated region
      $region13: #{csp_down_block_forward.8} parent=11 // pred_check
        %p340 = pneg %p150
      $region14: #{csp_down_block_forward.8} parent=11 // pred_check_branch
        %342 = sbr.rel (%p340) target = $region16
      $region15: #{csp_down_block_forward.8} parent=11 // pred_region
        _
      $region16: #{csp_down_block_forward.8} parent=11 // pred_fallthru
        _
      // Predicated region
      $region17: #{csp_down_block_forward.8} parent=11 // pred_check
        %p343 = pneg %p171
      $region18: #{csp_down_block_forward.8} parent=11 // pred_check_branch
        %345 = sbr.rel (%p343) target = $region20
      $region19: #{csp_down_block_forward.8} parent=11 // pred_region
        _
      $region20: #{csp_down_block_forward.8} parent=11 // pred_fallthru
        _
      // Predicated region
      $region21: #{csp_down_block_forward.8} parent=11 // pred_check
        %p346 = pneg %p192
      $region22: #{csp_down_block_forward.8} parent=11 // pred_check_branch
        %348 = sbr.rel (%p346) target = $region24
      $region23: #{csp_down_block_forward.8} parent=11 // pred_region
        _
      $region24: #{csp_down_block_forward.8} parent=11 // pred_fallthru
        _
      // Predicated region
      $region25: #{csp_down_block_forward.8} parent=11 // pred_check
        %p349 = pneg %p213
      $region26: #{csp_down_block_forward.8} parent=11 // pred_check_branch
        %351 = sbr.rel (%p349) target = $region28
      $region27: #{csp_down_block_forward.8} parent=11 // pred_region
        _
      $region28: #{csp_down_block_forward.8} parent=11 // pred_fallthru
        _
      // Predicated region
      $region29: #{csp_down_block_forward.8} parent=11 // pred_check
        %p352 = pneg %p234
      $region30: #{csp_down_block_forward.8} parent=11 // pred_check_branch
        %354 = sbr.rel (%p352) target = $region32
      $region31: #{csp_down_block_forward.8} parent=11 // pred_region
        _
      $region32: #{csp_down_block_forward.8} parent=11 // pred_fallthru
        _
      // Predicated region
      $region33: #{csp_down_block_forward.8} parent=11 // pred_check
        %p355 = pneg %p255
      $region34: #{csp_down_block_forward.8} parent=11 // pred_check_branch
        %357 = sbr.rel (%p355) target = $region36
      $region35: #{csp_down_block_forward.8} parent=11 // pred_region
        _
      $region36: #{csp_down_block_forward.8} parent=11 // pred_fallthru
        _
      // Predicated region
      $region37: #{csp_down_block_forward.8} parent=11 // pred_check
        %p358 = pneg %p276
      $region38: #{csp_down_block_forward.8} parent=11 // pred_check_branch
        %360 = sbr.rel (%p358) target = $region40
      $region39: #{csp_down_block_forward.8} parent=11 // pred_region
        _
      $region40: #{csp_down_block_forward.8} parent=11 // pred_fallthru
        _
      // Predicated region
      $region41: #{csp_down_block_forward.8} parent=11 // pred_check
        %p361 = pneg %p297
      $region42: #{csp_down_block_forward.8} parent=11 // pred_check_branch
        %363 = sbr.rel (%p361) target = $region44
      $region43: #{csp_down_block_forward.8} parent=11 // pred_region
        _
      $region44: #{csp_down_block_forward.8} parent=11 // pred_fallthru
        _
    $region12: #{csp_down_block_forward.8} parent=5 // pred_fallthru
      _
    %p364 = scmp.lt.s32.totalorder %s17, 2
    // Predicated region
    $region45: #{csp_down_block_forward.8} parent=5 // pred_check
      %p365 = pneg %p364
    $region46: #{csp_down_block_forward.8} parent=5 // pred_check_branch
      %367 = sbr.rel (%p365) target = $region48
    $region47: #{csp_down_block_forward.8} parent=5 // pred_region
      // Predicated region
      $region49: #{csp_down_block_forward.8} parent=47 // pred_check
        %p368 = pneg %p59
      $region50: #{csp_down_block_forward.8} parent=47 // pred_check_branch
        %370 = sbr.rel (%p368) target = $region52
      $region51: #{csp_down_block_forward.8} parent=47 // pred_region
        %s371 = smul.u32 %s25, 8
        %s372 = ssub.s32 %s371, 1
        %p373 = scmp.gt.s32.totalorder %s372, 0
        %s374 = scalar_select %p373, %s372, 0
        %p375 = scmp.lt.s32.totalorder %s24, 1
        %s376 = scalar_select %p375, %s24, 1
        %p377 = scmp.lt.s32.totalorder %s374, 7
        %s378 = scalar_select %p377, %s374, 7
        %s379 = smul.addr %s376, 8
        %s380 = sadd.s32 %s378, %s379
        %s381 = smul.addr %s380, 4
        %s382 = scalar_lea.vmem %s0, %s381
        %s383 = smul.u32 %s25, 8
        %s384 = ssub.s32 %s383, 1
        %p385 = scmp.gt.s32.totalorder %s384, 0
        %s386 = scalar_select %p385, %s384, 0
      $region52: #{csp_down_block_forward.8} parent=47 // pred_fallthru
        _
      // Predicated region
      $region53: #{csp_down_block_forward.8} parent=47 // pred_check
        %p387 = pneg %p87
      $region54: #{csp_down_block_forward.8} parent=47 // pred_check_branch
        %389 = sbr.rel (%p387) target = $region56
      $region55: #{csp_down_block_forward.8} parent=47 // pred_region
        %s390 = smul.u32 8, %s25
        %p391 = scmp.lt.s32.totalorder %s24, 1
        %s392 = scalar_select %p391, %s24, 1
        %p393 = scmp.lt.s32.totalorder %s390, 7
        %s394 = scalar_select %p393, %s390, 7
        %s395 = smul.addr %s392, 8
        %s396 = sadd.s32 %s394, %s395
        %s397 = smul.addr %s396, 4
        %s398 = scalar_lea.vmem %s1, %s397
        %s399 = smul.u32 8, %s25
      $region56: #{csp_down_block_forward.8} parent=47 // pred_fallthru
        _
      // Predicated region
      $region57: #{csp_down_block_forward.8} parent=47 // pred_check
        %p400 = pneg %p123
      $region58: #{csp_down_block_forward.8} parent=47 // pred_check_branch
        %402 = sbr.rel (%p400) target = $region60
      $region59: #{csp_down_block_forward.8} parent=47 // pred_region
        %s403 = smul.u32 %s25, 8
        %s404 = sadd.s32 %s403, 8
        %p405 = scmp.lt.s32.totalorder %s404, 7
        %s406 = scalar_select %p405, %s404, 7
        %p407 = scmp.lt.s32.totalorder %s24, 1
        %s408 = scalar_select %p407, %s24, 1
        %p409 = scmp.lt.s32.totalorder %s406, 7
        %s410 = scalar_select %p409, %s406, 7
        %s411 = smul.addr %s408, 8
        %s412 = sadd.s32 %s410, %s411
        %s413 = smul.addr %s412, 4
        %s414 = scalar_lea.vmem %s2, %s413
        %s415 = smul.u32 %s25, 8
        %s416 = sadd.s32 %s415, 8
        %p417 = scmp.lt.s32.totalorder %s416, 7
        %s418 = scalar_select %p417, %s416, 7
      $region60: #{csp_down_block_forward.8} parent=47 // pred_fallthru
        _
    $region48: #{csp_down_block_forward.8} parent=5 // pred_fallthru
      _
    %p419 = scmp.le.s32.totalorder 1, %s17
    %p420 = scmp.lt.s32.totalorder %s17, 3
    %p421 = pnand %p419, %p420
    %p422 = pneg %p421
    // Predicated region
    $region61: #{csp_down_block_forward.8} parent=5 // pred_check
      _
    $region62: #{csp_down_block_forward.8} parent=5 // pred_check_branch
      %424 = sbr.rel (%p421) target = $region64
    $region63: #{csp_down_block_forward.8} parent=5 // pred_region
      %s425 = ssub.s32 %s17, 1
      %s426 = smul.u32 %s27, 8
      %s427 = ssub.s32 %s426, 1
      %p428 = scmp.gt.s32.totalorder %s427, 0
      %s429 = scalar_select %p428, %s427, 0
      %p430 = scmp.lt.s32.totalorder %s26, 1
      %s431 = scalar_select %p430, %s26, 1
      %p432 = scmp.lt.s32.totalorder %s429, 7
      %s433 = scalar_select %p432, %s429, 7
      %s434 = smul.addr %s431, 8
      %s435 = sadd.s32 %s433, %s434
      %s436 = smul.addr %s435, 4
      %s437 = scalar_lea.vmem %s0, %s436
      %p438 = pneg %p65
      %p439 = pneg %p62
      %s440 = smul.u32 8, %s27
      %p441 = scmp.lt.s32.totalorder %s26, 1
      %s442 = scalar_select %p441, %s26, 1
      %p443 = scmp.lt.s32.totalorder %s440, 7
      %s444 = scalar_select %p443, %s440, 7
      %s445 = smul.addr %s442, 8
      %s446 = sadd.s32 %s444, %s445
      %s447 = smul.addr %s446, 4
      %s448 = scalar_lea.vmem %s1, %s447
      %p449 = pneg %p93
      %p450 = pneg %p90
      %s451 = smul.u32 %s27, 8
      %s452 = sadd.s32 %s451, 8
      %p453 = scmp.lt.s32.totalorder %s452, 7
      %s454 = scalar_select %p453, %s452, 7
      %p455 = scmp.lt.s32.totalorder %s26, 1
      %s456 = scalar_select %p455, %s26, 1
      %p457 = scmp.lt.s32.totalorder %s454, 7
      %s458 = scalar_select %p457, %s454, 7
      %s459 = smul.addr %s456, 8
      %s460 = sadd.s32 %s458, %s459
      %s461 = smul.addr %s460, 4
      %s462 = scalar_lea.vmem %s2, %s461
      %p463 = pneg %p129
      %p464 = pneg %p126
      %p465 = pneg %p150
      %p466 = pneg %p147
      %p467 = pneg %p171
      %p468 = pneg %p168
      %p469 = pneg %p192
      %p470 = pneg %p189
      %p471 = pneg %p213
      %p472 = pneg %p210
      %p473 = pneg %p234
      %p474 = pneg %p231
      %p475 = pneg %p255
      %p476 = pneg %p252
      %p477 = pneg %p276
      %p478 = pneg %p273
      %p479 = pneg %p297
      %p480 = pneg %p294
      %p481 = pneg %p325
      %p482 = pneg %p322
      %s483 = smul.u32 8, %s27
      %p484 = scmp.lt.s32.totalorder %s26, 1
      %s485 = scalar_select %p484, %s26, 1
      %p486 = scmp.lt.s32.totalorder %s483, 7
      %s487 = scalar_select %p486, %s483, 7
      %s488 = smul.addr %s485, 8
      %s489 = sadd.s32 %s487, %s488
      %s490 = smul.addr %s489, 4
      %s491 = scalar_lea.vmem %s11, %s490
      %s492 = smul.u32 %s27, 8
      %s493 = ssub.s32 %s492, 1
      %p494 = scmp.gt.s32.totalorder %s493, 0
      %s495 = scalar_select %p494, %s493, 0
      %p496 = scmp.lt.s32.totalorder %s26, 1
      %s497 = scalar_select %p496, %s26, 1
      %p498 = scmp.lt.s32.totalorder %s495, 7
      %s499 = scalar_select %p498, %s495, 7
      %s500 = smul.addr %s497, 8
      %s501 = sadd.s32 %s499, %s500
      %s502 = smul.addr %s501, 4
      %s503 = scalar_lea.vmem %s0, %s502
      %s504 = smul.u32 %s27, 8
      %s505 = ssub.s32 %s504, 1
      %p506 = scmp.gt.s32.totalorder %s505, 0
      %s507 = scalar_select %p506, %s505, 0
      %s508 = smul.u32 8, %s27
      %p509 = scmp.lt.s32.totalorder %s26, 1
      %s510 = scalar_select %p509, %s26, 1
      %p511 = scmp.lt.s32.totalorder %s508, 7
      %s512 = scalar_select %p511, %s508, 7
      %s513 = smul.addr %s510, 8
      %s514 = sadd.s32 %s512, %s513
      %s515 = smul.addr %s514, 4
      %s516 = scalar_lea.vmem %s1, %s515
      %s517 = smul.u32 8, %s27
      %s518 = smul.u32 %s27, 8
      %s519 = sadd.s32 %s518, 8
      %p520 = scmp.lt.s32.totalorder %s519, 7
      %s521 = scalar_select %p520, %s519, 7
      %p522 = scmp.lt.s32.totalorder %s26, 1
      %s523 = scalar_select %p522, %s26, 1
      %p524 = scmp.lt.s32.totalorder %s521, 7
      %s525 = scalar_select %p524, %s521, 7
      %s526 = smul.addr %s523, 8
      %s527 = sadd.s32 %s525, %s526
      %s528 = smul.addr %s527, 4
      %s529 = scalar_lea.vmem %s2, %s528
      %s530 = smul.u32 %s27, 8
      %s531 = sadd.s32 %s530, 8
      %p532 = scmp.lt.s32.totalorder %s531, 7
      %s533 = scalar_select %p532, %s531, 7
      %s534 = smul.u32 8, %s27
      %p535 = scmp.lt.s32.totalorder %s26, 1
      %s536 = scalar_select %p535, %s26, 1
      %p537 = scmp.lt.s32.totalorder %s534, 7
      %s538 = scalar_select %p537, %s534, 7
      %s539 = smul.addr %s536, 8
      %s540 = sadd.s32 %s538, %s539
      %s541 = smul.addr %s540, 4
      %s542 = scalar_lea.vmem %s11, %s541
      %s543 = smul.u32 8, %s27
      %v545 = vld [vmem:[%s3] sm:$0xf]
      %v546 = vld [vmem:[%s3 + $0x4] sm:$0xf]
      %v547 = vld [vmem:[%s3 + $0x8] sm:$0xf]
      %v548 = vld [vmem:[%s3 + $0xc] sm:$0xf]
      %v549 = vld [vmem:[%s3 + $0x10] sm:$0xf]
      %v550 = vld [vmem:[%s3 + $0x14] sm:$0xf]
      %v551 = vld [vmem:[%s3 + $0x18] sm:$0xf]
      %v552 = vld [vmem:[%s3 + $0x1c] sm:$0xf]
      %v553 = vld [vmem:[%s3 + $0x20] sm:$0xf]
      %v554 = vld [vmem:[%s3 + $0x24] sm:$0xf]
      %v555 = vld [vmem:[%s3 + $0x28] sm:$0xf]
      %v556 = vld [vmem:[%s3 + $0x2c] sm:$0xf]
      %v557 = vld [vmem:[%s3 + $0x30] sm:$0xf]
      %v558 = vld [vmem:[%s3 + $0x34] sm:$0xf]
      %v559 = vld [vmem:[%s3 + $0x38] sm:$0xf]
      %v560 = vld [vmem:[%s3 + $0x3c] sm:$0xf]
      %v561 = vld [vmem:[%s4] sm:$0x1]
      %v562 = vld [vmem:[%s5] sm:$0x1]
      %563 = vst [vmem:[#allocation2] sm:$0xf] 0
      %564 = vst [vmem:[#allocation2 + $0xc] sm:$0xf] 0
      %565 = vst [vmem:[#allocation2 + $0x18] sm:$0xf] 0
      %566 = vst [vmem:[#allocation2 + $0x24] sm:$0xf] 0
      %567 = vst [vmem:[#allocation2 + $0x30] sm:$0xf] 0
      %568 = vst [vmem:[#allocation2 + $0x3c] sm:$0xf] 0
      %569 = vst [vmem:[#allocation2 + $0x48] sm:$0xf] 0
      %570 = vst [vmem:[#allocation2 + $0x54] sm:$0xf] 0
      %571 = vst [vmem:[#allocation2 + $0x60] sm:$0xf] 0
      %572 = vst [vmem:[#allocation2 + $0x6c] sm:$0xf] 0
      %573 = vst [vmem:[#allocation2 + $0x8] sm:$0xf] 0
      %574 = vst [vmem:[#allocation2 + $0x14] sm:$0xf] 0
      %575 = vst [vmem:[#allocation2 + $0x20] sm:$0xf] 0
      %576 = vst [vmem:[#allocation2 + $0x2c] sm:$0xf] 0
      %577 = vst [vmem:[#allocation2 + $0x38] sm:$0xf] 0
      %578 = vst [vmem:[#allocation2 + $0x44] sm:$0xf] 0
      %579 = vst [vmem:[#allocation2 + $0x50] sm:$0xf] 0
      %580 = vst [vmem:[#allocation2 + $0x5c] sm:$0xf] 0
      %581 = vst [vmem:[#allocation2 + $0x68] sm:$0xf] 0
      %582 = vst [vmem:[#allocation2 + $0x74] sm:$0xf] 0
      %v583 = vld [vmem:[%s516] sm:$0xf]
      %v584 = vld [vmem:[%s516 + $0x4] sm:$0xf]
      %v585 = vld [vmem:[%s516 + $0x8] sm:$0xf]
      %v586 = vld [vmem:[%s516 + $0xc] sm:$0xf]
      %v587 = vld [vmem:[%s516 + $0x10] sm:$0xf]
      %v588 = vld [vmem:[%s516 + $0x14] sm:$0xf]
      %v589 = vld [vmem:[%s516 + $0x18] sm:$0xf]
      %v590 = vld [vmem:[%s516 + $0x1c] sm:$0xf]
      %v599 = vunpack.c.l.b16 %v583
      %v600 = vunpack.c.l.b16 %v584
      %v601 = vunpack.c.l.b16 %v585
      %v602 = vunpack.c.l.b16 %v586
      %v603 = vunpack.c.l.b16 %v587
      %v604 = vunpack.c.l.b16 %v588
      %v605 = vunpack.c.l.b16 %v589
      %v606 = vunpack.c.l.b16 %v590
      %v607 = vpack.c.b16 %v600, %v599
      %v608 = vpack.c.b16 %v602, %v601
      %v609 = vpack.c.b16 %v604, %v603
      %v610 = vpack.c.b16 %v606, %v605
      %v631 = vunpack.c.l.b16 %v545
      %v632 = vunpack.c.l.b16 %v546
      %v633 = vunpack.c.l.b16 %v547
      %v634 = vunpack.c.l.b16 %v548
      %v635 = vunpack.c.l.b16 %v549
      %v636 = vunpack.c.l.b16 %v550
      %v637 = vunpack.c.l.b16 %v551
      %v638 = vunpack.c.l.b16 %v552
      %v639 = vunpack.c.l.b16 %v553
      %v640 = vunpack.c.l.b16 %v554
      %v641 = vunpack.c.l.b16 %v555
      %v642 = vunpack.c.l.b16 %v556
      %v643 = vunpack.c.l.b16 %v557
      %v644 = vunpack.c.l.b16 %v558
      %v645 = vunpack.c.l.b16 %v559
      %v646 = vunpack.c.l.b16 %v560
      %v647 = vpack.c.b16 %v632, %v631
      %v648 = vpack.c.b16 %v634, %v633
      %v649 = vpack.c.b16 %v636, %v635
      %v650 = vpack.c.b16 %v638, %v637
      %v651 = vpack.c.b16 %v640, %v639
      %v652 = vpack.c.b16 %v642, %v641
      %v653 = vpack.c.b16 %v644, %v643
      %v654 = vpack.c.b16 %v646, %v645
      %663 = vmatprep.subr.bf16.mxu0 0
      %664 = vmatpush1.bf16.msra.mxu0 %v647
      %665 = vmatprep.subr.bf16.mxu0 0
      %666 = vmatpush1.bf16.msra.mxu0 %v648
      %667 = vmatprep.subr.bf16.mxu0 0
      %668 = vmatpush1.bf16.msra.mxu0 %v649
      %669 = vmatprep.subr.bf16.mxu0 0
      %670 = vmatpush1.bf16.msra.mxu0 %v650
      %671 = vmatprep.subr.bf16.mxu0 0
      %672 = vmatpush1.bf16.msra.mxu0 %v651
      %673 = vmatprep.subr.bf16.mxu0 0
      %674 = vmatpush1.bf16.msra.mxu0 %v652
      %675 = vmatprep.subr.bf16.mxu0 0
      %676 = vmatpush1.bf16.msra.mxu0 %v653
      %677 = vmatprep.subr.bf16.mxu0 0
      %678 = vmatpush1.bf16.msra.mxu0 %v654
      %679 = vmatprep.subr.bf16.mxu0 0
      %680 = vmatpush1.bf16.msra.mxu0 0
      %681 = vmatprep.subr.bf16.mxu0 0
      %682 = vmatpush1.bf16.msra.mxu0 0
      %683 = vmatprep.subr.bf16.mxu0 0
      %684 = vmatpush1.bf16.msra.mxu0 0
      %685 = vmatprep.subr.bf16.mxu0 0
      %686 = vmatpush1.bf16.msra.mxu0 0
      %687 = vmatprep.subr.bf16.mxu0 0
      %688 = vmatpush1.bf16.msra.mxu0 0
      %689 = vmatprep.subr.bf16.mxu0 0
      %690 = vmatpush1.bf16.msra.mxu0 0
      %691 = vmatprep.subr.bf16.mxu0 0
      %692 = vmatpush1.bf16.msra.mxu0 0
      %693 = vmatprep.subr.bf16.mxu0 0
      %694 = vmatpush1.bf16.msra.mxu0 0
      %695 = vmatprep.mubr.bf16.mxu0 0
      %696 = vmatmul.mubr.bf16.gmra.mrb[0].mxu0 %v607
      %v697 = vpop.f32.mrb[0].mxu0
      %v698 = vadd.f32 0.0, %v697
      %v699 = vpop.f32.mrb[0].mxu0
      %v700 = vpop.f32.mrb[0].mxu0
      %v701 = vadd.f32 0.0, %v700
      %v702 = vpop.f32.mrb[0].mxu0
      %703 = vmatprep.mubr.bf16.mxu0 0
      %704 = vmatmul.mubr.bf16.gmra.mrb[0].mxu0 %v608
      %v705 = vpop.f32.mrb[0].mxu0
      %v706 = vadd.f32 0.0, %v705
      %v707 = vpop.f32.mrb[0].mxu0
      %v708 = vpop.f32.mrb[0].mxu0
      %v709 = vadd.f32 0.0, %v708
      %v710 = vpop.f32.mrb[0].mxu0
      %711 = vmatprep.mubr.bf16.mxu0 0
      %712 = vmatmul.mubr.bf16.gmra.mrb[0].mxu0 %v609
      %v713 = vpop.f32.mrb[0].mxu0
      %v714 = vadd.f32 0.0, %v713
      %v715 = vpop.f32.mrb[0].mxu0
      %v716 = vpop.f32.mrb[0].mxu0
      %v717 = vadd.f32 0.0, %v716
      %v718 = vpop.f32.mrb[0].mxu0
      %719 = vmatprep.mubr.bf16.mxu0 0
      %720 = vmatmul.mubr.bf16.gmra.mrb[0].mxu0 %v610
      %v721 = vpop.f32.mrb[0].mxu0
      %v722 = vadd.f32 0.0, %v721
      %v723 = vpop.f32.mrb[0].mxu0
      %v724 = vpop.f32.mrb[0].mxu0
      %v725 = vadd.f32 0.0, %v724
      %v726 = vpop.f32.mrb[0].mxu0
      %727 = vdwg.mxu0
      %v729 = vlaneseq
      %v730 = vshrl.u32 %v729, 7
      %v731 = vsub.s32 0, %v730
      %v732 = vrot.slane %v561, %v731
      %v734 = vmul.f32 %v698, %v732
      %v735 = vmul.f32 %v701, %v732
      %v736 = vmul.f32 %v706, %v732
      %v737 = vmul.f32 %v709, %v732
      %v738 = vmul.f32 %v714, %v732
      %v739 = vmul.f32 %v717, %v732
      %v740 = vmul.f32 %v722, %v732
      %v741 = vmul.f32 %v725, %v732
      %v743 = vlaneseq
      %v744 = vshrl.u32 %v743, 7
      %v745 = vsub.s32 0, %v744
      %v746 = vrot.slane %v562, %v745
      %v748 = vadd.f32 %v734, %v746
      %v749 = vadd.f32 %v735, %v746
      %v750 = vadd.f32 %v736, %v746
      %v751 = vadd.f32 %v737, %v746
      %v752 = vadd.f32 %v738, %v746
      %v753 = vadd.f32 %v739, %v746
      %v754 = vadd.f32 %v740, %v746
      %v755 = vadd.f32 %v741, %v746
      %v756 = vmin.f32 %v748, 20.0
      %v757 = vmin.f32 %v749, 20.0
      %v758 = vmin.f32 %v750, 20.0
      %v759 = vmin.f32 %v751, 20.0
      %v760 = vmin.f32 %v752, 20.0
      %v761 = vmin.f32 %v753, 20.0
      %v762 = vmin.f32 %v754, 20.0
      %v763 = vmin.f32 %v755, 20.0
      %v764 = vmul.f32 %v756, 1.442695
      %v765 = vpow.pop %v764
      %v766 = vmul.f32 %v757, 1.442695
      %v767 = vpow.pop %v766
      %v768 = vmul.f32 %v758, 1.442695
      %v769 = vpow.pop %v768
      %v770 = vmul.f32 %v759, 1.442695
      %v771 = vpow.pop %v770
      %v772 = vmul.f32 %v760, 1.442695
      %v773 = vpow.pop %v772
      %v774 = vmul.f32 %v761, 1.442695
      %v775 = vpow.pop %v774
      %v776 = vmul.f32 %v762, 1.442695
      %v777 = vpow.pop %v776
      %v778 = vmul.f32 %v763, 1.442695
      %v779 = vpow.pop %v778
      %v780 = vadd.f32 %v765, 2.0
      %v781 = vadd.f32 %v767, 2.0
      %v782 = vadd.f32 %v769, 2.0
      %v783 = vadd.f32 %v771, 2.0
      %v784 = vadd.f32 %v773, 2.0
      %v785 = vadd.f32 %v775, 2.0
      %v786 = vadd.f32 %v777, 2.0
      %v787 = vadd.f32 %v779, 2.0
      %v788 = vmul.f32 %v765, %v780
      %v789 = vmul.f32 %v767, %v781
      %v790 = vmul.f32 %v769, %v782
      %v791 = vmul.f32 %v771, %v783
      %v792 = vmul.f32 %v773, %v784
      %v793 = vmul.f32 %v775, %v785
      %v794 = vmul.f32 %v777, %v786
      %v795 = vmul.f32 %v779, %v787
      %v796 = vadd.f32 %v788, 2.0
      %v797 = vadd.f32 %v789, 2.0
      %v798 = vadd.f32 %v790, 2.0
      %v799 = vadd.f32 %v791, 2.0
      %v800 = vadd.f32 %v792, 2.0
      %v801 = vadd.f32 %v793, 2.0
      %v802 = vadd.f32 %v794, 2.0
      %v803 = vadd.f32 %v795, 2.0
      %v804 = vrcp.pop %v796
      %v805 = vrcp.pop %v797
      %v806 = vrcp.pop %v798
      %v807 = vrcp.pop %v799
      %v808 = vrcp.pop %v800
      %v809 = vrcp.pop %v801
      %v810 = vrcp.pop %v802
      %v811 = vrcp.pop %v803
      %v812 = vmul.f32 %v788, %v804
      %v813 = vmul.f32 %v789, %v805
      %v814 = vmul.f32 %v790, %v806
      %v815 = vmul.f32 %v791, %v807
      %v816 = vmul.f32 %v792, %v808
      %v817 = vmul.f32 %v793, %v809
      %v818 = vmul.f32 %v794, %v810
      %v819 = vmul.f32 %v795, %v811
      %vm820 = vcmp.gt.f32.partialorder %v748, 20.0
      %vm821 = vcmp.gt.f32.partialorder %v749, 20.0
      %vm822 = vcmp.gt.f32.partialorder %v750, 20.0
      %vm823 = vcmp.gt.f32.partialorder %v751, 20.0
      %vm824 = vcmp.gt.f32.partialorder %v752, 20.0
      %vm825 = vcmp.gt.f32.partialorder %v753, 20.0
      %vm826 = vcmp.gt.f32.partialorder %v754, 20.0
      %vm827 = vcmp.gt.f32.partialorder %v755, 20.0
      %v828 = vsel %vm820, 1.0, %v812
      %v829 = vsel %vm821, 1.0, %v813
      %v830 = vsel %vm822, 1.0, %v814
      %v831 = vsel %vm823, 1.0, %v815
      %v832 = vsel %vm824, 1.0, %v816
      %v833 = vsel %vm825, 1.0, %v817
      %v834 = vsel %vm826, 1.0, %v818
      %v835 = vsel %vm827, 1.0, %v819
      %v836 = vmul.f32 %v748, %v828
      %v837 = vmul.f32 %v749, %v829
      %v838 = vmul.f32 %v750, %v830
      %v839 = vmul.f32 %v751, %v831
      %v840 = vmul.f32 %v752, %v832
      %v841 = vmul.f32 %v753, %v833
      %v842 = vmul.f32 %v754, %v834
      %v843 = vmul.f32 %v755, %v835
      %v844 = vpack.c.bf16 %v837, %v836
      %v845 = vpack.c.bf16 %v839, %v838
      %v846 = vpack.c.bf16 %v841, %v840
      %v847 = vpack.c.bf16 %v843, %v842
      %v852 = vunpack.c.l.b16 %v844
      %v853 = vunpack.c.h.b16 %v844
      %v854 = vunpack.c.l.b16 %v845
      %v855 = vunpack.c.h.b16 %v845
      %v856 = vunpack.c.l.b16 %v846
      %v857 = vunpack.c.h.b16 %v846
      %v858 = vunpack.c.l.b16 %v847
      %v859 = vunpack.c.h.b16 %v847
      %v860 = vpack.c.b16 %v852, %v852
      %v861 = vpack.c.b16 %v853, %v853
      %v862 = vpack.c.b16 %v854, %v854
      %v863 = vpack.c.b16 %v855, %v855
      %v864 = vpack.c.b16 %v856, %v856
      %v865 = vpack.c.b16 %v857, %v857
      %v866 = vpack.c.b16 %v858, %v858
      %v867 = vpack.c.b16 %v859, %v859
      %s876 = scalar_lea.vmem [#allocation2], 12
      %877 = vst [vmem:[%s876 + $0x4] sm:$0xf] %v860
      %878 = vst [vmem:[%s876 + $0x10] sm:$0xf] %v861
      %879 = vst [vmem:[%s876 + $0x1c] sm:$0xf] %v862
      %880 = vst [vmem:[%s876 + $0x28] sm:$0xf] %v863
      %881 = vst [vmem:[%s876 + $0x34] sm:$0xf] %v864
      %882 = vst [vmem:[%s876 + $0x40] sm:$0xf] %v865
      %883 = vst [vmem:[%s876 + $0x4c] sm:$0xf] %v866
      %884 = vst [vmem:[%s876 + $0x58] sm:$0xf] %v867
      %p885 = scmp.gt.s32.totalorder %s27, 0
      // Predicated region
      $region65: #{csp_down_block_forward.8} parent=63 // pred_check
        %p886 = pneg %p885
      $region66: #{csp_down_block_forward.8} parent=63 // pred_check_branch
        %888 = sbr.rel (%p886) target = $region68
      $region67: #{csp_down_block_forward.8} parent=63 // pred_region
        %v889 = vld [vmem:[%s503] sm:$0xf]
        %890 = vmatprep.subr.bf16.mxu0 0
        %891 = vmatpush1.bf16.msra.mxu0 %v647
        %892 = vmatprep.subr.bf16.mxu0 0
        %893 = vmatpush1.bf16.msra.mxu0 %v648
        %894 = vmatprep.subr.bf16.mxu0 0
        %895 = vmatpush1.bf16.msra.mxu0 %v649
        %896 = vmatprep.subr.bf16.mxu0 0
        %897 = vmatpush1.bf16.msra.mxu0 %v650
        %898 = vmatprep.subr.bf16.mxu0 0
        %899 = vmatpush1.bf16.msra.mxu0 %v651
        %900 = vmatprep.subr.bf16.mxu0 0
        %901 = vmatpush1.bf16.msra.mxu0 %v652
        %902 = vmatprep.subr.bf16.mxu0 0
        %903 = vmatpush1.bf16.msra.mxu0 %v653
        %904 = vmatprep.subr.bf16.mxu0 0
        %905 = vmatpush1.bf16.msra.mxu0 %v654
        %906 = vmatprep.subr.bf16.mxu0 0
        %907 = vmatpush1.bf16.msra.mxu0 0
        %908 = vmatprep.subr.bf16.mxu0 0
        %909 = vmatpush1.bf16.msra.mxu0 0
        %910 = vmatprep.subr.bf16.mxu0 0
        %911 = vmatpush1.bf16.msra.mxu0 0
        %912 = vmatprep.subr.bf16.mxu0 0
        %913 = vmatpush1.bf16.msra.mxu0 0
        %914 = vmatprep.subr.bf16.mxu0 0
        %915 = vmatpush1.bf16.msra.mxu0 0
        %916 = vmatprep.subr.bf16.mxu0 0
        %917 = vmatpush1.bf16.msra.mxu0 0
        %918 = vmatprep.subr.bf16.mxu0 0
        %919 = vmatpush1.bf16.msra.mxu0 0
        %920 = vmatprep.subr.bf16.mxu0 0
        %921 = vmatpush1.bf16.msra.mxu0 0
        %922 = vmatprep.mubr.bf16.mxu0 0
        %923 = vmatmul.mubr.bf16.gmra.mrb[0].mxu0 %v889
        %v924 = vpop.f32.mrb[0].mxu0
        %v925 = vadd.f32 0.0, %v924
        %v926 = vpop.f32.mrb[0].mxu0
        %v927 = vpop.f32.mrb[0].mxu0
        %v928 = vpop.f32.mrb[0].mxu0
        %929 = vdwg.mxu0
        %v930 = vmul.f32 %v925, %v732
        %v931 = vadd.f32 %v930, %v746
        %v932 = vmin.f32 %v931, 20.0
        %v933 = vmul.f32 %v932, 1.442695
        %v934 = vpow.pop %v933
        %v935 = vadd.f32 %v934, 2.0
        %v936 = vmul.f32 %v934, %v935
        %v937 = vadd.f32 %v936, 2.0
        %v938 = vrcp.pop %v937
        %v939 = vmul.f32 %v936, %v938
        %vm940 = vcmp.gt.f32.partialorder %v931, 20.0
        %v941 = vsel %vm940, 1.0, %v939
        %v942 = vmul.f32 %v931, %v941
        %v943 = vpack.c.bf16 %v942, %v942
        %944 = vst [vmem:[#allocation2 + $0x4] sm:$0xf] %v943
      $region68: #{csp_down_block_forward.8} parent=63 // pred_fallthru
        _
      %p945 = scmp.eq.s32.totalorder %s27, 0
      // Predicated region
      $region69: #{csp_down_block_forward.8} parent=63 // pred_check
        %p946 = pneg %p945
      $region70: #{csp_down_block_forward.8} parent=63 // pred_check_branch
        %948 = sbr.rel (%p946) target = $region72
      $region71: #{csp_down_block_forward.8} parent=63 // pred_region
        %949 = vst [vmem:[#allocation2 + $0x4] sm:$0xf] 0
      $region72: #{csp_down_block_forward.8} parent=63 // pred_fallthru
        _
      %p950 = scmp.lt.s32.totalorder %s27, 0
      // Predicated region
      $region73: #{csp_down_block_forward.8} parent=63 // pred_check
        %p951 = pneg %p950
      $region74: #{csp_down_block_forward.8} parent=63 // pred_check_branch
        %953 = sbr.rel (%p951) target = $region76
      $region75: #{csp_down_block_forward.8} parent=63 // pred_region
        %v954 = vld [vmem:[%s529] sm:$0xf]
        %955 = vmatprep.subr.bf16.mxu0 0
        %956 = vmatpush1.bf16.msra.mxu0 %v647
        %957 = vmatprep.subr.bf16.mxu0 0
        %958 = vmatpush1.bf16.msra.mxu0 %v648
        %959 = vmatprep.subr.bf16.mxu0 0
        %960 = vmatpush1.bf16.msra.mxu0 %v649
        %961 = vmatprep.subr.bf16.mxu0 0
        %962 = vmatpush1.bf16.msra.mxu0 %v650
        %963 = vmatprep.subr.bf16.mxu0 0
        %964 = vmatpush1.bf16.msra.mxu0 %v651
        %965 = vmatprep.subr.bf16.mxu0 0
        %966 = vmatpush1.bf16.msra.mxu0 %v652
        %967 = vmatprep.subr.bf16.mxu0 0
        %968 = vmatpush1.bf16.msra.mxu0 %v653
        %969 = vmatprep.subr.bf16.mxu0 0
        %970 = vmatpush1.bf16.msra.mxu0 %v654
        %971 = vmatprep.subr.bf16.mxu0 0
        %972 = vmatpush1.bf16.msra.mxu0 0
        %973 = vmatprep.subr.bf16.mxu0 0
        %974 = vmatpush1.bf16.msra.mxu0 0
        %975 = vmatprep.subr.bf16.mxu0 0
        %976 = vmatpush1.bf16.msra.mxu0 0
        %977 = vmatprep.subr.bf16.mxu0 0
        %978 = vmatpush1.bf16.msra.mxu0 0
        %979 = vmatprep.subr.bf16.mxu0 0
        %980 = vmatpush1.bf16.msra.mxu0 0
        %981 = vmatprep.subr.bf16.mxu0 0
        %982 = vmatpush1.bf16.msra.mxu0 0
        %983 = vmatprep.subr.bf16.mxu0 0
        %984 = vmatpush1.bf16.msra.mxu0 0
        %985 = vmatprep.subr.bf16.mxu0 0
        %986 = vmatpush1.bf16.msra.mxu0 0
        %987 = vmatprep.mubr.bf16.mxu0 0
        %988 = vmatmul.mubr.bf16.gmra.mrb[0].mxu0 %v954
        %v989 = vpop.f32.mrb[0].mxu0
        %v990 = vadd.f32 0.0, %v989
        %v991 = vpop.f32.mrb[0].mxu0
        %v992 = vpop.f32.mrb[0].mxu0
        %v993 = vpop.f32.mrb[0].mxu0
        %994 = vdwg.mxu0
        %v995 = vmul.f32 %v990, %v732
        %v996 = vadd.f32 %v995, %v746
        %v997 = vmin.f32 %v996, 20.0
        %v998 = vmul.f32 %v997, 1.442695
        %v999 = vpow.pop %v998
        %v1000 = vadd.f32 %v999, 2.0
        %v1001 = vmul.f32 %v999, %v1000
        %v1002 = vadd.f32 %v1001, 2.0
        %v1003 = vrcp.pop %v1002
        %v1004 = vmul.f32 %v1001, %v1003
        %vm1005 = vcmp.gt.f32.partialorder %v996, 20.0
        %v1006 = vsel %vm1005, 1.0, %v1004
        %v1007 = vmul.f32 %v996, %v1006
        %v1008 = vpack.c.bf16 %v1007, %v1007
        %s1009 = scalar_lea.vmem [#allocation2], 108
        %1010 = vst [vmem:[%s1009 + $0x4] sm:$0xf] %v1008
      $region76: #{csp_down_block_forward.8} parent=63 // pred_fallthru
        _
      %p1011 = scmp.ge.s32.totalorder %s27, 0
      // Predicated region
      $region77: #{csp_down_block_forward.8} parent=63 // pred_check
        %p1012 = pneg %p1011
      $region78: #{csp_down_block_forward.8} parent=63 // pred_check_branch
        %1014 = sbr.rel (%p1012) target = $region80
      $region79: #{csp_down_block_forward.8} parent=63 // pred_region
        %s1015 = scalar_lea.vmem [#allocation2], 108
        %1016 = vst [vmem:[%s1015 + $0x4] sm:$0xf] 0
      $region80: #{csp_down_block_forward.8} parent=63 // pred_fallthru
        _
      %v1017 = vld [vmem:[#allocation2] sm:$0x8]
      %v1018 = vld [vmem:[#allocation2 + $0x4] sm:$0xf]
      %v1019 = vld [vmem:[#allocation2 + $0xc] sm:$0x8]
      %v1020 = vld [vmem:[#allocation2 + $0x10] sm:$0xf]
      %v1021 = vld [vmem:[#allocation2 + $0x18] sm:$0x8]
      %v1022 = vld [vmem:[#allocation2 + $0x1c] sm:$0xf]
      %v1023 = vld [vmem:[#allocation2 + $0x24] sm:$0x8]
      %v1024 = vld [vmem:[#allocation2 + $0x28] sm:$0xf]
      %v1025 = vld [vmem:[#allocation2 + $0x30] sm:$0x8]
      %v1026 = vld [vmem:[#allocation2 + $0x34] sm:$0xf]
      %v1027 = vld [vmem:[#allocation2 + $0x3c] sm:$0x8]
      %v1028 = vld [vmem:[#allocation2 + $0x40] sm:$0xf]
      %v1029 = vld [vmem:[#allocation2 + $0x48] sm:$0x8]
      %v1030 = vld [vmem:[#allocation2 + $0x4c] sm:$0xf]
      %v1031 = vld [vmem:[#allocation2 + $0x54] sm:$0x8]
      %v1032 = vld [vmem:[#allocation2 + $0x58] sm:$0xf]
      %v1033 = vld [vmem:[#allocation2 + $0x60] sm:$0x8]
      %v1034 = vld [vmem:[#allocation2 + $0x64] sm:$0xf]
      %v1035 = vld [vmem:[#allocation2 + $0x6c] sm:$0x8]
      %v1036 = vld [vmem:[#allocation2 + $0x70] sm:$0xf]
      %vm1037 = vsmask.f32 256
      %vm1038 = vsmask.f32 4368
      %vm1039 = vmor %vm1037, %vm1038
      %v1041 = vshrl.u32 %v1017, 16
      %v1043 = vrot.slane %v1041, 7
      %v1044 = vrot.slane %v1043, 4
      %v1046 = vshrl.u32 %v1018, 16
      %v1048 = vrot.slane %v1046, 7
      %v1049 = vshll.u32 %v1018, 16
      %v1051 = vor.u32 %v1048, %v1049
      %v1052 = vsel %vm1039, %v1044, %v1051
      %v1054 = vshrl.u32 %v1019, 16
      %v1056 = vrot.slane %v1054, 7
      %v1057 = vrot.slane %v1056, 4
      %v1059 = vshrl.u32 %v1020, 16
      %v1061 = vrot.slane %v1059, 7
      %v1062 = vshll.u32 %v1020, 16
      %v1064 = vor.u32 %v1061, %v1062
      %v1065 = vsel %vm1039, %v1057, %v1064
      %v1067 = vshrl.u32 %v1021, 16
      %v1069 = vrot.slane %v1067, 7
      %v1070 = vrot.slane %v1069, 4
      %v1072 = vshrl.u32 %v1022, 16
      %v1074 = vrot.slane %v1072, 7
      %v1075 = vshll.u32 %v1022, 16
      %v1077 = vor.u32 %v1074, %v1075
      %v1078 = vsel %vm1039, %v1070, %v1077
      %v1080 = vshrl.u32 %v1023, 16
      %v1082 = vrot.slane %v1080, 7
      %v1083 = vrot.slane %v1082, 4
      %v1085 = vshrl.u32 %v1024, 16
      %v1087 = vrot.slane %v1085, 7
      %v1088 = vshll.u32 %v1024, 16
      %v1090 = vor.u32 %v1087, %v1088
      %v1091 = vsel %vm1039, %v1083, %v1090
      %v1093 = vshrl.u32 %v1025, 16
      %v1095 = vrot.slane %v1093, 7
      %v1096 = vrot.slane %v1095, 4
      %v1098 = vshrl.u32 %v1026, 16
      %v1100 = vrot.slane %v1098, 7
      %v1101 = vshll.u32 %v1026, 16
      %v1103 = vor.u32 %v1100, %v1101
      %v1104 = vsel %vm1039, %v1096, %v1103
      %v1106 = vshrl.u32 %v1027, 16
      %v1108 = vrot.slane %v1106, 7
      %v1109 = vrot.slane %v1108, 4
      %v1111 = vshrl.u32 %v1028, 16
      %v1113 = vrot.slane %v1111, 7
      %v1114 = vshll.u32 %v1028, 16
      %v1116 = vor.u32 %v1113, %v1114
      %v1117 = vsel %vm1039, %v1109, %v1116
      %v1119 = vshrl.u32 %v1029, 16
      %v1121 = vrot.slane %v1119, 7
      %v1122 = vrot.slane %v1121, 4
      %v1124 = vshrl.u32 %v1030, 16
      %v1126 = vrot.slane %v1124, 7
      %v1127 = vshll.u32 %v1030, 16
      %v1129 = vor.u32 %v1126, %v1127
      %v1130 = vsel %vm1039, %v1122, %v1129
      %v1132 = vshrl.u32 %v1031, 16
      %v1134 = vrot.slane %v1132, 7
      %v1135 = vrot.slane %v1134, 4
      %v1137 = vshrl.u32 %v1032, 16
      %v1139 = vrot.slane %v1137, 7
      %v1140 = vshll.u32 %v1032, 16
      %v1142 = vor.u32 %v1139, %v1140
      %v1143 = vsel %vm1039, %v1135, %v1142
      %v1145 = vshrl.u32 %v1033, 16
      %v1147 = vrot.slane %v1145, 7
      %v1148 = vrot.slane %v1147, 4
      %v1150 = vshrl.u32 %v1034, 16
      %v1152 = vrot.slane %v1150, 7
      %v1153 = vshll.u32 %v1034, 16
      %v1155 = vor.u32 %v1152, %v1153
      %v1156 = vsel %vm1039, %v1148, %v1155
      %v1158 = vshrl.u32 %v1035, 16
      %v1160 = vrot.slane %v1158, 7
      %v1161 = vrot.slane %v1160, 4
      %v1163 = vshrl.u32 %v1036, 16
      %v1165 = vrot.slane %v1163, 7
      %v1166 = vshll.u32 %v1036, 16
      %v1168 = vor.u32 %v1165, %v1166
      %v1169 = vsel %vm1039, %v1161, %v1168
      %1180 = vst [vmem:[#allocation3] sm:$0xf] %v1052
      %1181 = vst [vmem:[#allocation3 + $0xc] sm:$0xf] %v1065
      %1182 = vst [vmem:[#allocation3 + $0x18] sm:$0xf] %v1078
      %1183 = vst [vmem:[#allocation3 + $0x24] sm:$0xf] %v1091
      %1184 = vst [vmem:[#allocation3 + $0x30] sm:$0xf] %v1104
      %1185 = vst [vmem:[#allocation3 + $0x3c] sm:$0xf] %v1117
      %1186 = vst [vmem:[#allocation3 + $0x48] sm:$0xf] %v1130
      %1187 = vst [vmem:[#allocation3 + $0x54] sm:$0xf] %v1143
      %1188 = vst [vmem:[#allocation3 + $0x60] sm:$0xf] %v1156
      %1189 = vst [vmem:[#allocation3 + $0x6c] sm:$0xf] %v1169
      %v1190 = vld [vmem:[#allocation2 + $0x4] sm:$0xf]
      %v1191 = vld [vmem:[#allocation2 + $0x10] sm:$0xf]
      %v1192 = vld [vmem:[#allocation2 + $0x1c] sm:$0xf]
      %v1193 = vld [vmem:[#allocation2 + $0x28] sm:$0xf]
      %v1194 = vld [vmem:[#allocation2 + $0x34] sm:$0xf]
      %v1195 = vld [vmem:[#allocation2 + $0x40] sm:$0xf]
      %v1196 = vld [vmem:[#allocation2 + $0x4c] sm:$0xf]
      %v1197 = vld [vmem:[#allocation2 + $0x58] sm:$0xf]
      %v1198 = vld [vmem:[#allocation2 + $0x64] sm:$0xf]
      %v1199 = vld [vmem:[#allocation2 + $0x70] sm:$0xf]
      %1200 = vst [vmem:[#allocation3 + $0x4] sm:$0xf] %v1190
      %1201 = vst [vmem:[#allocation3 + $0x10] sm:$0xf] %v1191
      %1202 = vst [vmem:[#allocation3 + $0x1c] sm:$0xf] %v1192
      %1203 = vst [vmem:[#allocation3 + $0x28] sm:$0xf] %v1193
      %1204 = vst [vmem:[#allocation3 + $0x34] sm:$0xf] %v1194
      %1205 = vst [vmem:[#allocation3 + $0x40] sm:$0xf] %v1195
      %1206 = vst [vmem:[#allocation3 + $0x4c] sm:$0xf] %v1196
      %1207 = vst [vmem:[#allocation3 + $0x58] sm:$0xf] %v1197
      %1208 = vst [vmem:[#allocation3 + $0x64] sm:$0xf] %v1198
      %1209 = vst [vmem:[#allocation3 + $0x70] sm:$0xf] %v1199
      %v1210 = vld [vmem:[#allocation2 + $0x4] sm:$0xf]
      %v1211 = vld [vmem:[#allocation2 + $0x8] sm:$0x1]
      %v1212 = vld [vmem:[#allocation2 + $0x10] sm:$0xf]
      %v1213 = vld [vmem:[#allocation2 + $0x14] sm:$0x1]
      %v1214 = vld [vmem:[#allocation2 + $0x1c] sm:$0xf]
      %v1215 = vld [vmem:[#allocation2 + $0x20] sm:$0x1]
      %v1216 = vld [vmem:[#allocation2 + $0x28] sm:$0xf]
      %v1217 = vld [vmem:[#allocation2 + $0x2c] sm:$0x1]
      %v1218 = vld [vmem:[#allocation2 + $0x34] sm:$0xf]
      %v1219 = vld [vmem:[#allocation2 + $0x38] sm:$0x1]
      %v1220 = vld [vmem:[#allocation2 + $0x40] sm:$0xf]
      %v1221 = vld [vmem:[#allocation2 + $0x44] sm:$0x1]
      %v1222 = vld [vmem:[#allocation2 + $0x4c] sm:$0xf]
      %v1223 = vld [vmem:[#allocation2 + $0x50] sm:$0x1]
      %v1224 = vld [vmem:[#allocation2 + $0x58] sm:$0xf]
      %v1225 = vld [vmem:[#allocation2 + $0x5c] sm:$0x1]
      %v1226 = vld [vmem:[#allocation2 + $0x64] sm:$0xf]
      %v1227 = vld [vmem:[#allocation2 + $0x68] sm:$0x1]
      %v1228 = vld [vmem:[#allocation2 + $0x70] sm:$0xf]
      %v1229 = vld [vmem:[#allocation2 + $0x74] sm:$0x1]
      %vm1230 = vsmask.f32 3328
      %vm1231 = vsmask.f32 7440
      %vm1232 = vmor %vm1230, %vm1231
      %v1234 = vshrl.u32 %v1210, 16
      %v1236 = vrot.slane %v1234, 4
      %v1237 = vshll.u32 %v1210, 16
      %v1239 = vrot.slane %v1237, 5
      %v1240 = vor.u32 %v1236, %v1239
      %v1241 = vrot.slane %v1240, 4
      %v1243 = vshll.u32 %v1211, 16
      %v1245 = vrot.slane %v1243, 5
      %v1246 = vsel %vm1232, %v1241, %v1245
      %v1248 = vshrl.u32 %v1212, 16
      %v1250 = vrot.slane %v1248, 4
      %v1251 = vshll.u32 %v1212, 16
      %v1253 = vrot.slane %v1251, 5
      %v1254 = vor.u32 %v1250, %v1253
      %v1255 = vrot.slane %v1254, 4
      %v1257 = vshll.u32 %v1213, 16
      %v1259 = vrot.slane %v1257, 5
      %v1260 = vsel %vm1232, %v1255, %v1259
      %v1262 = vshrl.u32 %v1214, 16
      %v1264 = vrot.slane %v1262, 4
      %v1265 = vshll.u32 %v1214, 16
      %v1267 = vrot.slane %v1265, 5
      %v1268 = vor.u32 %v1264, %v1267
      %v1269 = vrot.slane %v1268, 4
      %v1271 = vshll.u32 %v1215, 16
      %v1273 = vrot.slane %v1271, 5
      %v1274 = vsel %vm1232, %v1269, %v1273
      %v1276 = vshrl.u32 %v1216, 16
      %v1278 = vrot.slane %v1276, 4
      %v1279 = vshll.u32 %v1216, 16
      %v1281 = vrot.slane %v1279, 5
      %v1282 = vor.u32 %v1278, %v1281
      %v1283 = vrot.slane %v1282, 4
      %v1285 = vshll.u32 %v1217, 16
      %v1287 = vrot.slane %v1285, 5
      %v1288 = vsel %vm1232, %v1283, %v1287
      %v1290 = vshrl.u32 %v1218, 16
      %v1292 = vrot.slane %v1290, 4
      %v1293 = vshll.u32 %v1218, 16
      %v1295 = vrot.slane %v1293, 5
      %v1296 = vor.u32 %v1292, %v1295
      %v1297 = vrot.slane %v1296, 4
      %v1299 = vshll.u32 %v1219, 16
      %v1301 = vrot.slane %v1299, 5
      %v1302 = vsel %vm1232, %v1297, %v1301
      %v1304 = vshrl.u32 %v1220, 16
      %v1306 = vrot.slane %v1304, 4
      %v1307 = vshll.u32 %v1220, 16
      %v1309 = vrot.slane %v1307, 5
      %v1310 = vor.u32 %v1306, %v1309
      %v1311 = vrot.slane %v1310, 4
      %v1313 = vshll.u32 %v1221, 16
      %v1315 = vrot.slane %v1313, 5
      %v1316 = vsel %vm1232, %v1311, %v1315
      %v1318 = vshrl.u32 %v1222, 16
      %v1320 = vrot.slane %v1318, 4
      %v1321 = vshll.u32 %v1222, 16
      %v1323 = vrot.slane %v1321, 5
      %v1324 = vor.u32 %v1320, %v1323
      %v1325 = vrot.slane %v1324, 4
      %v1327 = vshll.u32 %v1223, 16
      %v1329 = vrot.slane %v1327, 5
      %v1330 = vsel %vm1232, %v1325, %v1329
      %v1332 = vshrl.u32 %v1224, 16
      %v1334 = vrot.slane %v1332, 4
      %v1335 = vshll.u32 %v1224, 16
      %v1337 = vrot.slane %v1335, 5
      %v1338 = vor.u32 %v1334, %v1337
      %v1339 = vrot.slane %v1338, 4
      %v1341 = vshll.u32 %v1225, 16
      %v1343 = vrot.slane %v1341, 5
      %v1344 = vsel %vm1232, %v1339, %v1343
      %v1346 = vshrl.u32 %v1226, 16
      %v1348 = vrot.slane %v1346, 4
      %v1349 = vshll.u32 %v1226, 16
      %v1351 = vrot.slane %v1349, 5
      %v1352 = vor.u32 %v1348, %v1351
      %v1353 = vrot.slane %v1352, 4
      %v1355 = vshll.u32 %v1227, 16
      %v1357 = vrot.slane %v1355, 5
      %v1358 = vsel %vm1232, %v1353, %v1357
      %v1360 = vshrl.u32 %v1228, 16
      %v1362 = vrot.slane %v1360, 4
      %v1363 = vshll.u32 %v1228, 16
      %v1365 = vrot.slane %v1363, 5
      %v1366 = vor.u32 %v1362, %v1365
      %v1367 = vrot.slane %v1366, 4
      %v1369 = vshll.u32 %v1229, 16
      %v1371 = vrot.slane %v1369, 5
      %v1372 = vsel %vm1232, %v1367, %v1371
      %1383 = vst [vmem:[#allocation3 + $0x8] sm:$0xf] %v1246
      %1384 = vst [vmem:[#allocation3 + $0x14] sm:$0xf] %v1260
      %1385 = vst [vmem:[#allocation3 + $0x20] sm:$0xf] %v1274
      %1386 = vst [vmem:[#allocation3 + $0x2c] sm:$0xf] %v1288
      %1387 = vst [vmem:[#allocation3 + $0x38] sm:$0xf] %v1302
      %1388 = vst [vmem:[#allocation3 + $0x44] sm:$0xf] %v1316
      %1389 = vst [vmem:[#allocation3 + $0x50] sm:$0xf] %v1330
      %1390 = vst [vmem:[#allocation3 + $0x5c] sm:$0xf] %v1344
      %1391 = vst [vmem:[#allocation3 + $0x68] sm:$0xf] %v1358
      %1392 = vst [vmem:[#allocation3 + $0x74] sm:$0xf] %v1372
      %v1393 = vld [vmem:[#allocation3] sm:$0xff]
      %v1394 = vld [vmem:[#allocation3 + $0x8] sm:$0xf]
      %v1395 = vld [vmem:[#allocation3 + $0xc] sm:$0xff]
      %v1396 = vld [vmem:[#allocation3 + $0x14] sm:$0xf]
      %v1397 = vld [vmem:[#allocation3 + $0x18] sm:$0xff]
      %v1398 = vld [vmem:[#allocation3 + $0x20] sm:$0xf]
      %v1399 = vld [vmem:[#allocation3 + $0x24] sm:$0xff]
      %v1400 = vld [vmem:[#allocation3 + $0x2c] sm:$0xf]
      %v1401 = vld [vmem:[#allocation3 + $0x30] sm:$0xff]
      %v1402 = vld [vmem:[#allocation3 + $0x38] sm:$0xf]
      %v1403 = vld [vmem:[#allocation3 + $0x3c] sm:$0xff]
      %v1404 = vld [vmem:[#allocation3 + $0x44] sm:$0xf]
      %v1405 = vld [vmem:[#allocation3 + $0x48] sm:$0xff]
      %v1406 = vld [vmem:[#allocation3 + $0x50] sm:$0xf]
      %v1407 = vld [vmem:[#allocation3 + $0x54] sm:$0xff]
      %v1408 = vld [vmem:[#allocation3 + $0x5c] sm:$0xf]
      %v1409 = vld [vmem:[%s6] sm:$0xf]
      %v1410 = vld [vmem:[%s6 + $0x4] sm:$0xf]
      %v1411 = vld [vmem:[%s6 + $0x8] sm:$0xf]
      %v1412 = vld [vmem:[%s6 + $0xc] sm:$0xf]
      %v1413 = vld [vmem:[%s6 + $0x10] sm:$0xf]
      %v1414 = vld [vmem:[%s6 + $0x14] sm:$0xf]
      %v1415 = vld [vmem:[%s6 + $0x18] sm:$0xf]
      %v1416 = vld [vmem:[%s6 + $0x1c] sm:$0xf]
      %v1417 = vld [vmem:[%s6 + $0x20] sm:$0xf]
      %v1418 = vld [vmem:[%s6 + $0x24] sm:$0xf]
      %v1419 = vld [vmem:[%s6 + $0x28] sm:$0xf]
      %v1420 = vld [vmem:[%s6 + $0x2c] sm:$0xf]
      %v1421 = vld [vmem:[%s6 + $0x30] sm:$0xf]
      %v1422 = vld [vmem:[%s6 + $0x34] sm:$0xf]
      %v1423 = vld [vmem:[%s6 + $0x38] sm:$0xf]
      %v1424 = vld [vmem:[%s6 + $0x3c] sm:$0xf]
      %v1425 = vld [vmem:[%s6 + $0x40] sm:$0xf]
      %v1426 = vld [vmem:[%s6 + $0x44] sm:$0xf]
      %v1427 = vld [vmem:[%s6 + $0x48] sm:$0xf]
      %v1428 = vld [vmem:[%s6 + $0x4c] sm:$0xf]
      %v1429 = vld [vmem:[%s6 + $0x50] sm:$0xf]
      %v1430 = vld [vmem:[%s6 + $0x54] sm:$0xf]
      %v1431 = vld [vmem:[%s6 + $0x58] sm:$0xf]
      %v1432 = vld [vmem:[%s6 + $0x5c] sm:$0xf]
      %v1433 = vld [vmem:[%s6 + $0x60] sm:$0xf]
      %v1434 = vld [vmem:[%s6 + $0x64] sm:$0xf]
      %v1435 = vld [vmem:[%s6 + $0x68] sm:$0xf]
      %v1436 = vld [vmem:[%s6 + $0x6c] sm:$0xf]
      %v1437 = vld [vmem:[%s6 + $0x70] sm:$0xf]
      %v1438 = vld [vmem:[%s6 + $0x74] sm:$0xf]
      %v1439 = vld [vmem:[%s6 + $0x78] sm:$0xf]
      %v1440 = vld [vmem:[%s6 + $0x7c] sm:$0xf]
      %v1441 = vld [vmem:[%s6 + $0x80] sm:$0xf]
      %v1442 = vld [vmem:[%s6 + $0x84] sm:$0xf]
      %v1443 = vld [vmem:[%s6 + $0x88] sm:$0xf]
      %v1444 = vld [vmem:[%s6 + $0x8c] sm:$0xf]
      %v1445 = vld [vmem:[%s6 + $0x90] sm:$0xf]
      %v1446 = vld [vmem:[%s6 + $0x94] sm:$0xf]
      %v1447 = vld [vmem:[%s6 + $0x98] sm:$0xf]
      %v1448 = vld [vmem:[%s6 + $0x9c] sm:$0xf]
      %v1449 = vld [vmem:[%s6 + $0xa0] sm:$0xf]
      %v1450 = vld [vmem:[%s6 + $0xa4] sm:$0xf]
      %v1451 = vld [vmem:[%s6 + $0xa8] sm:$0xf]
      %v1452 = vld [vmem:[%s6 + $0xac] sm:$0xf]
      %v1453 = vld [vmem:[%s6 + $0xb0] sm:$0xf]
      %v1454 = vld [vmem:[%s6 + $0xb4] sm:$0xf]
      %v1455 = vld [vmem:[%s6 + $0xb8] sm:$0xf]
      %v1456 = vld [vmem:[%s6 + $0xbc] sm:$0xf]
      %s1457 = scalar_lea.vmem [#allocation3], 12
      %v1458 = vld [vmem:[%s1457] sm:$0xff]
      %v1459 = vld [vmem:[%s1457 + $0x8] sm:$0xf]
      %v1460 = vld [vmem:[%s1457 + $0xc] sm:$0xff]
      %v1461 = vld [vmem:[%s1457 + $0x14] sm:$0xf]
      %v1462 = vld [vmem:[%s1457 + $0x18] sm:$0xff]
      %v1463 = vld [vmem:[%s1457 + $0x20] sm:$0xf]
      %v1464 = vld [vmem:[%s1457 + $0x24] sm:$0xff]
      %v1465 = vld [vmem:[%s1457 + $0x2c] sm:$0xf]
      %v1466 = vld [vmem:[%s1457 + $0x30] sm:$0xff]
      %v1467 = vld [vmem:[%s1457 + $0x38] sm:$0xf]
      %v1468 = vld [vmem:[%s1457 + $0x3c] sm:$0xff]
      %v1469 = vld [vmem:[%s1457 + $0x44] sm:$0xf]
      %v1470 = vld [vmem:[%s1457 + $0x48] sm:$0xff]
      %v1471 = vld [vmem:[%s1457 + $0x50] sm:$0xf]
      %v1472 = vld [vmem:[%s1457 + $0x54] sm:$0xff]
      %v1473 = vld [vmem:[%s1457 + $0x5c] sm:$0xf]
      %s1474 = scalar_lea.vmem %s6, 192
      %v1475 = vld [vmem:[%s1474] sm:$0xf]
      %v1476 = vld [vmem:[%s1474 + $0x4] sm:$0xf]
      %v1477 = vld [vmem:[%s1474 + $0x8] sm:$0xf]
      %v1478 = vld [vmem:[%s1474 + $0xc] sm:$0xf]
      %v1479 = vld [vmem:[%s1474 + $0x10] sm:$0xf]
      %v1480 = vld [vmem:[%s1474 + $0x14] sm:$0xf]
      %v1481 = vld [vmem:[%s1474 + $0x18] sm:$0xf]
      %v1482 = vld [vmem:[%s1474 + $0x1c] sm:$0xf]
      %v1483 = vld [vmem:[%s1474 + $0x20] sm:$0xf]
      %v1484 = vld [vmem:[%s1474 + $0x24] sm:$0xf]
      %v1485 = vld [vmem:[%s1474 + $0x28] sm:$0xf]
      %v1486 = vld [vmem:[%s1474 + $0x2c] sm:$0xf]
      %v1487 = vld [vmem:[%s1474 + $0x30] sm:$0xf]
      %v1488 = vld [vmem:[%s1474 + $0x34] sm:$0xf]
      %v1489 = vld [vmem:[%s1474 + $0x38] sm:$0xf]
      %v1490 = vld [vmem:[%s1474 + $0x3c] sm:$0xf]
      %v1491 = vld [vmem:[%s1474 + $0x40] sm:$0xf]
      %v1492 = vld [vmem:[%s1474 + $0x44] sm:$0xf]
      %v1493 = vld [vmem:[%s1474 + $0x48] sm:$0xf]
      %v1494 = vld [vmem:[%s1474 + $0x4c] sm:$0xf]
      %v1495 = vld [vmem:[%s1474 + $0x50] sm:$0xf]
      %v1496 = vld [vmem:[%s1474 + $0x54] sm:$0xf]
      %v1497 = vld [vmem:[%s1474 + $0x58] sm:$0xf]
      %v1498 = vld [vmem:[%s1474 + $0x5c] sm:$0xf]
      %v1499 = vld [vmem:[%s1474 + $0x60] sm:$0xf]
      %v1500 = vld [vmem:[%s1474 + $0x64] sm:$0xf]
      %v1501 = vld [vmem:[%s1474 + $0x68] sm:$0xf]
      %v1502 = vld [vmem:[%s1474 + $0x6c] sm:$0xf]
      %v1503 = vld [vmem:[%s1474 + $0x70] sm:$0xf]
      %v1504 = vld [vmem:[%s1474 + $0x74] sm:$0xf]
      %v1505 = vld [vmem:[%s1474 + $0x78] sm:$0xf]
      %v1506 = vld [vmem:[%s1474 + $0x7c] sm:$0xf]
      %v1507 = vld [vmem:[%s1474 + $0x80] sm:$0xf]
      %v1508 = vld [vmem:[%s1474 + $0x84] sm:$0xf]
      %v1509 = vld [vmem:[%s1474 + $0x88] sm:$0xf]
      %v1510 = vld [vmem:[%s1474 + $0x8c] sm:$0xf]
      %v1511 = vld [vmem:[%s1474 + $0x90] sm:$0xf]
      %v1512 = vld [vmem:[%s1474 + $0x94] sm:$0xf]
      %v1513 = vld [vmem:[%s1474 + $0x98] sm:$0xf]
      %v1514 = vld [vmem:[%s1474 + $0x9c] sm:$0xf]
      %v1515 = vld [vmem:[%s1474 + $0xa0] sm:$0xf]
      %v1516 = vld [vmem:[%s1474 + $0xa4] sm:$0xf]
      %v1517 = vld [vmem:[%s1474 + $0xa8] sm:$0xf]
      %v1518 = vld [vmem:[%s1474 + $0xac] sm:$0xf]
      %v1519 = vld [vmem:[%s1474 + $0xb0] sm:$0xf]
      %v1520 = vld [vmem:[%s1474 + $0xb4] sm:$0xf]
      %v1521 = vld [vmem:[%s1474 + $0xb8] sm:$0xf]
      %v1522 = vld [vmem:[%s1474 + $0xbc] sm:$0xf]
      %v1539 = vunpack.c.l.b16 %v1458
      %v1540 = vunpack.c.h.b16 %v1458
      %v1541 = vunpack.c.l.b16 %v1459
      %v1542 = vunpack.c.l.b16 %v1460
      %v1543 = vunpack.c.h.b16 %v1460
      %v1544 = vunpack.c.l.b16 %v1461
      %v1545 = vunpack.c.l.b16 %v1462
      %v1546 = vunpack.c.h.b16 %v1462
      %v1547 = vunpack.c.l.b16 %v1463
      %v1548 = vunpack.c.l.b16 %v1464
      %v1549 = vunpack.c.h.b16 %v1464
      %v1550 = vunpack.c.l.b16 %v1465
      %v1551 = vunpack.c.l.b16 %v1466
      %v1552 = vunpack.c.h.b16 %v1466
      %v1553 = vunpack.c.l.b16 %v1467
      %v1554 = vunpack.c.l.b16 %v1468
      %v1555 = vunpack.c.h.b16 %v1468
      %v1556 = vunpack.c.l.b16 %v1469
      %v1557 = vunpack.c.l.b16 %v1470
      %v1558 = vunpack.c.h.b16 %v1470
      %v1559 = vunpack.c.l.b16 %v1471
      %v1560 = vunpack.c.l.b16 %v1472
      %v1561 = vunpack.c.h.b16 %v1472
      %v1562 = vunpack.c.l.b16 %v1473
      %v1563 = vpack.c.b16 %v1542, %v1539
      %v1564 = vpack.c.b16 %v1543, %v1540
      %v1565 = vpack.c.b16 %v1544, %v1541
      %v1566 = vpack.c.b16 %v1548, %v1545
      %v1567 = vpack.c.b16 %v1549, %v1546
      %v1568 = vpack.c.b16 %v1550, %v1547
      %v1569 = vpack.c.b16 %v1554, %v1551
      %v1570 = vpack.c.b16 %v1555, %v1552
      %v1571 = vpack.c.b16 %v1556, %v1553
      %v1572 = vpack.c.b16 %v1560, %v1557
      %v1573 = vpack.c.b16 %v1561, %v1558
      %v1574 = vpack.c.b16 %v1562, %v1559
      %v1635 = vunpack.c.l.b16 %v1475
      %v1636 = vunpack.c.l.b16 %v1476
      %v1637 = vunpack.c.l.b16 %v1477
      %v1638 = vunpack.c.l.b16 %v1478
      %v1639 = vunpack.c.l.b16 %v1479
      %v1640 = vunpack.c.l.b16 %v1480
      %v1641 = vunpack.c.l.b16 %v1481
      %v1642 = vunpack.c.l.b16 %v1482
      %v1643 = vunpack.c.l.b16 %v1483
      %v1644 = vunpack.c.l.b16 %v1484
      %v1645 = vunpack.c.l.b16 %v1485
      %v1646 = vunpack.c.l.b16 %v1486
      %v1647 = vunpack.c.l.b16 %v1487
      %v1648 = vunpack.c.l.b16 %v1488
      %v1649 = vunpack.c.l.b16 %v1489
      %v1650 = vunpack.c.l.b16 %v1490
      %v1651 = vunpack.c.l.b16 %v1491
      %v1652 = vunpack.c.l.b16 %v1492
      %v1653 = vunpack.c.l.b16 %v1493
      %v1654 = vunpack.c.l.b16 %v1494
      %v1655 = vunpack.c.l.b16 %v1495
      %v1656 = vunpack.c.l.b16 %v1496
      %v1657 = vunpack.c.l.b16 %v1497
      %v1658 = vunpack.c.l.b16 %v1498
      %v1659 = vunpack.c.l.b16 %v1499
      %v1660 = vunpack.c.l.b16 %v1500
      %v1661 = vunpack.c.l.b16 %v1501
      %v1662 = vunpack.c.l.b16 %v1502
      %v1663 = vunpack.c.l.b16 %v1503
      %v1664 = vunpack.c.l.b16 %v1504
      %v1665 = vunpack.c.l.b16 %v1505
      %v1666 = vunpack.c.l.b16 %v1506
      %v1667 = vunpack.c.l.b16 %v1507
      %v1668 = vunpack.c.l.b16 %v1508
      %v1669 = vunpack.c.l.b16 %v1509
      %v1670 = vunpack.c.l.b16 %v1510
      %v1671 = vunpack.c.l.b16 %v1511
      %v1672 = vunpack.c.l.b16 %v1512
      %v1673 = vunpack.c.l.b16 %v1513
      %v1674 = vunpack.c.l.b16 %v1514
      %v1675 = vunpack.c.l.b16 %v1515
      %v1676 = vunpack.c.l.b16 %v1516
      %v1677 = vunpack.c.l.b16 %v1517
      %v1678 = vunpack.c.l.b16 %v1518
      %v1679 = vunpack.c.l.b16 %v1519
      %v1680 = vunpack.c.l.b16 %v1520
      %v1681 = vunpack.c.l.b16 %v1521
      %v1682 = vunpack.c.l.b16 %v1522
      %v1683 = vpack.c.b16 %v1636, %v1635
      %v1684 = vpack.c.b16 %v1638, %v1637
      %v1685 = vpack.c.b16 %v1640, %v1639
      %v1686 = vpack.c.b16 %v1642, %v1641
      %v1687 = vpack.c.b16 %v1644, %v1643
      %v1688 = vpack.c.b16 %v1646, %v1645
      %v1689 = vpack.c.b16 %v1648, %v1647
      %v1690 = vpack.c.b16 %v1650, %v1649
      %v1691 = vpack.c.b16 %v1652, %v1651
      %v1692 = vpack.c.b16 %v1654, %v1653
      %v1693 = vpack.c.b16 %v1656, %v1655
      %v1694 = vpack.c.b16 %v1658, %v1657
      %v1695 = vpack.c.b16 %v1660, %v1659
      %v1696 = vpack.c.b16 %v1662, %v1661
      %v1697 = vpack.c.b16 %v1664, %v1663
      %v1698 = vpack.c.b16 %v1666, %v1665
      %v1699 = vpack.c.b16 %v1668, %v1667
      %v1700 = vpack.c.b16 %v1670, %v1669
      %v1701 = vpack.c.b16 %v1672, %v1671
      %v1702 = vpack.c.b16 %v1674, %v1673
      %v1703 = vpack.c.b16 %v1676, %v1675
      %v1704 = vpack.c.b16 %v1678, %v1677
      %v1705 = vpack.c.b16 %v1680, %v1679
      %v1706 = vpack.c.b16 %v1682, %v1681
      %1731 = vmatprep.subr.bf16.mxu0 0
      %1732 = vmatpush1.bf16.msra.mxu0 %v1683
      %1733 = vmatprep.subr.bf16.mxu0 0
      %1734 = vmatpush1.bf16.msra.mxu0 %v1684
      %1735 = vmatprep.subr.bf16.mxu0 0
      %1736 = vmatpush1.bf16.msra.mxu0 %v1685
      %1737 = vmatprep.subr.bf16.mxu0 0
      %1738 = vmatpush1.bf16.msra.mxu0 %v1686
      %1739 = vmatprep.subr.bf16.mxu0 0
      %1740 = vmatpush1.bf16.msra.mxu0 %v1687
      %1741 = vmatprep.subr.bf16.mxu0 0
      %1742 = vmatpush1.bf16.msra.mxu0 %v1688
      %1743 = vmatprep.subr.bf16.mxu0 0
      %1744 = vmatpush1.bf16.msra.mxu0 %v1689
      %1745 = vmatprep.subr.bf16.mxu0 0
      %1746 = vmatpush1.bf16.msra.mxu0 %v1690
      %1747 = vmatprep.subr.bf16.mxu0 0
      %1748 = vmatpush1.bf16.msra.mxu0 %v1691
      %1749 = vmatprep.subr.bf16.mxu0 0
      %1750 = vmatpush1.bf16.msra.mxu0 %v1692
      %1751 = vmatprep.subr.bf16.mxu0 0
      %1752 = vmatpush1.bf16.msra.mxu0 %v1693
      %1753 = vmatprep.subr.bf16.mxu0 0
      %1754 = vmatpush1.bf16.msra.mxu0 %v1694
      %1755 = vmatprep.subr.bf16.mxu0 0
      %1756 = vmatpush1.bf16.msra.mxu0 %v1695
      %1757 = vmatprep.subr.bf16.mxu0 0
      %1758 = vmatpush1.bf16.msra.mxu0 %v1696
      %1759 = vmatprep.subr.bf16.mxu0 0
      %1760 = vmatpush1.bf16.msra.mxu0 %v1697
      %1761 = vmatprep.subr.bf16.mxu0 0
      %1762 = vmatpush1.bf16.msra.mxu0 %v1698
      %1763 = vmatprep.mubr.bf16.mxu0 %v1564
      %1764 = vmatmul.mubr.bf16.gmra.mrb[0].mxu0 %v1563
      %v1765 = vpop.f32.mrb[0].mxu0
      %v1766 = vadd.f32 0.0, %v1765
      %v1767 = vpop.f32.mrb[0].mxu0
      %v1768 = vpop.f32.mrb[0].mxu0
      %v1769 = vadd.f32 0.0, %v1768
      %v1770 = vpop.f32.mrb[0].mxu0
      %1771 = vmatprep.mubr.bf16.mxu0 %v1567
      %1772 = vmatmul.mubr.bf16.gmra.mrb[0].mxu0 %v1566
      %v1773 = vpop.f32.mrb[0].mxu0
      %v1774 = vadd.f32 0.0, %v1773
      %v1775 = vpop.f32.mrb[0].mxu0
      %v1776 = vpop.f32.mrb[0].mxu0
      %v1777 = vadd.f32 0.0, %v1776
      %v1778 = vpop.f32.mrb[0].mxu0
      %1779 = vmatprep.mubr.bf16.mxu0 %v1570
      %1780 = vmatmul.mubr.bf16.gmra.mrb[0].mxu0 %v1569
      %v1781 = vpop.f32.mrb[0].mxu0
      %v1782 = vadd.f32 0.0, %v1781
      %v1783 = vpop.f32.mrb[0].mxu0
      %v1784 = vpop.f32.mrb[0].mxu0
      %v1785 = vadd.f32 0.0, %v1784
      %v1786 = vpop.f32.mrb[0].mxu0
      %1787 = vmatprep.mubr.bf16.mxu0 %v1573
      %1788 = vmatmul.mubr.bf16.gmra.mrb[0].mxu0 %v1572
      %v1789 = vpop.f32.mrb[0].mxu0
      %v1790 = vadd.f32 0.0, %v1789
      %v1791 = vpop.f32.mrb[0].mxu0
      %v1792 = vpop.f32.mrb[0].mxu0
      %v1793 = vadd.f32 0.0, %v1792
      %v1794 = vpop.f32.mrb[0].mxu0
      %1795 = vdwg.mxu0
      %1796 = vmatprep.subr.bf16.mxu0 0
      %1797 = vmatpush1.bf16.msra.mxu0 %v1699
      %1798 = vmatprep.subr.bf16.mxu0 0
      %1799 = vmatpush1.bf16.msra.mxu0 %v1700
      %1800 = vmatprep.subr.bf16.mxu0 0
      %1801 = vmatpush1.bf16.msra.mxu0 %v1701
      %1802 = vmatprep.subr.bf16.mxu0 0
      %1803 = vmatpush1.bf16.msra.mxu0 %v1702
      %1804 = vmatprep.subr.bf16.mxu0 0
      %1805 = vmatpush1.bf16.msra.mxu0 %v1703
      %1806 = vmatprep.subr.bf16.mxu0 0
      %1807 = vmatpush1.bf16.msra.mxu0 %v1704
      %1808 = vmatprep.subr.bf16.mxu0 0
      %1809 = vmatpush1.bf16.msra.mxu0 %v1705
      %1810 = vmatprep.subr.bf16.mxu0 0
      %1811 = vmatpush1.bf16.msra.mxu0 %v1706
      %1812 = vmatprep.subr.bf16.mxu0 0
      %1813 = vmatpush1.bf16.msra.mxu0 0
      %1814 = vmatprep.subr.bf16.mxu0 0
      %1815 = vmatpush1.bf16.msra.mxu0 0
      %1816 = vmatprep.subr.bf16.mxu0 0
      %1817 = vmatpush1.bf16.msra.mxu0 0
      %1818 = vmatprep.subr.bf16.mxu0 0
      %1819 = vmatpush1.bf16.msra.mxu0 0
      %1820 = vmatprep.subr.bf16.mxu0 0
      %1821 = vmatpush1.bf16.msra.mxu0 0
      %1822 = vmatprep.subr.bf16.mxu0 0
      %1823 = vmatpush1.bf16.msra.mxu0 0
      %1824 = vmatprep.subr.bf16.mxu0 0
      %1825 = vmatpush1.bf16.msra.mxu0 0
      %1826 = vmatprep.subr.bf16.mxu0 0
      %1827 = vmatpush1.bf16.msra.mxu0 0
      %1828 = vmatprep.mubr.bf16.mxu0 0
      %1829 = vmatmul.mubr.bf16.gmra.mrb[0].mxu0 %v1565
      %v1830 = vpop.f32.mrb[0].mxu0
      %v1831 = vadd.f32 %v1766, %v1830
      %v1832 = vpop.f32.mrb[0].mxu0
      %v1833 = vpop.f32.mrb[0].mxu0
      %v1834 = vadd.f32 %v1769, %v1833
      %v1835 = vpop.f32.mrb[0].mxu0
      %1836 = vmatprep.mubr.bf16.mxu0 0
      %1837 = vmatmul.mubr.bf16.gmra.mrb[0].mxu0 %v1568
      %v1838 = vpop.f32.mrb[0].mxu0
      %v1839 = vadd.f32 %v1774, %v1838
      %v1840 = vpop.f32.mrb[0].mxu0
      %v1841 = vpop.f32.mrb[0].mxu0
      %v1842 = vadd.f32 %v1777, %v1841
      %v1843 = vpop.f32.mrb[0].mxu0
      %1844 = vmatprep.mubr.bf16.mxu0 0
      %1845 = vmatmul.mubr.bf16.gmra.mrb[0].mxu0 %v1571
      %v1846 = vpop.f32.mrb[0].mxu0
      %v1847 = vadd.f32 %v1782, %v1846
      %v1848 = vpop.f32.mrb[0].mxu0
      %v1849 = vpop.f32.mrb[0].mxu0
      %v1850 = vadd.f32 %v1785, %v1849
      %v1851 = vpop.f32.mrb[0].mxu0
      %1852 = vmatprep.mubr.bf16.mxu0 0
      %1853 = vmatmul.mubr.bf16.gmra.mrb[0].mxu0 %v1574
      %v1854 = vpop.f32.mrb[0].mxu0
      %v1855 = vadd.f32 %v1790, %v1854
      %v1856 = vpop.f32.mrb[0].mxu0
      %v1857 = vpop.f32.mrb[0].mxu0
      %v1858 = vadd.f32 %v1793, %v1857
      %v1859 = vpop.f32.mrb[0].mxu0
      %1860 = vdwg.mxu0
      %v1877 = vunpack.c.l.b16 %v1393
      %v1878 = vunpack.c.h.b16 %v1393
      %v1879 = vunpack.c.l.b16 %v1394
      %v1880 = vunpack.c.l.b16 %v1395
      %v1881 = vunpack.c.h.b16 %v1395
      %v1882 = vunpack.c.l.b16 %v1396
      %v1883 = vunpack.c.l.b16 %v1397
      %v1884 = vunpack.c.h.b16 %v1397
      %v1885 = vunpack.c.l.b16 %v1398
      %v1886 = vunpack.c.l.b16 %v1399
      %v1887 = vunpack.c.h.b16 %v1399
      %v1888 = vunpack.c.l.b16 %v1400
      %v1889 = vunpack.c.l.b16 %v1401
      %v1890 = vunpack.c.h.b16 %v1401
      %v1891 = vunpack.c.l.b16 %v1402
      %v1892 = vunpack.c.l.b16 %v1403
      %v1893 = vunpack.c.h.b16 %v1403
      %v1894 = vunpack.c.l.b16 %v1404
      %v1895 = vunpack.c.l.b16 %v1405
      %v1896 = vunpack.c.h.b16 %v1405
      %v1897 = vunpack.c.l.b16 %v1406
      %v1898 = vunpack.c.l.b16 %v1407
      %v1899 = vunpack.c.h.b16 %v1407
      %v1900 = vunpack.c.l.b16 %v1408
      %v1901 = vpack.c.b16 %v1880, %v1877
      %v1902 = vpack.c.b16 %v1881, %v1878
      %v1903 = vpack.c.b16 %v1882, %v1879
      %v1904 = vpack.c.b16 %v1886, %v1883
      %v1905 = vpack.c.b16 %v1887, %v1884
      %v1906 = vpack.c.b16 %v1888, %v1885
      %v1907 = vpack.c.b16 %v1892, %v1889
      %v1908 = vpack.c.b16 %v1893, %v1890
      %v1909 = vpack.c.b16 %v1894, %v1891
      %v1910 = vpack.c.b16 %v1898, %v1895
      %v1911 = vpack.c.b16 %v1899, %v1896
      %v1912 = vpack.c.b16 %v1900, %v1897
      %v1973 = vunpack.c.l.b16 %v1409
      %v1974 = vunpack.c.l.b16 %v1410
      %v1975 = vunpack.c.l.b16 %v1411
      %v1976 = vunpack.c.l.b16 %v1412
      %v1977 = vunpack.c.l.b16 %v1413
      %v1978 = vunpack.c.l.b16 %v1414
      %v1979 = vunpack.c.l.b16 %v1415
      %v1980 = vunpack.c.l.b16 %v1416
      %v1981 = vunpack.c.l.b16 %v1417
      %v1982 = vunpack.c.l.b16 %v1418
      %v1983 = vunpack.c.l.b16 %v1419
      %v1984 = vunpack.c.l.b16 %v1420
      %v1985 = vunpack.c.l.b16 %v1421
      %v1986 = vunpack.c.l.b16 %v1422
      %v1987 = vunpack.c.l.b16 %v1423
      %v1988 = vunpack.c.l.b16 %v1424
      %v1989 = vunpack.c.l.b16 %v1425
      %v1990 = vunpack.c.l.b16 %v1426
      %v1991 = vunpack.c.l.b16 %v1427
      %v1992 = vunpack.c.l.b16 %v1428
      %v1993 = vunpack.c.l.b16 %v1429
      %v1994 = vunpack.c.l.b16 %v1430
      %v1995 = vunpack.c.l.b16 %v1431
      %v1996 = vunpack.c.l.b16 %v1432
      %v1997 = vunpack.c.l.b16 %v1433
      %v1998 = vunpack.c.l.b16 %v1434
      %v1999 = vunpack.c.l.b16 %v1435
      %v2000 = vunpack.c.l.b16 %v1436
      %v2001 = vunpack.c.l.b16 %v1437
      %v2002 = vunpack.c.l.b16 %v1438
      %v2003 = vunpack.c.l.b16 %v1439
      %v2004 = vunpack.c.l.b16 %v1440
      %v2005 = vunpack.c.l.b16 %v1441
      %v2006 = vunpack.c.l.b16 %v1442
      %v2007 = vunpack.c.l.b16 %v1443
      %v2008 = vunpack.c.l.b16 %v1444
      %v2009 = vunpack.c.l.b16 %v1445
      %v2010 = vunpack.c.l.b16 %v1446
      %v2011 = vunpack.c.l.b16 %v1447
      %v2012 = vunpack.c.l.b16 %v1448
      %v2013 = vunpack.c.l.b16 %v1449
      %v2014 = vunpack.c.l.b16 %v1450
      %v2015 = vunpack.c.l.b16 %v1451
      %v2016 = vunpack.c.l.b16 %v1452
      %v2017 = vunpack.c.l.b16 %v1453
      %v2018 = vunpack.c.l.b16 %v1454
      %v2019 = vunpack.c.l.b16 %v1455
      %v2020 = vunpack.c.l.b16 %v1456
      %v2021 = vpack.c.b16 %v1974, %v1973
      %v2022 = vpack.c.b16 %v1976, %v1975
      %v2023 = vpack.c.b16 %v1978, %v1977
      %v2024 = vpack.c.b16 %v1980, %v1979
      %v2025 = vpack.c.b16 %v1982, %v1981
      %v2026 = vpack.c.b16 %v1984, %v1983
      %v2027 = vpack.c.b16 %v1986, %v1985
      %v2028 = vpack.c.b16 %v1988, %v1987
      %v2029 = vpack.c.b16 %v1990, %v1989
      %v2030 = vpack.c.b16 %v1992, %v1991
      %v2031 = vpack.c.b16 %v1994, %v1993
      %v2032 = vpack.c.b16 %v1996, %v1995
      %v2033 = vpack.c.b16 %v1998, %v1997
      %v2034 = vpack.c.b16 %v2000, %v1999
      %v2035 = vpack.c.b16 %v2002, %v2001
      %v2036 = vpack.c.b16 %v2004, %v2003
      %v2037 = vpack.c.b16 %v2006, %v2005
      %v2038 = vpack.c.b16 %v2008, %v2007
      %v2039 = vpack.c.b16 %v2010, %v2009
      %v2040 = vpack.c.b16 %v2012, %v2011
      %v2041 = vpack.c.b16 %v2014, %v2013
      %v2042 = vpack.c.b16 %v2016, %v2015
      %v2043 = vpack.c.b16 %v2018, %v2017
      %v2044 = vpack.c.b16 %v2020, %v2019
      %2069 = vmatprep.subr.bf16.mxu0 0
      %2070 = vmatpush1.bf16.msra.mxu0 %v2021
      %2071 = vmatprep.subr.bf16.mxu0 0
      %2072 = vmatpush1.bf16.msra.mxu0 %v2022
      %2073 = vmatprep.subr.bf16.mxu0 0
      %2074 = vmatpush1.bf16.msra.mxu0 %v2023
      %2075 = vmatprep.subr.bf16.mxu0 0
      %2076 = vmatpush1.bf16.msra.mxu0 %v2024
      %2077 = vmatprep.subr.bf16.mxu0 0
      %2078 = vmatpush1.bf16.msra.mxu0 %v2025
      %2079 = vmatprep.subr.bf16.mxu0 0
      %2080 = vmatpush1.bf16.msra.mxu0 %v2026
      %2081 = vmatprep.subr.bf16.mxu0 0
      %2082 = vmatpush1.bf16.msra.mxu0 %v2027
      %2083 = vmatprep.subr.bf16.mxu0 0
      %2084 = vmatpush1.bf16.msra.mxu0 %v2028
      %2085 = vmatprep.subr.bf16.mxu0 0
      %2086 = vmatpush1.bf16.msra.mxu0 %v2029
      %2087 = vmatprep.subr.bf16.mxu0 0
      %2088 = vmatpush1.bf16.msra.mxu0 %v2030
      %2089 = vmatprep.subr.bf16.mxu0 0
      %2090 = vmatpush1.bf16.msra.mxu0 %v2031
      %2091 = vmatprep.subr.bf16.mxu0 0
      %2092 = vmatpush1.bf16.msra.mxu0 %v2032
      %2093 = vmatprep.subr.bf16.mxu0 0
      %2094 = vmatpush1.bf16.msra.mxu0 %v2033
      %2095 = vmatprep.subr.bf16.mxu0 0
      %2096 = vmatpush1.bf16.msra.mxu0 %v2034
      %2097 = vmatprep.subr.bf16.mxu0 0
      %2098 = vmatpush1.bf16.msra.mxu0 %v2035
      %2099 = vmatprep.subr.bf16.mxu0 0
      %2100 = vmatpush1.bf16.msra.mxu0 %v2036
      %2101 = vmatprep.mubr.bf16.mxu0 %v1902
      %2102 = vmatmul.mubr.bf16.gmra.mrb[0].mxu0 %v1901
      %v2103 = vpop.f32.mrb[0].mxu0
      %v2104 = vadd.f32 %v1831, %v2103
      %v2105 = vpop.f32.mrb[0].mxu0
      %v2106 = vpop.f32.mrb[0].mxu0
      %v2107 = vadd.f32 %v1834, %v2106
      %v2108 = vpop.f32.mrb[0].mxu0
      %2109 = vmatprep.mubr.bf16.mxu0 %v1905
      %2110 = vmatmul.mubr.bf16.gmra.mrb[0].mxu0 %v1904
      %v2111 = vpop.f32.mrb[0].mxu0
      %v2112 = vadd.f32 %v1839, %v2111
      %v2113 = vpop.f32.mrb[0].mxu0
      %v2114 = vpop.f32.mrb[0].mxu0
      %v2115 = vadd.f32 %v1842, %v2114
      %v2116 = vpop.f32.mrb[0].mxu0
      %2117 = vmatprep.mubr.bf16.mxu0 %v1908
      %2118 = vmatmul.mubr.bf16.gmra.mrb[0].mxu0 %v1907
      %v2119 = vpop.f32.mrb[0].mxu0
      %v2120 = vadd.f32 %v1847, %v2119
      %v2121 = vpop.f32.mrb[0].mxu0
      %v2122 = vpop.f32.mrb[0].mxu0
      %v2123 = vadd.f32 %v1850, %v2122
      %v2124 = vpop.f32.mrb[0].mxu0
      %2125 = vmatprep.mubr.bf16.mxu0 %v1911
      %2126 = vmatmul.mubr.bf16.gmra.mrb[0].mxu0 %v1910
      %v2127 = vpop.f32.mrb[0].mxu0
      %v2128 = vadd.f32 %v1855, %v2127
      %v2129 = vpop.f32.mrb[0].mxu0
      %v2130 = vpop.f32.mrb[0].mxu0
      %v2131 = vadd.f32 %v1858, %v2130
      %v2132 = vpop.f32.mrb[0].mxu0
      %2133 = vdwg.mxu0
      %2134 = vmatprep.subr.bf16.mxu0 0
      %2135 = vmatpush1.bf16.msra.mxu0 %v2037
      %2136 = vmatprep.subr.bf16.mxu0 0
      %2137 = vmatpush1.bf16.msra.mxu0 %v2038
      %2138 = vmatprep.subr.bf16.mxu0 0
      %2139 = vmatpush1.bf16.msra.mxu0 %v2039
      %2140 = vmatprep.subr.bf16.mxu0 0
      %2141 = vmatpush1.bf16.msra.mxu0 %v2040
      %2142 = vmatprep.subr.bf16.mxu0 0
      %2143 = vmatpush1.bf16.msra.mxu0 %v2041
      %2144 = vmatprep.subr.bf16.mxu0 0
      %2145 = vmatpush1.bf16.msra.mxu0 %v2042
      %2146 = vmatprep.subr.bf16.mxu0 0
      %2147 = vmatpush1.bf16.msra.mxu0 %v2043
      %2148 = vmatprep.subr.bf16.mxu0 0
      %2149 = vmatpush1.bf16.msra.mxu0 %v2044
      %2150 = vmatprep.subr.bf16.mxu0 0
      %2151 = vmatpush1.bf16.msra.mxu0 0
      %2152 = vmatprep.subr.bf16.mxu0 0
      %2153 = vmatpush1.bf16.msra.mxu0 0
      %2154 = vmatprep.subr.bf16.mxu0 0
      %2155 = vmatpush1.bf16.msra.mxu0 0
      %2156 = vmatprep.subr.bf16.mxu0 0
      %2157 = vmatpush1.bf16.msra.mxu0 0
      %2158 = vmatprep.subr.bf16.mxu0 0
      %2159 = vmatpush1.bf16.msra.mxu0 0
      %2160 = vmatprep.subr.bf16.mxu0 0
      %2161 = vmatpush1.bf16.msra.mxu0 0
      %2162 = vmatprep.subr.bf16.mxu0 0
      %2163 = vmatpush1.bf16.msra.mxu0 0
      %2164 = vmatprep.subr.bf16.mxu0 0
      %2165 = vmatpush1.bf16.msra.mxu0 0
      %2166 = vmatprep.mubr.bf16.mxu0 0
      %2167 = vmatmul.mubr.bf16.gmra.mrb[0].mxu0 %v1903
      %v2168 = vpop.f32.mrb[0].mxu0
      %v2169 = vadd.f32 %v2104, %v2168
      %v2170 = vpop.f32.mrb[0].mxu0
      %v2171 = vpop.f32.mrb[0].mxu0
      %v2172 = vadd.f32 %v2107, %v2171
      %v2173 = vpop.f32.mrb[0].mxu0
      %2174 = vmatprep.mubr.bf16.mxu0 0
      %2175 = vmatmul.mubr.bf16.gmra.mrb[0].mxu0 %v1906
      %v2176 = vpop.f32.mrb[0].mxu0
      %v2177 = vadd.f32 %v2112, %v2176
      %v2178 = vpop.f32.mrb[0].mxu0
      %v2179 = vpop.f32.mrb[0].mxu0
      %v2180 = vadd.f32 %v2115, %v2179
      %v2181 = vpop.f32.mrb[0].mxu0
      %2182 = vmatprep.mubr.bf16.mxu0 0
      %2183 = vmatmul.mubr.bf16.gmra.mrb[0].mxu0 %v1909
      %v2184 = vpop.f32.mrb[0].mxu0
      %v2185 = vadd.f32 %v2120, %v2184
      %v2186 = vpop.f32.mrb[0].mxu0
      %v2187 = vpop.f32.mrb[0].mxu0
      %v2188 = vadd.f32 %v2123, %v2187
      %v2189 = vpop.f32.mrb[0].mxu0
      %2190 = vmatprep.mubr.bf16.mxu0 0
      %2191 = vmatmul.mubr.bf16.gmra.mrb[0].mxu0 %v1912
      %v2192 = vpop.f32.mrb[0].mxu0
      %v2193 = vadd.f32 %v2128, %v2192
      %v2194 = vpop.f32.mrb[0].mxu0
      %v2195 = vpop.f32.mrb[0].mxu0
      %v2196 = vadd.f32 %v2131, %v2195
      %v2197 = vpop.f32.mrb[0].mxu0
      %2198 = vdwg.mxu0
      %s2199 = scalar_lea.vmem [#allocation3], 24
      %v2200 = vld [vmem:[%s2199] sm:$0xff]
      %v2201 = vld [vmem:[%s2199 + $0x8] sm:$0xf]
      %v2202 = vld [vmem:[%s2199 + $0xc] sm:$0xff]
      %v2203 = vld [vmem:[%s2199 + $0x14] sm:$0xf]
      %v2204 = vld [vmem:[%s2199 + $0x18] sm:$0xff]
      %v2205 = vld [vmem:[%s2199 + $0x20] sm:$0xf]
      %v2206 = vld [vmem:[%s2199 + $0x24] sm:$0xff]
      %v2207 = vld [vmem:[%s2199 + $0x2c] sm:$0xf]
      %v2208 = vld [vmem:[%s2199 + $0x30] sm:$0xff]
      %v2209 = vld [vmem:[%s2199 + $0x38] sm:$0xf]
      %v2210 = vld [vmem:[%s2199 + $0x3c] sm:$0xff]
      %v2211 = vld [vmem:[%s2199 + $0x44] sm:$0xf]
      %v2212 = vld [vmem:[%s2199 + $0x48] sm:$0xff]
      %v2213 = vld [vmem:[%s2199 + $0x50] sm:$0xf]
      %v2214 = vld [vmem:[%s2199 + $0x54] sm:$0xff]
      %v2215 = vld [vmem:[%s2199 + $0x5c] sm:$0xf]
      %s2216 = scalar_lea.vmem %s6, 384
      %v2217 = vld [vmem:[%s2216] sm:$0xf]
      %v2218 = vld [vmem:[%s2216 + $0x4] sm:$0xf]
      %v2219 = vld [vmem:[%s2216 + $0x8] sm:$0xf]
      %v2220 = vld [vmem:[%s2216 + $0xc] sm:$0xf]
      %v2221 = vld [vmem:[%s2216 + $0x10] sm:$0xf]
      %v2222 = vld [vmem:[%s2216 + $0x14] sm:$0xf]
      %v2223 = vld [vmem:[%s2216 + $0x18] sm:$0xf]
      %v2224 = vld [vmem:[%s2216 + $0x1c] sm:$0xf]
      %v2225 = vld [vmem:[%s2216 + $0x20] sm:$0xf]
      %v2226 = vld [vmem:[%s2216 + $0x24] sm:$0xf]
      %v2227 = vld [vmem:[%s2216 + $0x28] sm:$0xf]
      %v2228 = vld [vmem:[%s2216 + $0x2c] sm:$0xf]
      %v2229 = vld [vmem:[%s2216 + $0x30] sm:$0xf]
      %v2230 = vld [vmem:[%s2216 + $0x34] sm:$0xf]
      %v2231 = vld [vmem:[%s2216 + $0x38] sm:$0xf]
      %v2232 = vld [vmem:[%s2216 + $0x3c] sm:$0xf]
      %v2233 = vld [vmem:[%s2216 + $0x40] sm:$0xf]
      %v2234 = vld [vmem:[%s2216 + $0x44] sm:$0xf]
      %v2235 = vld [vmem:[%s2216 + $0x48] sm:$0xf]
      %v2236 = vld [vmem:[%s2216 + $0x4c] sm:$0xf]
      %v2237 = vld [vmem:[%s2216 + $0x50] sm:$0xf]
      %v2238 = vld [vmem:[%s2216 + $0x54] sm:$0xf]
      %v2239 = vld [vmem:[%s2216 + $0x58] sm:$0xf]
      %v2240 = vld [vmem:[%s2216 + $0x5c] sm:$0xf]
      %v2241 = vld [vmem:[%s2216 + $0x60] sm:$0xf]
      %v2242 = vld [vmem:[%s2216 + $0x64] sm:$0xf]
      %v2243 = vld [vmem:[%s2216 + $0x68] sm:$0xf]
      %v2244 = vld [vmem:[%s2216 + $0x6c] sm:$0xf]
      %v2245 = vld [vmem:[%s2216 + $0x70] sm:$0xf]
      %v2246 = vld [vmem:[%s2216 + $0x74] sm:$0xf]
      %v2247 = vld [vmem:[%s2216 + $0x78] sm:$0xf]
      %v2248 = vld [vmem:[%s2216 + $0x7c] sm:$0xf]
      %v2249 = vld [vmem:[%s2216 + $0x80] sm:$0xf]
      %v2250 = vld [vmem:[%s2216 + $0x84] sm:$0xf]
      %v2251 = vld [vmem:[%s2216 + $0x88] sm:$0xf]
      %v2252 = vld [vmem:[%s2216 + $0x8c] sm:$0xf]
      %v2253 = vld [vmem:[%s2216 + $0x90] sm:$0xf]
      %v2254 = vld [vmem:[%s2216 + $0x94] sm:$0xf]
      %v2255 = vld [vmem:[%s2216 + $0x98] sm:$0xf]
      %v2256 = vld [vmem:[%s2216 + $0x9c] sm:$0xf]
      %v2257 = vld [vmem:[%s2216 + $0xa0] sm:$0xf]
      %v2258 = vld [vmem:[%s2216 + $0xa4] sm:$0xf]
      %v2259 = vld [vmem:[%s2216 + $0xa8] sm:$0xf]
      %v2260 = vld [vmem:[%s2216 + $0xac] sm:$0xf]
      %v2261 = vld [vmem:[%s2216 + $0xb0] sm:$0xf]
      %v2262 = vld [vmem:[%s2216 + $0xb4] sm:$0xf]
      %v2263 = vld [vmem:[%s2216 + $0xb8] sm:$0xf]
      %v2264 = vld [vmem:[%s2216 + $0xbc] sm:$0xf]
      %v2281 = vunpack.c.l.b16 %v2200
      %v2282 = vunpack.c.h.b16 %v2200
      %v2283 = vunpack.c.l.b16 %v2201
      %v2284 = vunpack.c.l.b16 %v2202
      %v2285 = vunpack.c.h.b16 %v2202
      %v2286 = vunpack.c.l.b16 %v2203
      %v2287 = vunpack.c.l.b16 %v2204
      %v2288 = vunpack.c.h.b16 %v2204
      %v2289 = vunpack.c.l.b16 %v2205
      %v2290 = vunpack.c.l.b16 %v2206
      %v2291 = vunpack.c.h.b16 %v2206
      %v2292 = vunpack.c.l.b16 %v2207
      %v2293 = vunpack.c.l.b16 %v2208
      %v2294 = vunpack.c.h.b16 %v2208
      %v2295 = vunpack.c.l.b16 %v2209
      %v2296 = vunpack.c.l.b16 %v2210
      %v2297 = vunpack.c.h.b16 %v2210
      %v2298 = vunpack.c.l.b16 %v2211
      %v2299 = vunpack.c.l.b16 %v2212
      %v2300 = vunpack.c.h.b16 %v2212
      %v2301 = vunpack.c.l.b16 %v2213
      %v2302 = vunpack.c.l.b16 %v2214
      %v2303 = vunpack.c.h.b16 %v2214
      %v2304 = vunpack.c.l.b16 %v2215
      %v2305 = vpack.c.b16 %v2284, %v2281
      %v2306 = vpack.c.b16 %v2285, %v2282
      %v2307 = vpack.c.b16 %v2286, %v2283
      %v2308 = vpack.c.b16 %v2290, %v2287
      %v2309 = vpack.c.b16 %v2291, %v2288
      %v2310 = vpack.c.b16 %v2292, %v2289
      %v2311 = vpack.c.b16 %v2296, %v2293
      %v2312 = vpack.c.b16 %v2297, %v2294
      %v2313 = vpack.c.b16 %v2298, %v2295
      %v2314 = vpack.c.b16 %v2302, %v2299
      %v2315 = vpack.c.b16 %v2303, %v2300
      %v2316 = vpack.c.b16 %v2304, %v2301
      %v2377 = vunpack.c.l.b16 %v2217
      %v2378 = vunpack.c.l.b16 %v2218
      %v2379 = vunpack.c.l.b16 %v2219
      %v2380 = vunpack.c.l.b16 %v2220
      %v2381 = vunpack.c.l.b16 %v2221
      %v2382 = vunpack.c.l.b16 %v2222
      %v2383 = vunpack.c.l.b16 %v2223
      %v2384 = vunpack.c.l.b16 %v2224
      %v2385 = vunpack.c.l.b16 %v2225
      %v2386 = vunpack.c.l.b16 %v2226
      %v2387 = vunpack.c.l.b16 %v2227
      %v2388 = vunpack.c.l.b16 %v2228
      %v2389 = vunpack.c.l.b16 %v2229
      %v2390 = vunpack.c.l.b16 %v2230
      %v2391 = vunpack.c.l.b16 %v2231
      %v2392 = vunpack.c.l.b16 %v2232
      %v2393 = vunpack.c.l.b16 %v2233
      %v2394 = vunpack.c.l.b16 %v2234
      %v2395 = vunpack.c.l.b16 %v2235
      %v2396 = vunpack.c.l.b16 %v2236
      %v2397 = vunpack.c.l.b16 %v2237
      %v2398 = vunpack.c.l.b16 %v2238
      %v2399 = vunpack.c.l.b16 %v2239
      %v2400 = vunpack.c.l.b16 %v2240
      %v2401 = vunpack.c.l.b16 %v2241
      %v2402 = vunpack.c.l.b16 %v2242
      %v2403 = vunpack.c.l.b16 %v2243
      %v2404 = vunpack.c.l.b16 %v2244
      %v2405 = vunpack.c.l.b16 %v2245
      %v2406 = vunpack.c.l.b16 %v2246
      %v2407 = vunpack.c.l.b16 %v2247
      %v2408 = vunpack.c.l.b16 %v2248
      %v2409 = vunpack.c.l.b16 %v2249
      %v2410 = vunpack.c.l.b16 %v2250
      %v2411 = vunpack.c.l.b16 %v2251
      %v2412 = vunpack.c.l.b16 %v2252
      %v2413 = vunpack.c.l.b16 %v2253
      %v2414 = vunpack.c.l.b16 %v2254
      %v2415 = vunpack.c.l.b16 %v2255
      %v2416 = vunpack.c.l.b16 %v2256
      %v2417 = vunpack.c.l.b16 %v2257
      %v2418 = vunpack.c.l.b16 %v2258
      %v2419 = vunpack.c.l.b16 %v2259
      %v2420 = vunpack.c.l.b16 %v2260
      %v2421 = vunpack.c.l.b16 %v2261
      %v2422 = vunpack.c.l.b16 %v2262
      %v2423 = vunpack.c.l.b16 %v2263
      %v2424 = vunpack.c.l.b16 %v2264
      %v2425 = vpack.c.b16 %v2378, %v2377
      %v2426 = vpack.c.b16 %v2380, %v2379
      %v2427 = vpack.c.b16 %v2382, %v2381
      %v2428 = vpack.c.b16 %v2384, %v2383
      %v2429 = vpack.c.b16 %v2386, %v2385
      %v2430 = vpack.c.b16 %v2388, %v2387
      %v2431 = vpack.c.b16 %v2390, %v2389
      %v2432 = vpack.c.b16 %v2392, %v2391
      %v2433 = vpack.c.b16 %v2394, %v2393
      %v2434 = vpack.c.b16 %v2396, %v2395
      %v2435 = vpack.c.b16 %v2398, %v2397
      %v2436 = vpack.c.b16 %v2400, %v2399
      %v2437 = vpack.c.b16 %v2402, %v2401
      %v2438 = vpack.c.b16 %v2404, %v2403
      %v2439 = vpack.c.b16 %v2406, %v2405
      %v2440 = vpack.c.b16 %v2408, %v2407
      %v2441 = vpack.c.b16 %v2410, %v2409
      %v2442 = vpack.c.b16 %v2412, %v2411
      %v2443 = vpack.c.b16 %v2414, %v2413
      %v2444 = vpack.c.b16 %v2416, %v2415
      %v2445 = vpack.c.b16 %v2418, %v2417
      %v2446 = vpack.c.b16 %v2420, %v2419
      %v2447 = vpack.c.b16 %v2422, %v2421
      %v2448 = vpack.c.b16 %v2424, %v2423
      %2473 = vmatprep.subr.bf16.mxu0 0
      %2474 = vmatpush1.bf16.msra.mxu0 %v2425
      %2475 = vmatprep.subr.bf16.mxu0 0
      %2476 = vmatpush1.bf16.msra.mxu0 %v2426
      %2477 = vmatprep.subr.bf16.mxu0 0
      %2478 = vmatpush1.bf16.msra.mxu0 %v2427
      %2479 = vmatprep.subr.bf16.mxu0 0
      %2480 = vmatpush1.bf16.msra.mxu0 %v2428
      %2481 = vmatprep.subr.bf16.mxu0 0
      %2482 = vmatpush1.bf16.msra.mxu0 %v2429
      %2483 = vmatprep.subr.bf16.mxu0 0
      %2484 = vmatpush1.bf16.msra.mxu0 %v2430
      %2485 = vmatprep.subr.bf16.mxu0 0
      %2486 = vmatpush1.bf16.msra.mxu0 %v2431
      %2487 = vmatprep.subr.bf16.mxu0 0
      %2488 = vmatpush1.bf16.msra.mxu0 %v2432
      %2489 = vmatprep.subr.bf16.mxu0 0
      %2490 = vmatpush1.bf16.msra.mxu0 %v2433
      %2491 = vmatprep.subr.bf16.mxu0 0
      %2492 = vmatpush1.bf16.msra.mxu0 %v2434
      %2493 = vmatprep.subr.bf16.mxu0 0
      %2494 = vmatpush1.bf16.msra.mxu0 %v2435
      %2495 = vmatprep.subr.bf16.mxu0 0
      %2496 = vmatpush1.bf16.msra.mxu0 %v2436
      %2497 = vmatprep.subr.bf16.mxu0 0
      %2498 = vmatpush1.bf16.msra.mxu0 %v2437
      %2499 = vmatprep.subr.bf16.mxu0 0
      %2500 = vmatpush1.bf16.msra.mxu0 %v2438
      %2501 = vmatprep.subr.bf16.mxu0 0
      %2502 = vmatpush1.bf16.msra.mxu0 %v2439
      %2503 = vmatprep.subr.bf16.mxu0 0
      %2504 = vmatpush1.bf16.msra.mxu0 %v2440
      %2505 = vmatprep.mubr.bf16.mxu0 %v2306
      %2506 = vmatmul.mubr.bf16.gmra.mrb[0].mxu0 %v2305
      %v2507 = vpop.f32.mrb[0].mxu0
      %v2508 = vadd.f32 0.0, %v2507
      %v2509 = vpop.f32.mrb[0].mxu0
      %v2510 = vpop.f32.mrb[0].mxu0
      %v2511 = vadd.f32 0.0, %v2510
      %v2512 = vpop.f32.mrb[0].mxu0
      %2513 = vmatprep.mubr.bf16.mxu0 %v2309
      %2514 = vmatmul.mubr.bf16.gmra.mrb[0].mxu0 %v2308
      %v2515 = vpop.f32.mrb[0].mxu0
      %v2516 = vadd.f32 0.0, %v2515
      %v2517 = vpop.f32.mrb[0].mxu0
      %v2518 = vpop.f32.mrb[0].mxu0
      %v2519 = vadd.f32 0.0, %v2518
      %v2520 = vpop.f32.mrb[0].mxu0
      %2521 = vmatprep.mubr.bf16.mxu0 %v2312
      %2522 = vmatmul.mubr.bf16.gmra.mrb[0].mxu0 %v2311
      %v2523 = vpop.f32.mrb[0].mxu0
      %v2524 = vadd.f32 0.0, %v2523
      %v2525 = vpop.f32.mrb[0].mxu0
      %v2526 = vpop.f32.mrb[0].mxu0
      %v2527 = vadd.f32 0.0, %v2526
      %v2528 = vpop.f32.mrb[0].mxu0
      %2529 = vmatprep.mubr.bf16.mxu0 %v2315
      %2530 = vmatmul.mubr.bf16.gmra.mrb[0].mxu0 %v2314
      %v2531 = vpop.f32.mrb[0].mxu0
      %v2532 = vadd.f32 0.0, %v2531
      %v2533 = vpop.f32.mrb[0].mxu0
      %v2534 = vpop.f32.mrb[0].mxu0
      %v2535 = vadd.f32 0.0, %v2534
      %v2536 = vpop.f32.mrb[0].mxu0
      %2537 = vdwg.mxu0
      %2538 = vmatprep.subr.bf16.mxu0 0
      %2539 = vmatpush1.bf16.msra.mxu0 %v2441
      %2540 = vmatprep.subr.bf16.mxu0 0
      %2541 = vmatpush1.bf16.msra.mxu0 %v2442
      %2542 = vmatprep.subr.bf16.mxu0 0
      %2543 = vmatpush1.bf16.msra.mxu0 %v2443
      %2544 = vmatprep.subr.bf16.mxu0 0
      %2545 = vmatpush1.bf16.msra.mxu0 %v2444
      %2546 = vmatprep.subr.bf16.mxu0 0
      %2547 = vmatpush1.bf16.msra.mxu0 %v2445
      %2548 = vmatprep.subr.bf16.mxu0 0
      %2549 = vmatpush1.bf16.msra.mxu0 %v2446
      %2550 = vmatprep.subr.bf16.mxu0 0
      %2551 = vmatpush1.bf16.msra.mxu0 %v2447
      %2552 = vmatprep.subr.bf16.mxu0 0
      %2553 = vmatpush1.bf16.msra.mxu0 %v2448
      %2554 = vmatprep.subr.bf16.mxu0 0
      %2555 = vmatpush1.bf16.msra.mxu0 0
      %2556 = vmatprep.subr.bf16.mxu0 0
      %2557 = vmatpush1.bf16.msra.mxu0 0
      %2558 = vmatprep.subr.bf16.mxu0 0
      %2559 = vmatpush1.bf16.msra.mxu0 0
      %2560 = vmatprep.subr.bf16.mxu0 0
      %2561 = vmatpush1.bf16.msra.mxu0 0
      %2562 = vmatprep.subr.bf16.mxu0 0
      %2563 = vmatpush1.bf16.msra.mxu0 0
      %2564 = vmatprep.subr.bf16.mxu0 0
      %2565 = vmatpush1.bf16.msra.mxu0 0
      %2566 = vmatprep.subr.bf16.mxu0 0
      %2567 = vmatpush1.bf16.msra.mxu0 0
      %2568 = vmatprep.subr.bf16.mxu0 0
      %2569 = vmatpush1.bf16.msra.mxu0 0
      %2570 = vmatprep.mubr.bf16.mxu0 0
      %2571 = vmatmul.mubr.bf16.gmra.mrb[0].mxu0 %v2307
      %v2572 = vpop.f32.mrb[0].mxu0
      %v2573 = vadd.f32 %v2508, %v2572
      %v2574 = vpop.f32.mrb[0].mxu0
      %v2575 = vpop.f32.mrb[0].mxu0
      %v2576 = vadd.f32 %v2511, %v2575
      %v2577 = vpop.f32.mrb[0].mxu0
      %2578 = vmatprep.mubr.bf16.mxu0 0
      %2579 = vmatmul.mubr.bf16.gmra.mrb[0].mxu0 %v2310
      %v2580 = vpop.f32.mrb[0].mxu0
      %v2581 = vadd.f32 %v2516, %v2580
      %v2582 = vpop.f32.mrb[0].mxu0
      %v2583 = vpop.f32.mrb[0].mxu0
      %v2584 = vadd.f32 %v2519, %v2583
      %v2585 = vpop.f32.mrb[0].mxu0
      %2586 = vmatprep.mubr.bf16.mxu0 0
      %2587 = vmatmul.mubr.bf16.gmra.mrb[0].mxu0 %v2313
      %v2588 = vpop.f32.mrb[0].mxu0
      %v2589 = vadd.f32 %v2524, %v2588
      %v2590 = vpop.f32.mrb[0].mxu0
      %v2591 = vpop.f32.mrb[0].mxu0
      %v2592 = vadd.f32 %v2527, %v2591
      %v2593 = vpop.f32.mrb[0].mxu0
      %2594 = vmatprep.mubr.bf16.mxu0 0
      %2595 = vmatmul.mubr.bf16.gmra.mrb[0].mxu0 %v2316
      %v2596 = vpop.f32.mrb[0].mxu0
      %v2597 = vadd.f32 %v2532, %v2596
      %v2598 = vpop.f32.mrb[0].mxu0
      %v2599 = vpop.f32.mrb[0].mxu0
      %v2600 = vadd.f32 %v2535, %v2599
      %v2601 = vpop.f32.mrb[0].mxu0
      %2602 = vdwg.mxu0
      %v2603 = vadd.f32 %v2169, %v2573
      %v2604 = vadd.f32 %v2172, %v2576
      %v2605 = vadd.f32 %v2177, %v2581
      %v2606 = vadd.f32 %v2180, %v2584
      %v2607 = vadd.f32 %v2185, %v2589
      %v2608 = vadd.f32 %v2188, %v2592
      %v2609 = vadd.f32 %v2193, %v2597
      %v2610 = vadd.f32 %v2196, %v2600
      %v2611 = vld [vmem:[%s7] sm:$0x1]
      %v2613 = vlaneseq
      %v2614 = vshrl.u32 %v2613, 7
      %v2615 = vsub.s32 0, %v2614
      %v2616 = vrot.slane %v2611, %v2615
      %v2618 = vmul.f32 %v2603, %v2616
      %v2619 = vmul.f32 %v2604, %v2616
      %v2620 = vmul.f32 %v2605, %v2616
      %v2621 = vmul.f32 %v2606, %v2616
      %v2622 = vmul.f32 %v2607, %v2616
      %v2623 = vmul.f32 %v2608, %v2616
      %v2624 = vmul.f32 %v2609, %v2616
      %v2625 = vmul.f32 %v2610, %v2616
      %v2626 = vld [vmem:[%s8] sm:$0x1]
      %v2628 = vlaneseq
      %v2629 = vshrl.u32 %v2628, 7
      %v2630 = vsub.s32 0, %v2629
      %v2631 = vrot.slane %v2626, %v2630
      %v2633 = vadd.f32 %v2618, %v2631
      %v2634 = vadd.f32 %v2619, %v2631
      %v2635 = vadd.f32 %v2620, %v2631
      %v2636 = vadd.f32 %v2621, %v2631
      %v2637 = vadd.f32 %v2622, %v2631
      %v2638 = vadd.f32 %v2623, %v2631
      %v2639 = vadd.f32 %v2624, %v2631
      %v2640 = vadd.f32 %v2625, %v2631
      %v2641 = vmin.f32 %v2633, 20.0
      %v2642 = vmin.f32 %v2634, 20.0
      %v2643 = vmin.f32 %v2635, 20.0
      %v2644 = vmin.f32 %v2636, 20.0
      %v2645 = vmin.f32 %v2637, 20.0
      %v2646 = vmin.f32 %v2638, 20.0
      %v2647 = vmin.f32 %v2639, 20.0
      %v2648 = vmin.f32 %v2640, 20.0
      %v2649 = vmul.f32 %v2641, 1.442695
      %v2650 = vpow.pop %v2649
      %v2651 = vmul.f32 %v2642, 1.442695
      %v2652 = vpow.pop %v2651
      %v2653 = vmul.f32 %v2643, 1.442695
      %v2654 = vpow.pop %v2653
      %v2655 = vmul.f32 %v2644, 1.442695
      %v2656 = vpow.pop %v2655
      %v2657 = vmul.f32 %v2645, 1.442695
      %v2658 = vpow.pop %v2657
      %v2659 = vmul.f32 %v2646, 1.442695
      %v2660 = vpow.pop %v2659
      %v2661 = vmul.f32 %v2647, 1.442695
      %v2662 = vpow.pop %v2661
      %v2663 = vmul.f32 %v2648, 1.442695
      %v2664 = vpow.pop %v2663
      %v2665 = vadd.f32 %v2650, 2.0
      %v2666 = vadd.f32 %v2652, 2.0
      %v2667 = vadd.f32 %v2654, 2.0
      %v2668 = vadd.f32 %v2656, 2.0
      %v2669 = vadd.f32 %v2658, 2.0
      %v2670 = vadd.f32 %v2660, 2.0
      %v2671 = vadd.f32 %v2662, 2.0
      %v2672 = vadd.f32 %v2664, 2.0
      %v2673 = vmul.f32 %v2650, %v2665
      %v2674 = vmul.f32 %v2652, %v2666
      %v2675 = vmul.f32 %v2654, %v2667
      %v2676 = vmul.f32 %v2656, %v2668
      %v2677 = vmul.f32 %v2658, %v2669
      %v2678 = vmul.f32 %v2660, %v2670
      %v2679 = vmul.f32 %v2662, %v2671
      %v2680 = vmul.f32 %v2664, %v2672
      %v2681 = vadd.f32 %v2673, 2.0
      %v2682 = vadd.f32 %v2674, 2.0
      %v2683 = vadd.f32 %v2675, 2.0
      %v2684 = vadd.f32 %v2676, 2.0
      %v2685 = vadd.f32 %v2677, 2.0
      %v2686 = vadd.f32 %v2678, 2.0
      %v2687 = vadd.f32 %v2679, 2.0
      %v2688 = vadd.f32 %v2680, 2.0
      %v2689 = vrcp.pop %v2681
      %v2690 = vrcp.pop %v2682
      %v2691 = vrcp.pop %v2683
      %v2692 = vrcp.pop %v2684
      %v2693 = vrcp.pop %v2685
      %v2694 = vrcp.pop %v2686
      %v2695 = vrcp.pop %v2687
      %v2696 = vrcp.pop %v2688
      %v2697 = vmul.f32 %v2673, %v2689
      %v2698 = vmul.f32 %v2674, %v2690
      %v2699 = vmul.f32 %v2675, %v2691
      %v2700 = vmul.f32 %v2676, %v2692
      %v2701 = vmul.f32 %v2677, %v2693
      %v2702 = vmul.f32 %v2678, %v2694
      %v2703 = vmul.f32 %v2679, %v2695
      %v2704 = vmul.f32 %v2680, %v2696
      %vm2705 = vcmp.gt.f32.partialorder %v2633, 20.0
      %vm2706 = vcmp.gt.f32.partialorder %v2634, 20.0
      %vm2707 = vcmp.gt.f32.partialorder %v2635, 20.0
      %vm2708 = vcmp.gt.f32.partialorder %v2636, 20.0
      %vm2709 = vcmp.gt.f32.partialorder %v2637, 20.0
      %vm2710 = vcmp.gt.f32.partialorder %v2638, 20.0
      %vm2711 = vcmp.gt.f32.partialorder %v2639, 20.0
      %vm2712 = vcmp.gt.f32.partialorder %v2640, 20.0
      %v2713 = vsel %vm2705, 1.0, %v2697
      %v2714 = vsel %vm2706, 1.0, %v2698
      %v2715 = vsel %vm2707, 1.0, %v2699
      %v2716 = vsel %vm2708, 1.0, %v2700
      %v2717 = vsel %vm2709, 1.0, %v2701
      %v2718 = vsel %vm2710, 1.0, %v2702
      %v2719 = vsel %vm2711, 1.0, %v2703
      %v2720 = vsel %vm2712, 1.0, %v2704
      %v2721 = vmul.f32 %v2633, %v2713
      %v2722 = vmul.f32 %v2634, %v2714
      %v2723 = vmul.f32 %v2635, %v2715
      %v2724 = vmul.f32 %v2636, %v2716
      %v2725 = vmul.f32 %v2637, %v2717
      %v2726 = vmul.f32 %v2638, %v2718
      %v2727 = vmul.f32 %v2639, %v2719
      %v2728 = vmul.f32 %v2640, %v2720
      %v2729 = vld [vmem:[%s9] sm:$0x1]
      %v2731 = vlaneseq
      %v2732 = vshrl.u32 %v2731, 7
      %v2733 = vsub.s32 0, %v2732
      %v2734 = vrot.slane %v2729, %v2733
      %v2736 = vmul.f32 %v2721, %v2734
      %v2737 = vmul.f32 %v2722, %v2734
      %v2738 = vmul.f32 %v2723, %v2734
      %v2739 = vmul.f32 %v2724, %v2734
      %v2740 = vmul.f32 %v2725, %v2734
      %v2741 = vmul.f32 %v2726, %v2734
      %v2742 = vmul.f32 %v2727, %v2734
      %v2743 = vmul.f32 %v2728, %v2734
      %v2744 = vld [vmem:[%s10] sm:$0x1]
      %v2746 = vlaneseq
      %v2747 = vshrl.u32 %v2746, 7
      %v2748 = vsub.s32 0, %v2747
      %v2749 = vrot.slane %v2744, %v2748
      %v2751 = vadd.f32 %v2736, %v2749
      %v2752 = vadd.f32 %v2737, %v2749
      %v2753 = vadd.f32 %v2738, %v2749
      %v2754 = vadd.f32 %v2739, %v2749
      %v2755 = vadd.f32 %v2740, %v2749
      %v2756 = vadd.f32 %v2741, %v2749
      %v2757 = vadd.f32 %v2742, %v2749
      %v2758 = vadd.f32 %v2743, %v2749
      %v2759 = vmin.f32 %v2751, 20.0
      %v2760 = vmin.f32 %v2752, 20.0
      %v2761 = vmin.f32 %v2753, 20.0
      %v2762 = vmin.f32 %v2754, 20.0
      %v2763 = vmin.f32 %v2755, 20.0
      %v2764 = vmin.f32 %v2756, 20.0
      %v2765 = vmin.f32 %v2757, 20.0
      %v2766 = vmin.f32 %v2758, 20.0
      %v2767 = vmul.f32 %v2759, 1.442695
      %v2768 = vpow.pop %v2767
      %v2769 = vmul.f32 %v2760, 1.442695
      %v2770 = vpow.pop %v2769
      %v2771 = vmul.f32 %v2761, 1.442695
      %v2772 = vpow.pop %v2771
      %v2773 = vmul.f32 %v2762, 1.442695
      %v2774 = vpow.pop %v2773
      %v2775 = vmul.f32 %v2763, 1.442695
      %v2776 = vpow.pop %v2775
      %v2777 = vmul.f32 %v2764, 1.442695
      %v2778 = vpow.pop %v2777
      %v2779 = vmul.f32 %v2765, 1.442695
      %v2780 = vpow.pop %v2779
      %v2781 = vmul.f32 %v2766, 1.442695
      %v2782 = vpow.pop %v2781
      %v2783 = vadd.f32 %v2768, 2.0
      %v2784 = vadd.f32 %v2770, 2.0
      %v2785 = vadd.f32 %v2772, 2.0
      %v2786 = vadd.f32 %v2774, 2.0
      %v2787 = vadd.f32 %v2776, 2.0
      %v2788 = vadd.f32 %v2778, 2.0
      %v2789 = vadd.f32 %v2780, 2.0
      %v2790 = vadd.f32 %v2782, 2.0
      %v2791 = vmul.f32 %v2768, %v2783
      %v2792 = vmul.f32 %v2770, %v2784
      %v2793 = vmul.f32 %v2772, %v2785
      %v2794 = vmul.f32 %v2774, %v2786
      %v2795 = vmul.f32 %v2776, %v2787
      %v2796 = vmul.f32 %v2778, %v2788
      %v2797 = vmul.f32 %v2780, %v2789
      %v2798 = vmul.f32 %v2782, %v2790
      %v2799 = vadd.f32 %v2791, 2.0
      %v2800 = vadd.f32 %v2792, 2.0
      %v2801 = vadd.f32 %v2793, 2.0
      %v2802 = vadd.f32 %v2794, 2.0
      %v2803 = vadd.f32 %v2795, 2.0
      %v2804 = vadd.f32 %v2796, 2.0
      %v2805 = vadd.f32 %v2797, 2.0
      %v2806 = vadd.f32 %v2798, 2.0
      %v2807 = vrcp.pop %v2799
      %v2808 = vrcp.pop %v2800
      %v2809 = vrcp.pop %v2801
      %v2810 = vrcp.pop %v2802
      %v2811 = vrcp.pop %v2803
      %v2812 = vrcp.pop %v2804
      %v2813 = vrcp.pop %v2805
      %v2814 = vrcp.pop %v2806
      %v2815 = vmul.f32 %v2791, %v2807
      %v2816 = vmul.f32 %v2792, %v2808
      %v2817 = vmul.f32 %v2793, %v2809
      %v2818 = vmul.f32 %v2794, %v2810
      %v2819 = vmul.f32 %v2795, %v2811
      %v2820 = vmul.f32 %v2796, %v2812
      %v2821 = vmul.f32 %v2797, %v2813
      %v2822 = vmul.f32 %v2798, %v2814
      %vm2823 = vcmp.gt.f32.partialorder %v2751, 20.0
      %vm2824 = vcmp.gt.f32.partialorder %v2752, 20.0
      %vm2825 = vcmp.gt.f32.partialorder %v2753, 20.0
      %vm2826 = vcmp.gt.f32.partialorder %v2754, 20.0
      %vm2827 = vcmp.gt.f32.partialorder %v2755, 20.0
      %vm2828 = vcmp.gt.f32.partialorder %v2756, 20.0
      %vm2829 = vcmp.gt.f32.partialorder %v2757, 20.0
      %vm2830 = vcmp.gt.f32.partialorder %v2758, 20.0
      %v2831 = vsel %vm2823, 1.0, %v2815
      %v2832 = vsel %vm2824, 1.0, %v2816
      %v2833 = vsel %vm2825, 1.0, %v2817
      %v2834 = vsel %vm2826, 1.0, %v2818
      %v2835 = vsel %vm2827, 1.0, %v2819
      %v2836 = vsel %vm2828, 1.0, %v2820
      %v2837 = vsel %vm2829, 1.0, %v2821
      %v2838 = vsel %vm2830, 1.0, %v2822
      %v2839 = vmul.f32 %v2751, %v2831
      %v2840 = vmul.f32 %v2752, %v2832
      %v2841 = vmul.f32 %v2753, %v2833
      %v2842 = vmul.f32 %v2754, %v2834
      %v2843 = vmul.f32 %v2755, %v2835
      %v2844 = vmul.f32 %v2756, %v2836
      %v2845 = vmul.f32 %v2757, %v2837
      %v2846 = vmul.f32 %v2758, %v2838
      %v2847 = vpack.c.bf16 %v2839, %v2839
      %v2848 = vpack.c.bf16 %v2840, %v2840
      %v2849 = vpack.c.bf16 %v2841, %v2841
      %v2850 = vpack.c.bf16 %v2842, %v2842
      %v2851 = vpack.c.bf16 %v2843, %v2843
      %v2852 = vpack.c.bf16 %v2844, %v2844
      %v2853 = vpack.c.bf16 %v2845, %v2845
      %v2854 = vpack.c.bf16 %v2846, %v2846
      %2855 = vst [vmem:[%s542] sm:$0xf] %v2847
      %2856 = vst [vmem:[%s542 + $0x4] sm:$0xf] %v2848
      %2857 = vst [vmem:[%s542 + $0x8] sm:$0xf] %v2849
      %2858 = vst [vmem:[%s542 + $0xc] sm:$0xf] %v2850
      %2859 = vst [vmem:[%s542 + $0x10] sm:$0xf] %v2851
      %2860 = vst [vmem:[%s542 + $0x14] sm:$0xf] %v2852
      %2861 = vst [vmem:[%s542 + $0x18] sm:$0xf] %v2853
      %2862 = vst [vmem:[%s542 + $0x1c] sm:$0xf] %v2854
      %s2863 = smul.u32 8, %s27
      %p2864 = scmp.lt.s32.totalorder %s26, 1
      %s2865 = scalar_select %p2864, %s26, 1
      %p2866 = scmp.lt.s32.totalorder %s2863, 7
      %s2867 = scalar_select %p2866, %s2863, 7
      %s2868 = smul.addr %s2865, 8
      %s2869 = sadd.s32 %s2867, %s2868
      %s2870 = smul.addr %s2869, 4
      %s2871 = scalar_lea.vmem %s11, %s2870
      // Predicated region
      $region81: #{csp_down_block_forward.8} parent=63 // pred_check
        %p2872 = pneg %p322
      $region82: #{csp_down_block_forward.8} parent=63 // pred_check_branch
        %2874 = sbr.rel (%p2872) target = $region84
      $region83: #{csp_down_block_forward.8} parent=63 // pred_region
        %s2875 = smul.u32 8, %s27
      $region84: #{csp_down_block_forward.8} parent=63 // pred_fallthru
        _
    $region64: #{csp_down_block_forward.8} parent=5 // pred_fallthru
      _
    %p2876 = scmp.le.s32.totalorder 2, %s17
    // Predicated region
    $region85: #{csp_down_block_forward.8} parent=5 // pred_check
      %p2877 = pneg %p2876
    $region86: #{csp_down_block_forward.8} parent=5 // pred_check_branch
      %2879 = sbr.rel (%p2877) target = $region88
    $region87: #{csp_down_block_forward.8} parent=5 // pred_region
      %s2880 = ssub.s32 %s17, 2
      // Predicated region
      $region89: #{csp_down_block_forward.8} parent=87 // pred_check
        %p2881 = pneg %p328
      $region90: #{csp_down_block_forward.8} parent=87 // pred_check_branch
        %2883 = sbr.rel (%p2881) target = $region92
      $region91: #{csp_down_block_forward.8} parent=87 // pred_region
        %s2884 = smul.u32 8, %s29
        %p2885 = scmp.lt.s32.totalorder %s28, 1
        %s2886 = scalar_select %p2885, %s28, 1
        %p2887 = scmp.lt.s32.totalorder %s2884, 7
        %s2888 = scalar_select %p2887, %s2884, 7
        %s2889 = smul.addr %s2886, 8
        %s2890 = sadd.s32 %s2888, %s2889
        %s2891 = smul.addr %s2890, 4
        %s2892 = scalar_lea.vmem %s11, %s2891
      $region92: #{csp_down_block_forward.8} parent=87 // pred_fallthru
        _
    $region88: #{csp_down_block_forward.8} parent=5 // pred_fallthru
      _
  $region6: #{csp_down_block_forward.8} parent=0 // loop_footer
    %s21 = sadd.s32 1, %s17
  $region7: #{csp_down_block_forward.8} parent=0 // loop_footer_branch
    %16 = sbr.rel target = $region3
  $region8: #{csp_down_block_forward.8} parent=0 // loop_exit
    _

</llo_original>
